<compile_context>
chip_gen: v6e
topology: v6e:2x2x1
jax: 0.10.0
libtpu: 0.0.40
codegen_flags: <defaults>
</compile_context>

<pallas_src>
import functools

import numpy as np
import jax
import jax.numpy as jnp
from jax.experimental import pallas as pl
from jax.experimental.pallas import tpu as pltpu

# ----------------------------- configuration --------------------------------
# Synthetic MoleculeSpec (the real one is an external dependency).
NUM_ATOM_TYPES = 7                       # ms.num_atom_types
NUM_BOND_TYPES = 4                       # ms.num_bond_types
NUM_BOND_TYPES_EXT = NUM_BOND_TYPES + 3  # self._num_bond_types

NUM_ATOM_EMBEDDING = 16
CAUSAL_HIDDEN_SIZES = (16, 16)
NUM_BN_FEATURES = 8
NUM_K_FEATURES = 8
NUM_LAYERS = 2
NUM_OUTPUT_FEATURES = 32

NUM_AC_OUT = NUM_ATOM_TYPES * NUM_BOND_TYPES + NUM_BOND_TYPES   # 32 real columns
PAD_LANES = 128                                                 # lane-dense output
_NEG_BIG = -1e30

_VMEM = pl.BlockSpec(memory_space=pltpu.MemorySpace.VMEM)


# ------------------------------ kernel body ----------------------------------
def _elu(x):
    # numerically-safe ELU (exp only evaluated on the clamped negative branch)
    return jnp.where(x > 0, x, jnp.exp(jnp.minimum(x, 0.0)) - 1.0)


def _bn_elu_linear(chunks, p):
    """BNReLULinear (eval-mode BN folded into scale/shift) + ELU + Linear.

    The linear input is conceptually concat(chunks, -1); instead of a lane
    concat the weight matrix is pre-split per chunk (wrapper side) and the
    per-chunk matmuls are summed -- mathematically identical.  Matmuls run
    bf16 x bf16 -> f32 on the MXU; elementwise math stays f32.
    """
    acc = p["b"][...]                                    # [1, out]
    for x, sc, sh, w in zip(chunks, p["scale"], p["shift"], p["w"]):
        y = _elu(x * sc[...] + sh[...])
        acc = acc + jnp.dot(y.astype(jnp.bfloat16), w[...],
                            preferred_element_type=jnp.float32)
    return acc


def _make_fused_kernel(treedef, n_param_leaves):
    def kernel(*refs):
        x_ref, adj_ref, mask_gn_ref, mask_ng_ref = refs[:4]
        param_refs = refs[4:4 + n_param_leaves]
        out_ac_ref, out_end_ref = refs[4 + n_param_leaves:]
        kp = jax.tree_util.tree_unflatten(treedef, list(param_refs))

        mask_gn = mask_gn_ref[...]            # [G, N] one-hot block membership
        mask_ng = mask_ng_ref[...]            # [N, G]
        n_bond = adj_ref.shape[0]             # bext

        # ---- DenseNet graph convolution (all VMEM resident) ----
        # TODO(synk): exact CausalMolConvBlock internals are not in the provided
        # source; a pre-activation BN+ELU+Linear stack over
        # [bottleneck || per-bond-type neighbour aggregate] is used instead.
        chunks = [x_ref[...]]                                          # [N, emb]
        for layer in kp["layers"]:
            h = _bn_elu_linear(chunks, layer["bn"])                    # [N, bn]
            h_b = h.astype(jnp.bfloat16)
            agg = [jnp.dot(adj_ref[t], h_b, preferred_element_type=jnp.float32)
                   for t in range(n_bond)]                             # bext x [N, bn]
            z = _bn_elu_linear([h] + agg, layer["causal0"])
            for hp in layer["causal_rest"]:
                z = _bn_elu_linear([z], hp)
            chunks.append(_bn_elu_linear([z], layer["out"]))           # growth chunk
        feats = _bn_elu_linear(chunks, kp["final"])                    # [N, F]

        # ---- AvgPooling over blocks (BN+ELU, segment mean via MXU) ----
        y = _elu(feats * kp["avg_pool"]["scale"][...] + kp["avg_pool"]["shift"][...])
        counts = jnp.maximum(jnp.sum(mask_gn, axis=-1, keepdims=True), 1.0)     # [G,1]
        mol = jnp.dot(mask_gn, y, preferred_element_type=jnp.float32) / counts  # [G,F]
        mol_atom = jnp.dot(mask_ng, mol, preferred_element_type=jnp.float32)    # [N,F]

        # ---- readout heads ----
        # act_ac columns >= NUM_AC_OUT are forced to -1e30 via the padded bias,
        # so they vanish from the softmax (exp underflows to 0).
        act_ac = _bn_elu_linear([feats, mol_atom], kp["ac"])           # [N, 128]
        act_end = _bn_elu_linear([mol], kp["end"])                     # [G, 1]

        # ---- segment softmax with bias (joint over block atoms + end bias) ----
        row_max = jnp.max(act_ac, axis=-1, keepdims=True)                          # [N,1]
        bias_atom = jnp.dot(mask_ng, act_end, preferred_element_type=jnp.float32)  # [N,1]
        cand = jnp.maximum(row_max, bias_atom)                                     # [N,1]
        m_row = jnp.max(jnp.where(mask_ng > 0.0, cand, _NEG_BIG),
                        axis=0, keepdims=True)                                     # [1,G]
        m_atom = jnp.sum(mask_ng * m_row, axis=-1, keepdims=True)                  # [N,1]
        m_blk = (jnp.dot(mask_gn, m_atom, preferred_element_type=jnp.float32)
                 / counts)                                                         # [G,1]

        ex = jnp.exp(act_ac - m_atom)                        # padded cols -> 0
        row_sum = jnp.sum(ex, axis=-1, keepdims=True)                              # [N,1]
        ex_end = jnp.exp(act_end - m_blk)                                          # [G,1]
        denom = (jnp.dot(mask_gn, row_sum, preferred_element_type=jnp.float32)
                 + ex_end)                                                         # [G,1]
        denom_atom = jnp.maximum(
            jnp.dot(mask_ng, denom, preferred_element_type=jnp.float32), 1e-30)    # [N,1]

        out_ac_ref[...] = ex / denom_atom
        out_end_ref[...] = jnp.broadcast_to(ex_end / denom, out_end_ref.shape)

    return kernel


# ----------------------------- parameter init --------------------------------
def _init_bn_elu_linear(key, fin, fout):
    k_w, k_g = jax.random.split(key)
    w = jax.random.normal(k_w, (fin, fout), jnp.float32) / np.sqrt(fin)
    b = jnp.zeros((1, fout), jnp.float32)
    gamma = 1.0 + 0.1 * jax.random.normal(k_g, (1, fin), jnp.float32)
    beta = jnp.zeros((1, fin), jnp.float32)
    eps = 1e-5
    # eval-mode BatchNorm with running_mean=0, running_var=1 folded into affine
    return {"scale": gamma / jnp.sqrt(1.0 + eps), "shift": beta, "w": w, "b": b}


def init_params(key):
    keys = iter(jax.random.split(key, 64))
    params = {}
    emb_rows = NUM_ATOM_TYPES + NUM_ATOM_TYPES * 3
    params["embedding"] = 0.1 * jax.random.normal(
        next(keys), (emb_rows, NUM_ATOM_EMBEDDING), jnp.float32)

    dense_layers = []
    fin = NUM_ATOM_EMBEDDING
    for _ in range(NUM_LAYERS):
        layer = {"bottleneck": _init_bn_elu_linear(next(keys), fin, NUM_BN_FEATURES)}
        h_in = NUM_BN_FEATURES * (1 + NUM_BOND_TYPES_EXT)   # self || aggregated
        hidden = []
        for h in CAUSAL_HIDDEN_SIZES:
            hidden.append(_init_bn_elu_linear(next(keys), h_in, h))
            h_in = h
        layer["causal"] = hidden
        layer["out"] = _init_bn_elu_linear(next(keys), h_in, NUM_K_FEATURES)
        dense_layers.append(layer)
        fin += NUM_K_FEATURES
    params["dense_layers"] = dense_layers
    params["dense_final"] = _init_bn_elu_linear(next(keys), fin, NUM_OUTPUT_FEATURES)

    gamma = 1.0 + 0.1 * jax.random.normal(next(keys), (1, NUM_OUTPUT_FEATURES),
                                          jnp.float32)
    params["avg_pool"] = {"scale": gamma / jnp.sqrt(1.0 + 1e-5),
                          "shift": jnp.zeros((1, NUM_OUTPUT_FEATURES), jnp.float32)}
    params["end"] = _init_bn_elu_linear(next(keys), NUM_OUTPUT_FEATURES, 1)
    params["append_connect"] = _init_bn_elu_linear(
        next(keys), NUM_OUTPUT_FEATURES * 2, NUM_AC_OUT)
    return params


def _split_for_kernel(p, widths, pad_out_to=None, pad_bias_value=0.0):
    """Split a BN+Linear block per input chunk; bf16 weights; optional lane pad."""
    offs = np.cumsum([0] + list(widths)).tolist()
    n = len(widths)
    scale = [p["scale"][:, offs[i]:offs[i + 1]] for i in range(n)]
    shift = [p["shift"][:, offs[i]:offs[i + 1]] for i in range(n)]
    ws = [p["w"][offs[i]:offs[i + 1], :] for i in range(n)]
    b = p["b"]
    if pad_out_to is not None:
        extra = pad_out_to - b.shape[1]
        ws = [jnp.pad(w, ((0, 0), (0, extra))) for w in ws]
        b = jnp.concatenate(
            [b, jnp.full((1, extra), pad_bias_value, jnp.float32)], axis=1)
    ws = [w.astype(jnp.bfloat16) for w in ws]
    return {"scale": scale, "shift": shift, "w": ws, "b": b}


def prepare_kernel_params(params):
    """One-time restructuring of reference-shaped params for the fused kernel."""
    kp = {"layers": []}
    widths = [NUM_ATOM_EMBEDDING]
    for layer in params["dense_layers"]:
        lk = {
            "bn": _split_for_kernel(layer["bottleneck"], widths),
            "causal0": _split_for_kernel(
                layer["causal"][0], [NUM_BN_FEATURES] * (1 + NUM_BOND_TYPES_EXT)),
            "causal_rest": [_split_for_kernel(hp, [hp["w"].shape[0]])
                            for hp in layer["causal"][1:]],
            "out": _split_for_kernel(layer["out"], [layer["out"]["w"].shape[0]]),
        }
        kp["layers"].append(lk)
        widths = widths + [NUM_K_FEATURES]
    kp["final"] = _split_for_kernel(params["dense_final"], widths)
    kp["avg_pool"] = dict(params["avg_pool"])
    kp["end"] = _split_for_kernel(params["end"], [NUM_OUTPUT_FEATURES])
    kp["ac"] = _split_for_kernel(
        params["append_connect"], [NUM_OUTPUT_FEATURES, NUM_OUTPUT_FEATURES],
        pad_out_to=PAD_LANES, pad_bias_value=_NEG_BIG)
    return kp


# ------------------------------ forward pass ---------------------------------
def deep_scaffold_forward(embedding, kparams, atom_types, is_scaffold, bond_info,
                          block_ids, last_append_mask, num_blocks, log_prob=False):
    nat = NUM_ATOM_TYPES
    # Same offsetting as the reference _forward (is_scaffold wins over
    # last_append_mask, and scaffold atoms get +nat applied a second time).
    at = jnp.where(
        is_scaffold == 1, atom_types + nat,
        jnp.where(last_append_mask == 1, atom_types + nat * 2,
                  jnp.where(last_append_mask == 2, atom_types + nat * 3,
                            atom_types)))
    at = jnp.where(is_scaffold == 1, at + nat, at)
    atom_features = embedding[at]                       # [N, emb] (XLA gather)
    n_atoms = atom_features.shape[0]
    bext = NUM_BOND_TYPES_EXT

    # Dense per-bond-type adjacency (same semantics as the reference sparse
    # FloatTensor; duplicate bond entries accumulate).  bf16: small integer
    # counts are exact and the HBM->VMEM DMA is halved.
    # TODO(synk): for realistic packed sizes keep this sparse and aggregate
    # from scalar-prefetched bond lists instead of an O(N^2) dense adjacency.
    adj = jnp.zeros((bext, n_atoms, n_atoms), jnp.float32)
    adj = adj.at[bond_info[:, 2], bond_info[:, 0], bond_info[:, 1]].add(1.0)
    adj = adj.astype(jnp.bfloat16)

    blocks = jnp.arange(num_blocks, dtype=block_ids.dtype)
    mask_gn = (blocks[:, None] == block_ids[None, :]).astype(jnp.float32)   # [G,N]
    mask_ng = (block_ids[:, None] == blocks[None, :]).astype(jnp.float32)   # [N,G]

    leaves, treedef = jax.tree_util.tree_flatten(kparams)
    kernel = _make_fused_kernel(treedef, len(leaves))
    out_ac, out_end = pl.pallas_call(
        kernel,
        out_shape=(jax.ShapeDtypeStruct((n_atoms, PAD_LANES), jnp.float32),
                   jax.ShapeDtypeStruct((num_blocks, PAD_LANES), jnp.float32)),
        in_specs=[_VMEM] * (4 + len(leaves)),
        out_specs=(_VMEM, _VMEM),
    )(atom_features, adj, mask_gn, mask_ng, *leaves)

    p_ac = out_ac[:, :NUM_AC_OUT]
    p_end = out_end[:, 0]
    split = NUM_ATOM_TYPES * NUM_BOND_TYPES
    p_append = p_ac[:, :split].reshape(n_atoms, NUM_ATOM_TYPES, NUM_BOND_TYPES)
    p_connect = p_ac[:, split:]
    if log_prob:
        return (jnp.log(p_append + 1e-6),
                jnp.log(p_connect + 1e-6),
                jnp.log(p_end + 1e-6))
    return p_append, p_connect, p_end


@functools.partial(jax.jit,
                   static_argnames=("num_blocks", "batch_size", "max_num_steps"))
def deep_scaffold_likelihood(embedding, kparams, packed, num_blocks,
                             batch_size, max_num_steps):
    """forward() == likelihood() in the reference module."""
    # TODO(synk): ops.pack_decoder (mol_array -> packed step graphs) is pure
    # host-side index bookkeeping with no Pallas equivalent; its outputs are
    # supplied directly in `packed`.
    log_p_append, log_p_connect, log_p_end = deep_scaffold_forward(
        embedding, kparams,
        packed["atom_types"], packed["is_scaffold"], packed["bond_info"],
        packed["block_ids"], packed["last_append_mask"],
        num_blocks=num_blocks, log_prob=True)

    actions = packed["actions"]
    action_types = actions[:, 0]
    atom_types_t = actions[:, 1]
    bond_types_t = actions[:, 2]
    append_pos = actions[:, 3]
    connect_pos = actions[:, 4]
    I_APPEND, I_CONNECT, I_END = 0, 1, 2

    ll_end = jnp.where(action_types == I_END, log_p_end, 0.0)
    ll_append = log_p_append[append_pos, atom_types_t, bond_types_t]
    ll_append = jnp.where(action_types == I_APPEND, ll_append, 0.0)
    ll_connect = log_p_connect[connect_pos, bond_types_t]
    ll_connect = jnp.where(action_types == I_CONNECT, ll_connect, 0.0)
    ll = ll_append + ll_connect + ll_end

    ll_unpack = jnp.zeros((batch_size, max_num_steps), jnp.float32)
    ll_unpack = ll_unpack.at[packed["mol_ids"], packed["step_ids"]].set(ll)
    return ll_unpack


# ---------------------------------- main --------------------------------------
if __name__ == "__main__":
    key = jax.random.PRNGKey(0)
    (k_param, k1, k2, k3, k4, k5, k6,
     ka, kb, kc, kd, ke) = jax.random.split(key, 12)
    params = init_params(k_param)
    kparams = prepare_kernel_params(params)     # one-time split/pad/bf16 cast

    num_atoms = 24          # packed atoms across all blocks
    num_blocks = 4          # decoding steps packed together
    num_bonds = 40
    batch_size = 2
    max_num_steps = 8

    atom_types = jax.random.randint(k1, (num_atoms,), 0, NUM_ATOM_TYPES)
    is_scaffold = jax.random.randint(k2, (num_atoms,), 0, 2)
    last_append_mask = jax.random.randint(k3, (num_atoms,), 0, 3)
    block_ids = jnp.repeat(jnp.arange(num_blocks), num_atoms // num_blocks)
    bond_begin = jax.random.randint(k4, (num_bonds,), 0, num_atoms)
    bond_end = jax.random.randint(k5, (num_bonds,), 0, num_atoms)
    bond_type = jax.random.randint(k6, (num_bonds,), 0, NUM_BOND_TYPES_EXT)
    bond_info = jnp.stack([bond_begin, bond_end, bond_type], axis=-1)

    actions = jnp.stack([
        jax.random.randint(ka, (num_blocks,), 0, 3),               # action type
        jax.random.randint(kb, (num_blocks,), 0, NUM_ATOM_TYPES),  # atom type
        jax.random.randint(kc, (num_blocks,), 0, NUM_BOND_TYPES),  # bond type
        jax.random.randint(kd, (num_blocks,), 0, num_atoms),       # append pos
        jax.random.randint(ke, (num_blocks,), 0, num_atoms),       # connect pos
    ], axis=-1)
    mol_ids = jnp.array([0, 0, 1, 1], dtype=jnp.int32)
    step_ids = jnp.array([0, 1, 0, 1], dtype=jnp.int32)

    packed = dict(
        atom_types=atom_types, is_scaffold=is_scaffold, bond_info=bond_info,
        block_ids=block_ids, last_append_mask=last_append_mask,
        actions=actions, mol_ids=mol_ids, step_ids=step_ids)

    ll = deep_scaffold_likelihood(params["embedding"], kparams, packed,
                                  num_blocks=num_blocks, batch_size=batch_size,
                                  max_num_steps=max_num_steps)
    ll = jax.block_until_ready(ll)
    assert ll.shape == (batch_size, max_num_steps)
    assert bool(jnp.all(jnp.isfinite(ll)))
    print("KERNEL_OK")
</pallas_src>

<mosaic_0001>
module attributes {stable_mosaic.version = 11 : i64} {
  func.func private @main(%arg0: i32) attributes {dimension_semantics = [#tpu.dimension_semantics<core_parallel>], iteration_bounds = array<i64: 2>, tpu.core_type = #tpu.core_type<sc_scalar_subcore>, window_params = []} {
    return
  }
}

module attributes {stable_mosaic.version = 11 : i64} {
  func.func private @main(%arg0: i32) attributes {dimension_semantics = [#tpu.dimension_semantics<core_parallel>], iteration_bounds = array<i64: 2>, tpu.core_type = #tpu.core_type<sc_scalar_subcore>, window_params = []} {
    return
  }
}

module attributes {stable_mosaic.version = 11 : i64} {
  func.func @kernel(%arg0: memref<24x16xf32, #tpu.memory_space<vmem>>, %arg1: memref<7x24x24xbf16, #tpu.memory_space<vmem>>, %arg2: memref<4x24xf32, #tpu.memory_space<vmem>>, %arg3: memref<24x4xf32, #tpu.memory_space<vmem>>, %arg4: memref<1x128xf32, #tpu.memory_space<vmem>>, %arg5: memref<1x32xf32, #tpu.memory_space<vmem>>, %arg6: memref<1x32xf32, #tpu.memory_space<vmem>>, %arg7: memref<1x32xf32, #tpu.memory_space<vmem>>, %arg8: memref<1x32xf32, #tpu.memory_space<vmem>>, %arg9: memref<32x128xbf16, #tpu.memory_space<vmem>>, %arg10: memref<32x128xbf16, #tpu.memory_space<vmem>>, %arg11: memref<1x32xf32, #tpu.memory_space<vmem>>, %arg12: memref<1x32xf32, #tpu.memory_space<vmem>>, %arg13: memref<1x1xf32, #tpu.memory_space<vmem>>, %arg14: memref<1x32xf32, #tpu.memory_space<vmem>>, %arg15: memref<1x32xf32, #tpu.memory_space<vmem>>, %arg16: memref<32x1xbf16, #tpu.memory_space<vmem>>, %arg17: memref<1x32xf32, #tpu.memory_space<vmem>>, %arg18: memref<1x16xf32, #tpu.memory_space<vmem>>, %arg19: memref<1x8xf32, #tpu.memory_space<vmem>>, %arg20: memref<1x8xf32, #tpu.memory_space<vmem>>, %arg21: memref<1x16xf32, #tpu.memory_space<vmem>>, %arg22: memref<1x8xf32, #tpu.memory_space<vmem>>, %arg23: memref<1x8xf32, #tpu.memory_space<vmem>>, %arg24: memref<16x32xbf16, #tpu.memory_space<vmem>>, %arg25: memref<8x32xbf16, #tpu.memory_space<vmem>>, %arg26: memref<8x32xbf16, #tpu.memory_space<vmem>>, %arg27: memref<1x8xf32, #tpu.memory_space<vmem>>, %arg28: memref<1x16xf32, #tpu.memory_space<vmem>>, %arg29: memref<1x16xf32, #tpu.memory_space<vmem>>, %arg30: memref<16x8xbf16, #tpu.memory_space<vmem>>, %arg31: memref<1x16xf32, #tpu.memory_space<vmem>>, %arg32: memref<1x8xf32, #tpu.memory_space<vmem>>, %arg33: memref<1x8xf32, #tpu.memory_space<vmem>>, %arg34: memref<1x8xf32, #tpu.memory_space<vmem>>, %arg35: memref<1x8xf32, #tpu.memory_space<vmem>>, %arg36: memref<1x8xf32, #tpu.memory_space<vmem>>, %arg37: memref<1x8xf32, #tpu.memory_space<vmem>>, %arg38: memref<1x8xf32, #tpu.memory_space<vmem>>, %arg39: memref<1x8xf32, #tpu.memory_space<vmem>>, %arg40: memref<1x8xf32, #tpu.memory_space<vmem>>, %arg41: memref<1x8xf32, #tpu.memory_space<vmem>>, %arg42: memref<1x8xf32, #tpu.memory_space<vmem>>, %arg43: memref<1x8xf32, #tpu.memory_space<vmem>>, %arg44: memref<1x8xf32, #tpu.memory_space<vmem>>, %arg45: memref<1x8xf32, #tpu.memory_space<vmem>>, %arg46: memref<1x8xf32, #tpu.memory_space<vmem>>, %arg47: memref<1x8xf32, #tpu.memory_space<vmem>>, %arg48: memref<8x16xbf16, #tpu.memory_space<vmem>>, %arg49: memref<8x16xbf16, #tpu.memory_space<vmem>>, %arg50: memref<8x16xbf16, #tpu.memory_space<vmem>>, %arg51: memref<8x16xbf16, #tpu.memory_space<vmem>>, %arg52: memref<8x16xbf16, #tpu.memory_space<vmem>>, %arg53: memref<8x16xbf16, #tpu.memory_space<vmem>>, %arg54: memref<8x16xbf16, #tpu.memory_space<vmem>>, %arg55: memref<8x16xbf16, #tpu.memory_space<vmem>>, %arg56: memref<1x16xf32, #tpu.memory_space<vmem>>, %arg57: memref<1x16xf32, #tpu.memory_space<vmem>>, %arg58: memref<1x16xf32, #tpu.memory_space<vmem>>, %arg59: memref<16x16xbf16, #tpu.memory_space<vmem>>, %arg60: memref<1x8xf32, #tpu.memory_space<vmem>>, %arg61: memref<1x16xf32, #tpu.memory_space<vmem>>, %arg62: memref<1x16xf32, #tpu.memory_space<vmem>>, %arg63: memref<16x8xbf16, #tpu.memory_space<vmem>>, %arg64: memref<1x8xf32, #tpu.memory_space<vmem>>, %arg65: memref<1x16xf32, #tpu.memory_space<vmem>>, %arg66: memref<1x8xf32, #tpu.memory_space<vmem>>, %arg67: memref<1x16xf32, #tpu.memory_space<vmem>>, %arg68: memref<1x8xf32, #tpu.memory_space<vmem>>, %arg69: memref<16x8xbf16, #tpu.memory_space<vmem>>, %arg70: memref<8x8xbf16, #tpu.memory_space<vmem>>, %arg71: memref<1x16xf32, #tpu.memory_space<vmem>>, %arg72: memref<1x8xf32, #tpu.memory_space<vmem>>, %arg73: memref<1x8xf32, #tpu.memory_space<vmem>>, %arg74: memref<1x8xf32, #tpu.memory_space<vmem>>, %arg75: memref<1x8xf32, #tpu.memory_space<vmem>>, %arg76: memref<1x8xf32, #tpu.memory_space<vmem>>, %arg77: memref<1x8xf32, #tpu.memory_space<vmem>>, %arg78: memref<1x8xf32, #tpu.memory_space<vmem>>, %arg79: memref<1x8xf32, #tpu.memory_space<vmem>>, %arg80: memref<1x8xf32, #tpu.memory_space<vmem>>, %arg81: memref<1x8xf32, #tpu.memory_space<vmem>>, %arg82: memref<1x8xf32, #tpu.memory_space<vmem>>, %arg83: memref<1x8xf32, #tpu.memory_space<vmem>>, %arg84: memref<1x8xf32, #tpu.memory_space<vmem>>, %arg85: memref<1x8xf32, #tpu.memory_space<vmem>>, %arg86: memref<1x8xf32, #tpu.memory_space<vmem>>, %arg87: memref<1x8xf32, #tpu.memory_space<vmem>>, %arg88: memref<8x16xbf16, #tpu.memory_space<vmem>>, %arg89: memref<8x16xbf16, #tpu.memory_space<vmem>>, %arg90: memref<8x16xbf16, #tpu.memory_space<vmem>>, %arg91: memref<8x16xbf16, #tpu.memory_space<vmem>>, %arg92: memref<8x16xbf16, #tpu.memory_space<vmem>>, %arg93: memref<8x16xbf16, #tpu.memory_space<vmem>>, %arg94: memref<8x16xbf16, #tpu.memory_space<vmem>>, %arg95: memref<8x16xbf16, #tpu.memory_space<vmem>>, %arg96: memref<1x16xf32, #tpu.memory_space<vmem>>, %arg97: memref<1x16xf32, #tpu.memory_space<vmem>>, %arg98: memref<1x16xf32, #tpu.memory_space<vmem>>, %arg99: memref<16x16xbf16, #tpu.memory_space<vmem>>, %arg100: memref<1x8xf32, #tpu.memory_space<vmem>>, %arg101: memref<1x16xf32, #tpu.memory_space<vmem>>, %arg102: memref<1x16xf32, #tpu.memory_space<vmem>>, %arg103: memref<16x8xbf16, #tpu.memory_space<vmem>>, %arg104: memref<24x128xf32, #tpu.memory_space<vmem>>, %arg105: memref<4x128xf32, #tpu.memory_space<vmem>>) attributes {dimension_semantics = [], scalar_prefetch = 0 : i64, scratch_operands = 0 : i64, tpu.core_type = #tpu.core_type<tc>} {
    %c0 = arith.constant 0 : index
    %c0_0 = arith.constant 0 : index
    %0 = vector.load %arg2[%c0, %c0_0] : memref<4x24xf32, #tpu.memory_space<vmem>>, vector<4x24xf32>
    %c0_1 = arith.constant 0 : index
    %c0_2 = arith.constant 0 : index
    %1 = vector.load %arg3[%c0_1, %c0_2] : memref<24x4xf32, #tpu.memory_space<vmem>>, vector<24x4xf32>
    %c0_3 = arith.constant 0 : index
    %c0_4 = arith.constant 0 : index
    %2 = vector.load %arg0[%c0_3, %c0_4] : memref<24x16xf32, #tpu.memory_space<vmem>>, vector<24x16xf32>
    %c0_5 = arith.constant 0 : index
    %c0_6 = arith.constant 0 : index
    %3 = vector.load %arg27[%c0_5, %c0_6] : memref<1x8xf32, #tpu.memory_space<vmem>>, vector<1x8xf32>
    %c0_7 = arith.constant 0 : index
    %c0_8 = arith.constant 0 : index
    %4 = vector.load %arg28[%c0_7, %c0_8] : memref<1x16xf32, #tpu.memory_space<vmem>>, vector<1x16xf32>
    %5 = vector.broadcast %4 : vector<1x16xf32> to vector<24x16xf32>
    %6 = arith.mulf %2, %5 : vector<24x16xf32>
    %c0_9 = arith.constant 0 : index
    %c0_10 = arith.constant 0 : index
    %7 = vector.load %arg29[%c0_9, %c0_10] : memref<1x16xf32, #tpu.memory_space<vmem>>, vector<1x16xf32>
    %8 = vector.broadcast %7 : vector<1x16xf32> to vector<24x16xf32>
    %9 = arith.addf %6, %8 : vector<24x16xf32>
    %cst = arith.constant 0.000000e+00 : f32
    %10 = vector.broadcast %cst : f32 to vector<24x16xf32>
    %11 = arith.cmpf ogt, %9, %10 : vector<24x16xf32>
    %cst_11 = arith.constant 0.000000e+00 : f32
    %12 = vector.broadcast %cst_11 : f32 to vector<24x16xf32>
    %13 = arith.minimumf %9, %12 : vector<24x16xf32>
    %14 = math.exp %13 : vector<24x16xf32>
    %cst_12 = arith.constant 1.000000e+00 : f32
    %15 = vector.broadcast %cst_12 : f32 to vector<24x16xf32>
    %16 = arith.subf %14, %15 : vector<24x16xf32>
    %17 = arith.select %11, %9, %16 : vector<24x16xi1>, vector<24x16xf32>
    %18 = arith.truncf %17 : vector<24x16xf32> to vector<24x16xbf16>
    %c0_13 = arith.constant 0 : index
    %c0_14 = arith.constant 0 : index
    %19 = vector.load %arg30[%c0_13, %c0_14] : memref<16x8xbf16, #tpu.memory_space<vmem>>, vector<16x8xbf16>
    %cst_15 = arith.constant dense<0.000000e+00> : vector<24x8xf32>
    %20 = tpu.matmul %18, %19, %cst_15 {dimension_numbers = #tpu.dot_dimension_numbers<[1], [0], [0], [1], [0, 0, 1, 1], [], []>} : vector<24x16xbf16>, vector<16x8xbf16>, vector<24x8xf32> -> vector<24x8xf32>
    %21 = vector.broadcast %3 : vector<1x8xf32> to vector<24x8xf32>
    %22 = arith.addf %21, %20 : vector<24x8xf32>
    %23 = arith.truncf %22 : vector<24x8xf32> to vector<24x8xbf16>
    %c0_16 = arith.constant 0 : index
    %c0_17 = arith.constant 0 : index
    %c0_18 = arith.constant 0 : index
    %24 = vector.load %arg1[%c0_16, %c0_17, %c0_18] : memref<7x24x24xbf16, #tpu.memory_space<vmem>>, vector<1x24x24xbf16>
    %25 = vector.shape_cast %24 : vector<1x24x24xbf16> to vector<24x24xbf16>
    %cst_19 = arith.constant dense<0.000000e+00> : vector<24x8xf32>
    %26 = tpu.matmul %25, %23, %cst_19 {dimension_numbers = #tpu.dot_dimension_numbers<[1], [0], [0], [1], [0, 0, 1, 1], [], []>} : vector<24x24xbf16>, vector<24x8xbf16>, vector<24x8xf32> -> vector<24x8xf32>
    %c1 = arith.constant 1 : index
    %c0_20 = arith.constant 0 : index
    %c0_21 = arith.constant 0 : index
    %27 = vector.load %arg1[%c1, %c0_20, %c0_21] : memref<7x24x24xbf16, #tpu.memory_space<vmem>>, vector<1x24x24xbf16>
    %28 = vector.shape_cast %27 : vector<1x24x24xbf16> to vector<24x24xbf16>
    %cst_22 = arith.constant dense<0.000000e+00> : vector<24x8xf32>
    %29 = tpu.matmul %28, %23, %cst_22 {dimension_numbers = #tpu.dot_dimension_numbers<[1], [0], [0], [1], [0, 0, 1, 1], [], []>} : vector<24x24xbf16>, vector<24x8xbf16>, vector<24x8xf32> -> vector<24x8xf32>
    %c2 = arith.constant 2 : index
    %c0_23 = arith.constant 0 : index
    %c0_24 = arith.constant 0 : index
    %30 = vector.load %arg1[%c2, %c0_23, %c0_24] : memref<7x24x24xbf16, #tpu.memory_space<vmem>>, vector<1x24x24xbf16>
    %31 = vector.shape_cast %30 : vector<1x24x24xbf16> to vector<24x24xbf16>
    %cst_25 = arith.constant dense<0.000000e+00> : vector<24x8xf32>
    %32 = tpu.matmul %31, %23, %cst_25 {dimension_numbers = #tpu.dot_dimension_numbers<[1], [0], [0], [1], [0, 0, 1, 1], [], []>} : vector<24x24xbf16>, vector<24x8xbf16>, vector<24x8xf32> -> vector<24x8xf32>
    %c3 = arith.constant 3 : index
    %c0_26 = arith.constant 0 : index
    %c0_27 = arith.constant 0 : index
    %33 = vector.load %arg1[%c3, %c0_26, %c0_27] : memref<7x24x24xbf16, #tpu.memory_space<vmem>>, vector<1x24x24xbf16>
    %34 = vector.shape_cast %33 : vector<1x24x24xbf16> to vector<24x24xbf16>
    %cst_28 = arith.constant dense<0.000000e+00> : vector<24x8xf32>
    %35 = tpu.matmul %34, %23, %cst_28 {dimension_numbers = #tpu.dot_dimension_numbers<[1], [0], [0], [1], [0, 0, 1, 1], [], []>} : vector<24x24xbf16>, vector<24x8xbf16>, vector<24x8xf32> -> vector<24x8xf32>
    %c4 = arith.constant 4 : index
    %c0_29 = arith.constant 0 : index
    %c0_30 = arith.constant 0 : index
    %36 = vector.load %arg1[%c4, %c0_29, %c0_30] : memref<7x24x24xbf16, #tpu.memory_space<vmem>>, vector<1x24x24xbf16>
    %37 = vector.shape_cast %36 : vector<1x24x24xbf16> to vector<24x24xbf16>
    %cst_31 = arith.constant dense<0.000000e+00> : vector<24x8xf32>
    %38 = tpu.matmul %37, %23, %cst_31 {dimension_numbers = #tpu.dot_dimension_numbers<[1], [0], [0], [1], [0, 0, 1, 1], [], []>} : vector<24x24xbf16>, vector<24x8xbf16>, vector<24x8xf32> -> vector<24x8xf32>
    %c5 = arith.constant 5 : index
    %c0_32 = arith.constant 0 : index
    %c0_33 = arith.constant 0 : index
    %39 = vector.load %arg1[%c5, %c0_32, %c0_33] : memref<7x24x24xbf16, #tpu.memory_space<vmem>>, vector<1x24x24xbf16>
    %40 = vector.shape_cast %39 : vector<1x24x24xbf16> to vector<24x24xbf16>
    %cst_34 = arith.constant dense<0.000000e+00> : vector<24x8xf32>
    %41 = tpu.matmul %40, %23, %cst_34 {dimension_numbers = #tpu.dot_dimension_numbers<[1], [0], [0], [1], [0, 0, 1, 1], [], []>} : vector<24x24xbf16>, vector<24x8xbf16>, vector<24x8xf32> -> vector<24x8xf32>
    %c6 = arith.constant 6 : index
    %c0_35 = arith.constant 0 : index
    %c0_36 = arith.constant 0 : index
    %42 = vector.load %arg1[%c6, %c0_35, %c0_36] : memref<7x24x24xbf16, #tpu.memory_space<vmem>>, vector<1x24x24xbf16>
    %43 = vector.shape_cast %42 : vector<1x24x24xbf16> to vector<24x24xbf16>
    %cst_37 = arith.constant dense<0.000000e+00> : vector<24x8xf32>
    %44 = tpu.matmul %43, %23, %cst_37 {dimension_numbers = #tpu.dot_dimension_numbers<[1], [0], [0], [1], [0, 0, 1, 1], [], []>} : vector<24x24xbf16>, vector<24x8xbf16>, vector<24x8xf32> -> vector<24x8xf32>
    %c0_38 = arith.constant 0 : index
    %c0_39 = arith.constant 0 : index
    %45 = vector.load %arg31[%c0_38, %c0_39] : memref<1x16xf32, #tpu.memory_space<vmem>>, vector<1x16xf32>
    %c0_40 = arith.constant 0 : index
    %c0_41 = arith.constant 0 : index
    %46 = vector.load %arg32[%c0_40, %c0_41] : memref<1x8xf32, #tpu.memory_space<vmem>>, vector<1x8xf32>
    %47 = vector.broadcast %46 : vector<1x8xf32> to vector<24x8xf32>
    %48 = arith.mulf %22, %47 : vector<24x8xf32>
    %c0_42 = arith.constant 0 : index
    %c0_43 = arith.constant 0 : index
    %49 = vector.load %arg40[%c0_42, %c0_43] : memref<1x8xf32, #tpu.memory_space<vmem>>, vector<1x8xf32>
    %50 = vector.broadcast %49 : vector<1x8xf32> to vector<24x8xf32>
    %51 = arith.addf %48, %50 : vector<24x8xf32>
    %cst_44 = arith.constant 0.000000e+00 : f32
    %52 = vector.broadcast %cst_44 : f32 to vector<24x8xf32>
    %53 = arith.cmpf ogt, %51, %52 : vector<24x8xf32>
    %cst_45 = arith.constant 0.000000e+00 : f32
    %54 = vector.broadcast %cst_45 : f32 to vector<24x8xf32>
    %55 = arith.minimumf %51, %54 : vector<24x8xf32>
    %56 = math.exp %55 : vector<24x8xf32>
    %cst_46 = arith.constant 1.000000e+00 : f32
    %57 = vector.broadcast %cst_46 : f32 to vector<24x8xf32>
    %58 = arith.subf %56, %57 : vector<24x8xf32>
    %59 = arith.select %53, %51, %58 : vector<24x8xi1>, vector<24x8xf32>
    %60 = arith.truncf %59 : vector<24x8xf32> to vector<24x8xbf16>
    %c0_47 = arith.constant 0 : index
    %c0_48 = arith.constant 0 : index
    %61 = vector.load %arg48[%c0_47, %c0_48] : memref<8x16xbf16, #tpu.memory_space<vmem>>, vector<8x16xbf16>
    %cst_49 = arith.constant dense<0.000000e+00> : vector<24x16xf32>
    %62 = tpu.matmul %60, %61, %cst_49 {dimension_numbers = #tpu.dot_dimension_numbers<[1], [0], [0], [1], [0, 0, 1, 1], [], []>} : vector<24x8xbf16>, vector<8x16xbf16>, vector<24x16xf32> -> vector<24x16xf32>
    %63 = vector.broadcast %45 : vector<1x16xf32> to vector<24x16xf32>
    %64 = arith.addf %63, %62 : vector<24x16xf32>
    %c0_50 = arith.constant 0 : index
    %c0_51 = arith.constant 0 : index
    %65 = vector.load %arg33[%c0_50, %c0_51] : memref<1x8xf32, #tpu.memory_space<vmem>>, vector<1x8xf32>
    %66 = vector.broadcast %65 : vector<1x8xf32> to vector<24x8xf32>
    %67 = arith.mulf %26, %66 : vector<24x8xf32>
    %c0_52 = arith.constant 0 : index
    %c0_53 = arith.constant 0 : index
    %68 = vector.load %arg41[%c0_52, %c0_53] : memref<1x8xf32, #tpu.memory_space<vmem>>, vector<1x8xf32>
    %69 = vector.broadcast %68 : vector<1x8xf32> to vector<24x8xf32>
    %70 = arith.addf %67, %69 : vector<24x8xf32>
    %cst_54 = arith.constant 0.000000e+00 : f32
    %71 = vector.broadcast %cst_54 : f32 to vector<24x8xf32>
    %72 = arith.cmpf ogt, %70, %71 : vector<24x8xf32>
    %cst_55 = arith.constant 0.000000e+00 : f32
    %73 = vector.broadcast %cst_55 : f32 to vector<24x8xf32>
    %74 = arith.minimumf %70, %73 : vector<24x8xf32>
    %75 = math.exp %74 : vector<24x8xf32>
    %cst_56 = arith.constant 1.000000e+00 : f32
    %76 = vector.broadcast %cst_56 : f32 to vector<24x8xf32>
    %77 = arith.subf %75, %76 : vector<24x8xf32>
    %78 = arith.select %72, %70, %77 : vector<24x8xi1>, vector<24x8xf32>
    %79 = arith.truncf %78 : vector<24x8xf32> to vector<24x8xbf16>
    %c0_57 = arith.constant 0 : index
    %c0_58 = arith.constant 0 : index
    %80 = vector.load %arg49[%c0_57, %c0_58] : memref<8x16xbf16, #tpu.memory_space<vmem>>, vector<8x16xbf16>
    %cst_59 = arith.constant dense<0.000000e+00> : vector<24x16xf32>
    %81 = tpu.matmul %79, %80, %cst_59 {dimension_numbers = #tpu.dot_dimension_numbers<[1], [0], [0], [1], [0, 0, 1, 1], [], []>} : vector<24x8xbf16>, vector<8x16xbf16>, vector<24x16xf32> -> vector<24x16xf32>
    %82 = arith.addf %64, %81 : vector<24x16xf32>
    %c0_60 = arith.constant 0 : index
    %c0_61 = arith.constant 0 : index
    %83 = vector.load %arg34[%c0_60, %c0_61] : memref<1x8xf32, #tpu.memory_space<vmem>>, vector<1x8xf32>
    %84 = vector.broadcast %83 : vector<1x8xf32> to vector<24x8xf32>
    %85 = arith.mulf %29, %84 : vector<24x8xf32>
    %c0_62 = arith.constant 0 : index
    %c0_63 = arith.constant 0 : index
    %86 = vector.load %arg42[%c0_62, %c0_63] : memref<1x8xf32, #tpu.memory_space<vmem>>, vector<1x8xf32>
    %87 = vector.broadcast %86 : vector<1x8xf32> to vector<24x8xf32>
    %88 = arith.addf %85, %87 : vector<24x8xf32>
    %cst_64 = arith.constant 0.000000e+00 : f32
    %89 = vector.broadcast %cst_64 : f32 to vector<24x8xf32>
    %90 = arith.cmpf ogt, %88, %89 : vector<24x8xf32>
    %cst_65 = arith.constant 0.000000e+00 : f32
    %91 = vector.broadcast %cst_65 : f32 to vector<24x8xf32>
    %92 = arith.minimumf %88, %91 : vector<24x8xf32>
    %93 = math.exp %92 : vector<24x8xf32>
    %cst_66 = arith.constant 1.000000e+00 : f32
    %94 = vector.broadcast %cst_66 : f32 to vector<24x8xf32>
    %95 = arith.subf %93, %94 : vector<24x8xf32>
    %96 = arith.select %90, %88, %95 : vector<24x8xi1>, vector<24x8xf32>
    %97 = arith.truncf %96 : vector<24x8xf32> to vector<24x8xbf16>
    %c0_67 = arith.constant 0 : index
    %c0_68 = arith.constant 0 : index
    %98 = vector.load %arg50[%c0_67, %c0_68] : memref<8x16xbf16, #tpu.memory_space<vmem>>, vector<8x16xbf16>
    %cst_69 = arith.constant dense<0.000000e+00> : vector<24x16xf32>
    %99 = tpu.matmul %97, %98, %cst_69 {dimension_numbers = #tpu.dot_dimension_numbers<[1], [0], [0], [1], [0, 0, 1, 1], [], []>} : vector<24x8xbf16>, vector<8x16xbf16>, vector<24x16xf32> -> vector<24x16xf32>
    %100 = arith.addf %82, %99 : vector<24x16xf32>
    %c0_70 = arith.constant 0 : index
    %c0_71 = arith.constant 0 : index
    %101 = vector.load %arg35[%c0_70, %c0_71] : memref<1x8xf32, #tpu.memory_space<vmem>>, vector<1x8xf32>
    %102 = vector.broadcast %101 : vector<1x8xf32> to vector<24x8xf32>
    %103 = arith.mulf %32, %102 : vector<24x8xf32>
    %c0_72 = arith.constant 0 : index
    %c0_73 = arith.constant 0 : index
    %104 = vector.load %arg43[%c0_72, %c0_73] : memref<1x8xf32, #tpu.memory_space<vmem>>, vector<1x8xf32>
    %105 = vector.broadcast %104 : vector<1x8xf32> to vector<24x8xf32>
    %106 = arith.addf %103, %105 : vector<24x8xf32>
    %cst_74 = arith.constant 0.000000e+00 : f32
    %107 = vector.broadcast %cst_74 : f32 to vector<24x8xf32>
    %108 = arith.cmpf ogt, %106, %107 : vector<24x8xf32>
    %cst_75 = arith.constant 0.000000e+00 : f32
    %109 = vector.broadcast %cst_75 : f32 to vector<24x8xf32>
    %110 = arith.minimumf %106, %109 : vector<24x8xf32>
    %111 = math.exp %110 : vector<24x8xf32>
    %cst_76 = arith.constant 1.000000e+00 : f32
    %112 = vector.broadcast %cst_76 : f32 to vector<24x8xf32>
    %113 = arith.subf %111, %112 : vector<24x8xf32>
    %114 = arith.select %108, %106, %113 : vector<24x8xi1>, vector<24x8xf32>
    %115 = arith.truncf %114 : vector<24x8xf32> to vector<24x8xbf16>
    %c0_77 = arith.constant 0 : index
    %c0_78 = arith.constant 0 : index
    %116 = vector.load %arg51[%c0_77, %c0_78] : memref<8x16xbf16, #tpu.memory_space<vmem>>, vector<8x16xbf16>
    %cst_79 = arith.constant dense<0.000000e+00> : vector<24x16xf32>
    %117 = tpu.matmul %115, %116, %cst_79 {dimension_numbers = #tpu.dot_dimension_numbers<[1], [0], [0], [1], [0, 0, 1, 1], [], []>} : vector<24x8xbf16>, vector<8x16xbf16>, vector<24x16xf32> -> vector<24x16xf32>
    %118 = arith.addf %100, %117 : vector<24x16xf32>
    %c0_80 = arith.constant 0 : index
    %c0_81 = arith.constant 0 : index
    %119 = vector.load %arg36[%c0_80, %c0_81] : memref<1x8xf32, #tpu.memory_space<vmem>>, vector<1x8xf32>
    %120 = vector.broadcast %119 : vector<1x8xf32> to vector<24x8xf32>
    %121 = arith.mulf %35, %120 : vector<24x8xf32>
    %c0_82 = arith.constant 0 : index
    %c0_83 = arith.constant 0 : index
    %122 = vector.load %arg44[%c0_82, %c0_83] : memref<1x8xf32, #tpu.memory_space<vmem>>, vector<1x8xf32>
    %123 = vector.broadcast %122 : vector<1x8xf32> to vector<24x8xf32>
    %124 = arith.addf %121, %123 : vector<24x8xf32>
    %cst_84 = arith.constant 0.000000e+00 : f32
    %125 = vector.broadcast %cst_84 : f32 to vector<24x8xf32>
    %126 = arith.cmpf ogt, %124, %125 : vector<24x8xf32>
    %cst_85 = arith.constant 0.000000e+00 : f32
    %127 = vector.broadcast %cst_85 : f32 to vector<24x8xf32>
    %128 = arith.minimumf %124, %127 : vector<24x8xf32>
    %129 = math.exp %128 : vector<24x8xf32>
    %cst_86 = arith.constant 1.000000e+00 : f32
    %130 = vector.broadcast %cst_86 : f32 to vector<24x8xf32>
    %131 = arith.subf %129, %130 : vector<24x8xf32>
    %132 = arith.select %126, %124, %131 : vector<24x8xi1>, vector<24x8xf32>
    %133 = arith.truncf %132 : vector<24x8xf32> to vector<24x8xbf16>
    %c0_87 = arith.constant 0 : index
    %c0_88 = arith.constant 0 : index
    %134 = vector.load %arg52[%c0_87, %c0_88] : memref<8x16xbf16, #tpu.memory_space<vmem>>, vector<8x16xbf16>
    %cst_89 = arith.constant dense<0.000000e+00> : vector<24x16xf32>
    %135 = tpu.matmul %133, %134, %cst_89 {dimension_numbers = #tpu.dot_dimension_numbers<[1], [0], [0], [1], [0, 0, 1, 1], [], []>} : vector<24x8xbf16>, vector<8x16xbf16>, vector<24x16xf32> -> vector<24x16xf32>
    %136 = arith.addf %118, %135 : vector<24x16xf32>
    %c0_90 = arith.constant 0 : index
    %c0_91 = arith.constant 0 : index
    %137 = vector.load %arg37[%c0_90, %c0_91] : memref<1x8xf32, #tpu.memory_space<vmem>>, vector<1x8xf32>
    %138 = vector.broadcast %137 : vector<1x8xf32> to vector<24x8xf32>
    %139 = arith.mulf %38, %138 : vector<24x8xf32>
    %c0_92 = arith.constant 0 : index
    %c0_93 = arith.constant 0 : index
    %140 = vector.load %arg45[%c0_92, %c0_93] : memref<1x8xf32, #tpu.memory_space<vmem>>, vector<1x8xf32>
    %141 = vector.broadcast %140 : vector<1x8xf32> to vector<24x8xf32>
    %142 = arith.addf %139, %141 : vector<24x8xf32>
    %cst_94 = arith.constant 0.000000e+00 : f32
    %143 = vector.broadcast %cst_94 : f32 to vector<24x8xf32>
    %144 = arith.cmpf ogt, %142, %143 : vector<24x8xf32>
    %cst_95 = arith.constant 0.000000e+00 : f32
    %145 = vector.broadcast %cst_95 : f32 to vector<24x8xf32>
    %146 = arith.minimumf %142, %145 : vector<24x8xf32>
    %147 = math.exp %146 : vector<24x8xf32>
    %cst_96 = arith.constant 1.000000e+00 : f32
    %148 = vector.broadcast %cst_96 : f32 to vector<24x8xf32>
    %149 = arith.subf %147, %148 : vector<24x8xf32>
    %150 = arith.select %144, %142, %149 : vector<24x8xi1>, vector<24x8xf32>
    %151 = arith.truncf %150 : vector<24x8xf32> to vector<24x8xbf16>
    %c0_97 = arith.constant 0 : index
    %c0_98 = arith.constant 0 : index
    %152 = vector.load %arg53[%c0_97, %c0_98] : memref<8x16xbf16, #tpu.memory_space<vmem>>, vector<8x16xbf16>
    %cst_99 = arith.constant dense<0.000000e+00> : vector<24x16xf32>
    %153 = tpu.matmul %151, %152, %cst_99 {dimension_numbers = #tpu.dot_dimension_numbers<[1], [0], [0], [1], [0, 0, 1, 1], [], []>} : vector<24x8xbf16>, vector<8x16xbf16>, vector<24x16xf32> -> vector<24x16xf32>
    %154 = arith.addf %136, %153 : vector<24x16xf32>
    %c0_100 = arith.constant 0 : index
    %c0_101 = arith.constant 0 : index
    %155 = vector.load %arg38[%c0_100, %c0_101] : memref<1x8xf32, #tpu.memory_space<vmem>>, vector<1x8xf32>
    %156 = vector.broadcast %155 : vector<1x8xf32> to vector<24x8xf32>
    %157 = arith.mulf %41, %156 : vector<24x8xf32>
    %c0_102 = arith.constant 0 : index
    %c0_103 = arith.constant 0 : index
    %158 = vector.load %arg46[%c0_102, %c0_103] : memref<1x8xf32, #tpu.memory_space<vmem>>, vector<1x8xf32>
    %159 = vector.broadcast %158 : vector<1x8xf32> to vector<24x8xf32>
    %160 = arith.addf %157, %159 : vector<24x8xf32>
    %cst_104 = arith.constant 0.000000e+00 : f32
    %161 = vector.broadcast %cst_104 : f32 to vector<24x8xf32>
    %162 = arith.cmpf ogt, %160, %161 : vector<24x8xf32>
    %cst_105 = arith.constant 0.000000e+00 : f32
    %163 = vector.broadcast %cst_105 : f32 to vector<24x8xf32>
    %164 = arith.minimumf %160, %163 : vector<24x8xf32>
    %165 = math.exp %164 : vector<24x8xf32>
    %cst_106 = arith.constant 1.000000e+00 : f32
    %166 = vector.broadcast %cst_106 : f32 to vector<24x8xf32>
    %167 = arith.subf %165, %166 : vector<24x8xf32>
    %168 = arith.select %162, %160, %167 : vector<24x8xi1>, vector<24x8xf32>
    %169 = arith.truncf %168 : vector<24x8xf32> to vector<24x8xbf16>
    %c0_107 = arith.constant 0 : index
    %c0_108 = arith.constant 0 : index
    %170 = vector.load %arg54[%c0_107, %c0_108] : memref<8x16xbf16, #tpu.memory_space<vmem>>, vector<8x16xbf16>
    %cst_109 = arith.constant dense<0.000000e+00> : vector<24x16xf32>
    %171 = tpu.matmul %169, %170, %cst_109 {dimension_numbers = #tpu.dot_dimension_numbers<[1], [0], [0], [1], [0, 0, 1, 1], [], []>} : vector<24x8xbf16>, vector<8x16xbf16>, vector<24x16xf32> -> vector<24x16xf32>
    %172 = arith.addf %154, %171 : vector<24x16xf32>
    %c0_110 = arith.constant 0 : index
    %c0_111 = arith.constant 0 : index
    %173 = vector.load %arg39[%c0_110, %c0_111] : memref<1x8xf32, #tpu.memory_space<vmem>>, vector<1x8xf32>
    %174 = vector.broadcast %173 : vector<1x8xf32> to vector<24x8xf32>
    %175 = arith.mulf %44, %174 : vector<24x8xf32>
    %c0_112 = arith.constant 0 : index
    %c0_113 = arith.constant 0 : index
    %176 = vector.load %arg47[%c0_112, %c0_113] : memref<1x8xf32, #tpu.memory_space<vmem>>, vector<1x8xf32>
    %177 = vector.broadcast %176 : vector<1x8xf32> to vector<24x8xf32>
    %178 = arith.addf %175, %177 : vector<24x8xf32>
    %cst_114 = arith.constant 0.000000e+00 : f32
    %179 = vector.broadcast %cst_114 : f32 to vector<24x8xf32>
    %180 = arith.cmpf ogt, %178, %179 : vector<24x8xf32>
    %cst_115 = arith.constant 0.000000e+00 : f32
    %181 = vector.broadcast %cst_115 : f32 to vector<24x8xf32>
    %182 = arith.minimumf %178, %181 : vector<24x8xf32>
    %183 = math.exp %182 : vector<24x8xf32>
    %cst_116 = arith.constant 1.000000e+00 : f32
    %184 = vector.broadcast %cst_116 : f32 to vector<24x8xf32>
    %185 = arith.subf %183, %184 : vector<24x8xf32>
    %186 = arith.select %180, %178, %185 : vector<24x8xi1>, vector<24x8xf32>
    %187 = arith.truncf %186 : vector<24x8xf32> to vector<24x8xbf16>
    %c0_117 = arith.constant 0 : index
    %c0_118 = arith.constant 0 : index
    %188 = vector.load %arg55[%c0_117, %c0_118] : memref<8x16xbf16, #tpu.memory_space<vmem>>, vector<8x16xbf16>
    %cst_119 = arith.constant dense<0.000000e+00> : vector<24x16xf32>
    %189 = tpu.matmul %187, %188, %cst_119 {dimension_numbers = #tpu.dot_dimension_numbers<[1], [0], [0], [1], [0, 0, 1, 1], [], []>} : vector<24x8xbf16>, vector<8x16xbf16>, vector<24x16xf32> -> vector<24x16xf32>
    %190 = arith.addf %172, %189 : vector<24x16xf32>
    %c0_120 = arith.constant 0 : index
    %c0_121 = arith.constant 0 : index
    %191 = vector.load %arg56[%c0_120, %c0_121] : memref<1x16xf32, #tpu.memory_space<vmem>>, vector<1x16xf32>
    %c0_122 = arith.constant 0 : index
    %c0_123 = arith.constant 0 : index
    %192 = vector.load %arg57[%c0_122, %c0_123] : memref<1x16xf32, #tpu.memory_space<vmem>>, vector<1x16xf32>
    %193 = vector.broadcast %192 : vector<1x16xf32> to vector<24x16xf32>
    %194 = arith.mulf %190, %193 : vector<24x16xf32>
    %c0_124 = arith.constant 0 : index
    %c0_125 = arith.constant 0 : index
    %195 = vector.load %arg58[%c0_124, %c0_125] : memref<1x16xf32, #tpu.memory_space<vmem>>, vector<1x16xf32>
    %196 = vector.broadcast %195 : vector<1x16xf32> to vector<24x16xf32>
    %197 = arith.addf %194, %196 : vector<24x16xf32>
    %cst_126 = arith.constant 0.000000e+00 : f32
    %198 = vector.broadcast %cst_126 : f32 to vector<24x16xf32>
    %199 = arith.cmpf ogt, %197, %198 : vector<24x16xf32>
    %cst_127 = arith.constant 0.000000e+00 : f32
    %200 = vector.broadcast %cst_127 : f32 to vector<24x16xf32>
    %201 = arith.minimumf %197, %200 : vector<24x16xf32>
    %202 = math.exp %201 : vector<24x16xf32>
    %cst_128 = arith.constant 1.000000e+00 : f32
    %203 = vector.broadcast %cst_128 : f32 to vector<24x16xf32>
    %204 = arith.subf %202, %203 : vector<24x16xf32>
    %205 = arith.select %199, %197, %204 : vector<24x16xi1>, vector<24x16xf32>
    %206 = arith.truncf %205 : vector<24x16xf32> to vector<24x16xbf16>
    %c0_129 = arith.constant 0 : index
    %c0_130 = arith.constant 0 : index
    %207 = vector.load %arg59[%c0_129, %c0_130] : memref<16x16xbf16, #tpu.memory_space<vmem>>, vector<16x16xbf16>
    %cst_131 = arith.constant dense<0.000000e+00> : vector<24x16xf32>
    %208 = tpu.matmul %206, %207, %cst_131 {dimension_numbers = #tpu.dot_dimension_numbers<[1], [0], [0], [1], [0, 0, 1, 1], [], []>} : vector<24x16xbf16>, vector<16x16xbf16>, vector<24x16xf32> -> vector<24x16xf32>
    %209 = vector.broadcast %191 : vector<1x16xf32> to vector<24x16xf32>
    %210 = arith.addf %209, %208 : vector<24x16xf32>
    %c0_132 = arith.constant 0 : index
    %c0_133 = arith.constant 0 : index
    %211 = vector.load %arg60[%c0_132, %c0_133] : memref<1x8xf32, #tpu.memory_space<vmem>>, vector<1x8xf32>
    %c0_134 = arith.constant 0 : index
    %c0_135 = arith.constant 0 : index
    %212 = vector.load %arg61[%c0_134, %c0_135] : memref<1x16xf32, #tpu.memory_space<vmem>>, vector<1x16xf32>
    %213 = vector.broadcast %212 : vector<1x16xf32> to vector<24x16xf32>
    %214 = arith.mulf %210, %213 : vector<24x16xf32>
    %c0_136 = arith.constant 0 : index
    %c0_137 = arith.constant 0 : index
    %215 = vector.load %arg62[%c0_136, %c0_137] : memref<1x16xf32, #tpu.memory_space<vmem>>, vector<1x16xf32>
    %216 = vector.broadcast %215 : vector<1x16xf32> to vector<24x16xf32>
    %217 = arith.addf %214, %216 : vector<24x16xf32>
    %cst_138 = arith.constant 0.000000e+00 : f32
    %218 = vector.broadcast %cst_138 : f32 to vector<24x16xf32>
    %219 = arith.cmpf ogt, %217, %218 : vector<24x16xf32>
    %cst_139 = arith.constant 0.000000e+00 : f32
    %220 = vector.broadcast %cst_139 : f32 to vector<24x16xf32>
    %221 = arith.minimumf %217, %220 : vector<24x16xf32>
    %222 = math.exp %221 : vector<24x16xf32>
    %cst_140 = arith.constant 1.000000e+00 : f32
    %223 = vector.broadcast %cst_140 : f32 to vector<24x16xf32>
    %224 = arith.subf %222, %223 : vector<24x16xf32>
    %225 = arith.select %219, %217, %224 : vector<24x16xi1>, vector<24x16xf32>
    %226 = arith.truncf %225 : vector<24x16xf32> to vector<24x16xbf16>
    %c0_141 = arith.constant 0 : index
    %c0_142 = arith.constant 0 : index
    %227 = vector.load %arg63[%c0_141, %c0_142] : memref<16x8xbf16, #tpu.memory_space<vmem>>, vector<16x8xbf16>
    %cst_143 = arith.constant dense<0.000000e+00> : vector<24x8xf32>
    %228 = tpu.matmul %226, %227, %cst_143 {dimension_numbers = #tpu.dot_dimension_numbers<[1], [0], [0], [1], [0, 0, 1, 1], [], []>} : vector<24x16xbf16>, vector<16x8xbf16>, vector<24x8xf32> -> vector<24x8xf32>
    %229 = vector.broadcast %211 : vector<1x8xf32> to vector<24x8xf32>
    %230 = arith.addf %229, %228 : vector<24x8xf32>
    %c0_144 = arith.constant 0 : index
    %c0_145 = arith.constant 0 : index
    %231 = vector.load %arg64[%c0_144, %c0_145] : memref<1x8xf32, #tpu.memory_space<vmem>>, vector<1x8xf32>
    %c0_146 = arith.constant 0 : index
    %c0_147 = arith.constant 0 : index
    %232 = vector.load %arg65[%c0_146, %c0_147] : memref<1x16xf32, #tpu.memory_space<vmem>>, vector<1x16xf32>
    %233 = vector.broadcast %232 : vector<1x16xf32> to vector<24x16xf32>
    %234 = arith.mulf %2, %233 : vector<24x16xf32>
    %c0_148 = arith.constant 0 : index
    %c0_149 = arith.constant 0 : index
    %235 = vector.load %arg67[%c0_148, %c0_149] : memref<1x16xf32, #tpu.memory_space<vmem>>, vector<1x16xf32>
    %236 = vector.broadcast %235 : vector<1x16xf32> to vector<24x16xf32>
    %237 = arith.addf %234, %236 : vector<24x16xf32>
    %cst_150 = arith.constant 0.000000e+00 : f32
    %238 = vector.broadcast %cst_150 : f32 to vector<24x16xf32>
    %239 = arith.cmpf ogt, %237, %238 : vector<24x16xf32>
    %cst_151 = arith.constant 0.000000e+00 : f32
    %240 = vector.broadcast %cst_151 : f32 to vector<24x16xf32>
    %241 = arith.minimumf %237, %240 : vector<24x16xf32>
    %242 = math.exp %241 : vector<24x16xf32>
    %cst_152 = arith.constant 1.000000e+00 : f32
    %243 = vector.broadcast %cst_152 : f32 to vector<24x16xf32>
    %244 = arith.subf %242, %243 : vector<24x16xf32>
    %245 = arith.select %239, %237, %244 : vector<24x16xi1>, vector<24x16xf32>
    %246 = arith.truncf %245 : vector<24x16xf32> to vector<24x16xbf16>
    %c0_153 = arith.constant 0 : index
    %c0_154 = arith.constant 0 : index
    %247 = vector.load %arg69[%c0_153, %c0_154] : memref<16x8xbf16, #tpu.memory_space<vmem>>, vector<16x8xbf16>
    %cst_155 = arith.constant dense<0.000000e+00> : vector<24x8xf32>
    %248 = tpu.matmul %246, %247, %cst_155 {dimension_numbers = #tpu.dot_dimension_numbers<[1], [0], [0], [1], [0, 0, 1, 1], [], []>} : vector<24x16xbf16>, vector<16x8xbf16>, vector<24x8xf32> -> vector<24x8xf32>
    %249 = vector.broadcast %231 : vector<1x8xf32> to vector<24x8xf32>
    %250 = arith.addf %249, %248 : vector<24x8xf32>
    %c0_156 = arith.constant 0 : index
    %c0_157 = arith.constant 0 : index
    %251 = vector.load %arg66[%c0_156, %c0_157] : memref<1x8xf32, #tpu.memory_space<vmem>>, vector<1x8xf32>
    %252 = vector.broadcast %251 : vector<1x8xf32> to vector<24x8xf32>
    %253 = arith.mulf %230, %252 : vector<24x8xf32>
    %c0_158 = arith.constant 0 : index
    %c0_159 = arith.constant 0 : index
    %254 = vector.load %arg68[%c0_158, %c0_159] : memref<1x8xf32, #tpu.memory_space<vmem>>, vector<1x8xf32>
    %255 = vector.broadcast %254 : vector<1x8xf32> to vector<24x8xf32>
    %256 = arith.addf %253, %255 : vector<24x8xf32>
    %cst_160 = arith.constant 0.000000e+00 : f32
    %257 = vector.broadcast %cst_160 : f32 to vector<24x8xf32>
    %258 = arith.cmpf ogt, %256, %257 : vector<24x8xf32>
    %cst_161 = arith.constant 0.000000e+00 : f32
    %259 = vector.broadcast %cst_161 : f32 to vector<24x8xf32>
    %260 = arith.minimumf %256, %259 : vector<24x8xf32>
    %261 = math.exp %260 : vector<24x8xf32>
    %cst_162 = arith.constant 1.000000e+00 : f32
    %262 = vector.broadcast %cst_162 : f32 to vector<24x8xf32>
    %263 = arith.subf %261, %262 : vector<24x8xf32>
    %264 = arith.select %258, %256, %263 : vector<24x8xi1>, vector<24x8xf32>
    %265 = arith.truncf %264 : vector<24x8xf32> to vector<24x8xbf16>
    %c0_163 = arith.constant 0 : index
    %c0_164 = arith.constant 0 : index
    %266 = vector.load %arg70[%c0_163, %c0_164] : memref<8x8xbf16, #tpu.memory_space<vmem>>, vector<8x8xbf16>
    %cst_165 = arith.constant dense<0.000000e+00> : vector<24x8xf32>
    %267 = tpu.matmul %265, %266, %cst_165 {dimension_numbers = #tpu.dot_dimension_numbers<[1], [0], [0], [1], [0, 0, 1, 1], [], []>} : vector<24x8xbf16>, vector<8x8xbf16>, vector<24x8xf32> -> vector<24x8xf32>
    %268 = arith.addf %250, %267 : vector<24x8xf32>
    %269 = arith.truncf %268 : vector<24x8xf32> to vector<24x8xbf16>
    %c0_166 = arith.constant 0 : index
    %c0_167 = arith.constant 0 : index
    %c0_168 = arith.constant 0 : index
    %270 = vector.load %arg1[%c0_166, %c0_167, %c0_168] : memref<7x24x24xbf16, #tpu.memory_space<vmem>>, vector<1x24x24xbf16>
    %271 = vector.shape_cast %270 : vector<1x24x24xbf16> to vector<24x24xbf16>
    %cst_169 = arith.constant dense<0.000000e+00> : vector<24x8xf32>
    %272 = tpu.matmul %271, %269, %cst_169 {dimension_numbers = #tpu.dot_dimension_numbers<[1], [0], [0], [1], [0, 0, 1, 1], [], []>} : vector<24x24xbf16>, vector<24x8xbf16>, vector<24x8xf32> -> vector<24x8xf32>
    %c1_170 = arith.constant 1 : index
    %c0_171 = arith.constant 0 : index
    %c0_172 = arith.constant 0 : index
    %273 = vector.load %arg1[%c1_170, %c0_171, %c0_172] : memref<7x24x24xbf16, #tpu.memory_space<vmem>>, vector<1x24x24xbf16>
    %274 = vector.shape_cast %273 : vector<1x24x24xbf16> to vector<24x24xbf16>
    %cst_173 = arith.constant dense<0.000000e+00> : vector<24x8xf32>
    %275 = tpu.matmul %274, %269, %cst_173 {dimension_numbers = #tpu.dot_dimension_numbers<[1], [0], [0], [1], [0, 0, 1, 1], [], []>} : vector<24x24xbf16>, vector<24x8xbf16>, vector<24x8xf32> -> vector<24x8xf32>
    %c2_174 = arith.constant 2 : index
    %c0_175 = arith.constant 0 : index
    %c0_176 = arith.constant 0 : index
    %276 = vector.load %arg1[%c2_174, %c0_175, %c0_176] : memref<7x24x24xbf16, #tpu.memory_space<vmem>>, vector<1x24x24xbf16>
    %277 = vector.shape_cast %276 : vector<1x24x24xbf16> to vector<24x24xbf16>
    %cst_177 = arith.constant dense<0.000000e+00> : vector<24x8xf32>
    %278 = tpu.matmul %277, %269, %cst_177 {dimension_numbers = #tpu.dot_dimension_numbers<[1], [0], [0], [1], [0, 0, 1, 1], [], []>} : vector<24x24xbf16>, vector<24x8xbf16>, vector<24x8xf32> -> vector<24x8xf32>
    %c3_178 = arith.constant 3 : index
    %c0_179 = arith.constant 0 : index
    %c0_180 = arith.constant 0 : index
    %279 = vector.load %arg1[%c3_178, %c0_179, %c0_180] : memref<7x24x24xbf16, #tpu.memory_space<vmem>>, vector<1x24x24xbf16>
    %280 = vector.shape_cast %279 : vector<1x24x24xbf16> to vector<24x24xbf16>
    %cst_181 = arith.constant dense<0.000000e+00> : vector<24x8xf32>
    %281 = tpu.matmul %280, %269, %cst_181 {dimension_numbers = #tpu.dot_dimension_numbers<[1], [0], [0], [1], [0, 0, 1, 1], [], []>} : vector<24x24xbf16>, vector<24x8xbf16>, vector<24x8xf32> -> vector<24x8xf32>
    %c4_182 = arith.constant 4 : index
    %c0_183 = arith.constant 0 : index
    %c0_184 = arith.constant 0 : index
    %282 = vector.load %arg1[%c4_182, %c0_183, %c0_184] : memref<7x24x24xbf16, #tpu.memory_space<vmem>>, vector<1x24x24xbf16>
    %283 = vector.shape_cast %282 : vector<1x24x24xbf16> to vector<24x24xbf16>
    %cst_185 = arith.constant dense<0.000000e+00> : vector<24x8xf32>
    %284 = tpu.matmul %283, %269, %cst_185 {dimension_numbers = #tpu.dot_dimension_numbers<[1], [0], [0], [1], [0, 0, 1, 1], [], []>} : vector<24x24xbf16>, vector<24x8xbf16>, vector<24x8xf32> -> vector<24x8xf32>
    %c5_186 = arith.constant 5 : index
    %c0_187 = arith.constant 0 : index
    %c0_188 = arith.constant 0 : index
    %285 = vector.load %arg1[%c5_186, %c0_187, %c0_188] : memref<7x24x24xbf16, #tpu.memory_space<vmem>>, vector<1x24x24xbf16>
    %286 = vector.shape_cast %285 : vector<1x24x24xbf16> to vector<24x24xbf16>
    %cst_189 = arith.constant dense<0.000000e+00> : vector<24x8xf32>
    %287 = tpu.matmul %286, %269, %cst_189 {dimension_numbers = #tpu.dot_dimension_numbers<[1], [0], [0], [1], [0, 0, 1, 1], [], []>} : vector<24x24xbf16>, vector<24x8xbf16>, vector<24x8xf32> -> vector<24x8xf32>
    %c6_190 = arith.constant 6 : index
    %c0_191 = arith.constant 0 : index
    %c0_192 = arith.constant 0 : index
    %288 = vector.load %arg1[%c6_190, %c0_191, %c0_192] : memref<7x24x24xbf16, #tpu.memory_space<vmem>>, vector<1x24x24xbf16>
    %289 = vector.shape_cast %288 : vector<1x24x24xbf16> to vector<24x24xbf16>
    %cst_193 = arith.constant dense<0.000000e+00> : vector<24x8xf32>
    %290 = tpu.matmul %289, %269, %cst_193 {dimension_numbers = #tpu.dot_dimension_numbers<[1], [0], [0], [1], [0, 0, 1, 1], [], []>} : vector<24x24xbf16>, vector<24x8xbf16>, vector<24x8xf32> -> vector<24x8xf32>
    %c0_194 = arith.constant 0 : index
    %c0_195 = arith.constant 0 : index
    %291 = vector.load %arg71[%c0_194, %c0_195] : memref<1x16xf32, #tpu.memory_space<vmem>>, vector<1x16xf32>
    %c0_196 = arith.constant 0 : index
    %c0_197 = arith.constant 0 : index
    %292 = vector.load %arg72[%c0_196, %c0_197] : memref<1x8xf32, #tpu.memory_space<vmem>>, vector<1x8xf32>
    %293 = vector.broadcast %292 : vector<1x8xf32> to vector<24x8xf32>
    %294 = arith.mulf %268, %293 : vector<24x8xf32>
    %c0_198 = arith.constant 0 : index
    %c0_199 = arith.constant 0 : index
    %295 = vector.load %arg80[%c0_198, %c0_199] : memref<1x8xf32, #tpu.memory_space<vmem>>, vector<1x8xf32>
    %296 = vector.broadcast %295 : vector<1x8xf32> to vector<24x8xf32>
    %297 = arith.addf %294, %296 : vector<24x8xf32>
    %cst_200 = arith.constant 0.000000e+00 : f32
    %298 = vector.broadcast %cst_200 : f32 to vector<24x8xf32>
    %299 = arith.cmpf ogt, %297, %298 : vector<24x8xf32>
    %cst_201 = arith.constant 0.000000e+00 : f32
    %300 = vector.broadcast %cst_201 : f32 to vector<24x8xf32>
    %301 = arith.minimumf %297, %300 : vector<24x8xf32>
    %302 = math.exp %301 : vector<24x8xf32>
    %cst_202 = arith.constant 1.000000e+00 : f32
    %303 = vector.broadcast %cst_202 : f32 to vector<24x8xf32>
    %304 = arith.subf %302, %303 : vector<24x8xf32>
    %305 = arith.select %299, %297, %304 : vector<24x8xi1>, vector<24x8xf32>
    %306 = arith.truncf %305 : vector<24x8xf32> to vector<24x8xbf16>
    %c0_203 = arith.constant 0 : index
    %c0_204 = arith.constant 0 : index
    %307 = vector.load %arg88[%c0_203, %c0_204] : memref<8x16xbf16, #tpu.memory_space<vmem>>, vector<8x16xbf16>
    %cst_205 = arith.constant dense<0.000000e+00> : vector<24x16xf32>
    %308 = tpu.matmul %306, %307, %cst_205 {dimension_numbers = #tpu.dot_dimension_numbers<[1], [0], [0], [1], [0, 0, 1, 1], [], []>} : vector<24x8xbf16>, vector<8x16xbf16>, vector<24x16xf32> -> vector<24x16xf32>
    %309 = vector.broadcast %291 : vector<1x16xf32> to vector<24x16xf32>
    %310 = arith.addf %309, %308 : vector<24x16xf32>
    %c0_206 = arith.constant 0 : index
    %c0_207 = arith.constant 0 : index
    %311 = vector.load %arg73[%c0_206, %c0_207] : memref<1x8xf32, #tpu.memory_space<vmem>>, vector<1x8xf32>
    %312 = vector.broadcast %311 : vector<1x8xf32> to vector<24x8xf32>
    %313 = arith.mulf %272, %312 : vector<24x8xf32>
    %c0_208 = arith.constant 0 : index
    %c0_209 = arith.constant 0 : index
    %314 = vector.load %arg81[%c0_208, %c0_209] : memref<1x8xf32, #tpu.memory_space<vmem>>, vector<1x8xf32>
    %315 = vector.broadcast %314 : vector<1x8xf32> to vector<24x8xf32>
    %316 = arith.addf %313, %315 : vector<24x8xf32>
    %cst_210 = arith.constant 0.000000e+00 : f32
    %317 = vector.broadcast %cst_210 : f32 to vector<24x8xf32>
    %318 = arith.cmpf ogt, %316, %317 : vector<24x8xf32>
    %cst_211 = arith.constant 0.000000e+00 : f32
    %319 = vector.broadcast %cst_211 : f32 to vector<24x8xf32>
    %320 = arith.minimumf %316, %319 : vector<24x8xf32>
    %321 = math.exp %320 : vector<24x8xf32>
    %cst_212 = arith.constant 1.000000e+00 : f32
    %322 = vector.broadcast %cst_212 : f32 to vector<24x8xf32>
    %323 = arith.subf %321, %322 : vector<24x8xf32>
    %324 = arith.select %318, %316, %323 : vector<24x8xi1>, vector<24x8xf32>
    %325 = arith.truncf %324 : vector<24x8xf32> to vector<24x8xbf16>
    %c0_213 = arith.constant 0 : index
    %c0_214 = arith.constant 0 : index
    %326 = vector.load %arg89[%c0_213, %c0_214] : memref<8x16xbf16, #tpu.memory_space<vmem>>, vector<8x16xbf16>
    %cst_215 = arith.constant dense<0.000000e+00> : vector<24x16xf32>
    %327 = tpu.matmul %325, %326, %cst_215 {dimension_numbers = #tpu.dot_dimension_numbers<[1], [0], [0], [1], [0, 0, 1, 1], [], []>} : vector<24x8xbf16>, vector<8x16xbf16>, vector<24x16xf32> -> vector<24x16xf32>
    %328 = arith.addf %310, %327 : vector<24x16xf32>
    %c0_216 = arith.constant 0 : index
    %c0_217 = arith.constant 0 : index
    %329 = vector.load %arg74[%c0_216, %c0_217] : memref<1x8xf32, #tpu.memory_space<vmem>>, vector<1x8xf32>
    %330 = vector.broadcast %329 : vector<1x8xf32> to vector<24x8xf32>
    %331 = arith.mulf %275, %330 : vector<24x8xf32>
    %c0_218 = arith.constant 0 : index
    %c0_219 = arith.constant 0 : index
    %332 = vector.load %arg82[%c0_218, %c0_219] : memref<1x8xf32, #tpu.memory_space<vmem>>, vector<1x8xf32>
    %333 = vector.broadcast %332 : vector<1x8xf32> to vector<24x8xf32>
    %334 = arith.addf %331, %333 : vector<24x8xf32>
    %cst_220 = arith.constant 0.000000e+00 : f32
    %335 = vector.broadcast %cst_220 : f32 to vector<24x8xf32>
    %336 = arith.cmpf ogt, %334, %335 : vector<24x8xf32>
    %cst_221 = arith.constant 0.000000e+00 : f32
    %337 = vector.broadcast %cst_221 : f32 to vector<24x8xf32>
    %338 = arith.minimumf %334, %337 : vector<24x8xf32>
    %339 = math.exp %338 : vector<24x8xf32>
    %cst_222 = arith.constant 1.000000e+00 : f32
    %340 = vector.broadcast %cst_222 : f32 to vector<24x8xf32>
    %341 = arith.subf %339, %340 : vector<24x8xf32>
    %342 = arith.select %336, %334, %341 : vector<24x8xi1>, vector<24x8xf32>
    %343 = arith.truncf %342 : vector<24x8xf32> to vector<24x8xbf16>
    %c0_223 = arith.constant 0 : index
    %c0_224 = arith.constant 0 : index
    %344 = vector.load %arg90[%c0_223, %c0_224] : memref<8x16xbf16, #tpu.memory_space<vmem>>, vector<8x16xbf16>
    %cst_225 = arith.constant dense<0.000000e+00> : vector<24x16xf32>
    %345 = tpu.matmul %343, %344, %cst_225 {dimension_numbers = #tpu.dot_dimension_numbers<[1], [0], [0], [1], [0, 0, 1, 1], [], []>} : vector<24x8xbf16>, vector<8x16xbf16>, vector<24x16xf32> -> vector<24x16xf32>
    %346 = arith.addf %328, %345 : vector<24x16xf32>
    %c0_226 = arith.constant 0 : index
    %c0_227 = arith.constant 0 : index
    %347 = vector.load %arg75[%c0_226, %c0_227] : memref<1x8xf32, #tpu.memory_space<vmem>>, vector<1x8xf32>
    %348 = vector.broadcast %347 : vector<1x8xf32> to vector<24x8xf32>
    %349 = arith.mulf %278, %348 : vector<24x8xf32>
    %c0_228 = arith.constant 0 : index
    %c0_229 = arith.constant 0 : index
    %350 = vector.load %arg83[%c0_228, %c0_229] : memref<1x8xf32, #tpu.memory_space<vmem>>, vector<1x8xf32>
    %351 = vector.broadcast %350 : vector<1x8xf32> to vector<24x8xf32>
    %352 = arith.addf %349, %351 : vector<24x8xf32>
    %cst_230 = arith.constant 0.000000e+00 : f32
    %353 = vector.broadcast %cst_230 : f32 to vector<24x8xf32>
    %354 = arith.cmpf ogt, %352, %353 : vector<24x8xf32>
    %cst_231 = arith.constant 0.000000e+00 : f32
    %355 = vector.broadcast %cst_231 : f32 to vector<24x8xf32>
    %356 = arith.minimumf %352, %355 : vector<24x8xf32>
    %357 = math.exp %356 : vector<24x8xf32>
    %cst_232 = arith.constant 1.000000e+00 : f32
    %358 = vector.broadcast %cst_232 : f32 to vector<24x8xf32>
    %359 = arith.subf %357, %358 : vector<24x8xf32>
    %360 = arith.select %354, %352, %359 : vector<24x8xi1>, vector<24x8xf32>
    %361 = arith.truncf %360 : vector<24x8xf32> to vector<24x8xbf16>
    %c0_233 = arith.constant 0 : index
    %c0_234 = arith.constant 0 : index
    %362 = vector.load %arg91[%c0_233, %c0_234] : memref<8x16xbf16, #tpu.memory_space<vmem>>, vector<8x16xbf16>
    %cst_235 = arith.constant dense<0.000000e+00> : vector<24x16xf32>
    %363 = tpu.matmul %361, %362, %cst_235 {dimension_numbers = #tpu.dot_dimension_numbers<[1], [0], [0], [1], [0, 0, 1, 1], [], []>} : vector<24x8xbf16>, vector<8x16xbf16>, vector<24x16xf32> -> vector<24x16xf32>
    %364 = arith.addf %346, %363 : vector<24x16xf32>
    %c0_236 = arith.constant 0 : index
    %c0_237 = arith.constant 0 : index
    %365 = vector.load %arg76[%c0_236, %c0_237] : memref<1x8xf32, #tpu.memory_space<vmem>>, vector<1x8xf32>
    %366 = vector.broadcast %365 : vector<1x8xf32> to vector<24x8xf32>
    %367 = arith.mulf %281, %366 : vector<24x8xf32>
    %c0_238 = arith.constant 0 : index
    %c0_239 = arith.constant 0 : index
    %368 = vector.load %arg84[%c0_238, %c0_239] : memref<1x8xf32, #tpu.memory_space<vmem>>, vector<1x8xf32>
    %369 = vector.broadcast %368 : vector<1x8xf32> to vector<24x8xf32>
    %370 = arith.addf %367, %369 : vector<24x8xf32>
    %cst_240 = arith.constant 0.000000e+00 : f32
    %371 = vector.broadcast %cst_240 : f32 to vector<24x8xf32>
    %372 = arith.cmpf ogt, %370, %371 : vector<24x8xf32>
    %cst_241 = arith.constant 0.000000e+00 : f32
    %373 = vector.broadcast %cst_241 : f32 to vector<24x8xf32>
    %374 = arith.minimumf %370, %373 : vector<24x8xf32>
    %375 = math.exp %374 : vector<24x8xf32>
    %cst_242 = arith.constant 1.000000e+00 : f32
    %376 = vector.broadcast %cst_242 : f32 to vector<24x8xf32>
    %377 = arith.subf %375, %376 : vector<24x8xf32>
    %378 = arith.select %372, %370, %377 : vector<24x8xi1>, vector<24x8xf32>
    %379 = arith.truncf %378 : vector<24x8xf32> to vector<24x8xbf16>
    %c0_243 = arith.constant 0 : index
    %c0_244 = arith.constant 0 : index
    %380 = vector.load %arg92[%c0_243, %c0_244] : memref<8x16xbf16, #tpu.memory_space<vmem>>, vector<8x16xbf16>
    %cst_245 = arith.constant dense<0.000000e+00> : vector<24x16xf32>
    %381 = tpu.matmul %379, %380, %cst_245 {dimension_numbers = #tpu.dot_dimension_numbers<[1], [0], [0], [1], [0, 0, 1, 1], [], []>} : vector<24x8xbf16>, vector<8x16xbf16>, vector<24x16xf32> -> vector<24x16xf32>
    %382 = arith.addf %364, %381 : vector<24x16xf32>
    %c0_246 = arith.constant 0 : index
    %c0_247 = arith.constant 0 : index
    %383 = vector.load %arg77[%c0_246, %c0_247] : memref<1x8xf32, #tpu.memory_space<vmem>>, vector<1x8xf32>
    %384 = vector.broadcast %383 : vector<1x8xf32> to vector<24x8xf32>
    %385 = arith.mulf %284, %384 : vector<24x8xf32>
    %c0_248 = arith.constant 0 : index
    %c0_249 = arith.constant 0 : index
    %386 = vector.load %arg85[%c0_248, %c0_249] : memref<1x8xf32, #tpu.memory_space<vmem>>, vector<1x8xf32>
    %387 = vector.broadcast %386 : vector<1x8xf32> to vector<24x8xf32>
    %388 = arith.addf %385, %387 : vector<24x8xf32>
    %cst_250 = arith.constant 0.000000e+00 : f32
    %389 = vector.broadcast %cst_250 : f32 to vector<24x8xf32>
    %390 = arith.cmpf ogt, %388, %389 : vector<24x8xf32>
    %cst_251 = arith.constant 0.000000e+00 : f32
    %391 = vector.broadcast %cst_251 : f32 to vector<24x8xf32>
    %392 = arith.minimumf %388, %391 : vector<24x8xf32>
    %393 = math.exp %392 : vector<24x8xf32>
    %cst_252 = arith.constant 1.000000e+00 : f32
    %394 = vector.broadcast %cst_252 : f32 to vector<24x8xf32>
    %395 = arith.subf %393, %394 : vector<24x8xf32>
    %396 = arith.select %390, %388, %395 : vector<24x8xi1>, vector<24x8xf32>
    %397 = arith.truncf %396 : vector<24x8xf32> to vector<24x8xbf16>
    %c0_253 = arith.constant 0 : index
    %c0_254 = arith.constant 0 : index
    %398 = vector.load %arg93[%c0_253, %c0_254] : memref<8x16xbf16, #tpu.memory_space<vmem>>, vector<8x16xbf16>
    %cst_255 = arith.constant dense<0.000000e+00> : vector<24x16xf32>
    %399 = tpu.matmul %397, %398, %cst_255 {dimension_numbers = #tpu.dot_dimension_numbers<[1], [0], [0], [1], [0, 0, 1, 1], [], []>} : vector<24x8xbf16>, vector<8x16xbf16>, vector<24x16xf32> -> vector<24x16xf32>
    %400 = arith.addf %382, %399 : vector<24x16xf32>
    %c0_256 = arith.constant 0 : index
    %c0_257 = arith.constant 0 : index
    %401 = vector.load %arg78[%c0_256, %c0_257] : memref<1x8xf32, #tpu.memory_space<vmem>>, vector<1x8xf32>
    %402 = vector.broadcast %401 : vector<1x8xf32> to vector<24x8xf32>
    %403 = arith.mulf %287, %402 : vector<24x8xf32>
    %c0_258 = arith.constant 0 : index
    %c0_259 = arith.constant 0 : index
    %404 = vector.load %arg86[%c0_258, %c0_259] : memref<1x8xf32, #tpu.memory_space<vmem>>, vector<1x8xf32>
    %405 = vector.broadcast %404 : vector<1x8xf32> to vector<24x8xf32>
    %406 = arith.addf %403, %405 : vector<24x8xf32>
    %cst_260 = arith.constant 0.000000e+00 : f32
    %407 = vector.broadcast %cst_260 : f32 to vector<24x8xf32>
    %408 = arith.cmpf ogt, %406, %407 : vector<24x8xf32>
    %cst_261 = arith.constant 0.000000e+00 : f32
    %409 = vector.broadcast %cst_261 : f32 to vector<24x8xf32>
    %410 = arith.minimumf %406, %409 : vector<24x8xf32>
    %411 = math.exp %410 : vector<24x8xf32>
    %cst_262 = arith.constant 1.000000e+00 : f32
    %412 = vector.broadcast %cst_262 : f32 to vector<24x8xf32>
    %413 = arith.subf %411, %412 : vector<24x8xf32>
    %414 = arith.select %408, %406, %413 : vector<24x8xi1>, vector<24x8xf32>
    %415 = arith.truncf %414 : vector<24x8xf32> to vector<24x8xbf16>
    %c0_263 = arith.constant 0 : index
    %c0_264 = arith.constant 0 : index
    %416 = vector.load %arg94[%c0_263, %c0_264] : memref<8x16xbf16, #tpu.memory_space<vmem>>, vector<8x16xbf16>
    %cst_265 = arith.constant dense<0.000000e+00> : vector<24x16xf32>
    %417 = tpu.matmul %415, %416, %cst_265 {dimension_numbers = #tpu.dot_dimension_numbers<[1], [0], [0], [1], [0, 0, 1, 1], [], []>} : vector<24x8xbf16>, vector<8x16xbf16>, vector<24x16xf32> -> vector<24x16xf32>
    %418 = arith.addf %400, %417 : vector<24x16xf32>
    %c0_266 = arith.constant 0 : index
    %c0_267 = arith.constant 0 : index
    %419 = vector.load %arg79[%c0_266, %c0_267] : memref<1x8xf32, #tpu.memory_space<vmem>>, vector<1x8xf32>
    %420 = vector.broadcast %419 : vector<1x8xf32> to vector<24x8xf32>
    %421 = arith.mulf %290, %420 : vector<24x8xf32>
    %c0_268 = arith.constant 0 : index
    %c0_269 = arith.constant 0 : index
    %422 = vector.load %arg87[%c0_268, %c0_269] : memref<1x8xf32, #tpu.memory_space<vmem>>, vector<1x8xf32>
    %423 = vector.broadcast %422 : vector<1x8xf32> to vector<24x8xf32>
    %424 = arith.addf %421, %423 : vector<24x8xf32>
    %cst_270 = arith.constant 0.000000e+00 : f32
    %425 = vector.broadcast %cst_270 : f32 to vector<24x8xf32>
    %426 = arith.cmpf ogt, %424, %425 : vector<24x8xf32>
    %cst_271 = arith.constant 0.000000e+00 : f32
    %427 = vector.broadcast %cst_271 : f32 to vector<24x8xf32>
    %428 = arith.minimumf %424, %427 : vector<24x8xf32>
    %429 = math.exp %428 : vector<24x8xf32>
    %cst_272 = arith.constant 1.000000e+00 : f32
    %430 = vector.broadcast %cst_272 : f32 to vector<24x8xf32>
    %431 = arith.subf %429, %430 : vector<24x8xf32>
    %432 = arith.select %426, %424, %431 : vector<24x8xi1>, vector<24x8xf32>
    %433 = arith.truncf %432 : vector<24x8xf32> to vector<24x8xbf16>
    %c0_273 = arith.constant 0 : index
    %c0_274 = arith.constant 0 : index
    %434 = vector.load %arg95[%c0_273, %c0_274] : memref<8x16xbf16, #tpu.memory_space<vmem>>, vector<8x16xbf16>
    %cst_275 = arith.constant dense<0.000000e+00> : vector<24x16xf32>
    %435 = tpu.matmul %433, %434, %cst_275 {dimension_numbers = #tpu.dot_dimension_numbers<[1], [0], [0], [1], [0, 0, 1, 1], [], []>} : vector<24x8xbf16>, vector<8x16xbf16>, vector<24x16xf32> -> vector<24x16xf32>
    %436 = arith.addf %418, %435 : vector<24x16xf32>
    %c0_276 = arith.constant 0 : index
    %c0_277 = arith.constant 0 : index
    %437 = vector.load %arg96[%c0_276, %c0_277] : memref<1x16xf32, #tpu.memory_space<vmem>>, vector<1x16xf32>
    %c0_278 = arith.constant 0 : index
    %c0_279 = arith.constant 0 : index
    %438 = vector.load %arg97[%c0_278, %c0_279] : memref<1x16xf32, #tpu.memory_space<vmem>>, vector<1x16xf32>
    %439 = vector.broadcast %438 : vector<1x16xf32> to vector<24x16xf32>
    %440 = arith.mulf %436, %439 : vector<24x16xf32>
    %c0_280 = arith.constant 0 : index
    %c0_281 = arith.constant 0 : index
    %441 = vector.load %arg98[%c0_280, %c0_281] : memref<1x16xf32, #tpu.memory_space<vmem>>, vector<1x16xf32>
    %442 = vector.broadcast %441 : vector<1x16xf32> to vector<24x16xf32>
    %443 = arith.addf %440, %442 : vector<24x16xf32>
    %cst_282 = arith.constant 0.000000e+00 : f32
    %444 = vector.broadcast %cst_282 : f32 to vector<24x16xf32>
    %445 = arith.cmpf ogt, %443, %444 : vector<24x16xf32>
    %cst_283 = arith.constant 0.000000e+00 : f32
    %446 = vector.broadcast %cst_283 : f32 to vector<24x16xf32>
    %447 = arith.minimumf %443, %446 : vector<24x16xf32>
    %448 = math.exp %447 : vector<24x16xf32>
    %cst_284 = arith.constant 1.000000e+00 : f32
    %449 = vector.broadcast %cst_284 : f32 to vector<24x16xf32>
    %450 = arith.subf %448, %449 : vector<24x16xf32>
    %451 = arith.select %445, %443, %450 : vector<24x16xi1>, vector<24x16xf32>
    %452 = arith.truncf %451 : vector<24x16xf32> to vector<24x16xbf16>
    %c0_285 = arith.constant 0 : index
    %c0_286 = arith.constant 0 : index
    %453 = vector.load %arg99[%c0_285, %c0_286] : memref<16x16xbf16, #tpu.memory_space<vmem>>, vector<16x16xbf16>
    %cst_287 = arith.constant dense<0.000000e+00> : vector<24x16xf32>
    %454 = tpu.matmul %452, %453, %cst_287 {dimension_numbers = #tpu.dot_dimension_numbers<[1], [0], [0], [1], [0, 0, 1, 1], [], []>} : vector<24x16xbf16>, vector<16x16xbf16>, vector<24x16xf32> -> vector<24x16xf32>
    %455 = vector.broadcast %437 : vector<1x16xf32> to vector<24x16xf32>
    %456 = arith.addf %455, %454 : vector<24x16xf32>
    %c0_288 = arith.constant 0 : index
    %c0_289 = arith.constant 0 : index
    %457 = vector.load %arg100[%c0_288, %c0_289] : memref<1x8xf32, #tpu.memory_space<vmem>>, vector<1x8xf32>
    %c0_290 = arith.constant 0 : index
    %c0_291 = arith.constant 0 : index
    %458 = vector.load %arg101[%c0_290, %c0_291] : memref<1x16xf32, #tpu.memory_space<vmem>>, vector<1x16xf32>
    %459 = vector.broadcast %458 : vector<1x16xf32> to vector<24x16xf32>
    %460 = arith.mulf %456, %459 : vector<24x16xf32>
    %c0_292 = arith.constant 0 : index
    %c0_293 = arith.constant 0 : index
    %461 = vector.load %arg102[%c0_292, %c0_293] : memref<1x16xf32, #tpu.memory_space<vmem>>, vector<1x16xf32>
    %462 = vector.broadcast %461 : vector<1x16xf32> to vector<24x16xf32>
    %463 = arith.addf %460, %462 : vector<24x16xf32>
    %cst_294 = arith.constant 0.000000e+00 : f32
    %464 = vector.broadcast %cst_294 : f32 to vector<24x16xf32>
    %465 = arith.cmpf ogt, %463, %464 : vector<24x16xf32>
    %cst_295 = arith.constant 0.000000e+00 : f32
    %466 = vector.broadcast %cst_295 : f32 to vector<24x16xf32>
    %467 = arith.minimumf %463, %466 : vector<24x16xf32>
    %468 = math.exp %467 : vector<24x16xf32>
    %cst_296 = arith.constant 1.000000e+00 : f32
    %469 = vector.broadcast %cst_296 : f32 to vector<24x16xf32>
    %470 = arith.subf %468, %469 : vector<24x16xf32>
    %471 = arith.select %465, %463, %470 : vector<24x16xi1>, vector<24x16xf32>
    %472 = arith.truncf %471 : vector<24x16xf32> to vector<24x16xbf16>
    %c0_297 = arith.constant 0 : index
    %c0_298 = arith.constant 0 : index
    %473 = vector.load %arg103[%c0_297, %c0_298] : memref<16x8xbf16, #tpu.memory_space<vmem>>, vector<16x8xbf16>
    %cst_299 = arith.constant dense<0.000000e+00> : vector<24x8xf32>
    %474 = tpu.matmul %472, %473, %cst_299 {dimension_numbers = #tpu.dot_dimension_numbers<[1], [0], [0], [1], [0, 0, 1, 1], [], []>} : vector<24x16xbf16>, vector<16x8xbf16>, vector<24x8xf32> -> vector<24x8xf32>
    %475 = vector.broadcast %457 : vector<1x8xf32> to vector<24x8xf32>
    %476 = arith.addf %475, %474 : vector<24x8xf32>
    %c0_300 = arith.constant 0 : index
    %c0_301 = arith.constant 0 : index
    %477 = vector.load %arg17[%c0_300, %c0_301] : memref<1x32xf32, #tpu.memory_space<vmem>>, vector<1x32xf32>
    %c0_302 = arith.constant 0 : index
    %c0_303 = arith.constant 0 : index
    %478 = vector.load %arg18[%c0_302, %c0_303] : memref<1x16xf32, #tpu.memory_space<vmem>>, vector<1x16xf32>
    %479 = vector.broadcast %478 : vector<1x16xf32> to vector<24x16xf32>
    %480 = arith.mulf %2, %479 : vector<24x16xf32>
    %c0_304 = arith.constant 0 : index
    %c0_305 = arith.constant 0 : index
    %481 = vector.load %arg21[%c0_304, %c0_305] : memref<1x16xf32, #tpu.memory_space<vmem>>, vector<1x16xf32>
    %482 = vector.broadcast %481 : vector<1x16xf32> to vector<24x16xf32>
    %483 = arith.addf %480, %482 : vector<24x16xf32>
    %cst_306 = arith.constant 0.000000e+00 : f32
    %484 = vector.broadcast %cst_306 : f32 to vector<24x16xf32>
    %485 = arith.cmpf ogt, %483, %484 : vector<24x16xf32>
    %cst_307 = arith.constant 0.000000e+00 : f32
    %486 = vector.broadcast %cst_307 : f32 to vector<24x16xf32>
    %487 = arith.minimumf %483, %486 : vector<24x16xf32>
    %488 = math.exp %487 : vector<24x16xf32>
    %cst_308 = arith.constant 1.000000e+00 : f32
    %489 = vector.broadcast %cst_308 : f32 to vector<24x16xf32>
    %490 = arith.subf %488, %489 : vector<24x16xf32>
    %491 = arith.select %485, %483, %490 : vector<24x16xi1>, vector<24x16xf32>
    %492 = arith.truncf %491 : vector<24x16xf32> to vector<24x16xbf16>
    %c0_309 = arith.constant 0 : index
    %c0_310 = arith.constant 0 : index
    %493 = vector.load %arg24[%c0_309, %c0_310] : memref<16x32xbf16, #tpu.memory_space<vmem>>, vector<16x32xbf16>
    %cst_311 = arith.constant dense<0.000000e+00> : vector<24x32xf32>
    %494 = tpu.matmul %492, %493, %cst_311 {dimension_numbers = #tpu.dot_dimension_numbers<[1], [0], [0], [1], [0, 0, 1, 1], [], []>} : vector<24x16xbf16>, vector<16x32xbf16>, vector<24x32xf32> -> vector<24x32xf32>
    %495 = vector.broadcast %477 : vector<1x32xf32> to vector<24x32xf32>
    %496 = arith.addf %495, %494 : vector<24x32xf32>
    %c0_312 = arith.constant 0 : index
    %c0_313 = arith.constant 0 : index
    %497 = vector.load %arg19[%c0_312, %c0_313] : memref<1x8xf32, #tpu.memory_space<vmem>>, vector<1x8xf32>
    %498 = vector.broadcast %497 : vector<1x8xf32> to vector<24x8xf32>
    %499 = arith.mulf %230, %498 : vector<24x8xf32>
    %c0_314 = arith.constant 0 : index
    %c0_315 = arith.constant 0 : index
    %500 = vector.load %arg22[%c0_314, %c0_315] : memref<1x8xf32, #tpu.memory_space<vmem>>, vector<1x8xf32>
    %501 = vector.broadcast %500 : vector<1x8xf32> to vector<24x8xf32>
    %502 = arith.addf %499, %501 : vector<24x8xf32>
    %cst_316 = arith.constant 0.000000e+00 : f32
    %503 = vector.broadcast %cst_316 : f32 to vector<24x8xf32>
    %504 = arith.cmpf ogt, %502, %503 : vector<24x8xf32>
    %cst_317 = arith.constant 0.000000e+00 : f32
    %505 = vector.broadcast %cst_317 : f32 to vector<24x8xf32>
    %506 = arith.minimumf %502, %505 : vector<24x8xf32>
    %507 = math.exp %506 : vector<24x8xf32>
    %cst_318 = arith.constant 1.000000e+00 : f32
    %508 = vector.broadcast %cst_318 : f32 to vector<24x8xf32>
    %509 = arith.subf %507, %508 : vector<24x8xf32>
    %510 = arith.select %504, %502, %509 : vector<24x8xi1>, vector<24x8xf32>
    %511 = arith.truncf %510 : vector<24x8xf32> to vector<24x8xbf16>
    %c0_319 = arith.constant 0 : index
    %c0_320 = arith.constant 0 : index
    %512 = vector.load %arg25[%c0_319, %c0_320] : memref<8x32xbf16, #tpu.memory_space<vmem>>, vector<8x32xbf16>
    %cst_321 = arith.constant dense<0.000000e+00> : vector<24x32xf32>
    %513 = tpu.matmul %511, %512, %cst_321 {dimension_numbers = #tpu.dot_dimension_numbers<[1], [0], [0], [1], [0, 0, 1, 1], [], []>} : vector<24x8xbf16>, vector<8x32xbf16>, vector<24x32xf32> -> vector<24x32xf32>
    %514 = arith.addf %496, %513 : vector<24x32xf32>
    %c0_322 = arith.constant 0 : index
    %c0_323 = arith.constant 0 : index
    %515 = vector.load %arg20[%c0_322, %c0_323] : memref<1x8xf32, #tpu.memory_space<vmem>>, vector<1x8xf32>
    %516 = vector.broadcast %515 : vector<1x8xf32> to vector<24x8xf32>
    %517 = arith.mulf %476, %516 : vector<24x8xf32>
    %c0_324 = arith.constant 0 : index
    %c0_325 = arith.constant 0 : index
    %518 = vector.load %arg23[%c0_324, %c0_325] : memref<1x8xf32, #tpu.memory_space<vmem>>, vector<1x8xf32>
    %519 = vector.broadcast %518 : vector<1x8xf32> to vector<24x8xf32>
    %520 = arith.addf %517, %519 : vector<24x8xf32>
    %cst_326 = arith.constant 0.000000e+00 : f32
    %521 = vector.broadcast %cst_326 : f32 to vector<24x8xf32>
    %522 = arith.cmpf ogt, %520, %521 : vector<24x8xf32>
    %cst_327 = arith.constant 0.000000e+00 : f32
    %523 = vector.broadcast %cst_327 : f32 to vector<24x8xf32>
    %524 = arith.minimumf %520, %523 : vector<24x8xf32>
    %525 = math.exp %524 : vector<24x8xf32>
    %cst_328 = arith.constant 1.000000e+00 : f32
    %526 = vector.broadcast %cst_328 : f32 to vector<24x8xf32>
    %527 = arith.subf %525, %526 : vector<24x8xf32>
    %528 = arith.select %522, %520, %527 : vector<24x8xi1>, vector<24x8xf32>
    %529 = arith.truncf %528 : vector<24x8xf32> to vector<24x8xbf16>
    %c0_329 = arith.constant 0 : index
    %c0_330 = arith.constant 0 : index
    %530 = vector.load %arg26[%c0_329, %c0_330] : memref<8x32xbf16, #tpu.memory_space<vmem>>, vector<8x32xbf16>
    %cst_331 = arith.constant dense<0.000000e+00> : vector<24x32xf32>
    %531 = tpu.matmul %529, %530, %cst_331 {dimension_numbers = #tpu.dot_dimension_numbers<[1], [0], [0], [1], [0, 0, 1, 1], [], []>} : vector<24x8xbf16>, vector<8x32xbf16>, vector<24x32xf32> -> vector<24x32xf32>
    %532 = arith.addf %514, %531 : vector<24x32xf32>
    %c0_332 = arith.constant 0 : index
    %c0_333 = arith.constant 0 : index
    %533 = vector.load %arg11[%c0_332, %c0_333] : memref<1x32xf32, #tpu.memory_space<vmem>>, vector<1x32xf32>
    %534 = vector.broadcast %533 : vector<1x32xf32> to vector<24x32xf32>
    %535 = arith.mulf %532, %534 : vector<24x32xf32>
    %c0_334 = arith.constant 0 : index
    %c0_335 = arith.constant 0 : index
    %536 = vector.load %arg12[%c0_334, %c0_335] : memref<1x32xf32, #tpu.memory_space<vmem>>, vector<1x32xf32>
    %537 = vector.broadcast %536 : vector<1x32xf32> to vector<24x32xf32>
    %538 = arith.addf %535, %537 : vector<24x32xf32>
    %cst_336 = arith.constant 0.000000e+00 : f32
    %539 = vector.broadcast %cst_336 : f32 to vector<24x32xf32>
    %540 = arith.cmpf ogt, %538, %539 : vector<24x32xf32>
    %cst_337 = arith.constant 0.000000e+00 : f32
    %541 = vector.broadcast %cst_337 : f32 to vector<24x32xf32>
    %542 = arith.minimumf %538, %541 : vector<24x32xf32>
    %543 = math.exp %542 : vector<24x32xf32>
    %cst_338 = arith.constant 1.000000e+00 : f32
    %544 = vector.broadcast %cst_338 : f32 to vector<24x32xf32>
    %545 = arith.subf %543, %544 : vector<24x32xf32>
    %546 = arith.select %540, %538, %545 : vector<24x32xi1>, vector<24x32xf32>
    %cst_339 = arith.constant dense<0.000000e+00> : vector<4xf32>
    %547 = vector.multi_reduction <add>, %0, %cst_339 [1] : vector<4x24xf32> to vector<4xf32>
    %548 = vector.shape_cast %547 : vector<4xf32> to vector<4x1xf32>
    %cst_340 = arith.constant 1.000000e+00 : f32
    %549 = vector.broadcast %cst_340 : f32 to vector<4x1xf32>
    %550 = arith.maximumf %548, %549 : vector<4x1xf32>
    %cst_341 = arith.constant dense<0.000000e+00> : vector<4x32xf32>
    %551 = tpu.matmul %0, %546, %cst_341 {dimension_numbers = #tpu.dot_dimension_numbers<[1], [0], [0], [1], [0, 0, 1, 1], [], []>} : vector<4x24xf32>, vector<24x32xf32>, vector<4x32xf32> -> vector<4x32xf32>
    %552 = vector.broadcast %550 : vector<4x1xf32> to vector<4x32xf32>
    %553 = arith.divf %551, %552 : vector<4x32xf32>
    %cst_342 = arith.constant dense<0.000000e+00> : vector<24x32xf32>
    %554 = tpu.matmul %1, %553, %cst_342 {dimension_numbers = #tpu.dot_dimension_numbers<[1], [0], [0], [1], [0, 0, 1, 1], [], []>} : vector<24x4xf32>, vector<4x32xf32>, vector<24x32xf32> -> vector<24x32xf32>
    %c0_343 = arith.constant 0 : index
    %c0_344 = arith.constant 0 : index
    %555 = vector.load %arg4[%c0_343, %c0_344] : memref<1x128xf32, #tpu.memory_space<vmem>>, vector<1x128xf32>
    %c0_345 = arith.constant 0 : index
    %c0_346 = arith.constant 0 : index
    %556 = vector.load %arg5[%c0_345, %c0_346] : memref<1x32xf32, #tpu.memory_space<vmem>>, vector<1x32xf32>
    %557 = vector.broadcast %556 : vector<1x32xf32> to vector<24x32xf32>
    %558 = arith.mulf %532, %557 : vector<24x32xf32>
    %c0_347 = arith.constant 0 : index
    %c0_348 = arith.constant 0 : index
    %559 = vector.load %arg7[%c0_347, %c0_348] : memref<1x32xf32, #tpu.memory_space<vmem>>, vector<1x32xf32>
    %560 = vector.broadcast %559 : vector<1x32xf32> to vector<24x32xf32>
    %561 = arith.addf %558, %560 : vector<24x32xf32>
    %cst_349 = arith.constant 0.000000e+00 : f32
    %562 = vector.broadcast %cst_349 : f32 to vector<24x32xf32>
    %563 = arith.cmpf ogt, %561, %562 : vector<24x32xf32>
    %cst_350 = arith.constant 0.000000e+00 : f32
    %564 = vector.broadcast %cst_350 : f32 to vector<24x32xf32>
    %565 = arith.minimumf %561, %564 : vector<24x32xf32>
    %566 = math.exp %565 : vector<24x32xf32>
    %cst_351 = arith.constant 1.000000e+00 : f32
    %567 = vector.broadcast %cst_351 : f32 to vector<24x32xf32>
    %568 = arith.subf %566, %567 : vector<24x32xf32>
    %569 = arith.select %563, %561, %568 : vector<24x32xi1>, vector<24x32xf32>
    %570 = arith.truncf %569 : vector<24x32xf32> to vector<24x32xbf16>
    %c0_352 = arith.constant 0 : index
    %c0_353 = arith.constant 0 : index
    %571 = vector.load %arg9[%c0_352, %c0_353] : memref<32x128xbf16, #tpu.memory_space<vmem>>, vector<32x128xbf16>
    %cst_354 = arith.constant dense<0.000000e+00> : vector<24x128xf32>
    %572 = tpu.matmul %570, %571, %cst_354 {dimension_numbers = #tpu.dot_dimension_numbers<[1], [0], [0], [1], [0, 0, 1, 1], [], []>} : vector<24x32xbf16>, vector<32x128xbf16>, vector<24x128xf32> -> vector<24x128xf32>
    %573 = vector.broadcast %555 : vector<1x128xf32> to vector<24x128xf32>
    %574 = arith.addf %573, %572 : vector<24x128xf32>
    %c0_355 = arith.constant 0 : index
    %c0_356 = arith.constant 0 : index
    %575 = vector.load %arg6[%c0_355, %c0_356] : memref<1x32xf32, #tpu.memory_space<vmem>>, vector<1x32xf32>
    %576 = vector.broadcast %575 : vector<1x32xf32> to vector<24x32xf32>
    %577 = arith.mulf %554, %576 : vector<24x32xf32>
    %c0_357 = arith.constant 0 : index
    %c0_358 = arith.constant 0 : index
    %578 = vector.load %arg8[%c0_357, %c0_358] : memref<1x32xf32, #tpu.memory_space<vmem>>, vector<1x32xf32>
    %579 = vector.broadcast %578 : vector<1x32xf32> to vector<24x32xf32>
    %580 = arith.addf %577, %579 : vector<24x32xf32>
    %cst_359 = arith.constant 0.000000e+00 : f32
    %581 = vector.broadcast %cst_359 : f32 to vector<24x32xf32>
    %582 = arith.cmpf ogt, %580, %581 : vector<24x32xf32>
    %cst_360 = arith.constant 0.000000e+00 : f32
    %583 = vector.broadcast %cst_360 : f32 to vector<24x32xf32>
    %584 = arith.minimumf %580, %583 : vector<24x32xf32>
    %585 = math.exp %584 : vector<24x32xf32>
    %cst_361 = arith.constant 1.000000e+00 : f32
    %586 = vector.broadcast %cst_361 : f32 to vector<24x32xf32>
    %587 = arith.subf %585, %586 : vector<24x32xf32>
    %588 = arith.select %582, %580, %587 : vector<24x32xi1>, vector<24x32xf32>
    %589 = arith.truncf %588 : vector<24x32xf32> to vector<24x32xbf16>
    %c0_362 = arith.constant 0 : index
    %c0_363 = arith.constant 0 : index
    %590 = vector.load %arg10[%c0_362, %c0_363] : memref<32x128xbf16, #tpu.memory_space<vmem>>, vector<32x128xbf16>
    %cst_364 = arith.constant dense<0.000000e+00> : vector<24x128xf32>
    %591 = tpu.matmul %589, %590, %cst_364 {dimension_numbers = #tpu.dot_dimension_numbers<[1], [0], [0], [1], [0, 0, 1, 1], [], []>} : vector<24x32xbf16>, vector<32x128xbf16>, vector<24x128xf32> -> vector<24x128xf32>
    %592 = arith.addf %574, %591 : vector<24x128xf32>
    %c0_365 = arith.constant 0 : index
    %c0_366 = arith.constant 0 : index
    %593 = vector.load %arg13[%c0_365, %c0_366] : memref<1x1xf32, #tpu.memory_space<vmem>>, vector<1x1xf32>
    %c0_367 = arith.constant 0 : index
    %c0_368 = arith.constant 0 : index
    %594 = vector.load %arg14[%c0_367, %c0_368] : memref<1x32xf32, #tpu.memory_space<vmem>>, vector<1x32xf32>
    %595 = vector.broadcast %594 : vector<1x32xf32> to vector<4x32xf32>
    %596 = arith.mulf %553, %595 : vector<4x32xf32>
    %c0_369 = arith.constant 0 : index
    %c0_370 = arith.constant 0 : index
    %597 = vector.load %arg15[%c0_369, %c0_370] : memref<1x32xf32, #tpu.memory_space<vmem>>, vector<1x32xf32>
    %598 = vector.broadcast %597 : vector<1x32xf32> to vector<4x32xf32>
    %599 = arith.addf %596, %598 : vector<4x32xf32>
    %cst_371 = arith.constant 0.000000e+00 : f32
    %600 = vector.broadcast %cst_371 : f32 to vector<4x32xf32>
    %601 = arith.cmpf ogt, %599, %600 : vector<4x32xf32>
    %cst_372 = arith.constant 0.000000e+00 : f32
    %602 = vector.broadcast %cst_372 : f32 to vector<4x32xf32>
    %603 = arith.minimumf %599, %602 : vector<4x32xf32>
    %604 = math.exp %603 : vector<4x32xf32>
    %cst_373 = arith.constant 1.000000e+00 : f32
    %605 = vector.broadcast %cst_373 : f32 to vector<4x32xf32>
    %606 = arith.subf %604, %605 : vector<4x32xf32>
    %607 = arith.select %601, %599, %606 : vector<4x32xi1>, vector<4x32xf32>
    %608 = arith.truncf %607 : vector<4x32xf32> to vector<4x32xbf16>
    %c0_374 = arith.constant 0 : index
    %c0_375 = arith.constant 0 : index
    %609 = vector.load %arg16[%c0_374, %c0_375] : memref<32x1xbf16, #tpu.memory_space<vmem>>, vector<32x1xbf16>
    %cst_376 = arith.constant dense<0.000000e+00> : vector<4x1xf32>
    %610 = tpu.matmul %608, %609, %cst_376 {dimension_numbers = #tpu.dot_dimension_numbers<[1], [0], [0], [1], [0, 0, 1, 1], [], []>} : vector<4x32xbf16>, vector<32x1xbf16>, vector<4x1xf32> -> vector<4x1xf32>
    %611 = vector.broadcast %593 : vector<1x1xf32> to vector<4x1xf32>
    %612 = arith.addf %611, %610 : vector<4x1xf32>
    %cst_377 = arith.constant dense<0xFF800000> : vector<24xf32>
    %613 = vector.multi_reduction <maximumf>, %592, %cst_377 [1] : vector<24x128xf32> to vector<24xf32>
    %614 = vector.shape_cast %613 : vector<24xf32> to vector<24x1xf32>
    %cst_378 = arith.constant dense<0.000000e+00> : vector<24x1xf32>
    %615 = tpu.matmul %1, %612, %cst_378 {dimension_numbers = #tpu.dot_dimension_numbers<[1], [0], [0], [1], [0, 0, 1, 1], [], []>} : vector<24x4xf32>, vector<4x1xf32>, vector<24x1xf32> -> vector<24x1xf32>
    %616 = arith.maximumf %614, %615 : vector<24x1xf32>
    %cst_379 = arith.constant 0.000000e+00 : f32
    %617 = vector.broadcast %cst_379 : f32 to vector<24x4xf32>
    %618 = arith.cmpf ogt, %1, %617 : vector<24x4xf32>
    %cst_380 = arith.constant -1.000000e+30 : f32
    %619 = vector.shape_cast %616 : vector<24x1xf32> to vector<24x1xf32>
    %620 = vector.broadcast %619 : vector<24x1xf32> to vector<24x4xf32>
    %621 = vector.broadcast %cst_380 : f32 to vector<24x4xf32>
    %622 = arith.select %618, %620, %621 : vector<24x4xi1>, vector<24x4xf32>
    %cst_381 = arith.constant dense<0xFF800000> : vector<4xf32>
    %623 = vector.multi_reduction <maximumf>, %622, %cst_381 [0] : vector<24x4xf32> to vector<4xf32>
    %624 = vector.shape_cast %623 : vector<4xf32> to vector<1x4xf32>
    %625 = vector.broadcast %624 : vector<1x4xf32> to vector<24x4xf32>
    %626 = arith.mulf %1, %625 : vector<24x4xf32>
    %cst_382 = arith.constant dense<0.000000e+00> : vector<24xf32>
    %627 = vector.multi_reduction <add>, %626, %cst_382 [1] : vector<24x4xf32> to vector<24xf32>
    %628 = vector.shape_cast %627 : vector<24xf32> to vector<24x1xf32>
    %cst_383 = arith.constant dense<0.000000e+00> : vector<4x1xf32>
    %629 = tpu.matmul %0, %628, %cst_383 {dimension_numbers = #tpu.dot_dimension_numbers<[1], [0], [0], [1], [0, 0, 1, 1], [], []>} : vector<4x24xf32>, vector<24x1xf32>, vector<4x1xf32> -> vector<4x1xf32>
    %630 = arith.divf %629, %550 : vector<4x1xf32>
    %631 = vector.broadcast %628 : vector<24x1xf32> to vector<24x128xf32>
    %632 = arith.subf %592, %631 : vector<24x128xf32>
    %633 = math.exp %632 : vector<24x128xf32>
    %cst_384 = arith.constant dense<0.000000e+00> : vector<24xf32>
    %634 = vector.multi_reduction <add>, %633, %cst_384 [1] : vector<24x128xf32> to vector<24xf32>
    %635 = vector.shape_cast %634 : vector<24xf32> to vector<24x1xf32>
    %636 = arith.subf %612, %630 : vector<4x1xf32>
    %637 = math.exp %636 : vector<4x1xf32>
    %cst_385 = arith.constant dense<0.000000e+00> : vector<4x1xf32>
    %638 = tpu.matmul %0, %635, %cst_385 {dimension_numbers = #tpu.dot_dimension_numbers<[1], [0], [0], [1], [0, 0, 1, 1], [], []>} : vector<4x24xf32>, vector<24x1xf32>, vector<4x1xf32> -> vector<4x1xf32>
    %639 = arith.addf %638, %637 : vector<4x1xf32>
    %cst_386 = arith.constant dense<0.000000e+00> : vector<24x1xf32>
    %640 = tpu.matmul %1, %639, %cst_386 {dimension_numbers = #tpu.dot_dimension_numbers<[1], [0], [0], [1], [0, 0, 1, 1], [], []>} : vector<24x4xf32>, vector<4x1xf32>, vector<24x1xf32> -> vector<24x1xf32>
    %cst_387 = arith.constant 1.000000e-30 : f32
    %641 = vector.broadcast %cst_387 : f32 to vector<24x1xf32>
    %642 = arith.maximumf %640, %641 : vector<24x1xf32>
    %643 = vector.broadcast %642 : vector<24x1xf32> to vector<24x128xf32>
    %644 = arith.divf %633, %643 : vector<24x128xf32>
    %c0_388 = arith.constant 0 : index
    %c0_389 = arith.constant 0 : index
    %645 = vector.load %arg104[%c0_388, %c0_389] : memref<24x128xf32, #tpu.memory_space<vmem>>, vector<24x128xf32>
    tpu.vector_store %arg104[%c0_388, %c0_389], %644 {strides = array<i32>} : memref<24x128xf32, #tpu.memory_space<vmem>>, vector<24x128xf32>,
    %646 = arith.divf %637, %639 : vector<4x1xf32>
    %647 = vector.shape_cast %646 : vector<4x1xf32> to vector<4x1xf32>
    %648 = vector.broadcast %647 : vector<4x1xf32> to vector<4x128xf32>
    %c0_390 = arith.constant 0 : index
    %c0_391 = arith.constant 0 : index
    %649 = vector.load %arg105[%c0_390, %c0_391] : memref<4x128xf32, #tpu.memory_space<vmem>>, vector<4x128xf32>
    tpu.vector_store %arg105[%c0_390, %c0_391], %648 {strides = array<i32>} : memref<4x128xf32, #tpu.memory_space<vmem>>, vector<4x128xf32>,
    return
  }
}

</mosaic_0001>

<llo_original>
// kernel: deep_scaffold_likelihood.1
$region0: #{deep_scaffold_likelihood.1}
  #allocation0 [shape = 'u32[]', space=smem, size = 0x4, offset = 0x4, fixed_abs, tag = 'smem constant byte address 0x4 - core index']
  #allocation1 [shape = 'u32[144,128]{1,0:T(1,128)}', space=vmem, size = 0x12000, scoped, tag = 'internal scratch']
  #allocation2 [shape = 'f32[1,1]{1,0:T(1,128)S(1)}', space=vmem, size = 0x200, scoped, tag = 'scoped memory for deep_scaffold_likelihood.1']
  %s0 = inlined_call_operand.smem [shape: u32[106], index: -1, kind: input, shape index: {}]
  %s1 = sld [smem:[%s0]]
  %s2 = scalar_lea.smem %s0, 1
  %s3 = sld [smem:[%s2]]
  %s4 = scalar_lea.smem %s0, 2
  %s5 = sld [smem:[%s4]]
  %s6 = scalar_lea.smem %s0, 3
  %s7 = sld [smem:[%s6]]
  %s8 = scalar_lea.smem %s0, 4
  %s9 = sld [smem:[%s8]]
  %s10 = scalar_lea.smem %s0, 5
  %s11 = sld [smem:[%s10]]
  %s12 = scalar_lea.smem %s0, 6
  %s13 = sld [smem:[%s12]]
  %s14 = scalar_lea.smem %s0, 7
  %s15 = sld [smem:[%s14]]
  %s16 = scalar_lea.smem %s0, 8
  %s17 = sld [smem:[%s16]]
  %s18 = scalar_lea.smem %s0, 9
  %s19 = sld [smem:[%s18]]
  %s20 = scalar_lea.smem %s0, 10
  %s21 = sld [smem:[%s20]]
  %s22 = scalar_lea.smem %s0, 11
  %s23 = sld [smem:[%s22]]
  %s24 = scalar_lea.smem %s0, 12
  %s25 = sld [smem:[%s24]]
  %s26 = scalar_lea.smem %s0, 13
  %s27 = sld [smem:[%s26]]
  %s28 = scalar_lea.smem %s0, 14
  %s29 = sld [smem:[%s28]]
  %s30 = scalar_lea.smem %s0, 15
  %s31 = sld [smem:[%s30]]
  %s32 = scalar_lea.smem %s0, 16
  %s33 = sld [smem:[%s32]]
  %s34 = scalar_lea.smem %s0, 17
  %s35 = sld [smem:[%s34]]
  %s36 = scalar_lea.smem %s0, 18
  %s37 = sld [smem:[%s36]]
  %s38 = scalar_lea.smem %s0, 19
  %s39 = sld [smem:[%s38]]
  %s40 = scalar_lea.smem %s0, 20
  %s41 = sld [smem:[%s40]]
  %s42 = scalar_lea.smem %s0, 21
  %s43 = sld [smem:[%s42]]
  %s44 = scalar_lea.smem %s0, 22
  %s45 = sld [smem:[%s44]]
  %s46 = scalar_lea.smem %s0, 23
  %s47 = sld [smem:[%s46]]
  %s48 = scalar_lea.smem %s0, 24
  %s49 = sld [smem:[%s48]]
  %s50 = scalar_lea.smem %s0, 25
  %s51 = sld [smem:[%s50]]
  %s52 = scalar_lea.smem %s0, 26
  %s53 = sld [smem:[%s52]]
  %s54 = scalar_lea.smem %s0, 27
  %s55 = sld [smem:[%s54]]
  %s56 = scalar_lea.smem %s0, 28
  %s57 = sld [smem:[%s56]]
  %s58 = scalar_lea.smem %s0, 29
  %s59 = sld [smem:[%s58]]
  %s60 = scalar_lea.smem %s0, 30
  %s61 = sld [smem:[%s60]]
  %s62 = scalar_lea.smem %s0, 31
  %s63 = sld [smem:[%s62]]
  %s64 = scalar_lea.smem %s0, 32
  %s65 = sld [smem:[%s64]]
  %s66 = scalar_lea.smem %s0, 33
  %s67 = sld [smem:[%s66]]
  %s68 = scalar_lea.smem %s0, 34
  %s69 = sld [smem:[%s68]]
  %s70 = scalar_lea.smem %s0, 35
  %s71 = sld [smem:[%s70]]
  %s72 = scalar_lea.smem %s0, 36
  %s73 = sld [smem:[%s72]]
  %s74 = scalar_lea.smem %s0, 37
  %s75 = sld [smem:[%s74]]
  %s76 = scalar_lea.smem %s0, 38
  %s77 = sld [smem:[%s76]]
  %s78 = scalar_lea.smem %s0, 39
  %s79 = sld [smem:[%s78]]
  %s80 = scalar_lea.smem %s0, 40
  %s81 = sld [smem:[%s80]]
  %s82 = scalar_lea.smem %s0, 41
  %s83 = sld [smem:[%s82]]
  %s84 = scalar_lea.smem %s0, 42
  %s85 = sld [smem:[%s84]]
  %s86 = scalar_lea.smem %s0, 43
  %s87 = sld [smem:[%s86]]
  %s88 = scalar_lea.smem %s0, 44
  %s89 = sld [smem:[%s88]]
  %s90 = scalar_lea.smem %s0, 45
  %s91 = sld [smem:[%s90]]
  %s92 = scalar_lea.smem %s0, 46
  %s93 = sld [smem:[%s92]]
  %s94 = scalar_lea.smem %s0, 47
  %s95 = sld [smem:[%s94]]
  %s96 = scalar_lea.smem %s0, 48
  %s97 = sld [smem:[%s96]]
  %s98 = scalar_lea.smem %s0, 49
  %s99 = sld [smem:[%s98]]
  %s100 = scalar_lea.smem %s0, 50
  %s101 = sld [smem:[%s100]]
  %s102 = scalar_lea.smem %s0, 51
  %s103 = sld [smem:[%s102]]
  %s104 = scalar_lea.smem %s0, 52
  %s105 = sld [smem:[%s104]]
  %s106 = scalar_lea.smem %s0, 53
  %s107 = sld [smem:[%s106]]
  %s108 = scalar_lea.smem %s0, 54
  %s109 = sld [smem:[%s108]]
  %s110 = scalar_lea.smem %s0, 55
  %s111 = sld [smem:[%s110]]
  %s112 = scalar_lea.smem %s0, 56
  %s113 = sld [smem:[%s112]]
  %s114 = scalar_lea.smem %s0, 57
  %s115 = sld [smem:[%s114]]
  %s116 = scalar_lea.smem %s0, 58
  %s117 = sld [smem:[%s116]]
  %s118 = scalar_lea.smem %s0, 59
  %s119 = sld [smem:[%s118]]
  %s120 = scalar_lea.smem %s0, 60
  %s121 = sld [smem:[%s120]]
  %s122 = scalar_lea.smem %s0, 61
  %s123 = sld [smem:[%s122]]
  %s124 = scalar_lea.smem %s0, 62
  %s125 = sld [smem:[%s124]]
  %s126 = scalar_lea.smem %s0, 63
  %s127 = sld [smem:[%s126]]
  %s128 = scalar_lea.smem %s0, 64
  %s129 = sld [smem:[%s128]]
  %s130 = scalar_lea.smem %s0, 65
  %s131 = sld [smem:[%s130]]
  %s132 = scalar_lea.smem %s0, 66
  %s133 = sld [smem:[%s132]]
  %s134 = scalar_lea.smem %s0, 67
  %s135 = sld [smem:[%s134]]
  %s136 = scalar_lea.smem %s0, 68
  %s137 = sld [smem:[%s136]]
  %s138 = scalar_lea.smem %s0, 69
  %s139 = sld [smem:[%s138]]
  %s140 = scalar_lea.smem %s0, 70
  %s141 = sld [smem:[%s140]]
  %s142 = scalar_lea.smem %s0, 71
  %s143 = sld [smem:[%s142]]
  %s144 = scalar_lea.smem %s0, 72
  %s145 = sld [smem:[%s144]]
  %s146 = scalar_lea.smem %s0, 73
  %s147 = sld [smem:[%s146]]
  %s148 = scalar_lea.smem %s0, 74
  %s149 = sld [smem:[%s148]]
  %s150 = scalar_lea.smem %s0, 75
  %s151 = sld [smem:[%s150]]
  %s152 = scalar_lea.smem %s0, 76
  %s153 = sld [smem:[%s152]]
  %s154 = scalar_lea.smem %s0, 77
  %s155 = sld [smem:[%s154]]
  %s156 = scalar_lea.smem %s0, 78
  %s157 = sld [smem:[%s156]]
  %s158 = scalar_lea.smem %s0, 79
  %s159 = sld [smem:[%s158]]
  %s160 = scalar_lea.smem %s0, 80
  %s161 = sld [smem:[%s160]]
  %s162 = scalar_lea.smem %s0, 81
  %s163 = sld [smem:[%s162]]
  %s164 = scalar_lea.smem %s0, 82
  %s165 = sld [smem:[%s164]]
  %s166 = scalar_lea.smem %s0, 83
  %s167 = sld [smem:[%s166]]
  %s168 = scalar_lea.smem %s0, 84
  %s169 = sld [smem:[%s168]]
  %s170 = scalar_lea.smem %s0, 85
  %s171 = sld [smem:[%s170]]
  %s172 = scalar_lea.smem %s0, 86
  %s173 = sld [smem:[%s172]]
  %s174 = scalar_lea.smem %s0, 87
  %s175 = sld [smem:[%s174]]
  %s176 = scalar_lea.smem %s0, 88
  %s177 = sld [smem:[%s176]]
  %s178 = scalar_lea.smem %s0, 89
  %s179 = sld [smem:[%s178]]
  %s180 = scalar_lea.smem %s0, 90
  %s181 = sld [smem:[%s180]]
  %s182 = scalar_lea.smem %s0, 91
  %s183 = sld [smem:[%s182]]
  %s184 = scalar_lea.smem %s0, 92
  %s185 = sld [smem:[%s184]]
  %s186 = scalar_lea.smem %s0, 93
  %s187 = sld [smem:[%s186]]
  %s188 = scalar_lea.smem %s0, 94
  %s189 = sld [smem:[%s188]]
  %s190 = scalar_lea.smem %s0, 95
  %s191 = sld [smem:[%s190]]
  %s192 = scalar_lea.smem %s0, 96
  %s193 = sld [smem:[%s192]]
  %s194 = scalar_lea.smem %s0, 97
  %s195 = sld [smem:[%s194]]
  %s196 = scalar_lea.smem %s0, 98
  %s197 = sld [smem:[%s196]]
  %s198 = scalar_lea.smem %s0, 99
  %s199 = sld [smem:[%s198]]
  %s200 = scalar_lea.smem %s0, 100
  %s201 = sld [smem:[%s200]]
  %s202 = scalar_lea.smem %s0, 101
  %s203 = sld [smem:[%s202]]
  %s204 = scalar_lea.smem %s0, 102
  %s205 = sld [smem:[%s204]]
  %s206 = scalar_lea.smem %s0, 103
  %s207 = sld [smem:[%s206]]
  %s208 = scalar_lea.smem %s0, 104
  %s209 = sld [smem:[%s208]]
  %s210 = scalar_lea.smem %s0, 105
  %s211 = sld [smem:[%s210]]
  %212 = xla_tuple %s209, %s211
  %s213 = sld [smem:[#allocation0]]
  $region650: #{deep_scaffold_likelihood.1} parent=0
    _
  %s215 = ssub.s32 1, %s213
  %s216 = scalar_select 0, %s215, %s213
  %v217 = vstv %s27
  %218 = vst [vmem:[#allocation2] sm:$0x1] %v217
  $region1: #{deep_scaffold_likelihood.1} parent=0
    #allocation3 [shape = 'u8[512]{0}', space=vmem, size = 0x400, scoped, tag = 'input window, operand 27, single buffered']
    #allocation4 [shape = 's32[1]{0}', space=sflag, size = 0x4, scoped, tag = 'scoped memory for deep_scaffold_likelihood.1']
    #allocation5 [shape = 'u8[512]{0}', space=vmem, size = 0x400, scoped, tag = 'input window, operand 28, single buffered']
    #allocation6 [shape = 's32[1]{0}', space=sflag, size = 0x4, scoped, tag = 'scoped memory for deep_scaffold_likelihood.1']
    #allocation7 [shape = 'u8[512]{0}', space=vmem, size = 0x400, scoped, tag = 'input window, operand 29, single buffered']
    #allocation8 [shape = 'u8[512]{0}', space=vmem, size = 0x400, scoped, tag = 'input window, operand 31, single buffered']
    #allocation9 [shape = 's32[1]{0}', space=sflag, size = 0x4, scoped, tag = 'scoped memory for deep_scaffold_likelihood.1']
    #allocation10 [shape = 'u8[512]{0}', space=vmem, size = 0x400, scoped, tag = 'input window, operand 32, single buffered']
    #allocation11 [shape = 'u8[512]{0}', space=vmem, size = 0x400, scoped, tag = 'input window, operand 33, single buffered']
    #allocation12 [shape = 's32[1]{0}', space=sflag, size = 0x4, scoped, tag = 'scoped memory for deep_scaffold_likelihood.1']
    #allocation13 [shape = 'u8[512]{0}', space=vmem, size = 0x400, scoped, tag = 'input window, operand 34, single buffered']
    #allocation14 [shape = 'u8[512]{0}', space=vmem, size = 0x400, scoped, tag = 'input window, operand 35, single buffered']
    #allocation15 [shape = 's32[1]{0}', space=sflag, size = 0x4, scoped, tag = 'scoped memory for deep_scaffold_likelihood.1']
    #allocation16 [shape = 'u8[512]{0}', space=vmem, size = 0x400, scoped, tag = 'input window, operand 36, single buffered']
    #allocation17 [shape = 'u8[512]{0}', space=vmem, size = 0x400, scoped, tag = 'input window, operand 37, single buffered']
    #allocation18 [shape = 's32[1]{0}', space=sflag, size = 0x4, scoped, tag = 'scoped memory for deep_scaffold_likelihood.1']
    #allocation19 [shape = 'u8[512]{0}', space=vmem, size = 0x400, scoped, tag = 'input window, operand 38, single buffered']
    #allocation20 [shape = 'u8[512]{0}', space=vmem, size = 0x400, scoped, tag = 'input window, operand 39, single buffered']
    #allocation21 [shape = 's32[1]{0}', space=sflag, size = 0x4, scoped, tag = 'scoped memory for deep_scaffold_likelihood.1']
    #allocation22 [shape = 'u8[512]{0}', space=vmem, size = 0x400, scoped, tag = 'input window, operand 40, single buffered']
    #allocation23 [shape = 'u8[512]{0}', space=vmem, size = 0x400, scoped, tag = 'input window, operand 41, single buffered']
    #allocation24 [shape = 's32[1]{0}', space=sflag, size = 0x4, scoped, tag = 'scoped memory for deep_scaffold_likelihood.1']
    #allocation25 [shape = 'u8[512]{0}', space=vmem, size = 0x400, scoped, tag = 'input window, operand 42, single buffered']
    #allocation26 [shape = 'u8[512]{0}', space=vmem, size = 0x400, scoped, tag = 'input window, operand 43, single buffered']
    #allocation27 [shape = 's32[1]{0}', space=sflag, size = 0x4, scoped, tag = 'scoped memory for deep_scaffold_likelihood.1']
    #allocation28 [shape = 'u8[512]{0}', space=vmem, size = 0x400, scoped, tag = 'input window, operand 44, single buffered']
    #allocation29 [shape = 'u8[512]{0}', space=vmem, size = 0x400, scoped, tag = 'input window, operand 45, single buffered']
    #allocation30 [shape = 's32[1]{0}', space=sflag, size = 0x4, scoped, tag = 'scoped memory for deep_scaffold_likelihood.1']
    #allocation31 [shape = 'u8[512]{0}', space=vmem, size = 0x400, scoped, tag = 'input window, operand 46, single buffered']
    #allocation32 [shape = 'u8[512]{0}', space=vmem, size = 0x400, scoped, tag = 'input window, operand 47, single buffered']
    #allocation33 [shape = 's32[1]{0}', space=sflag, size = 0x4, scoped, tag = 'scoped memory for deep_scaffold_likelihood.1']
    #allocation34 [shape = 'u8[512]{0}', space=vmem, size = 0x400, scoped, tag = 'input window, operand 56, single buffered']
    #allocation35 [shape = 'u8[512]{0}', space=vmem, size = 0x400, scoped, tag = 'input window, operand 57, single buffered']
    #allocation36 [shape = 's32[1]{0}', space=sflag, size = 0x4, scoped, tag = 'scoped memory for deep_scaffold_likelihood.1']
    #allocation37 [shape = 'u8[512]{0}', space=vmem, size = 0x400, scoped, tag = 'input window, operand 58, single buffered']
    #allocation38 [shape = 'u8[512]{0}', space=vmem, size = 0x400, scoped, tag = 'input window, operand 60, single buffered']
    #allocation39 [shape = 's32[1]{0}', space=sflag, size = 0x4, scoped, tag = 'scoped memory for deep_scaffold_likelihood.1']
    #allocation40 [shape = 'u8[512]{0}', space=vmem, size = 0x400, scoped, tag = 'input window, operand 61, single buffered']
    #allocation41 [shape = 'u8[512]{0}', space=vmem, size = 0x400, scoped, tag = 'input window, operand 62, single buffered']
    #allocation42 [shape = 's32[1]{0}', space=sflag, size = 0x4, scoped, tag = 'scoped memory for deep_scaffold_likelihood.1']
    #allocation43 [shape = 'u8[512]{0}', space=vmem, size = 0x400, scoped, tag = 'input window, operand 64, single buffered']
    #allocation44 [shape = 'u8[512]{0}', space=vmem, size = 0x400, scoped, tag = 'input window, operand 65, single buffered']
    #allocation45 [shape = 's32[1]{0}', space=sflag, size = 0x4, scoped, tag = 'scoped memory for deep_scaffold_likelihood.1']
    #allocation46 [shape = 'u8[512]{0}', space=vmem, size = 0x400, scoped, tag = 'input window, operand 66, single buffered']
    #allocation47 [shape = 'u8[512]{0}', space=vmem, size = 0x400, scoped, tag = 'input window, operand 67, single buffered']
    #allocation48 [shape = 's32[1]{0}', space=sflag, size = 0x4, scoped, tag = 'scoped memory for deep_scaffold_likelihood.1']
    #allocation49 [shape = 'u8[512]{0}', space=vmem, size = 0x400, scoped, tag = 'input window, operand 68, single buffered']
    #allocation50 [shape = 'u8[512]{0}', space=vmem, size = 0x400, scoped, tag = 'input window, operand 71, single buffered']
    #allocation51 [shape = 's32[1]{0}', space=sflag, size = 0x4, scoped, tag = 'scoped memory for deep_scaffold_likelihood.1']
    #allocation52 [shape = 'u8[512]{0}', space=vmem, size = 0x400, scoped, tag = 'input window, operand 72, single buffered']
    #allocation53 [shape = 'u8[512]{0}', space=vmem, size = 0x400, scoped, tag = 'input window, operand 73, single buffered']
    #allocation54 [shape = 's32[1]{0}', space=sflag, size = 0x4, scoped, tag = 'scoped memory for deep_scaffold_likelihood.1']
    #allocation55 [shape = 'u8[512]{0}', space=vmem, size = 0x400, scoped, tag = 'input window, operand 74, single buffered']
    #allocation56 [shape = 'u8[512]{0}', space=vmem, size = 0x400, scoped, tag = 'input window, operand 75, single buffered']
    #allocation57 [shape = 's32[1]{0}', space=sflag, size = 0x4, scoped, tag = 'scoped memory for deep_scaffold_likelihood.1']
    #allocation58 [shape = 'u8[512]{0}', space=vmem, size = 0x400, scoped, tag = 'input window, operand 76, single buffered']
    #allocation59 [shape = 'u8[512]{0}', space=vmem, size = 0x400, scoped, tag = 'input window, operand 77, single buffered']
    #allocation60 [shape = 's32[1]{0}', space=sflag, size = 0x4, scoped, tag = 'scoped memory for deep_scaffold_likelihood.1']
    #allocation61 [shape = 'u8[512]{0}', space=vmem, size = 0x400, scoped, tag = 'input window, operand 78, single buffered']
    #allocation62 [shape = 'u8[512]{0}', space=vmem, size = 0x400, scoped, tag = 'input window, operand 79, single buffered']
    #allocation63 [shape = 's32[1]{0}', space=sflag, size = 0x4, scoped, tag = 'scoped memory for deep_scaffold_likelihood.1']
    #allocation64 [shape = 'u8[512]{0}', space=vmem, size = 0x400, scoped, tag = 'input window, operand 80, single buffered']
    #allocation65 [shape = 'u8[512]{0}', space=vmem, size = 0x400, scoped, tag = 'input window, operand 81, single buffered']
    #allocation66 [shape = 's32[1]{0}', space=sflag, size = 0x4, scoped, tag = 'scoped memory for deep_scaffold_likelihood.1']
    #allocation67 [shape = 'u8[512]{0}', space=vmem, size = 0x400, scoped, tag = 'input window, operand 82, single buffered']
    #allocation68 [shape = 'u8[512]{0}', space=vmem, size = 0x400, scoped, tag = 'input window, operand 83, single buffered']
    #allocation69 [shape = 's32[1]{0}', space=sflag, size = 0x4, scoped, tag = 'scoped memory for deep_scaffold_likelihood.1']
    #allocation70 [shape = 'u8[512]{0}', space=vmem, size = 0x400, scoped, tag = 'input window, operand 84, single buffered']
    #allocation71 [shape = 'u8[512]{0}', space=vmem, size = 0x400, scoped, tag = 'input window, operand 85, single buffered']
    #allocation72 [shape = 's32[1]{0}', space=sflag, size = 0x4, scoped, tag = 'scoped memory for deep_scaffold_likelihood.1']
    #allocation73 [shape = 'u8[512]{0}', space=vmem, size = 0x400, scoped, tag = 'input window, operand 86, single buffered']
    #allocation74 [shape = 'u8[512]{0}', space=vmem, size = 0x400, scoped, tag = 'input window, operand 87, single buffered']
    #allocation75 [shape = 's32[1]{0}', space=sflag, size = 0x4, scoped, tag = 'scoped memory for deep_scaffold_likelihood.1']
    #allocation76 [shape = 'u8[512]{0}', space=vmem, size = 0x400, scoped, tag = 'input window, operand 96, single buffered']
    #allocation77 [shape = 'u8[512]{0}', space=vmem, size = 0x400, scoped, tag = 'input window, operand 97, single buffered']
    #allocation78 [shape = 's32[1]{0}', space=sflag, size = 0x4, scoped, tag = 'scoped memory for deep_scaffold_likelihood.1']
    #allocation79 [shape = 'u8[512]{0}', space=vmem, size = 0x400, scoped, tag = 'input window, operand 98, single buffered']
    #allocation80 [shape = 'u8[512]{0}', space=vmem, size = 0x400, scoped, tag = 'input window, operand 100, single buffered']
    #allocation81 [shape = 's32[1]{0}', space=sflag, size = 0x4, scoped, tag = 'scoped memory for deep_scaffold_likelihood.1']
    #allocation82 [shape = 'u8[512]{0}', space=vmem, size = 0x400, scoped, tag = 'input window, operand 101, single buffered']
    #allocation83 [shape = 'u8[512]{0}', space=vmem, size = 0x400, scoped, tag = 'input window, operand 102, single buffered']
    #allocation84 [shape = 's32[1]{0}', space=sflag, size = 0x4, scoped, tag = 'scoped memory for deep_scaffold_likelihood.1']
    %219 = vsyncpa [#allocation4], 0
    %220 = vsyncpa [#allocation6], 0
    %221 = vsyncpa [#allocation9], 0
    %222 = vsyncpa [#allocation12], 0
    %223 = vsyncpa [#allocation15], 0
    %224 = vsyncpa [#allocation18], 0
    %225 = vsyncpa [#allocation21], 0
    %226 = vsyncpa [#allocation24], 0
    %227 = vsyncpa [#allocation27], 0
    %228 = vsyncpa [#allocation30], 0
    %229 = vsyncpa [#allocation33], 0
    %230 = vsyncpa [#allocation36], 0
    %231 = vsyncpa [#allocation39], 0
    %232 = vsyncpa [#allocation42], 0
    %233 = vsyncpa [#allocation45], 0
    %234 = vsyncpa [#allocation48], 0
    %235 = vsyncpa [#allocation51], 0
    %236 = vsyncpa [#allocation54], 0
    %237 = vsyncpa [#allocation57], 0
    %238 = vsyncpa [#allocation60], 0
    %239 = vsyncpa [#allocation63], 0
    %240 = vsyncpa [#allocation66], 0
    %241 = vsyncpa [#allocation69], 0
    %242 = vsyncpa [#allocation72], 0
    %243 = vsyncpa [#allocation75], 0
    %244 = vsyncpa [#allocation78], 0
    %245 = vsyncpa [#allocation81], 0
    %246 = vsyncpa [#allocation84], 0
    // Predicated region
    $region2: #{deep_scaffold_likelihood.1} parent=1 // pred_check
      _
    $region3: #{deep_scaffold_likelihood.1} parent=1 // pred_check_branch
      %248 = sbr.rel (0) target = $region5
    $region4: #{deep_scaffold_likelihood.1} parent=1 // pred_region
      _
    $region5: #{deep_scaffold_likelihood.1} parent=1 // pred_fallthru
      _
    // Predicated region
    $region6: #{deep_scaffold_likelihood.1} parent=1 // pred_check
      _
    $region7: #{deep_scaffold_likelihood.1} parent=1 // pred_check_branch
      %250 = sbr.rel (0) target = $region9
    $region8: #{deep_scaffold_likelihood.1} parent=1 // pred_region
      _
    $region9: #{deep_scaffold_likelihood.1} parent=1 // pred_fallthru
      _
    // Predicated region
    $region10: #{deep_scaffold_likelihood.1} parent=1 // pred_check
      _
    $region11: #{deep_scaffold_likelihood.1} parent=1 // pred_check_branch
      %252 = sbr.rel (0) target = $region13
    $region12: #{deep_scaffold_likelihood.1} parent=1 // pred_region
      _
    $region13: #{deep_scaffold_likelihood.1} parent=1 // pred_fallthru
      _
    // Predicated region
    $region14: #{deep_scaffold_likelihood.1} parent=1 // pred_check
      _
    $region15: #{deep_scaffold_likelihood.1} parent=1 // pred_check_branch
      %254 = sbr.rel (0) target = $region17
    $region16: #{deep_scaffold_likelihood.1} parent=1 // pred_region
      _
    $region17: #{deep_scaffold_likelihood.1} parent=1 // pred_fallthru
      _
    // Predicated region
    $region18: #{deep_scaffold_likelihood.1} parent=1 // pred_check
      _
    $region19: #{deep_scaffold_likelihood.1} parent=1 // pred_check_branch
      %256 = sbr.rel (0) target = $region21
    $region20: #{deep_scaffold_likelihood.1} parent=1 // pred_region
      _
    $region21: #{deep_scaffold_likelihood.1} parent=1 // pred_fallthru
      _
    // Predicated region
    $region22: #{deep_scaffold_likelihood.1} parent=1 // pred_check
      _
    $region23: #{deep_scaffold_likelihood.1} parent=1 // pred_check_branch
      %258 = sbr.rel (0) target = $region25
    $region24: #{deep_scaffold_likelihood.1} parent=1 // pred_region
      _
    $region25: #{deep_scaffold_likelihood.1} parent=1 // pred_fallthru
      _
    // Predicated region
    $region26: #{deep_scaffold_likelihood.1} parent=1 // pred_check
      _
    $region27: #{deep_scaffold_likelihood.1} parent=1 // pred_check_branch
      %260 = sbr.rel (0) target = $region29
    $region28: #{deep_scaffold_likelihood.1} parent=1 // pred_region
      _
    $region29: #{deep_scaffold_likelihood.1} parent=1 // pred_fallthru
      _
    // Predicated region
    $region30: #{deep_scaffold_likelihood.1} parent=1 // pred_check
      _
    $region31: #{deep_scaffold_likelihood.1} parent=1 // pred_check_branch
      %262 = sbr.rel (0) target = $region33
    $region32: #{deep_scaffold_likelihood.1} parent=1 // pred_region
      _
    $region33: #{deep_scaffold_likelihood.1} parent=1 // pred_fallthru
      _
    // Predicated region
    $region34: #{deep_scaffold_likelihood.1} parent=1 // pred_check
      _
    $region35: #{deep_scaffold_likelihood.1} parent=1 // pred_check_branch
      %264 = sbr.rel (0) target = $region37
    $region36: #{deep_scaffold_likelihood.1} parent=1 // pred_region
      _
    $region37: #{deep_scaffold_likelihood.1} parent=1 // pred_fallthru
      _
    // Predicated region
    $region38: #{deep_scaffold_likelihood.1} parent=1 // pred_check
      _
    $region39: #{deep_scaffold_likelihood.1} parent=1 // pred_check_branch
      %266 = sbr.rel (0) target = $region41
    $region40: #{deep_scaffold_likelihood.1} parent=1 // pred_region
      _
    $region41: #{deep_scaffold_likelihood.1} parent=1 // pred_fallthru
      _
    // Predicated region
    $region42: #{deep_scaffold_likelihood.1} parent=1 // pred_check
      _
    $region43: #{deep_scaffold_likelihood.1} parent=1 // pred_check_branch
      %268 = sbr.rel (0) target = $region45
    $region44: #{deep_scaffold_likelihood.1} parent=1 // pred_region
      _
    $region45: #{deep_scaffold_likelihood.1} parent=1 // pred_fallthru
      _
    // Predicated region
    $region46: #{deep_scaffold_likelihood.1} parent=1 // pred_check
      _
    $region47: #{deep_scaffold_likelihood.1} parent=1 // pred_check_branch
      %270 = sbr.rel (0) target = $region49
    $region48: #{deep_scaffold_likelihood.1} parent=1 // pred_region
      _
    $region49: #{deep_scaffold_likelihood.1} parent=1 // pred_fallthru
      _
    // Predicated region
    $region50: #{deep_scaffold_likelihood.1} parent=1 // pred_check
      _
    $region51: #{deep_scaffold_likelihood.1} parent=1 // pred_check_branch
      %272 = sbr.rel (0) target = $region53
    $region52: #{deep_scaffold_likelihood.1} parent=1 // pred_region
      _
    $region53: #{deep_scaffold_likelihood.1} parent=1 // pred_fallthru
      _
    // Predicated region
    $region54: #{deep_scaffold_likelihood.1} parent=1 // pred_check
      _
    $region55: #{deep_scaffold_likelihood.1} parent=1 // pred_check_branch
      %274 = sbr.rel (0) target = $region57
    $region56: #{deep_scaffold_likelihood.1} parent=1 // pred_region
      _
    $region57: #{deep_scaffold_likelihood.1} parent=1 // pred_fallthru
      _
    // Predicated region
    $region58: #{deep_scaffold_likelihood.1} parent=1 // pred_check
      _
    $region59: #{deep_scaffold_likelihood.1} parent=1 // pred_check_branch
      %276 = sbr.rel (0) target = $region61
    $region60: #{deep_scaffold_likelihood.1} parent=1 // pred_region
      _
    $region61: #{deep_scaffold_likelihood.1} parent=1 // pred_fallthru
      _
    // Predicated region
    $region62: #{deep_scaffold_likelihood.1} parent=1 // pred_check
      _
    $region63: #{deep_scaffold_likelihood.1} parent=1 // pred_check_branch
      %278 = sbr.rel (0) target = $region65
    $region64: #{deep_scaffold_likelihood.1} parent=1 // pred_region
      _
    $region65: #{deep_scaffold_likelihood.1} parent=1 // pred_fallthru
      _
    // Predicated region
    $region66: #{deep_scaffold_likelihood.1} parent=1 // pred_check
      _
    $region67: #{deep_scaffold_likelihood.1} parent=1 // pred_check_branch
      %280 = sbr.rel (0) target = $region69
    $region68: #{deep_scaffold_likelihood.1} parent=1 // pred_region
      _
    $region69: #{deep_scaffold_likelihood.1} parent=1 // pred_fallthru
      _
    // Predicated region
    $region70: #{deep_scaffold_likelihood.1} parent=1 // pred_check
      _
    $region71: #{deep_scaffold_likelihood.1} parent=1 // pred_check_branch
      %282 = sbr.rel (0) target = $region73
    $region72: #{deep_scaffold_likelihood.1} parent=1 // pred_region
      _
    $region73: #{deep_scaffold_likelihood.1} parent=1 // pred_fallthru
      _
    // Predicated region
    $region74: #{deep_scaffold_likelihood.1} parent=1 // pred_check
      _
    $region75: #{deep_scaffold_likelihood.1} parent=1 // pred_check_branch
      %284 = sbr.rel (0) target = $region77
    $region76: #{deep_scaffold_likelihood.1} parent=1 // pred_region
      _
    $region77: #{deep_scaffold_likelihood.1} parent=1 // pred_fallthru
      _
    // Predicated region
    $region78: #{deep_scaffold_likelihood.1} parent=1 // pred_check
      _
    $region79: #{deep_scaffold_likelihood.1} parent=1 // pred_check_branch
      %286 = sbr.rel (0) target = $region81
    $region80: #{deep_scaffold_likelihood.1} parent=1 // pred_region
      _
    $region81: #{deep_scaffold_likelihood.1} parent=1 // pred_fallthru
      _
    // Predicated region
    $region82: #{deep_scaffold_likelihood.1} parent=1 // pred_check
      _
    $region83: #{deep_scaffold_likelihood.1} parent=1 // pred_check_branch
      %288 = sbr.rel (0) target = $region85
    $region84: #{deep_scaffold_likelihood.1} parent=1 // pred_region
      _
    $region85: #{deep_scaffold_likelihood.1} parent=1 // pred_fallthru
      _
    // Predicated region
    $region86: #{deep_scaffold_likelihood.1} parent=1 // pred_check
      _
    $region87: #{deep_scaffold_likelihood.1} parent=1 // pred_check_branch
      %290 = sbr.rel (0) target = $region89
    $region88: #{deep_scaffold_likelihood.1} parent=1 // pred_region
      _
    $region89: #{deep_scaffold_likelihood.1} parent=1 // pred_fallthru
      _
    // Predicated region
    $region90: #{deep_scaffold_likelihood.1} parent=1 // pred_check
      _
    $region91: #{deep_scaffold_likelihood.1} parent=1 // pred_check_branch
      %292 = sbr.rel (0) target = $region93
    $region92: #{deep_scaffold_likelihood.1} parent=1 // pred_region
      _
    $region93: #{deep_scaffold_likelihood.1} parent=1 // pred_fallthru
      _
    // Predicated region
    $region94: #{deep_scaffold_likelihood.1} parent=1 // pred_check
      _
    $region95: #{deep_scaffold_likelihood.1} parent=1 // pred_check_branch
      %294 = sbr.rel (0) target = $region97
    $region96: #{deep_scaffold_likelihood.1} parent=1 // pred_region
      _
    $region97: #{deep_scaffold_likelihood.1} parent=1 // pred_fallthru
      _
    // Predicated region
    $region98: #{deep_scaffold_likelihood.1} parent=1 // pred_check
      _
    $region99: #{deep_scaffold_likelihood.1} parent=1 // pred_check_branch
      %296 = sbr.rel (0) target = $region101
    $region100: #{deep_scaffold_likelihood.1} parent=1 // pred_region
      _
    $region101: #{deep_scaffold_likelihood.1} parent=1 // pred_fallthru
      _
    // Predicated region
    $region102: #{deep_scaffold_likelihood.1} parent=1 // pred_check
      _
    $region103: #{deep_scaffold_likelihood.1} parent=1 // pred_check_branch
      %298 = sbr.rel (0) target = $region105
    $region104: #{deep_scaffold_likelihood.1} parent=1 // pred_region
      _
    $region105: #{deep_scaffold_likelihood.1} parent=1 // pred_fallthru
      _
    // Predicated region
    $region106: #{deep_scaffold_likelihood.1} parent=1 // pred_check
      _
    $region107: #{deep_scaffold_likelihood.1} parent=1 // pred_check_branch
      %300 = sbr.rel (0) target = $region109
    $region108: #{deep_scaffold_likelihood.1} parent=1 // pred_region
      _
    $region109: #{deep_scaffold_likelihood.1} parent=1 // pred_fallthru
      _
    // Predicated region
    $region110: #{deep_scaffold_likelihood.1} parent=1 // pred_check
      _
    $region111: #{deep_scaffold_likelihood.1} parent=1 // pred_check_branch
      %302 = sbr.rel (0) target = $region113
    $region112: #{deep_scaffold_likelihood.1} parent=1 // pred_region
      %s304 = ssub.s32 16, 16
      %305 = vsyncadd [#allocation4], %s304
      %s307 = sshll.u32 [#allocation3], 4
      %s308 = int_to_ptr.vmem [resolvable:$true] %s307
      %310 = dma.hbm_to_vmem [thread:$0]  %s55, 16, %s308, [#allocation4]
    $region113: #{deep_scaffold_likelihood.1} parent=1 // pred_fallthru
      _
    // Predicated region
    $region114: #{deep_scaffold_likelihood.1} parent=1 // pred_check
      _
    $region115: #{deep_scaffold_likelihood.1} parent=1 // pred_check_branch
      %312 = sbr.rel (0) target = $region117
    $region116: #{deep_scaffold_likelihood.1} parent=1 // pred_region
      %s314 = ssub.s32 16, 16
      %315 = vsyncadd [#allocation6], %s314
      %s317 = sshll.u32 [#allocation5], 4
      %s318 = int_to_ptr.vmem [resolvable:$true] %s317
      %320 = dma.hbm_to_vmem [thread:$0]  %s57, 16, %s318, [#allocation6]
    $region117: #{deep_scaffold_likelihood.1} parent=1 // pred_fallthru
      _
    // Predicated region
    $region118: #{deep_scaffold_likelihood.1} parent=1 // pred_check
      _
    $region119: #{deep_scaffold_likelihood.1} parent=1 // pred_check_branch
      %322 = sbr.rel (0) target = $region121
    $region120: #{deep_scaffold_likelihood.1} parent=1 // pred_region
      %s324 = ssub.s32 16, 16
      %325 = vsyncadd [#allocation6], %s324
      %s327 = sshll.u32 [#allocation7], 4
      %s328 = int_to_ptr.vmem [resolvable:$true] %s327
      %330 = dma.hbm_to_vmem [thread:$0]  %s59, 16, %s328, [#allocation6]
    $region121: #{deep_scaffold_likelihood.1} parent=1 // pred_fallthru
      _
    // Predicated region
    $region122: #{deep_scaffold_likelihood.1} parent=1 // pred_check
      _
    $region123: #{deep_scaffold_likelihood.1} parent=1 // pred_check_branch
      %332 = sbr.rel (0) target = $region125
    $region124: #{deep_scaffold_likelihood.1} parent=1 // pred_region
      _
    $region125: #{deep_scaffold_likelihood.1} parent=1 // pred_fallthru
      _
    // Predicated region
    $region126: #{deep_scaffold_likelihood.1} parent=1 // pred_check
      _
    $region127: #{deep_scaffold_likelihood.1} parent=1 // pred_check_branch
      %334 = sbr.rel (0) target = $region129
    $region128: #{deep_scaffold_likelihood.1} parent=1 // pred_region
      %s336 = ssub.s32 16, 16
      %337 = vsyncadd [#allocation9], %s336
      %s339 = sshll.u32 [#allocation8], 4
      %s340 = int_to_ptr.vmem [resolvable:$true] %s339
      %342 = dma.hbm_to_vmem [thread:$0]  %s63, 16, %s340, [#allocation9]
    $region129: #{deep_scaffold_likelihood.1} parent=1 // pred_fallthru
      _
    // Predicated region
    $region130: #{deep_scaffold_likelihood.1} parent=1 // pred_check
      _
    $region131: #{deep_scaffold_likelihood.1} parent=1 // pred_check_branch
      %344 = sbr.rel (0) target = $region133
    $region132: #{deep_scaffold_likelihood.1} parent=1 // pred_region
      %s346 = ssub.s32 16, 16
      %347 = vsyncadd [#allocation9], %s346
      %s349 = sshll.u32 [#allocation10], 4
      %s350 = int_to_ptr.vmem [resolvable:$true] %s349
      %352 = dma.hbm_to_vmem [thread:$0]  %s65, 16, %s350, [#allocation9]
    $region133: #{deep_scaffold_likelihood.1} parent=1 // pred_fallthru
      _
    // Predicated region
    $region134: #{deep_scaffold_likelihood.1} parent=1 // pred_check
      _
    $region135: #{deep_scaffold_likelihood.1} parent=1 // pred_check_branch
      %354 = sbr.rel (0) target = $region137
    $region136: #{deep_scaffold_likelihood.1} parent=1 // pred_region
      %s356 = ssub.s32 16, 16
      %357 = vsyncadd [#allocation12], %s356
      %s359 = sshll.u32 [#allocation11], 4
      %s360 = int_to_ptr.vmem [resolvable:$true] %s359
      %362 = dma.hbm_to_vmem [thread:$0]  %s67, 16, %s360, [#allocation12]
    $region137: #{deep_scaffold_likelihood.1} parent=1 // pred_fallthru
      _
    // Predicated region
    $region138: #{deep_scaffold_likelihood.1} parent=1 // pred_check
      _
    $region139: #{deep_scaffold_likelihood.1} parent=1 // pred_check_branch
      %364 = sbr.rel (0) target = $region141
    $region140: #{deep_scaffold_likelihood.1} parent=1 // pred_region
      %s366 = ssub.s32 16, 16
      %367 = vsyncadd [#allocation12], %s366
      %s369 = sshll.u32 [#allocation13], 4
      %s370 = int_to_ptr.vmem [resolvable:$true] %s369
      %372 = dma.hbm_to_vmem [thread:$0]  %s69, 16, %s370, [#allocation12]
    $region141: #{deep_scaffold_likelihood.1} parent=1 // pred_fallthru
      _
    // Predicated region
    $region142: #{deep_scaffold_likelihood.1} parent=1 // pred_check
      _
    $region143: #{deep_scaffold_likelihood.1} parent=1 // pred_check_branch
      %374 = sbr.rel (0) target = $region145
    $region144: #{deep_scaffold_likelihood.1} parent=1 // pred_region
      %s376 = ssub.s32 16, 16
      %377 = vsyncadd [#allocation15], %s376
      %s379 = sshll.u32 [#allocation14], 4
      %s380 = int_to_ptr.vmem [resolvable:$true] %s379
      %382 = dma.hbm_to_vmem [thread:$0]  %s71, 16, %s380, [#allocation15]
    $region145: #{deep_scaffold_likelihood.1} parent=1 // pred_fallthru
      _
    // Predicated region
    $region146: #{deep_scaffold_likelihood.1} parent=1 // pred_check
      _
    $region147: #{deep_scaffold_likelihood.1} parent=1 // pred_check_branch
      %384 = sbr.rel (0) target = $region149
    $region148: #{deep_scaffold_likelihood.1} parent=1 // pred_region
      %s386 = ssub.s32 16, 16
      %387 = vsyncadd [#allocation15], %s386
      %s389 = sshll.u32 [#allocation16], 4
      %s390 = int_to_ptr.vmem [resolvable:$true] %s389
      %392 = dma.hbm_to_vmem [thread:$0]  %s73, 16, %s390, [#allocation15]
    $region149: #{deep_scaffold_likelihood.1} parent=1 // pred_fallthru
      _
    // Predicated region
    $region150: #{deep_scaffold_likelihood.1} parent=1 // pred_check
      _
    $region151: #{deep_scaffold_likelihood.1} parent=1 // pred_check_branch
      %394 = sbr.rel (0) target = $region153
    $region152: #{deep_scaffold_likelihood.1} parent=1 // pred_region
      %s396 = ssub.s32 16, 16
      %397 = vsyncadd [#allocation18], %s396
      %s399 = sshll.u32 [#allocation17], 4
      %s400 = int_to_ptr.vmem [resolvable:$true] %s399
      %402 = dma.hbm_to_vmem [thread:$0]  %s75, 16, %s400, [#allocation18]
    $region153: #{deep_scaffold_likelihood.1} parent=1 // pred_fallthru
      _
    // Predicated region
    $region154: #{deep_scaffold_likelihood.1} parent=1 // pred_check
      _
    $region155: #{deep_scaffold_likelihood.1} parent=1 // pred_check_branch
      %404 = sbr.rel (0) target = $region157
    $region156: #{deep_scaffold_likelihood.1} parent=1 // pred_region
      %s406 = ssub.s32 16, 16
      %407 = vsyncadd [#allocation18], %s406
      %s409 = sshll.u32 [#allocation19], 4
      %s410 = int_to_ptr.vmem [resolvable:$true] %s409
      %412 = dma.hbm_to_vmem [thread:$0]  %s77, 16, %s410, [#allocation18]
    $region157: #{deep_scaffold_likelihood.1} parent=1 // pred_fallthru
      _
    // Predicated region
    $region158: #{deep_scaffold_likelihood.1} parent=1 // pred_check
      _
    $region159: #{deep_scaffold_likelihood.1} parent=1 // pred_check_branch
      %414 = sbr.rel (0) target = $region161
    $region160: #{deep_scaffold_likelihood.1} parent=1 // pred_region
      %s416 = ssub.s32 16, 16
      %417 = vsyncadd [#allocation21], %s416
      %s419 = sshll.u32 [#allocation20], 4
      %s420 = int_to_ptr.vmem [resolvable:$true] %s419
      %422 = dma.hbm_to_vmem [thread:$0]  %s79, 16, %s420, [#allocation21]
    $region161: #{deep_scaffold_likelihood.1} parent=1 // pred_fallthru
      _
    // Predicated region
    $region162: #{deep_scaffold_likelihood.1} parent=1 // pred_check
      _
    $region163: #{deep_scaffold_likelihood.1} parent=1 // pred_check_branch
      %424 = sbr.rel (0) target = $region165
    $region164: #{deep_scaffold_likelihood.1} parent=1 // pred_region
      %s426 = ssub.s32 16, 16
      %427 = vsyncadd [#allocation21], %s426
      %s429 = sshll.u32 [#allocation22], 4
      %s430 = int_to_ptr.vmem [resolvable:$true] %s429
      %432 = dma.hbm_to_vmem [thread:$0]  %s81, 16, %s430, [#allocation21]
    $region165: #{deep_scaffold_likelihood.1} parent=1 // pred_fallthru
      _
    // Predicated region
    $region166: #{deep_scaffold_likelihood.1} parent=1 // pred_check
      _
    $region167: #{deep_scaffold_likelihood.1} parent=1 // pred_check_branch
      %434 = sbr.rel (0) target = $region169
    $region168: #{deep_scaffold_likelihood.1} parent=1 // pred_region
      %s436 = ssub.s32 16, 16
      %437 = vsyncadd [#allocation24], %s436
      %s439 = sshll.u32 [#allocation23], 4
      %s440 = int_to_ptr.vmem [resolvable:$true] %s439
      %442 = dma.hbm_to_vmem [thread:$0]  %s83, 16, %s440, [#allocation24]
    $region169: #{deep_scaffold_likelihood.1} parent=1 // pred_fallthru
      _
    // Predicated region
    $region170: #{deep_scaffold_likelihood.1} parent=1 // pred_check
      _
    $region171: #{deep_scaffold_likelihood.1} parent=1 // pred_check_branch
      %444 = sbr.rel (0) target = $region173
    $region172: #{deep_scaffold_likelihood.1} parent=1 // pred_region
      %s446 = ssub.s32 16, 16
      %447 = vsyncadd [#allocation24], %s446
      %s449 = sshll.u32 [#allocation25], 4
      %s450 = int_to_ptr.vmem [resolvable:$true] %s449
      %452 = dma.hbm_to_vmem [thread:$0]  %s85, 16, %s450, [#allocation24]
    $region173: #{deep_scaffold_likelihood.1} parent=1 // pred_fallthru
      _
    // Predicated region
    $region174: #{deep_scaffold_likelihood.1} parent=1 // pred_check
      _
    $region175: #{deep_scaffold_likelihood.1} parent=1 // pred_check_branch
      %454 = sbr.rel (0) target = $region177
    $region176: #{deep_scaffold_likelihood.1} parent=1 // pred_region
      %s456 = ssub.s32 16, 16
      %457 = vsyncadd [#allocation27], %s456
      %s459 = sshll.u32 [#allocation26], 4
      %s460 = int_to_ptr.vmem [resolvable:$true] %s459
      %462 = dma.hbm_to_vmem [thread:$0]  %s87, 16, %s460, [#allocation27]
    $region177: #{deep_scaffold_likelihood.1} parent=1 // pred_fallthru
      _
    // Predicated region
    $region178: #{deep_scaffold_likelihood.1} parent=1 // pred_check
      _
    $region179: #{deep_scaffold_likelihood.1} parent=1 // pred_check_branch
      %464 = sbr.rel (0) target = $region181
    $region180: #{deep_scaffold_likelihood.1} parent=1 // pred_region
      %s466 = ssub.s32 16, 16
      %467 = vsyncadd [#allocation27], %s466
      %s469 = sshll.u32 [#allocation28], 4
      %s470 = int_to_ptr.vmem [resolvable:$true] %s469
      %472 = dma.hbm_to_vmem [thread:$0]  %s89, 16, %s470, [#allocation27]
    $region181: #{deep_scaffold_likelihood.1} parent=1 // pred_fallthru
      _
    // Predicated region
    $region182: #{deep_scaffold_likelihood.1} parent=1 // pred_check
      _
    $region183: #{deep_scaffold_likelihood.1} parent=1 // pred_check_branch
      %474 = sbr.rel (0) target = $region185
    $region184: #{deep_scaffold_likelihood.1} parent=1 // pred_region
      %s476 = ssub.s32 16, 16
      %477 = vsyncadd [#allocation30], %s476
      %s479 = sshll.u32 [#allocation29], 4
      %s480 = int_to_ptr.vmem [resolvable:$true] %s479
      %482 = dma.hbm_to_vmem [thread:$0]  %s91, 16, %s480, [#allocation30]
    $region185: #{deep_scaffold_likelihood.1} parent=1 // pred_fallthru
      _
    // Predicated region
    $region186: #{deep_scaffold_likelihood.1} parent=1 // pred_check
      _
    $region187: #{deep_scaffold_likelihood.1} parent=1 // pred_check_branch
      %484 = sbr.rel (0) target = $region189
    $region188: #{deep_scaffold_likelihood.1} parent=1 // pred_region
      %s486 = ssub.s32 16, 16
      %487 = vsyncadd [#allocation30], %s486
      %s489 = sshll.u32 [#allocation31], 4
      %s490 = int_to_ptr.vmem [resolvable:$true] %s489
      %492 = dma.hbm_to_vmem [thread:$0]  %s93, 16, %s490, [#allocation30]
    $region189: #{deep_scaffold_likelihood.1} parent=1 // pred_fallthru
      _
    // Predicated region
    $region190: #{deep_scaffold_likelihood.1} parent=1 // pred_check
      _
    $region191: #{deep_scaffold_likelihood.1} parent=1 // pred_check_branch
      %494 = sbr.rel (0) target = $region193
    $region192: #{deep_scaffold_likelihood.1} parent=1 // pred_region
      %s496 = ssub.s32 16, 16
      %497 = vsyncadd [#allocation33], %s496
      %s499 = sshll.u32 [#allocation32], 4
      %s500 = int_to_ptr.vmem [resolvable:$true] %s499
      %502 = dma.hbm_to_vmem [thread:$0]  %s95, 16, %s500, [#allocation33]
    $region193: #{deep_scaffold_likelihood.1} parent=1 // pred_fallthru
      _
    // Predicated region
    $region194: #{deep_scaffold_likelihood.1} parent=1 // pred_check
      _
    $region195: #{deep_scaffold_likelihood.1} parent=1 // pred_check_branch
      %504 = sbr.rel (0) target = $region197
    $region196: #{deep_scaffold_likelihood.1} parent=1 // pred_region
      _
    $region197: #{deep_scaffold_likelihood.1} parent=1 // pred_fallthru
      _
    // Predicated region
    $region198: #{deep_scaffold_likelihood.1} parent=1 // pred_check
      _
    $region199: #{deep_scaffold_likelihood.1} parent=1 // pred_check_branch
      %506 = sbr.rel (0) target = $region201
    $region200: #{deep_scaffold_likelihood.1} parent=1 // pred_region
      _
    $region201: #{deep_scaffold_likelihood.1} parent=1 // pred_fallthru
      _
    // Predicated region
    $region202: #{deep_scaffold_likelihood.1} parent=1 // pred_check
      _
    $region203: #{deep_scaffold_likelihood.1} parent=1 // pred_check_branch
      %508 = sbr.rel (0) target = $region205
    $region204: #{deep_scaffold_likelihood.1} parent=1 // pred_region
      _
    $region205: #{deep_scaffold_likelihood.1} parent=1 // pred_fallthru
      _
    // Predicated region
    $region206: #{deep_scaffold_likelihood.1} parent=1 // pred_check
      _
    $region207: #{deep_scaffold_likelihood.1} parent=1 // pred_check_branch
      %510 = sbr.rel (0) target = $region209
    $region208: #{deep_scaffold_likelihood.1} parent=1 // pred_region
      _
    $region209: #{deep_scaffold_likelihood.1} parent=1 // pred_fallthru
      _
    // Predicated region
    $region210: #{deep_scaffold_likelihood.1} parent=1 // pred_check
      _
    $region211: #{deep_scaffold_likelihood.1} parent=1 // pred_check_branch
      %512 = sbr.rel (0) target = $region213
    $region212: #{deep_scaffold_likelihood.1} parent=1 // pred_region
      _
    $region213: #{deep_scaffold_likelihood.1} parent=1 // pred_fallthru
      _
    // Predicated region
    $region214: #{deep_scaffold_likelihood.1} parent=1 // pred_check
      _
    $region215: #{deep_scaffold_likelihood.1} parent=1 // pred_check_branch
      %514 = sbr.rel (0) target = $region217
    $region216: #{deep_scaffold_likelihood.1} parent=1 // pred_region
      _
    $region217: #{deep_scaffold_likelihood.1} parent=1 // pred_fallthru
      _
    // Predicated region
    $region218: #{deep_scaffold_likelihood.1} parent=1 // pred_check
      _
    $region219: #{deep_scaffold_likelihood.1} parent=1 // pred_check_branch
      %516 = sbr.rel (0) target = $region221
    $region220: #{deep_scaffold_likelihood.1} parent=1 // pred_region
      _
    $region221: #{deep_scaffold_likelihood.1} parent=1 // pred_fallthru
      _
    // Predicated region
    $region222: #{deep_scaffold_likelihood.1} parent=1 // pred_check
      _
    $region223: #{deep_scaffold_likelihood.1} parent=1 // pred_check_branch
      %518 = sbr.rel (0) target = $region225
    $region224: #{deep_scaffold_likelihood.1} parent=1 // pred_region
      _
    $region225: #{deep_scaffold_likelihood.1} parent=1 // pred_fallthru
      _
    // Predicated region
    $region226: #{deep_scaffold_likelihood.1} parent=1 // pred_check
      _
    $region227: #{deep_scaffold_likelihood.1} parent=1 // pred_check_branch
      %520 = sbr.rel (0) target = $region229
    $region228: #{deep_scaffold_likelihood.1} parent=1 // pred_region
      %s522 = ssub.s32 16, 16
      %523 = vsyncadd [#allocation33], %s522
      %s525 = sshll.u32 [#allocation34], 4
      %s526 = int_to_ptr.vmem [resolvable:$true] %s525
      %528 = dma.hbm_to_vmem [thread:$0]  %s113, 16, %s526, [#allocation33]
    $region229: #{deep_scaffold_likelihood.1} parent=1 // pred_fallthru
      _
    // Predicated region
    $region230: #{deep_scaffold_likelihood.1} parent=1 // pred_check
      _
    $region231: #{deep_scaffold_likelihood.1} parent=1 // pred_check_branch
      %530 = sbr.rel (0) target = $region233
    $region232: #{deep_scaffold_likelihood.1} parent=1 // pred_region
      %s532 = ssub.s32 16, 16
      %533 = vsyncadd [#allocation36], %s532
      %s535 = sshll.u32 [#allocation35], 4
      %s536 = int_to_ptr.vmem [resolvable:$true] %s535
      %538 = dma.hbm_to_vmem [thread:$0]  %s115, 16, %s536, [#allocation36]
    $region233: #{deep_scaffold_likelihood.1} parent=1 // pred_fallthru
      _
    // Predicated region
    $region234: #{deep_scaffold_likelihood.1} parent=1 // pred_check
      _
    $region235: #{deep_scaffold_likelihood.1} parent=1 // pred_check_branch
      %540 = sbr.rel (0) target = $region237
    $region236: #{deep_scaffold_likelihood.1} parent=1 // pred_region
      %s542 = ssub.s32 16, 16
      %543 = vsyncadd [#allocation36], %s542
      %s545 = sshll.u32 [#allocation37], 4
      %s546 = int_to_ptr.vmem [resolvable:$true] %s545
      %548 = dma.hbm_to_vmem [thread:$0]  %s117, 16, %s546, [#allocation36]
    $region237: #{deep_scaffold_likelihood.1} parent=1 // pred_fallthru
      _
    // Predicated region
    $region238: #{deep_scaffold_likelihood.1} parent=1 // pred_check
      _
    $region239: #{deep_scaffold_likelihood.1} parent=1 // pred_check_branch
      %550 = sbr.rel (0) target = $region241
    $region240: #{deep_scaffold_likelihood.1} parent=1 // pred_region
      _
    $region241: #{deep_scaffold_likelihood.1} parent=1 // pred_fallthru
      _
    // Predicated region
    $region242: #{deep_scaffold_likelihood.1} parent=1 // pred_check
      _
    $region243: #{deep_scaffold_likelihood.1} parent=1 // pred_check_branch
      %552 = sbr.rel (0) target = $region245
    $region244: #{deep_scaffold_likelihood.1} parent=1 // pred_region
      %s554 = ssub.s32 16, 16
      %555 = vsyncadd [#allocation39], %s554
      %s557 = sshll.u32 [#allocation38], 4
      %s558 = int_to_ptr.vmem [resolvable:$true] %s557
      %560 = dma.hbm_to_vmem [thread:$0]  %s121, 16, %s558, [#allocation39]
    $region245: #{deep_scaffold_likelihood.1} parent=1 // pred_fallthru
      _
    // Predicated region
    $region246: #{deep_scaffold_likelihood.1} parent=1 // pred_check
      _
    $region247: #{deep_scaffold_likelihood.1} parent=1 // pred_check_branch
      %562 = sbr.rel (0) target = $region249
    $region248: #{deep_scaffold_likelihood.1} parent=1 // pred_region
      %s564 = ssub.s32 16, 16
      %565 = vsyncadd [#allocation39], %s564
      %s567 = sshll.u32 [#allocation40], 4
      %s568 = int_to_ptr.vmem [resolvable:$true] %s567
      %570 = dma.hbm_to_vmem [thread:$0]  %s123, 16, %s568, [#allocation39]
    $region249: #{deep_scaffold_likelihood.1} parent=1 // pred_fallthru
      _
    // Predicated region
    $region250: #{deep_scaffold_likelihood.1} parent=1 // pred_check
      _
    $region251: #{deep_scaffold_likelihood.1} parent=1 // pred_check_branch
      %572 = sbr.rel (0) target = $region253
    $region252: #{deep_scaffold_likelihood.1} parent=1 // pred_region
      %s574 = ssub.s32 16, 16
      %575 = vsyncadd [#allocation42], %s574
      %s577 = sshll.u32 [#allocation41], 4
      %s578 = int_to_ptr.vmem [resolvable:$true] %s577
      %580 = dma.hbm_to_vmem [thread:$0]  %s125, 16, %s578, [#allocation42]
    $region253: #{deep_scaffold_likelihood.1} parent=1 // pred_fallthru
      _
    // Predicated region
    $region254: #{deep_scaffold_likelihood.1} parent=1 // pred_check
      _
    $region255: #{deep_scaffold_likelihood.1} parent=1 // pred_check_branch
      %582 = sbr.rel (0) target = $region257
    $region256: #{deep_scaffold_likelihood.1} parent=1 // pred_region
      _
    $region257: #{deep_scaffold_likelihood.1} parent=1 // pred_fallthru
      _
    // Predicated region
    $region258: #{deep_scaffold_likelihood.1} parent=1 // pred_check
      _
    $region259: #{deep_scaffold_likelihood.1} parent=1 // pred_check_branch
      %584 = sbr.rel (0) target = $region261
    $region260: #{deep_scaffold_likelihood.1} parent=1 // pred_region
      %s586 = ssub.s32 16, 16
      %587 = vsyncadd [#allocation42], %s586
      %s589 = sshll.u32 [#allocation43], 4
      %s590 = int_to_ptr.vmem [resolvable:$true] %s589
      %592 = dma.hbm_to_vmem [thread:$0]  %s129, 16, %s590, [#allocation42]
    $region261: #{deep_scaffold_likelihood.1} parent=1 // pred_fallthru
      _
    // Predicated region
    $region262: #{deep_scaffold_likelihood.1} parent=1 // pred_check
      _
    $region263: #{deep_scaffold_likelihood.1} parent=1 // pred_check_branch
      %594 = sbr.rel (0) target = $region265
    $region264: #{deep_scaffold_likelihood.1} parent=1 // pred_region
      %s596 = ssub.s32 16, 16
      %597 = vsyncadd [#allocation45], %s596
      %s599 = sshll.u32 [#allocation44], 4
      %s600 = int_to_ptr.vmem [resolvable:$true] %s599
      %602 = dma.hbm_to_vmem [thread:$0]  %s131, 16, %s600, [#allocation45]
    $region265: #{deep_scaffold_likelihood.1} parent=1 // pred_fallthru
      _
    // Predicated region
    $region266: #{deep_scaffold_likelihood.1} parent=1 // pred_check
      _
    $region267: #{deep_scaffold_likelihood.1} parent=1 // pred_check_branch
      %604 = sbr.rel (0) target = $region269
    $region268: #{deep_scaffold_likelihood.1} parent=1 // pred_region
      %s606 = ssub.s32 16, 16
      %607 = vsyncadd [#allocation45], %s606
      %s609 = sshll.u32 [#allocation46], 4
      %s610 = int_to_ptr.vmem [resolvable:$true] %s609
      %612 = dma.hbm_to_vmem [thread:$0]  %s133, 16, %s610, [#allocation45]
    $region269: #{deep_scaffold_likelihood.1} parent=1 // pred_fallthru
      _
    // Predicated region
    $region270: #{deep_scaffold_likelihood.1} parent=1 // pred_check
      _
    $region271: #{deep_scaffold_likelihood.1} parent=1 // pred_check_branch
      %614 = sbr.rel (0) target = $region273
    $region272: #{deep_scaffold_likelihood.1} parent=1 // pred_region
      %s616 = ssub.s32 16, 16
      %617 = vsyncadd [#allocation48], %s616
      %s619 = sshll.u32 [#allocation47], 4
      %s620 = int_to_ptr.vmem [resolvable:$true] %s619
      %622 = dma.hbm_to_vmem [thread:$0]  %s135, 16, %s620, [#allocation48]
    $region273: #{deep_scaffold_likelihood.1} parent=1 // pred_fallthru
      _
    // Predicated region
    $region274: #{deep_scaffold_likelihood.1} parent=1 // pred_check
      _
    $region275: #{deep_scaffold_likelihood.1} parent=1 // pred_check_branch
      %624 = sbr.rel (0) target = $region277
    $region276: #{deep_scaffold_likelihood.1} parent=1 // pred_region
      %s626 = ssub.s32 16, 16
      %627 = vsyncadd [#allocation48], %s626
      %s629 = sshll.u32 [#allocation49], 4
      %s630 = int_to_ptr.vmem [resolvable:$true] %s629
      %632 = dma.hbm_to_vmem [thread:$0]  %s137, 16, %s630, [#allocation48]
    $region277: #{deep_scaffold_likelihood.1} parent=1 // pred_fallthru
      _
    // Predicated region
    $region278: #{deep_scaffold_likelihood.1} parent=1 // pred_check
      _
    $region279: #{deep_scaffold_likelihood.1} parent=1 // pred_check_branch
      %634 = sbr.rel (0) target = $region281
    $region280: #{deep_scaffold_likelihood.1} parent=1 // pred_region
      _
    $region281: #{deep_scaffold_likelihood.1} parent=1 // pred_fallthru
      _
    // Predicated region
    $region282: #{deep_scaffold_likelihood.1} parent=1 // pred_check
      _
    $region283: #{deep_scaffold_likelihood.1} parent=1 // pred_check_branch
      %636 = sbr.rel (0) target = $region285
    $region284: #{deep_scaffold_likelihood.1} parent=1 // pred_region
      _
    $region285: #{deep_scaffold_likelihood.1} parent=1 // pred_fallthru
      _
    // Predicated region
    $region286: #{deep_scaffold_likelihood.1} parent=1 // pred_check
      _
    $region287: #{deep_scaffold_likelihood.1} parent=1 // pred_check_branch
      %638 = sbr.rel (0) target = $region289
    $region288: #{deep_scaffold_likelihood.1} parent=1 // pred_region
      %s640 = ssub.s32 16, 16
      %641 = vsyncadd [#allocation51], %s640
      %s643 = sshll.u32 [#allocation50], 4
      %s644 = int_to_ptr.vmem [resolvable:$true] %s643
      %646 = dma.hbm_to_vmem [thread:$0]  %s143, 16, %s644, [#allocation51]
    $region289: #{deep_scaffold_likelihood.1} parent=1 // pred_fallthru
      _
    // Predicated region
    $region290: #{deep_scaffold_likelihood.1} parent=1 // pred_check
      _
    $region291: #{deep_scaffold_likelihood.1} parent=1 // pred_check_branch
      %648 = sbr.rel (0) target = $region293
    $region292: #{deep_scaffold_likelihood.1} parent=1 // pred_region
      %s650 = ssub.s32 16, 16
      %651 = vsyncadd [#allocation51], %s650
      %s653 = sshll.u32 [#allocation52], 4
      %s654 = int_to_ptr.vmem [resolvable:$true] %s653
      %656 = dma.hbm_to_vmem [thread:$0]  %s145, 16, %s654, [#allocation51]
    $region293: #{deep_scaffold_likelihood.1} parent=1 // pred_fallthru
      _
    // Predicated region
    $region294: #{deep_scaffold_likelihood.1} parent=1 // pred_check
      _
    $region295: #{deep_scaffold_likelihood.1} parent=1 // pred_check_branch
      %658 = sbr.rel (0) target = $region297
    $region296: #{deep_scaffold_likelihood.1} parent=1 // pred_region
      %s660 = ssub.s32 16, 16
      %661 = vsyncadd [#allocation54], %s660
      %s663 = sshll.u32 [#allocation53], 4
      %s664 = int_to_ptr.vmem [resolvable:$true] %s663
      %666 = dma.hbm_to_vmem [thread:$0]  %s147, 16, %s664, [#allocation54]
    $region297: #{deep_scaffold_likelihood.1} parent=1 // pred_fallthru
      _
    // Predicated region
    $region298: #{deep_scaffold_likelihood.1} parent=1 // pred_check
      _
    $region299: #{deep_scaffold_likelihood.1} parent=1 // pred_check_branch
      %668 = sbr.rel (0) target = $region301
    $region300: #{deep_scaffold_likelihood.1} parent=1 // pred_region
      %s670 = ssub.s32 16, 16
      %671 = vsyncadd [#allocation54], %s670
      %s673 = sshll.u32 [#allocation55], 4
      %s674 = int_to_ptr.vmem [resolvable:$true] %s673
      %676 = dma.hbm_to_vmem [thread:$0]  %s149, 16, %s674, [#allocation54]
    $region301: #{deep_scaffold_likelihood.1} parent=1 // pred_fallthru
      _
    // Predicated region
    $region302: #{deep_scaffold_likelihood.1} parent=1 // pred_check
      _
    $region303: #{deep_scaffold_likelihood.1} parent=1 // pred_check_branch
      %678 = sbr.rel (0) target = $region305
    $region304: #{deep_scaffold_likelihood.1} parent=1 // pred_region
      %s680 = ssub.s32 16, 16
      %681 = vsyncadd [#allocation57], %s680
      %s683 = sshll.u32 [#allocation56], 4
      %s684 = int_to_ptr.vmem [resolvable:$true] %s683
      %686 = dma.hbm_to_vmem [thread:$0]  %s151, 16, %s684, [#allocation57]
    $region305: #{deep_scaffold_likelihood.1} parent=1 // pred_fallthru
      _
    // Predicated region
    $region306: #{deep_scaffold_likelihood.1} parent=1 // pred_check
      _
    $region307: #{deep_scaffold_likelihood.1} parent=1 // pred_check_branch
      %688 = sbr.rel (0) target = $region309
    $region308: #{deep_scaffold_likelihood.1} parent=1 // pred_region
      %s690 = ssub.s32 16, 16
      %691 = vsyncadd [#allocation57], %s690
      %s693 = sshll.u32 [#allocation58], 4
      %s694 = int_to_ptr.vmem [resolvable:$true] %s693
      %696 = dma.hbm_to_vmem [thread:$0]  %s153, 16, %s694, [#allocation57]
    $region309: #{deep_scaffold_likelihood.1} parent=1 // pred_fallthru
      _
    // Predicated region
    $region310: #{deep_scaffold_likelihood.1} parent=1 // pred_check
      _
    $region311: #{deep_scaffold_likelihood.1} parent=1 // pred_check_branch
      %698 = sbr.rel (0) target = $region313
    $region312: #{deep_scaffold_likelihood.1} parent=1 // pred_region
      %s700 = ssub.s32 16, 16
      %701 = vsyncadd [#allocation60], %s700
      %s703 = sshll.u32 [#allocation59], 4
      %s704 = int_to_ptr.vmem [resolvable:$true] %s703
      %706 = dma.hbm_to_vmem [thread:$0]  %s155, 16, %s704, [#allocation60]
    $region313: #{deep_scaffold_likelihood.1} parent=1 // pred_fallthru
      _
    // Predicated region
    $region314: #{deep_scaffold_likelihood.1} parent=1 // pred_check
      _
    $region315: #{deep_scaffold_likelihood.1} parent=1 // pred_check_branch
      %708 = sbr.rel (0) target = $region317
    $region316: #{deep_scaffold_likelihood.1} parent=1 // pred_region
      %s710 = ssub.s32 16, 16
      %711 = vsyncadd [#allocation60], %s710
      %s713 = sshll.u32 [#allocation61], 4
      %s714 = int_to_ptr.vmem [resolvable:$true] %s713
      %716 = dma.hbm_to_vmem [thread:$0]  %s157, 16, %s714, [#allocation60]
    $region317: #{deep_scaffold_likelihood.1} parent=1 // pred_fallthru
      _
    // Predicated region
    $region318: #{deep_scaffold_likelihood.1} parent=1 // pred_check
      _
    $region319: #{deep_scaffold_likelihood.1} parent=1 // pred_check_branch
      %718 = sbr.rel (0) target = $region321
    $region320: #{deep_scaffold_likelihood.1} parent=1 // pred_region
      %s720 = ssub.s32 16, 16
      %721 = vsyncadd [#allocation63], %s720
      %s723 = sshll.u32 [#allocation62], 4
      %s724 = int_to_ptr.vmem [resolvable:$true] %s723
      %726 = dma.hbm_to_vmem [thread:$0]  %s159, 16, %s724, [#allocation63]
    $region321: #{deep_scaffold_likelihood.1} parent=1 // pred_fallthru
      _
    // Predicated region
    $region322: #{deep_scaffold_likelihood.1} parent=1 // pred_check
      _
    $region323: #{deep_scaffold_likelihood.1} parent=1 // pred_check_branch
      %728 = sbr.rel (0) target = $region325
    $region324: #{deep_scaffold_likelihood.1} parent=1 // pred_region
      %s730 = ssub.s32 16, 16
      %731 = vsyncadd [#allocation63], %s730
      %s733 = sshll.u32 [#allocation64], 4
      %s734 = int_to_ptr.vmem [resolvable:$true] %s733
      %736 = dma.hbm_to_vmem [thread:$0]  %s161, 16, %s734, [#allocation63]
    $region325: #{deep_scaffold_likelihood.1} parent=1 // pred_fallthru
      _
    // Predicated region
    $region326: #{deep_scaffold_likelihood.1} parent=1 // pred_check
      _
    $region327: #{deep_scaffold_likelihood.1} parent=1 // pred_check_branch
      %738 = sbr.rel (0) target = $region329
    $region328: #{deep_scaffold_likelihood.1} parent=1 // pred_region
      %s740 = ssub.s32 16, 16
      %741 = vsyncadd [#allocation66], %s740
      %s743 = sshll.u32 [#allocation65], 4
      %s744 = int_to_ptr.vmem [resolvable:$true] %s743
      %746 = dma.hbm_to_vmem [thread:$0]  %s163, 16, %s744, [#allocation66]
    $region329: #{deep_scaffold_likelihood.1} parent=1 // pred_fallthru
      _
    // Predicated region
    $region330: #{deep_scaffold_likelihood.1} parent=1 // pred_check
      _
    $region331: #{deep_scaffold_likelihood.1} parent=1 // pred_check_branch
      %748 = sbr.rel (0) target = $region333
    $region332: #{deep_scaffold_likelihood.1} parent=1 // pred_region
      %s750 = ssub.s32 16, 16
      %751 = vsyncadd [#allocation66], %s750
      %s753 = sshll.u32 [#allocation67], 4
      %s754 = int_to_ptr.vmem [resolvable:$true] %s753
      %756 = dma.hbm_to_vmem [thread:$0]  %s165, 16, %s754, [#allocation66]
    $region333: #{deep_scaffold_likelihood.1} parent=1 // pred_fallthru
      _
    // Predicated region
    $region334: #{deep_scaffold_likelihood.1} parent=1 // pred_check
      _
    $region335: #{deep_scaffold_likelihood.1} parent=1 // pred_check_branch
      %758 = sbr.rel (0) target = $region337
    $region336: #{deep_scaffold_likelihood.1} parent=1 // pred_region
      %s760 = ssub.s32 16, 16
      %761 = vsyncadd [#allocation69], %s760
      %s763 = sshll.u32 [#allocation68], 4
      %s764 = int_to_ptr.vmem [resolvable:$true] %s763
      %766 = dma.hbm_to_vmem [thread:$0]  %s167, 16, %s764, [#allocation69]
    $region337: #{deep_scaffold_likelihood.1} parent=1 // pred_fallthru
      _
    // Predicated region
    $region338: #{deep_scaffold_likelihood.1} parent=1 // pred_check
      _
    $region339: #{deep_scaffold_likelihood.1} parent=1 // pred_check_branch
      %768 = sbr.rel (0) target = $region341
    $region340: #{deep_scaffold_likelihood.1} parent=1 // pred_region
      %s770 = ssub.s32 16, 16
      %771 = vsyncadd [#allocation69], %s770
      %s773 = sshll.u32 [#allocation70], 4
      %s774 = int_to_ptr.vmem [resolvable:$true] %s773
      %776 = dma.hbm_to_vmem [thread:$0]  %s169, 16, %s774, [#allocation69]
    $region341: #{deep_scaffold_likelihood.1} parent=1 // pred_fallthru
      _
    // Predicated region
    $region342: #{deep_scaffold_likelihood.1} parent=1 // pred_check
      _
    $region343: #{deep_scaffold_likelihood.1} parent=1 // pred_check_branch
      %778 = sbr.rel (0) target = $region345
    $region344: #{deep_scaffold_likelihood.1} parent=1 // pred_region
      %s780 = ssub.s32 16, 16
      %781 = vsyncadd [#allocation72], %s780
      %s783 = sshll.u32 [#allocation71], 4
      %s784 = int_to_ptr.vmem [resolvable:$true] %s783
      %786 = dma.hbm_to_vmem [thread:$0]  %s171, 16, %s784, [#allocation72]
    $region345: #{deep_scaffold_likelihood.1} parent=1 // pred_fallthru
      _
    // Predicated region
    $region346: #{deep_scaffold_likelihood.1} parent=1 // pred_check
      _
    $region347: #{deep_scaffold_likelihood.1} parent=1 // pred_check_branch
      %788 = sbr.rel (0) target = $region349
    $region348: #{deep_scaffold_likelihood.1} parent=1 // pred_region
      %s790 = ssub.s32 16, 16
      %791 = vsyncadd [#allocation72], %s790
      %s793 = sshll.u32 [#allocation73], 4
      %s794 = int_to_ptr.vmem [resolvable:$true] %s793
      %796 = dma.hbm_to_vmem [thread:$0]  %s173, 16, %s794, [#allocation72]
    $region349: #{deep_scaffold_likelihood.1} parent=1 // pred_fallthru
      _
    // Predicated region
    $region350: #{deep_scaffold_likelihood.1} parent=1 // pred_check
      _
    $region351: #{deep_scaffold_likelihood.1} parent=1 // pred_check_branch
      %798 = sbr.rel (0) target = $region353
    $region352: #{deep_scaffold_likelihood.1} parent=1 // pred_region
      %s800 = ssub.s32 16, 16
      %801 = vsyncadd [#allocation75], %s800
      %s803 = sshll.u32 [#allocation74], 4
      %s804 = int_to_ptr.vmem [resolvable:$true] %s803
      %806 = dma.hbm_to_vmem [thread:$0]  %s175, 16, %s804, [#allocation75]
    $region353: #{deep_scaffold_likelihood.1} parent=1 // pred_fallthru
      _
    // Predicated region
    $region354: #{deep_scaffold_likelihood.1} parent=1 // pred_check
      _
    $region355: #{deep_scaffold_likelihood.1} parent=1 // pred_check_branch
      %808 = sbr.rel (0) target = $region357
    $region356: #{deep_scaffold_likelihood.1} parent=1 // pred_region
      _
    $region357: #{deep_scaffold_likelihood.1} parent=1 // pred_fallthru
      _
    // Predicated region
    $region358: #{deep_scaffold_likelihood.1} parent=1 // pred_check
      _
    $region359: #{deep_scaffold_likelihood.1} parent=1 // pred_check_branch
      %810 = sbr.rel (0) target = $region361
    $region360: #{deep_scaffold_likelihood.1} parent=1 // pred_region
      _
    $region361: #{deep_scaffold_likelihood.1} parent=1 // pred_fallthru
      _
    // Predicated region
    $region362: #{deep_scaffold_likelihood.1} parent=1 // pred_check
      _
    $region363: #{deep_scaffold_likelihood.1} parent=1 // pred_check_branch
      %812 = sbr.rel (0) target = $region365
    $region364: #{deep_scaffold_likelihood.1} parent=1 // pred_region
      _
    $region365: #{deep_scaffold_likelihood.1} parent=1 // pred_fallthru
      _
    // Predicated region
    $region366: #{deep_scaffold_likelihood.1} parent=1 // pred_check
      _
    $region367: #{deep_scaffold_likelihood.1} parent=1 // pred_check_branch
      %814 = sbr.rel (0) target = $region369
    $region368: #{deep_scaffold_likelihood.1} parent=1 // pred_region
      _
    $region369: #{deep_scaffold_likelihood.1} parent=1 // pred_fallthru
      _
    // Predicated region
    $region370: #{deep_scaffold_likelihood.1} parent=1 // pred_check
      _
    $region371: #{deep_scaffold_likelihood.1} parent=1 // pred_check_branch
      %816 = sbr.rel (0) target = $region373
    $region372: #{deep_scaffold_likelihood.1} parent=1 // pred_region
      _
    $region373: #{deep_scaffold_likelihood.1} parent=1 // pred_fallthru
      _
    // Predicated region
    $region374: #{deep_scaffold_likelihood.1} parent=1 // pred_check
      _
    $region375: #{deep_scaffold_likelihood.1} parent=1 // pred_check_branch
      %818 = sbr.rel (0) target = $region377
    $region376: #{deep_scaffold_likelihood.1} parent=1 // pred_region
      _
    $region377: #{deep_scaffold_likelihood.1} parent=1 // pred_fallthru
      _
    // Predicated region
    $region378: #{deep_scaffold_likelihood.1} parent=1 // pred_check
      _
    $region379: #{deep_scaffold_likelihood.1} parent=1 // pred_check_branch
      %820 = sbr.rel (0) target = $region381
    $region380: #{deep_scaffold_likelihood.1} parent=1 // pred_region
      _
    $region381: #{deep_scaffold_likelihood.1} parent=1 // pred_fallthru
      _
    // Predicated region
    $region382: #{deep_scaffold_likelihood.1} parent=1 // pred_check
      _
    $region383: #{deep_scaffold_likelihood.1} parent=1 // pred_check_branch
      %822 = sbr.rel (0) target = $region385
    $region384: #{deep_scaffold_likelihood.1} parent=1 // pred_region
      _
    $region385: #{deep_scaffold_likelihood.1} parent=1 // pred_fallthru
      _
    // Predicated region
    $region386: #{deep_scaffold_likelihood.1} parent=1 // pred_check
      _
    $region387: #{deep_scaffold_likelihood.1} parent=1 // pred_check_branch
      %824 = sbr.rel (0) target = $region389
    $region388: #{deep_scaffold_likelihood.1} parent=1 // pred_region
      %s826 = ssub.s32 16, 16
      %827 = vsyncadd [#allocation75], %s826
      %s829 = sshll.u32 [#allocation76], 4
      %s830 = int_to_ptr.vmem [resolvable:$true] %s829
      %832 = dma.hbm_to_vmem [thread:$0]  %s193, 16, %s830, [#allocation75]
    $region389: #{deep_scaffold_likelihood.1} parent=1 // pred_fallthru
      _
    // Predicated region
    $region390: #{deep_scaffold_likelihood.1} parent=1 // pred_check
      _
    $region391: #{deep_scaffold_likelihood.1} parent=1 // pred_check_branch
      %834 = sbr.rel (0) target = $region393
    $region392: #{deep_scaffold_likelihood.1} parent=1 // pred_region
      %s836 = ssub.s32 16, 16
      %837 = vsyncadd [#allocation78], %s836
      %s839 = sshll.u32 [#allocation77], 4
      %s840 = int_to_ptr.vmem [resolvable:$true] %s839
      %842 = dma.hbm_to_vmem [thread:$0]  %s195, 16, %s840, [#allocation78]
    $region393: #{deep_scaffold_likelihood.1} parent=1 // pred_fallthru
      _
    // Predicated region
    $region394: #{deep_scaffold_likelihood.1} parent=1 // pred_check
      _
    $region395: #{deep_scaffold_likelihood.1} parent=1 // pred_check_branch
      %844 = sbr.rel (0) target = $region397
    $region396: #{deep_scaffold_likelihood.1} parent=1 // pred_region
      %s846 = ssub.s32 16, 16
      %847 = vsyncadd [#allocation78], %s846
      %s849 = sshll.u32 [#allocation79], 4
      %s850 = int_to_ptr.vmem [resolvable:$true] %s849
      %852 = dma.hbm_to_vmem [thread:$0]  %s197, 16, %s850, [#allocation78]
    $region397: #{deep_scaffold_likelihood.1} parent=1 // pred_fallthru
      _
    // Predicated region
    $region398: #{deep_scaffold_likelihood.1} parent=1 // pred_check
      _
    $region399: #{deep_scaffold_likelihood.1} parent=1 // pred_check_branch
      %854 = sbr.rel (0) target = $region401
    $region400: #{deep_scaffold_likelihood.1} parent=1 // pred_region
      _
    $region401: #{deep_scaffold_likelihood.1} parent=1 // pred_fallthru
      _
    // Predicated region
    $region402: #{deep_scaffold_likelihood.1} parent=1 // pred_check
      _
    $region403: #{deep_scaffold_likelihood.1} parent=1 // pred_check_branch
      %856 = sbr.rel (0) target = $region405
    $region404: #{deep_scaffold_likelihood.1} parent=1 // pred_region
      %s858 = ssub.s32 16, 16
      %859 = vsyncadd [#allocation81], %s858
      %s861 = sshll.u32 [#allocation80], 4
      %s862 = int_to_ptr.vmem [resolvable:$true] %s861
      %864 = dma.hbm_to_vmem [thread:$0]  %s201, 16, %s862, [#allocation81]
    $region405: #{deep_scaffold_likelihood.1} parent=1 // pred_fallthru
      _
    // Predicated region
    $region406: #{deep_scaffold_likelihood.1} parent=1 // pred_check
      _
    $region407: #{deep_scaffold_likelihood.1} parent=1 // pred_check_branch
      %866 = sbr.rel (0) target = $region409
    $region408: #{deep_scaffold_likelihood.1} parent=1 // pred_region
      %s868 = ssub.s32 16, 16
      %869 = vsyncadd [#allocation81], %s868
      %s871 = sshll.u32 [#allocation82], 4
      %s872 = int_to_ptr.vmem [resolvable:$true] %s871
      %874 = dma.hbm_to_vmem [thread:$0]  %s203, 16, %s872, [#allocation81]
    $region409: #{deep_scaffold_likelihood.1} parent=1 // pred_fallthru
      _
    // Predicated region
    $region410: #{deep_scaffold_likelihood.1} parent=1 // pred_check
      _
    $region411: #{deep_scaffold_likelihood.1} parent=1 // pred_check_branch
      %876 = sbr.rel (0) target = $region413
    $region412: #{deep_scaffold_likelihood.1} parent=1 // pred_region
      %s878 = ssub.s32 16, 16
      %879 = vsyncadd [#allocation84], %s878
      %s881 = sshll.u32 [#allocation83], 4
      %s882 = int_to_ptr.vmem [resolvable:$true] %s881
      %884 = dma.hbm_to_vmem [thread:$0]  %s205, 16, %s882, [#allocation84]
    $region413: #{deep_scaffold_likelihood.1} parent=1 // pred_fallthru
      _
    // Predicated region
    $region414: #{deep_scaffold_likelihood.1} parent=1 // pred_check
      _
    $region415: #{deep_scaffold_likelihood.1} parent=1 // pred_check_branch
      %886 = sbr.rel (0) target = $region417
    $region416: #{deep_scaffold_likelihood.1} parent=1 // pred_region
      _
    $region417: #{deep_scaffold_likelihood.1} parent=1 // pred_fallthru
      _
    // Predicated region
    $region418: #{deep_scaffold_likelihood.1} parent=1 // pred_check
      _
    $region419: #{deep_scaffold_likelihood.1} parent=1 // pred_check_branch
      %888 = sbr.rel (0) target = $region421
    $region420: #{deep_scaffold_likelihood.1} parent=1 // pred_region
      %889 = dma.done [#allocation4], 16
    $region421: #{deep_scaffold_likelihood.1} parent=1 // pred_fallthru
      _
    // Predicated region
    $region422: #{deep_scaffold_likelihood.1} parent=1 // pred_check
      _
    $region423: #{deep_scaffold_likelihood.1} parent=1 // pred_check_branch
      %891 = sbr.rel (0) target = $region425
    $region424: #{deep_scaffold_likelihood.1} parent=1 // pred_region
      %892 = dma.done [#allocation6], 16
    $region425: #{deep_scaffold_likelihood.1} parent=1 // pred_fallthru
      _
    // Predicated region
    $region426: #{deep_scaffold_likelihood.1} parent=1 // pred_check
      _
    $region427: #{deep_scaffold_likelihood.1} parent=1 // pred_check_branch
      %894 = sbr.rel (0) target = $region429
    $region428: #{deep_scaffold_likelihood.1} parent=1 // pred_region
      %895 = dma.done [#allocation6], 16
    $region429: #{deep_scaffold_likelihood.1} parent=1 // pred_fallthru
      _
    // Predicated region
    $region430: #{deep_scaffold_likelihood.1} parent=1 // pred_check
      _
    $region431: #{deep_scaffold_likelihood.1} parent=1 // pred_check_branch
      %897 = sbr.rel (0) target = $region433
    $region432: #{deep_scaffold_likelihood.1} parent=1 // pred_region
      %898 = dma.done [#allocation9], 16
    $region433: #{deep_scaffold_likelihood.1} parent=1 // pred_fallthru
      _
    // Predicated region
    $region434: #{deep_scaffold_likelihood.1} parent=1 // pred_check
      _
    $region435: #{deep_scaffold_likelihood.1} parent=1 // pred_check_branch
      %900 = sbr.rel (0) target = $region437
    $region436: #{deep_scaffold_likelihood.1} parent=1 // pred_region
      %901 = dma.done [#allocation9], 16
    $region437: #{deep_scaffold_likelihood.1} parent=1 // pred_fallthru
      _
    // Predicated region
    $region438: #{deep_scaffold_likelihood.1} parent=1 // pred_check
      _
    $region439: #{deep_scaffold_likelihood.1} parent=1 // pred_check_branch
      %903 = sbr.rel (0) target = $region441
    $region440: #{deep_scaffold_likelihood.1} parent=1 // pred_region
      %904 = dma.done [#allocation12], 16
    $region441: #{deep_scaffold_likelihood.1} parent=1 // pred_fallthru
      _
    // Predicated region
    $region442: #{deep_scaffold_likelihood.1} parent=1 // pred_check
      _
    $region443: #{deep_scaffold_likelihood.1} parent=1 // pred_check_branch
      %906 = sbr.rel (0) target = $region445
    $region444: #{deep_scaffold_likelihood.1} parent=1 // pred_region
      %907 = dma.done [#allocation12], 16
    $region445: #{deep_scaffold_likelihood.1} parent=1 // pred_fallthru
      _
    // Predicated region
    $region446: #{deep_scaffold_likelihood.1} parent=1 // pred_check
      _
    $region447: #{deep_scaffold_likelihood.1} parent=1 // pred_check_branch
      %909 = sbr.rel (0) target = $region449
    $region448: #{deep_scaffold_likelihood.1} parent=1 // pred_region
      %910 = dma.done [#allocation15], 16
    $region449: #{deep_scaffold_likelihood.1} parent=1 // pred_fallthru
      _
    // Predicated region
    $region450: #{deep_scaffold_likelihood.1} parent=1 // pred_check
      _
    $region451: #{deep_scaffold_likelihood.1} parent=1 // pred_check_branch
      %912 = sbr.rel (0) target = $region453
    $region452: #{deep_scaffold_likelihood.1} parent=1 // pred_region
      %913 = dma.done [#allocation15], 16
    $region453: #{deep_scaffold_likelihood.1} parent=1 // pred_fallthru
      _
    // Predicated region
    $region454: #{deep_scaffold_likelihood.1} parent=1 // pred_check
      _
    $region455: #{deep_scaffold_likelihood.1} parent=1 // pred_check_branch
      %915 = sbr.rel (0) target = $region457
    $region456: #{deep_scaffold_likelihood.1} parent=1 // pred_region
      %916 = dma.done [#allocation18], 16
    $region457: #{deep_scaffold_likelihood.1} parent=1 // pred_fallthru
      _
    // Predicated region
    $region458: #{deep_scaffold_likelihood.1} parent=1 // pred_check
      _
    $region459: #{deep_scaffold_likelihood.1} parent=1 // pred_check_branch
      %918 = sbr.rel (0) target = $region461
    $region460: #{deep_scaffold_likelihood.1} parent=1 // pred_region
      %919 = dma.done [#allocation18], 16
    $region461: #{deep_scaffold_likelihood.1} parent=1 // pred_fallthru
      _
    // Predicated region
    $region462: #{deep_scaffold_likelihood.1} parent=1 // pred_check
      _
    $region463: #{deep_scaffold_likelihood.1} parent=1 // pred_check_branch
      %921 = sbr.rel (0) target = $region465
    $region464: #{deep_scaffold_likelihood.1} parent=1 // pred_region
      %922 = dma.done [#allocation21], 16
    $region465: #{deep_scaffold_likelihood.1} parent=1 // pred_fallthru
      _
    // Predicated region
    $region466: #{deep_scaffold_likelihood.1} parent=1 // pred_check
      _
    $region467: #{deep_scaffold_likelihood.1} parent=1 // pred_check_branch
      %924 = sbr.rel (0) target = $region469
    $region468: #{deep_scaffold_likelihood.1} parent=1 // pred_region
      %925 = dma.done [#allocation21], 16
    $region469: #{deep_scaffold_likelihood.1} parent=1 // pred_fallthru
      _
    // Predicated region
    $region470: #{deep_scaffold_likelihood.1} parent=1 // pred_check
      _
    $region471: #{deep_scaffold_likelihood.1} parent=1 // pred_check_branch
      %927 = sbr.rel (0) target = $region473
    $region472: #{deep_scaffold_likelihood.1} parent=1 // pred_region
      %928 = dma.done [#allocation24], 16
    $region473: #{deep_scaffold_likelihood.1} parent=1 // pred_fallthru
      _
    // Predicated region
    $region474: #{deep_scaffold_likelihood.1} parent=1 // pred_check
      _
    $region475: #{deep_scaffold_likelihood.1} parent=1 // pred_check_branch
      %930 = sbr.rel (0) target = $region477
    $region476: #{deep_scaffold_likelihood.1} parent=1 // pred_region
      %931 = dma.done [#allocation24], 16
    $region477: #{deep_scaffold_likelihood.1} parent=1 // pred_fallthru
      _
    // Predicated region
    $region478: #{deep_scaffold_likelihood.1} parent=1 // pred_check
      _
    $region479: #{deep_scaffold_likelihood.1} parent=1 // pred_check_branch
      %933 = sbr.rel (0) target = $region481
    $region480: #{deep_scaffold_likelihood.1} parent=1 // pred_region
      %934 = dma.done [#allocation27], 16
    $region481: #{deep_scaffold_likelihood.1} parent=1 // pred_fallthru
      _
    // Predicated region
    $region482: #{deep_scaffold_likelihood.1} parent=1 // pred_check
      _
    $region483: #{deep_scaffold_likelihood.1} parent=1 // pred_check_branch
      %936 = sbr.rel (0) target = $region485
    $region484: #{deep_scaffold_likelihood.1} parent=1 // pred_region
      %937 = dma.done [#allocation27], 16
    $region485: #{deep_scaffold_likelihood.1} parent=1 // pred_fallthru
      _
    // Predicated region
    $region486: #{deep_scaffold_likelihood.1} parent=1 // pred_check
      _
    $region487: #{deep_scaffold_likelihood.1} parent=1 // pred_check_branch
      %939 = sbr.rel (0) target = $region489
    $region488: #{deep_scaffold_likelihood.1} parent=1 // pred_region
      %940 = dma.done [#allocation30], 16
    $region489: #{deep_scaffold_likelihood.1} parent=1 // pred_fallthru
      _
    // Predicated region
    $region490: #{deep_scaffold_likelihood.1} parent=1 // pred_check
      _
    $region491: #{deep_scaffold_likelihood.1} parent=1 // pred_check_branch
      %942 = sbr.rel (0) target = $region493
    $region492: #{deep_scaffold_likelihood.1} parent=1 // pred_region
      %943 = dma.done [#allocation30], 16
    $region493: #{deep_scaffold_likelihood.1} parent=1 // pred_fallthru
      _
    // Predicated region
    $region494: #{deep_scaffold_likelihood.1} parent=1 // pred_check
      _
    $region495: #{deep_scaffold_likelihood.1} parent=1 // pred_check_branch
      %945 = sbr.rel (0) target = $region497
    $region496: #{deep_scaffold_likelihood.1} parent=1 // pred_region
      %946 = dma.done [#allocation33], 16
    $region497: #{deep_scaffold_likelihood.1} parent=1 // pred_fallthru
      _
    // Predicated region
    $region498: #{deep_scaffold_likelihood.1} parent=1 // pred_check
      _
    $region499: #{deep_scaffold_likelihood.1} parent=1 // pred_check_branch
      %948 = sbr.rel (0) target = $region501
    $region500: #{deep_scaffold_likelihood.1} parent=1 // pred_region
      %949 = dma.done [#allocation33], 16
    $region501: #{deep_scaffold_likelihood.1} parent=1 // pred_fallthru
      _
    // Predicated region
    $region502: #{deep_scaffold_likelihood.1} parent=1 // pred_check
      _
    $region503: #{deep_scaffold_likelihood.1} parent=1 // pred_check_branch
      %951 = sbr.rel (0) target = $region505
    $region504: #{deep_scaffold_likelihood.1} parent=1 // pred_region
      %952 = dma.done [#allocation36], 16
    $region505: #{deep_scaffold_likelihood.1} parent=1 // pred_fallthru
      _
    // Predicated region
    $region506: #{deep_scaffold_likelihood.1} parent=1 // pred_check
      _
    $region507: #{deep_scaffold_likelihood.1} parent=1 // pred_check_branch
      %954 = sbr.rel (0) target = $region509
    $region508: #{deep_scaffold_likelihood.1} parent=1 // pred_region
      %955 = dma.done [#allocation36], 16
    $region509: #{deep_scaffold_likelihood.1} parent=1 // pred_fallthru
      _
    // Predicated region
    $region510: #{deep_scaffold_likelihood.1} parent=1 // pred_check
      _
    $region511: #{deep_scaffold_likelihood.1} parent=1 // pred_check_branch
      %957 = sbr.rel (0) target = $region513
    $region512: #{deep_scaffold_likelihood.1} parent=1 // pred_region
      %958 = dma.done [#allocation39], 16
    $region513: #{deep_scaffold_likelihood.1} parent=1 // pred_fallthru
      _
    // Predicated region
    $region514: #{deep_scaffold_likelihood.1} parent=1 // pred_check
      _
    $region515: #{deep_scaffold_likelihood.1} parent=1 // pred_check_branch
      %960 = sbr.rel (0) target = $region517
    $region516: #{deep_scaffold_likelihood.1} parent=1 // pred_region
      %961 = dma.done [#allocation39], 16
    $region517: #{deep_scaffold_likelihood.1} parent=1 // pred_fallthru
      _
    // Predicated region
    $region518: #{deep_scaffold_likelihood.1} parent=1 // pred_check
      _
    $region519: #{deep_scaffold_likelihood.1} parent=1 // pred_check_branch
      %963 = sbr.rel (0) target = $region521
    $region520: #{deep_scaffold_likelihood.1} parent=1 // pred_region
      %964 = dma.done [#allocation42], 16
    $region521: #{deep_scaffold_likelihood.1} parent=1 // pred_fallthru
      _
    // Predicated region
    $region522: #{deep_scaffold_likelihood.1} parent=1 // pred_check
      _
    $region523: #{deep_scaffold_likelihood.1} parent=1 // pred_check_branch
      %966 = sbr.rel (0) target = $region525
    $region524: #{deep_scaffold_likelihood.1} parent=1 // pred_region
      %967 = dma.done [#allocation42], 16
    $region525: #{deep_scaffold_likelihood.1} parent=1 // pred_fallthru
      _
    // Predicated region
    $region526: #{deep_scaffold_likelihood.1} parent=1 // pred_check
      _
    $region527: #{deep_scaffold_likelihood.1} parent=1 // pred_check_branch
      %969 = sbr.rel (0) target = $region529
    $region528: #{deep_scaffold_likelihood.1} parent=1 // pred_region
      %970 = dma.done [#allocation45], 16
    $region529: #{deep_scaffold_likelihood.1} parent=1 // pred_fallthru
      _
    // Predicated region
    $region530: #{deep_scaffold_likelihood.1} parent=1 // pred_check
      _
    $region531: #{deep_scaffold_likelihood.1} parent=1 // pred_check_branch
      %972 = sbr.rel (0) target = $region533
    $region532: #{deep_scaffold_likelihood.1} parent=1 // pred_region
      %973 = dma.done [#allocation45], 16
    $region533: #{deep_scaffold_likelihood.1} parent=1 // pred_fallthru
      _
    // Predicated region
    $region534: #{deep_scaffold_likelihood.1} parent=1 // pred_check
      _
    $region535: #{deep_scaffold_likelihood.1} parent=1 // pred_check_branch
      %975 = sbr.rel (0) target = $region537
    $region536: #{deep_scaffold_likelihood.1} parent=1 // pred_region
      %976 = dma.done [#allocation48], 16
    $region537: #{deep_scaffold_likelihood.1} parent=1 // pred_fallthru
      _
    // Predicated region
    $region538: #{deep_scaffold_likelihood.1} parent=1 // pred_check
      _
    $region539: #{deep_scaffold_likelihood.1} parent=1 // pred_check_branch
      %978 = sbr.rel (0) target = $region541
    $region540: #{deep_scaffold_likelihood.1} parent=1 // pred_region
      %979 = dma.done [#allocation48], 16
    $region541: #{deep_scaffold_likelihood.1} parent=1 // pred_fallthru
      _
    // Predicated region
    $region542: #{deep_scaffold_likelihood.1} parent=1 // pred_check
      _
    $region543: #{deep_scaffold_likelihood.1} parent=1 // pred_check_branch
      %981 = sbr.rel (0) target = $region545
    $region544: #{deep_scaffold_likelihood.1} parent=1 // pred_region
      %982 = dma.done [#allocation51], 16
    $region545: #{deep_scaffold_likelihood.1} parent=1 // pred_fallthru
      _
    // Predicated region
    $region546: #{deep_scaffold_likelihood.1} parent=1 // pred_check
      _
    $region547: #{deep_scaffold_likelihood.1} parent=1 // pred_check_branch
      %984 = sbr.rel (0) target = $region549
    $region548: #{deep_scaffold_likelihood.1} parent=1 // pred_region
      %985 = dma.done [#allocation51], 16
    $region549: #{deep_scaffold_likelihood.1} parent=1 // pred_fallthru
      _
    // Predicated region
    $region550: #{deep_scaffold_likelihood.1} parent=1 // pred_check
      _
    $region551: #{deep_scaffold_likelihood.1} parent=1 // pred_check_branch
      %987 = sbr.rel (0) target = $region553
    $region552: #{deep_scaffold_likelihood.1} parent=1 // pred_region
      %988 = dma.done [#allocation54], 16
    $region553: #{deep_scaffold_likelihood.1} parent=1 // pred_fallthru
      _
    // Predicated region
    $region554: #{deep_scaffold_likelihood.1} parent=1 // pred_check
      _
    $region555: #{deep_scaffold_likelihood.1} parent=1 // pred_check_branch
      %990 = sbr.rel (0) target = $region557
    $region556: #{deep_scaffold_likelihood.1} parent=1 // pred_region
      %991 = dma.done [#allocation54], 16
    $region557: #{deep_scaffold_likelihood.1} parent=1 // pred_fallthru
      _
    // Predicated region
    $region558: #{deep_scaffold_likelihood.1} parent=1 // pred_check
      _
    $region559: #{deep_scaffold_likelihood.1} parent=1 // pred_check_branch
      %993 = sbr.rel (0) target = $region561
    $region560: #{deep_scaffold_likelihood.1} parent=1 // pred_region
      %994 = dma.done [#allocation57], 16
    $region561: #{deep_scaffold_likelihood.1} parent=1 // pred_fallthru
      _
    // Predicated region
    $region562: #{deep_scaffold_likelihood.1} parent=1 // pred_check
      _
    $region563: #{deep_scaffold_likelihood.1} parent=1 // pred_check_branch
      %996 = sbr.rel (0) target = $region565
    $region564: #{deep_scaffold_likelihood.1} parent=1 // pred_region
      %997 = dma.done [#allocation57], 16
    $region565: #{deep_scaffold_likelihood.1} parent=1 // pred_fallthru
      _
    // Predicated region
    $region566: #{deep_scaffold_likelihood.1} parent=1 // pred_check
      _
    $region567: #{deep_scaffold_likelihood.1} parent=1 // pred_check_branch
      %999 = sbr.rel (0) target = $region569
    $region568: #{deep_scaffold_likelihood.1} parent=1 // pred_region
      %1000 = dma.done [#allocation60], 16
    $region569: #{deep_scaffold_likelihood.1} parent=1 // pred_fallthru
      _
    // Predicated region
    $region570: #{deep_scaffold_likelihood.1} parent=1 // pred_check
      _
    $region571: #{deep_scaffold_likelihood.1} parent=1 // pred_check_branch
      %1002 = sbr.rel (0) target = $region573
    $region572: #{deep_scaffold_likelihood.1} parent=1 // pred_region
      %1003 = dma.done [#allocation60], 16
    $region573: #{deep_scaffold_likelihood.1} parent=1 // pred_fallthru
      _
    // Predicated region
    $region574: #{deep_scaffold_likelihood.1} parent=1 // pred_check
      _
    $region575: #{deep_scaffold_likelihood.1} parent=1 // pred_check_branch
      %1005 = sbr.rel (0) target = $region577
    $region576: #{deep_scaffold_likelihood.1} parent=1 // pred_region
      %1006 = dma.done [#allocation63], 16
    $region577: #{deep_scaffold_likelihood.1} parent=1 // pred_fallthru
      _
    // Predicated region
    $region578: #{deep_scaffold_likelihood.1} parent=1 // pred_check
      _
    $region579: #{deep_scaffold_likelihood.1} parent=1 // pred_check_branch
      %1008 = sbr.rel (0) target = $region581
    $region580: #{deep_scaffold_likelihood.1} parent=1 // pred_region
      %1009 = dma.done [#allocation63], 16
    $region581: #{deep_scaffold_likelihood.1} parent=1 // pred_fallthru
      _
    // Predicated region
    $region582: #{deep_scaffold_likelihood.1} parent=1 // pred_check
      _
    $region583: #{deep_scaffold_likelihood.1} parent=1 // pred_check_branch
      %1011 = sbr.rel (0) target = $region585
    $region584: #{deep_scaffold_likelihood.1} parent=1 // pred_region
      %1012 = dma.done [#allocation66], 16
    $region585: #{deep_scaffold_likelihood.1} parent=1 // pred_fallthru
      _
    // Predicated region
    $region586: #{deep_scaffold_likelihood.1} parent=1 // pred_check
      _
    $region587: #{deep_scaffold_likelihood.1} parent=1 // pred_check_branch
      %1014 = sbr.rel (0) target = $region589
    $region588: #{deep_scaffold_likelihood.1} parent=1 // pred_region
      %1015 = dma.done [#allocation66], 16
    $region589: #{deep_scaffold_likelihood.1} parent=1 // pred_fallthru
      _
    // Predicated region
    $region590: #{deep_scaffold_likelihood.1} parent=1 // pred_check
      _
    $region591: #{deep_scaffold_likelihood.1} parent=1 // pred_check_branch
      %1017 = sbr.rel (0) target = $region593
    $region592: #{deep_scaffold_likelihood.1} parent=1 // pred_region
      %1018 = dma.done [#allocation69], 16
    $region593: #{deep_scaffold_likelihood.1} parent=1 // pred_fallthru
      _
    // Predicated region
    $region594: #{deep_scaffold_likelihood.1} parent=1 // pred_check
      _
    $region595: #{deep_scaffold_likelihood.1} parent=1 // pred_check_branch
      %1020 = sbr.rel (0) target = $region597
    $region596: #{deep_scaffold_likelihood.1} parent=1 // pred_region
      %1021 = dma.done [#allocation69], 16
    $region597: #{deep_scaffold_likelihood.1} parent=1 // pred_fallthru
      _
    // Predicated region
    $region598: #{deep_scaffold_likelihood.1} parent=1 // pred_check
      _
    $region599: #{deep_scaffold_likelihood.1} parent=1 // pred_check_branch
      %1023 = sbr.rel (0) target = $region601
    $region600: #{deep_scaffold_likelihood.1} parent=1 // pred_region
      %1024 = dma.done [#allocation72], 16
    $region601: #{deep_scaffold_likelihood.1} parent=1 // pred_fallthru
      _
    // Predicated region
    $region602: #{deep_scaffold_likelihood.1} parent=1 // pred_check
      _
    $region603: #{deep_scaffold_likelihood.1} parent=1 // pred_check_branch
      %1026 = sbr.rel (0) target = $region605
    $region604: #{deep_scaffold_likelihood.1} parent=1 // pred_region
      %1027 = dma.done [#allocation72], 16
    $region605: #{deep_scaffold_likelihood.1} parent=1 // pred_fallthru
      _
    // Predicated region
    $region606: #{deep_scaffold_likelihood.1} parent=1 // pred_check
      _
    $region607: #{deep_scaffold_likelihood.1} parent=1 // pred_check_branch
      %1029 = sbr.rel (0) target = $region609
    $region608: #{deep_scaffold_likelihood.1} parent=1 // pred_region
      %1030 = dma.done [#allocation75], 16
    $region609: #{deep_scaffold_likelihood.1} parent=1 // pred_fallthru
      _
    // Predicated region
    $region610: #{deep_scaffold_likelihood.1} parent=1 // pred_check
      _
    $region611: #{deep_scaffold_likelihood.1} parent=1 // pred_check_branch
      %1032 = sbr.rel (0) target = $region613
    $region612: #{deep_scaffold_likelihood.1} parent=1 // pred_region
      %1033 = dma.done [#allocation75], 16
    $region613: #{deep_scaffold_likelihood.1} parent=1 // pred_fallthru
      _
    // Predicated region
    $region614: #{deep_scaffold_likelihood.1} parent=1 // pred_check
      _
    $region615: #{deep_scaffold_likelihood.1} parent=1 // pred_check_branch
      %1035 = sbr.rel (0) target = $region617
    $region616: #{deep_scaffold_likelihood.1} parent=1 // pred_region
      %1036 = dma.done [#allocation78], 16
    $region617: #{deep_scaffold_likelihood.1} parent=1 // pred_fallthru
      _
    // Predicated region
    $region618: #{deep_scaffold_likelihood.1} parent=1 // pred_check
      _
    $region619: #{deep_scaffold_likelihood.1} parent=1 // pred_check_branch
      %1038 = sbr.rel (0) target = $region621
    $region620: #{deep_scaffold_likelihood.1} parent=1 // pred_region
      %1039 = dma.done [#allocation78], 16
    $region621: #{deep_scaffold_likelihood.1} parent=1 // pred_fallthru
      _
    // Predicated region
    $region622: #{deep_scaffold_likelihood.1} parent=1 // pred_check
      _
    $region623: #{deep_scaffold_likelihood.1} parent=1 // pred_check_branch
      %1041 = sbr.rel (0) target = $region625
    $region624: #{deep_scaffold_likelihood.1} parent=1 // pred_region
      %1042 = dma.done [#allocation81], 16
    $region625: #{deep_scaffold_likelihood.1} parent=1 // pred_fallthru
      _
    // Predicated region
    $region626: #{deep_scaffold_likelihood.1} parent=1 // pred_check
      _
    $region627: #{deep_scaffold_likelihood.1} parent=1 // pred_check_branch
      %1044 = sbr.rel (0) target = $region629
    $region628: #{deep_scaffold_likelihood.1} parent=1 // pred_region
      %1045 = dma.done [#allocation81], 16
    $region629: #{deep_scaffold_likelihood.1} parent=1 // pred_fallthru
      _
    // Predicated region
    $region630: #{deep_scaffold_likelihood.1} parent=1 // pred_check
      _
    $region631: #{deep_scaffold_likelihood.1} parent=1 // pred_check_branch
      %1047 = sbr.rel (0) target = $region633
    $region632: #{deep_scaffold_likelihood.1} parent=1 // pred_region
      %1048 = dma.done [#allocation84], 16
    $region633: #{deep_scaffold_likelihood.1} parent=1 // pred_fallthru
      _
    %v1050 = vld [vmem:[%s5] sm:$0xf]
    %v1051 = vld [vmem:[%s7] sm:$0xff]
    %v1052 = vld [vmem:[%s7 + $0x8] sm:$0xff]
    %v1053 = vld [vmem:[%s7 + $0x10] sm:$0xff]
    %v1054 = vld [vmem:[%s1] sm:$0xff]
    %v1055 = vld [vmem:[%s1 + $0x8] sm:$0xff]
    %v1056 = vld [vmem:[%s1 + $0x10] sm:$0xff]
    %v1057 = vld [vmem:[#allocation3] sm:$0x1]
    %v1058 = vld [vmem:[#allocation5] sm:$0x1]
    %v1060 = vlaneseq
    %v1061 = vshrl.u32 %v1060, 7
    %v1062 = vsub.s32 0, %v1061
    %v1063 = vrot.slane %v1058, %v1062
    %v1065 = vmul.f32 %v1054, %v1063
    %v1066 = vmul.f32 %v1055, %v1063
    %v1067 = vmul.f32 %v1056, %v1063
    %v1068 = vld [vmem:[#allocation7] sm:$0x1]
    %v1070 = vlaneseq
    %v1071 = vshrl.u32 %v1070, 7
    %v1072 = vsub.s32 0, %v1071
    %v1073 = vrot.slane %v1068, %v1072
    %v1075 = vadd.f32 %v1065, %v1073
    %v1076 = vadd.f32 %v1066, %v1073
    %v1077 = vadd.f32 %v1067, %v1073
    %vm1078 = vcmp.gt.f32.partialorder %v1075, 0.0
    %vm1079 = vcmp.gt.f32.partialorder %v1076, 0.0
    %vm1080 = vcmp.gt.f32.partialorder %v1077, 0.0
    %v1081 = vmin.f32 %v1075, 0.0
    %v1082 = vmin.f32 %v1076, 0.0
    %v1083 = vmin.f32 %v1077, 0.0
    %v1084 = vmul.f32 %v1081, 1.442695
    %v1085 = vpow.pop %v1084
    %v1086 = vmul.f32 %v1082, 1.442695
    %v1087 = vpow.pop %v1086
    %v1088 = vmul.f32 %v1083, 1.442695
    %v1089 = vpow.pop %v1088
    %v1090 = vsub.f32 %v1085, 1.0
    %v1091 = vsub.f32 %v1087, 1.0
    %v1092 = vsub.f32 %v1089, 1.0
    %v1093 = vsel %vm1078, %v1075, %v1090
    %v1094 = vsel %vm1079, %v1076, %v1091
    %v1095 = vsel %vm1080, %v1077, %v1092
    %v1096 = vpack.c.bf16 %v1094, %v1093
    %v1097 = vpack.c.bf16 %v1095, %v1095
    %v1098 = vld [vmem:[%s61] sm:$0xf]
    %v1099 = vld [vmem:[%s61 + $0x4] sm:$0xf]
    %v1102 = vunpack.c.l.b16 %v1098
    %v1103 = vunpack.c.l.b16 %v1099
    %v1104 = vpack.c.b16 %v1103, %v1102
    %vm1106 = vcmask 130048
    %v1108 = vsel %vm1106, %v1096, 0
    %v1111 = vsel %vm1106, %v1097, 0
    %1113 = vmatprep.subr.bf16.mxu0 0
    %1114 = vmatpush1.bf16.msra.mxu0 0
    %1115 = vmatprep.subr.bf16.mxu0 0
    %1116 = vmatpush1.bf16.msra.mxu0 0
    %1117 = vmatprep.subr.bf16.mxu0 0
    %1118 = vmatpush1.bf16.msra.mxu0 0
    %1119 = vmatprep.subr.bf16.mxu0 0
    %1120 = vmatpush1.bf16.msra.mxu0 0
    %1121 = vmatprep.subr.bf16.mxu0 0
    %1122 = vmatpush1.bf16.msra.mxu0 0
    %1123 = vmatprep.subr.bf16.mxu0 0
    %1124 = vmatpush1.bf16.msra.mxu0 0
    %1125 = vmatprep.subr.bf16.mxu0 0
    %1126 = vmatpush1.bf16.msra.mxu0 0
    %1127 = vmatprep.subr.bf16.mxu0 0
    %1128 = vmatpush1.bf16.msra.mxu0 %v1104
    %1129 = vmatprep.subr.bf16.mxu0 0
    %1130 = vmatpush2.bf16.msra.mxu0 0
    %1131 = vmatprep.subr.bf16.mxu0 0
    %1132 = vmatpush2.bf16.msra.mxu0 0
    %1133 = vmatprep.subr.bf16.mxu0 0
    %1134 = vmatpush2.bf16.msra.mxu0 0
    %1135 = vmatprep.subr.bf16.mxu0 0
    %1136 = vmatpush2.bf16.msra.mxu0 0
    %1137 = vmatprep.subr.bf16.mxu0 0
    %1138 = vmatpush2.bf16.msra.mxu0 0
    %1139 = vmatprep.subr.bf16.mxu0 0
    %1140 = vmatpush2.bf16.msra.mxu0 0
    %1141 = vmatprep.subr.bf16.mxu0 0
    %1142 = vmatpush2.bf16.msra.mxu0 0
    %1143 = vmatprep.subr.bf16.mxu0 0
    %1144 = vmatpush2.bf16.msra.mxu0 0
    %1145 = vmatprep.mubr.bf16.mxu0 0
    %1146 = vmatmul.mubr.bf16.gmra.mxu0 %v1108
    %v1147 = vpop.f32.mrf.mxu0
    %v1148 = vadd.f32 0.0, %v1147
    %v1149 = vpop.f32.mrf.mxu0
    %v1150 = vpop.f32.mrf.mxu0
    %v1151 = vadd.f32 0.0, %v1150
    %v1152 = vpop.f32.mrf.mxu0
    %1153 = vmatprep.mubr.bf16.mxu0 0
    %1154 = vmatmul.mubr.bf16.gmra.mxu0 %v1111
    %v1155 = vpop.f32.mrf.mxu0
    %v1156 = vadd.f32 0.0, %v1155
    %v1157 = vpop.f32.mrf.mxu0
    %v1158 = vpop.f32.mrf.mxu0
    %v1159 = vpop.f32.mrf.mxu0
    %1160 = vdwg.mxu0
    %v1162 = vlaneseq
    %v1163 = vshrl.u32 %v1162, 7
    %v1164 = vsub.s32 0, %v1163
    %v1165 = vrot.slane %v1057, %v1164
    %v1167 = vadd.f32 %v1165, %v1148
    %v1168 = vadd.f32 %v1165, %v1151
    %v1169 = vadd.f32 %v1165, %v1156
    %v1170 = vpack.c.bf16 %v1168, %v1167
    %v1171 = vpack.c.bf16 %v1169, %v1169
    %v1172 = vld [vmem:[%s3] sm:$0xf]
    %v1173 = vld [vmem:[%s3 + $0x4] sm:$0xf]
    %v1174 = vld [vmem:[%s3 + $0x8] sm:$0xf]
    %v1178 = vunpack.c.l.b16 %v1172
    %v1179 = vunpack.c.l.b16 %v1173
    %v1180 = vunpack.c.l.b16 %v1174
    %v1181 = vpack.c.b16 %v1179, %v1178
    %v1182 = vpack.c.b16 %v1180, %v1180
    %vm1183 = vcmask 195584
    %v1185 = vsel %vm1183, %v1181, 0
    %v1188 = vsel %vm1183, %v1182, 0
    %vm1190 = vcmask 1043456
    %v1192 = vsel %vm1190, %v1171, 0
    %1194 = vmatprep.subr.bf16.mxu0 0
    %1195 = vmatpush1.bf16.msra.mxu0 0
    %1196 = vmatprep.subr.bf16.mxu0 0
    %1197 = vmatpush1.bf16.msra.mxu0 0
    %1198 = vmatprep.subr.bf16.mxu0 0
    %1199 = vmatpush1.bf16.msra.mxu0 0
    %1200 = vmatprep.subr.bf16.mxu0 0
    %1201 = vmatpush1.bf16.msra.mxu0 0
    %1202 = vmatprep.subr.bf16.mxu0 0
    %1203 = vmatpush1.bf16.msra.mxu0 0
    %1204 = vmatprep.subr.bf16.mxu0 0
    %1205 = vmatpush1.bf16.msra.mxu0 0
    %1206 = vmatprep.subr.bf16.mxu0 0
    %1207 = vmatpush1.bf16.msra.mxu0 %v1192
    %1208 = vmatprep.subr.bf16.mxu0 0
    %1209 = vmatpush1.bf16.msra.mxu0 %v1170
    %1210 = vmatprep.subr.bf16.mxu0 0
    %1211 = vmatpush2.bf16.msra.mxu0 0
    %1212 = vmatprep.subr.bf16.mxu0 0
    %1213 = vmatpush2.bf16.msra.mxu0 0
    %1214 = vmatprep.subr.bf16.mxu0 0
    %1215 = vmatpush2.bf16.msra.mxu0 0
    %1216 = vmatprep.subr.bf16.mxu0 0
    %1217 = vmatpush2.bf16.msra.mxu0 0
    %1218 = vmatprep.subr.bf16.mxu0 0
    %1219 = vmatpush2.bf16.msra.mxu0 0
    %1220 = vmatprep.subr.bf16.mxu0 0
    %1221 = vmatpush2.bf16.msra.mxu0 0
    %1222 = vmatprep.subr.bf16.mxu0 0
    %1223 = vmatpush2.bf16.msra.mxu0 0
    %1224 = vmatprep.subr.bf16.mxu0 0
    %1225 = vmatpush2.bf16.msra.mxu0 0
    %1226 = vmatprep.mubr.bf16.mxu0 0
    %1227 = vmatmul.mubr.bf16.gmra.mxu0 %v1185
    %v1228 = vpop.f32.mrf.mxu0
    %v1229 = vadd.f32 0.0, %v1228
    %v1230 = vpop.f32.mrf.mxu0
    %v1231 = vpop.f32.mrf.mxu0
    %v1232 = vadd.f32 0.0, %v1231
    %v1233 = vpop.f32.mrf.mxu0
    %1234 = vmatprep.mubr.bf16.mxu0 0
    %1235 = vmatmul.mubr.bf16.gmra.mxu0 %v1188
    %v1236 = vpop.f32.mrf.mxu0
    %v1237 = vadd.f32 0.0, %v1236
    %v1238 = vpop.f32.mrf.mxu0
    %v1239 = vpop.f32.mrf.mxu0
    %v1240 = vpop.f32.mrf.mxu0
    %1241 = vdwg.mxu0
    %s1242 = scalar_lea.vmem %s3, 12
    %v1243 = vld [vmem:[%s1242] sm:$0xf]
    %v1244 = vld [vmem:[%s1242 + $0x4] sm:$0xf]
    %v1245 = vld [vmem:[%s1242 + $0x8] sm:$0xf]
    %v1249 = vunpack.c.l.b16 %v1243
    %v1250 = vunpack.c.l.b16 %v1244
    %v1251 = vunpack.c.l.b16 %v1245
    %v1252 = vpack.c.b16 %v1250, %v1249
    %v1253 = vpack.c.b16 %v1251, %v1251
    %v1255 = vsel %vm1183, %v1252, 0
    %v1258 = vsel %vm1183, %v1253, 0
    %1260 = vmatprep.subr.bf16.mxu0 0
    %1261 = vmatpush1.bf16.msra.mxu0 0
    %1262 = vmatprep.subr.bf16.mxu0 0
    %1263 = vmatpush1.bf16.msra.mxu0 0
    %1264 = vmatprep.subr.bf16.mxu0 0
    %1265 = vmatpush1.bf16.msra.mxu0 0
    %1266 = vmatprep.subr.bf16.mxu0 0
    %1267 = vmatpush1.bf16.msra.mxu0 0
    %1268 = vmatprep.subr.bf16.mxu0 0
    %1269 = vmatpush1.bf16.msra.mxu0 0
    %1270 = vmatprep.subr.bf16.mxu0 0
    %1271 = vmatpush1.bf16.msra.mxu0 0
    %1272 = vmatprep.subr.bf16.mxu0 0
    %1273 = vmatpush1.bf16.msra.mxu0 %v1192
    %1274 = vmatprep.subr.bf16.mxu0 0
    %1275 = vmatpush1.bf16.msra.mxu0 %v1170
    %1276 = vmatprep.subr.bf16.mxu0 0
    %1277 = vmatpush2.bf16.msra.mxu0 0
    %1278 = vmatprep.subr.bf16.mxu0 0
    %1279 = vmatpush2.bf16.msra.mxu0 0
    %1280 = vmatprep.subr.bf16.mxu0 0
    %1281 = vmatpush2.bf16.msra.mxu0 0
    %1282 = vmatprep.subr.bf16.mxu0 0
    %1283 = vmatpush2.bf16.msra.mxu0 0
    %1284 = vmatprep.subr.bf16.mxu0 0
    %1285 = vmatpush2.bf16.msra.mxu0 0
    %1286 = vmatprep.subr.bf16.mxu0 0
    %1287 = vmatpush2.bf16.msra.mxu0 0
    %1288 = vmatprep.subr.bf16.mxu0 0
    %1289 = vmatpush2.bf16.msra.mxu0 0
    %1290 = vmatprep.subr.bf16.mxu0 0
    %1291 = vmatpush2.bf16.msra.mxu0 0
    %1292 = vmatprep.mubr.bf16.mxu0 0
    %1293 = vmatmul.mubr.bf16.gmra.mxu0 %v1255
    %v1294 = vpop.f32.mrf.mxu0
    %v1295 = vadd.f32 0.0, %v1294
    %v1296 = vpop.f32.mrf.mxu0
    %v1297 = vpop.f32.mrf.mxu0
    %v1298 = vadd.f32 0.0, %v1297
    %v1299 = vpop.f32.mrf.mxu0
    %1300 = vmatprep.mubr.bf16.mxu0 0
    %1301 = vmatmul.mubr.bf16.gmra.mxu0 %v1258
    %v1302 = vpop.f32.mrf.mxu0
    %v1303 = vadd.f32 0.0, %v1302
    %v1304 = vpop.f32.mrf.mxu0
    %v1305 = vpop.f32.mrf.mxu0
    %v1306 = vpop.f32.mrf.mxu0
    %1307 = vdwg.mxu0
    %s1308 = scalar_lea.vmem %s3, 24
    %v1309 = vld [vmem:[%s1308] sm:$0xf]
    %v1310 = vld [vmem:[%s1308 + $0x4] sm:$0xf]
    %v1311 = vld [vmem:[%s1308 + $0x8] sm:$0xf]
    %v1315 = vunpack.c.l.b16 %v1309
    %v1316 = vunpack.c.l.b16 %v1310
    %v1317 = vunpack.c.l.b16 %v1311
    %v1318 = vpack.c.b16 %v1316, %v1315
    %v1319 = vpack.c.b16 %v1317, %v1317
    %v1321 = vsel %vm1183, %v1318, 0
    %v1324 = vsel %vm1183, %v1319, 0
    %1326 = vmatprep.subr.bf16.mxu0 0
    %1327 = vmatpush1.bf16.msra.mxu0 0
    %1328 = vmatprep.subr.bf16.mxu0 0
    %1329 = vmatpush1.bf16.msra.mxu0 0
    %1330 = vmatprep.subr.bf16.mxu0 0
    %1331 = vmatpush1.bf16.msra.mxu0 0
    %1332 = vmatprep.subr.bf16.mxu0 0
    %1333 = vmatpush1.bf16.msra.mxu0 0
    %1334 = vmatprep.subr.bf16.mxu0 0
    %1335 = vmatpush1.bf16.msra.mxu0 0
    %1336 = vmatprep.subr.bf16.mxu0 0
    %1337 = vmatpush1.bf16.msra.mxu0 0
    %1338 = vmatprep.subr.bf16.mxu0 0
    %1339 = vmatpush1.bf16.msra.mxu0 %v1192
    %1340 = vmatprep.subr.bf16.mxu0 0
    %1341 = vmatpush1.bf16.msra.mxu0 %v1170
    %1342 = vmatprep.subr.bf16.mxu0 0
    %1343 = vmatpush2.bf16.msra.mxu0 0
    %1344 = vmatprep.subr.bf16.mxu0 0
    %1345 = vmatpush2.bf16.msra.mxu0 0
    %1346 = vmatprep.subr.bf16.mxu0 0
    %1347 = vmatpush2.bf16.msra.mxu0 0
    %1348 = vmatprep.subr.bf16.mxu0 0
    %1349 = vmatpush2.bf16.msra.mxu0 0
    %1350 = vmatprep.subr.bf16.mxu0 0
    %1351 = vmatpush2.bf16.msra.mxu0 0
    %1352 = vmatprep.subr.bf16.mxu0 0
    %1353 = vmatpush2.bf16.msra.mxu0 0
    %1354 = vmatprep.subr.bf16.mxu0 0
    %1355 = vmatpush2.bf16.msra.mxu0 0
    %1356 = vmatprep.subr.bf16.mxu0 0
    %1357 = vmatpush2.bf16.msra.mxu0 0
    %1358 = vmatprep.mubr.bf16.mxu0 0
    %1359 = vmatmul.mubr.bf16.gmra.mxu0 %v1321
    %v1360 = vpop.f32.mrf.mxu0
    %v1361 = vadd.f32 0.0, %v1360
    %v1362 = vpop.f32.mrf.mxu0
    %v1363 = vpop.f32.mrf.mxu0
    %v1364 = vadd.f32 0.0, %v1363
    %v1365 = vpop.f32.mrf.mxu0
    %1366 = vmatprep.mubr.bf16.mxu0 0
    %1367 = vmatmul.mubr.bf16.gmra.mxu0 %v1324
    %v1368 = vpop.f32.mrf.mxu0
    %v1369 = vadd.f32 0.0, %v1368
    %v1370 = vpop.f32.mrf.mxu0
    %v1371 = vpop.f32.mrf.mxu0
    %v1372 = vpop.f32.mrf.mxu0
    %1373 = vdwg.mxu0
    %s1374 = scalar_lea.vmem %s3, 36
    %v1375 = vld [vmem:[%s1374] sm:$0xf]
    %v1376 = vld [vmem:[%s1374 + $0x4] sm:$0xf]
    %v1377 = vld [vmem:[%s1374 + $0x8] sm:$0xf]
    %v1381 = vunpack.c.l.b16 %v1375
    %v1382 = vunpack.c.l.b16 %v1376
    %v1383 = vunpack.c.l.b16 %v1377
    %v1384 = vpack.c.b16 %v1382, %v1381
    %v1385 = vpack.c.b16 %v1383, %v1383
    %v1387 = vsel %vm1183, %v1384, 0
    %v1390 = vsel %vm1183, %v1385, 0
    %1392 = vmatprep.subr.bf16.mxu0 0
    %1393 = vmatpush1.bf16.msra.mxu0 0
    %1394 = vmatprep.subr.bf16.mxu0 0
    %1395 = vmatpush1.bf16.msra.mxu0 0
    %1396 = vmatprep.subr.bf16.mxu0 0
    %1397 = vmatpush1.bf16.msra.mxu0 0
    %1398 = vmatprep.subr.bf16.mxu0 0
    %1399 = vmatpush1.bf16.msra.mxu0 0
    %1400 = vmatprep.subr.bf16.mxu0 0
    %1401 = vmatpush1.bf16.msra.mxu0 0
    %1402 = vmatprep.subr.bf16.mxu0 0
    %1403 = vmatpush1.bf16.msra.mxu0 0
    %1404 = vmatprep.subr.bf16.mxu0 0
    %1405 = vmatpush1.bf16.msra.mxu0 %v1192
    %1406 = vmatprep.subr.bf16.mxu0 0
    %1407 = vmatpush1.bf16.msra.mxu0 %v1170
    %1408 = vmatprep.subr.bf16.mxu0 0
    %1409 = vmatpush2.bf16.msra.mxu0 0
    %1410 = vmatprep.subr.bf16.mxu0 0
    %1411 = vmatpush2.bf16.msra.mxu0 0
    %1412 = vmatprep.subr.bf16.mxu0 0
    %1413 = vmatpush2.bf16.msra.mxu0 0
    %1414 = vmatprep.subr.bf16.mxu0 0
    %1415 = vmatpush2.bf16.msra.mxu0 0
    %1416 = vmatprep.subr.bf16.mxu0 0
    %1417 = vmatpush2.bf16.msra.mxu0 0
    %1418 = vmatprep.subr.bf16.mxu0 0
    %1419 = vmatpush2.bf16.msra.mxu0 0
    %1420 = vmatprep.subr.bf16.mxu0 0
    %1421 = vmatpush2.bf16.msra.mxu0 0
    %1422 = vmatprep.subr.bf16.mxu0 0
    %1423 = vmatpush2.bf16.msra.mxu0 0
    %1424 = vmatprep.mubr.bf16.mxu0 0
    %1425 = vmatmul.mubr.bf16.gmra.mxu0 %v1387
    %v1426 = vpop.f32.mrf.mxu0
    %v1427 = vadd.f32 0.0, %v1426
    %v1428 = vpop.f32.mrf.mxu0
    %v1429 = vpop.f32.mrf.mxu0
    %v1430 = vadd.f32 0.0, %v1429
    %v1431 = vpop.f32.mrf.mxu0
    %1432 = vmatprep.mubr.bf16.mxu0 0
    %1433 = vmatmul.mubr.bf16.gmra.mxu0 %v1390
    %v1434 = vpop.f32.mrf.mxu0
    %v1435 = vadd.f32 0.0, %v1434
    %v1436 = vpop.f32.mrf.mxu0
    %v1437 = vpop.f32.mrf.mxu0
    %v1438 = vpop.f32.mrf.mxu0
    %1439 = vdwg.mxu0
    %s1440 = scalar_lea.vmem %s3, 48
    %v1441 = vld [vmem:[%s1440] sm:$0xf]
    %v1442 = vld [vmem:[%s1440 + $0x4] sm:$0xf]
    %v1443 = vld [vmem:[%s1440 + $0x8] sm:$0xf]
    %v1447 = vunpack.c.l.b16 %v1441
    %v1448 = vunpack.c.l.b16 %v1442
    %v1449 = vunpack.c.l.b16 %v1443
    %v1450 = vpack.c.b16 %v1448, %v1447
    %v1451 = vpack.c.b16 %v1449, %v1449
    %v1453 = vsel %vm1183, %v1450, 0
    %v1456 = vsel %vm1183, %v1451, 0
    %1458 = vmatprep.subr.bf16.mxu0 0
    %1459 = vmatpush1.bf16.msra.mxu0 0
    %1460 = vmatprep.subr.bf16.mxu0 0
    %1461 = vmatpush1.bf16.msra.mxu0 0
    %1462 = vmatprep.subr.bf16.mxu0 0
    %1463 = vmatpush1.bf16.msra.mxu0 0
    %1464 = vmatprep.subr.bf16.mxu0 0
    %1465 = vmatpush1.bf16.msra.mxu0 0
    %1466 = vmatprep.subr.bf16.mxu0 0
    %1467 = vmatpush1.bf16.msra.mxu0 0
    %1468 = vmatprep.subr.bf16.mxu0 0
    %1469 = vmatpush1.bf16.msra.mxu0 0
    %1470 = vmatprep.subr.bf16.mxu0 0
    %1471 = vmatpush1.bf16.msra.mxu0 %v1192
    %1472 = vmatprep.subr.bf16.mxu0 0
    %1473 = vmatpush1.bf16.msra.mxu0 %v1170
    %1474 = vmatprep.subr.bf16.mxu0 0
    %1475 = vmatpush2.bf16.msra.mxu0 0
    %1476 = vmatprep.subr.bf16.mxu0 0
    %1477 = vmatpush2.bf16.msra.mxu0 0
    %1478 = vmatprep.subr.bf16.mxu0 0
    %1479 = vmatpush2.bf16.msra.mxu0 0
    %1480 = vmatprep.subr.bf16.mxu0 0
    %1481 = vmatpush2.bf16.msra.mxu0 0
    %1482 = vmatprep.subr.bf16.mxu0 0
    %1483 = vmatpush2.bf16.msra.mxu0 0
    %1484 = vmatprep.subr.bf16.mxu0 0
    %1485 = vmatpush2.bf16.msra.mxu0 0
    %1486 = vmatprep.subr.bf16.mxu0 0
    %1487 = vmatpush2.bf16.msra.mxu0 0
    %1488 = vmatprep.subr.bf16.mxu0 0
    %1489 = vmatpush2.bf16.msra.mxu0 0
    %1490 = vmatprep.mubr.bf16.mxu0 0
    %1491 = vmatmul.mubr.bf16.gmra.mxu0 %v1453
    %v1492 = vpop.f32.mrf.mxu0
    %v1493 = vadd.f32 0.0, %v1492
    %v1494 = vpop.f32.mrf.mxu0
    %v1495 = vpop.f32.mrf.mxu0
    %v1496 = vadd.f32 0.0, %v1495
    %v1497 = vpop.f32.mrf.mxu0
    %1498 = vmatprep.mubr.bf16.mxu0 0
    %1499 = vmatmul.mubr.bf16.gmra.mxu0 %v1456
    %v1500 = vpop.f32.mrf.mxu0
    %v1501 = vadd.f32 0.0, %v1500
    %v1502 = vpop.f32.mrf.mxu0
    %v1503 = vpop.f32.mrf.mxu0
    %v1504 = vpop.f32.mrf.mxu0
    %1505 = vdwg.mxu0
    %s1506 = scalar_lea.vmem %s3, 60
    %v1507 = vld [vmem:[%s1506] sm:$0xf]
    %v1508 = vld [vmem:[%s1506 + $0x4] sm:$0xf]
    %v1509 = vld [vmem:[%s1506 + $0x8] sm:$0xf]
    %v1513 = vunpack.c.l.b16 %v1507
    %v1514 = vunpack.c.l.b16 %v1508
    %v1515 = vunpack.c.l.b16 %v1509
    %v1516 = vpack.c.b16 %v1514, %v1513
    %v1517 = vpack.c.b16 %v1515, %v1515
    %v1519 = vsel %vm1183, %v1516, 0
    %v1522 = vsel %vm1183, %v1517, 0
    %1524 = vmatprep.subr.bf16.mxu0 0
    %1525 = vmatpush1.bf16.msra.mxu0 0
    %1526 = vmatprep.subr.bf16.mxu0 0
    %1527 = vmatpush1.bf16.msra.mxu0 0
    %1528 = vmatprep.subr.bf16.mxu0 0
    %1529 = vmatpush1.bf16.msra.mxu0 0
    %1530 = vmatprep.subr.bf16.mxu0 0
    %1531 = vmatpush1.bf16.msra.mxu0 0
    %1532 = vmatprep.subr.bf16.mxu0 0
    %1533 = vmatpush1.bf16.msra.mxu0 0
    %1534 = vmatprep.subr.bf16.mxu0 0
    %1535 = vmatpush1.bf16.msra.mxu0 0
    %1536 = vmatprep.subr.bf16.mxu0 0
    %1537 = vmatpush1.bf16.msra.mxu0 %v1192
    %1538 = vmatprep.subr.bf16.mxu0 0
    %1539 = vmatpush1.bf16.msra.mxu0 %v1170
    %1540 = vmatprep.subr.bf16.mxu0 0
    %1541 = vmatpush2.bf16.msra.mxu0 0
    %1542 = vmatprep.subr.bf16.mxu0 0
    %1543 = vmatpush2.bf16.msra.mxu0 0
    %1544 = vmatprep.subr.bf16.mxu0 0
    %1545 = vmatpush2.bf16.msra.mxu0 0
    %1546 = vmatprep.subr.bf16.mxu0 0
    %1547 = vmatpush2.bf16.msra.mxu0 0
    %1548 = vmatprep.subr.bf16.mxu0 0
    %1549 = vmatpush2.bf16.msra.mxu0 0
    %1550 = vmatprep.subr.bf16.mxu0 0
    %1551 = vmatpush2.bf16.msra.mxu0 0
    %1552 = vmatprep.subr.bf16.mxu0 0
    %1553 = vmatpush2.bf16.msra.mxu0 0
    %1554 = vmatprep.subr.bf16.mxu0 0
    %1555 = vmatpush2.bf16.msra.mxu0 0
    %1556 = vmatprep.mubr.bf16.mxu0 0
    %1557 = vmatmul.mubr.bf16.gmra.mxu0 %v1519
    %v1558 = vpop.f32.mrf.mxu0
    %v1559 = vadd.f32 0.0, %v1558
    %v1560 = vpop.f32.mrf.mxu0
    %v1561 = vpop.f32.mrf.mxu0
    %v1562 = vadd.f32 0.0, %v1561
    %v1563 = vpop.f32.mrf.mxu0
    %1564 = vmatprep.mubr.bf16.mxu0 0
    %1565 = vmatmul.mubr.bf16.gmra.mxu0 %v1522
    %v1566 = vpop.f32.mrf.mxu0
    %v1567 = vadd.f32 0.0, %v1566
    %v1568 = vpop.f32.mrf.mxu0
    %v1569 = vpop.f32.mrf.mxu0
    %v1570 = vpop.f32.mrf.mxu0
    %1571 = vdwg.mxu0
    %s1572 = scalar_lea.vmem %s3, 72
    %v1573 = vld [vmem:[%s1572] sm:$0xf]
    %v1574 = vld [vmem:[%s1572 + $0x4] sm:$0xf]
    %v1575 = vld [vmem:[%s1572 + $0x8] sm:$0xf]
    %v1579 = vunpack.c.l.b16 %v1573
    %v1580 = vunpack.c.l.b16 %v1574
    %v1581 = vunpack.c.l.b16 %v1575
    %v1582 = vpack.c.b16 %v1580, %v1579
    %v1583 = vpack.c.b16 %v1581, %v1581
    %v1585 = vsel %vm1183, %v1582, 0
    %v1588 = vsel %vm1183, %v1583, 0
    %1590 = vmatprep.subr.bf16.mxu0 0
    %1591 = vmatpush1.bf16.msra.mxu0 0
    %1592 = vmatprep.subr.bf16.mxu0 0
    %1593 = vmatpush1.bf16.msra.mxu0 0
    %1594 = vmatprep.subr.bf16.mxu0 0
    %1595 = vmatpush1.bf16.msra.mxu0 0
    %1596 = vmatprep.subr.bf16.mxu0 0
    %1597 = vmatpush1.bf16.msra.mxu0 0
    %1598 = vmatprep.subr.bf16.mxu0 0
    %1599 = vmatpush1.bf16.msra.mxu0 0
    %1600 = vmatprep.subr.bf16.mxu0 0
    %1601 = vmatpush1.bf16.msra.mxu0 0
    %1602 = vmatprep.subr.bf16.mxu0 0
    %1603 = vmatpush1.bf16.msra.mxu0 %v1192
    %1604 = vmatprep.subr.bf16.mxu0 0
    %1605 = vmatpush1.bf16.msra.mxu0 %v1170
    %1606 = vmatprep.subr.bf16.mxu0 0
    %1607 = vmatpush2.bf16.msra.mxu0 0
    %1608 = vmatprep.subr.bf16.mxu0 0
    %1609 = vmatpush2.bf16.msra.mxu0 0
    %1610 = vmatprep.subr.bf16.mxu0 0
    %1611 = vmatpush2.bf16.msra.mxu0 0
    %1612 = vmatprep.subr.bf16.mxu0 0
    %1613 = vmatpush2.bf16.msra.mxu0 0
    %1614 = vmatprep.subr.bf16.mxu0 0
    %1615 = vmatpush2.bf16.msra.mxu0 0
    %1616 = vmatprep.subr.bf16.mxu0 0
    %1617 = vmatpush2.bf16.msra.mxu0 0
    %1618 = vmatprep.subr.bf16.mxu0 0
    %1619 = vmatpush2.bf16.msra.mxu0 0
    %1620 = vmatprep.subr.bf16.mxu0 0
    %1621 = vmatpush2.bf16.msra.mxu0 0
    %1622 = vmatprep.mubr.bf16.mxu0 0
    %1623 = vmatmul.mubr.bf16.gmra.mxu0 %v1585
    %v1624 = vpop.f32.mrf.mxu0
    %v1625 = vadd.f32 0.0, %v1624
    %v1626 = vpop.f32.mrf.mxu0
    %v1627 = vpop.f32.mrf.mxu0
    %v1628 = vadd.f32 0.0, %v1627
    %v1629 = vpop.f32.mrf.mxu0
    %1630 = vmatprep.mubr.bf16.mxu0 0
    %1631 = vmatmul.mubr.bf16.gmra.mxu0 %v1588
    %v1632 = vpop.f32.mrf.mxu0
    %v1633 = vadd.f32 0.0, %v1632
    %v1634 = vpop.f32.mrf.mxu0
    %v1635 = vpop.f32.mrf.mxu0
    %v1636 = vpop.f32.mrf.mxu0
    %1637 = vdwg.mxu0
    %v1638 = vld [vmem:[#allocation8] sm:$0x1]
    %v1639 = vld [vmem:[#allocation10] sm:$0x1]
    %v1641 = vlaneseq
    %v1642 = vshrl.u32 %v1641, 7
    %v1643 = vsub.s32 0, %v1642
    %v1644 = vrot.slane %v1639, %v1643
    %v1646 = vmul.f32 %v1167, %v1644
    %v1647 = vmul.f32 %v1168, %v1644
    %v1648 = vmul.f32 %v1169, %v1644
    %v1649 = vld [vmem:[#allocation22] sm:$0x1]
    %v1651 = vlaneseq
    %v1652 = vshrl.u32 %v1651, 7
    %v1653 = vsub.s32 0, %v1652
    %v1654 = vrot.slane %v1649, %v1653
    %v1656 = vadd.f32 %v1646, %v1654
    %v1657 = vadd.f32 %v1647, %v1654
    %v1658 = vadd.f32 %v1648, %v1654
    %vm1659 = vcmp.gt.f32.partialorder %v1656, 0.0
    %vm1660 = vcmp.gt.f32.partialorder %v1657, 0.0
    %vm1661 = vcmp.gt.f32.partialorder %v1658, 0.0
    %v1662 = vmin.f32 %v1656, 0.0
    %v1663 = vmin.f32 %v1657, 0.0
    %v1664 = vmin.f32 %v1658, 0.0
    %v1665 = vmul.f32 %v1662, 1.442695
    %v1666 = vpow.pop %v1665
    %v1667 = vmul.f32 %v1663, 1.442695
    %v1668 = vpow.pop %v1667
    %v1669 = vmul.f32 %v1664, 1.442695
    %v1670 = vpow.pop %v1669
    %v1671 = vsub.f32 %v1666, 1.0
    %v1672 = vsub.f32 %v1668, 1.0
    %v1673 = vsub.f32 %v1670, 1.0
    %v1674 = vsel %vm1659, %v1656, %v1671
    %v1675 = vsel %vm1660, %v1657, %v1672
    %v1676 = vsel %vm1661, %v1658, %v1673
    %v1677 = vpack.c.bf16 %v1675, %v1674
    %v1678 = vpack.c.bf16 %v1676, %v1676
    %v1679 = vld [vmem:[%s97] sm:$0xf]
    %vm1680 = vcmask 64512
    %v1682 = vsel %vm1680, %v1677, 0
    %v1685 = vsel %vm1680, %v1678, 0
    %v1688 = vsel %vm1190, %v1679, 0
    %1690 = vmatprep.subr.bf16.mxu0 0
    %1691 = vmatpush1.bf16.msra.mxu0 0
    %1692 = vmatprep.subr.bf16.mxu0 0
    %1693 = vmatpush1.bf16.msra.mxu0 0
    %1694 = vmatprep.subr.bf16.mxu0 0
    %1695 = vmatpush1.bf16.msra.mxu0 0
    %1696 = vmatprep.subr.bf16.mxu0 0
    %1697 = vmatpush1.bf16.msra.mxu0 0
    %1698 = vmatprep.subr.bf16.mxu0 0
    %1699 = vmatpush1.bf16.msra.mxu0 0
    %1700 = vmatprep.subr.bf16.mxu0 0
    %1701 = vmatpush1.bf16.msra.mxu0 0
    %1702 = vmatprep.subr.bf16.mxu0 0
    %1703 = vmatpush1.bf16.msra.mxu0 0
    %1704 = vmatprep.subr.bf16.mxu0 0
    %1705 = vmatpush1.bf16.msra.mxu0 %v1688
    %1706 = vmatprep.subr.bf16.mxu0 0
    %1707 = vmatpush2.bf16.msra.mxu0 0
    %1708 = vmatprep.subr.bf16.mxu0 0
    %1709 = vmatpush2.bf16.msra.mxu0 0
    %1710 = vmatprep.subr.bf16.mxu0 0
    %1711 = vmatpush2.bf16.msra.mxu0 0
    %1712 = vmatprep.subr.bf16.mxu0 0
    %1713 = vmatpush2.bf16.msra.mxu0 0
    %1714 = vmatprep.subr.bf16.mxu0 0
    %1715 = vmatpush2.bf16.msra.mxu0 0
    %1716 = vmatprep.subr.bf16.mxu0 0
    %1717 = vmatpush2.bf16.msra.mxu0 0
    %1718 = vmatprep.subr.bf16.mxu0 0
    %1719 = vmatpush2.bf16.msra.mxu0 0
    %1720 = vmatprep.subr.bf16.mxu0 0
    %1721 = vmatpush2.bf16.msra.mxu0 0
    %1722 = vmatprep.mubr.bf16.mxu0 0
    %1723 = vmatmul.mubr.bf16.gmra.mxu0 %v1682
    %v1724 = vpop.f32.mrf.mxu0
    %v1725 = vadd.f32 0.0, %v1724
    %v1726 = vpop.f32.mrf.mxu0
    %v1727 = vpop.f32.mrf.mxu0
    %v1728 = vadd.f32 0.0, %v1727
    %v1729 = vpop.f32.mrf.mxu0
    %1730 = vmatprep.mubr.bf16.mxu0 0
    %1731 = vmatmul.mubr.bf16.gmra.mxu0 %v1685
    %v1732 = vpop.f32.mrf.mxu0
    %v1733 = vadd.f32 0.0, %v1732
    %v1734 = vpop.f32.mrf.mxu0
    %v1735 = vpop.f32.mrf.mxu0
    %v1736 = vpop.f32.mrf.mxu0
    %1737 = vdwg.mxu0
    %v1739 = vlaneseq
    %v1740 = vshrl.u32 %v1739, 7
    %v1741 = vsub.s32 0, %v1740
    %v1742 = vrot.slane %v1638, %v1741
    %v1744 = vadd.f32 %v1742, %v1725
    %v1745 = vadd.f32 %v1742, %v1728
    %v1746 = vadd.f32 %v1742, %v1733
    %v1747 = vld [vmem:[#allocation11] sm:$0x1]
    %v1749 = vlaneseq
    %v1750 = vshrl.u32 %v1749, 7
    %v1751 = vsub.s32 0, %v1750
    %v1752 = vrot.slane %v1747, %v1751
    %v1754 = vmul.f32 %v1229, %v1752
    %v1755 = vmul.f32 %v1232, %v1752
    %v1756 = vmul.f32 %v1237, %v1752
    %v1757 = vld [vmem:[#allocation23] sm:$0x1]
    %v1759 = vlaneseq
    %v1760 = vshrl.u32 %v1759, 7
    %v1761 = vsub.s32 0, %v1760
    %v1762 = vrot.slane %v1757, %v1761
    %v1764 = vadd.f32 %v1754, %v1762
    %v1765 = vadd.f32 %v1755, %v1762
    %v1766 = vadd.f32 %v1756, %v1762
    %vm1767 = vcmp.gt.f32.partialorder %v1764, 0.0
    %vm1768 = vcmp.gt.f32.partialorder %v1765, 0.0
    %vm1769 = vcmp.gt.f32.partialorder %v1766, 0.0
    %v1770 = vmin.f32 %v1764, 0.0
    %v1771 = vmin.f32 %v1765, 0.0
    %v1772 = vmin.f32 %v1766, 0.0
    %v1773 = vmul.f32 %v1770, 1.442695
    %v1774 = vpow.pop %v1773
    %v1775 = vmul.f32 %v1771, 1.442695
    %v1776 = vpow.pop %v1775
    %v1777 = vmul.f32 %v1772, 1.442695
    %v1778 = vpow.pop %v1777
    %v1779 = vsub.f32 %v1774, 1.0
    %v1780 = vsub.f32 %v1776, 1.0
    %v1781 = vsub.f32 %v1778, 1.0
    %v1782 = vsel %vm1767, %v1764, %v1779
    %v1783 = vsel %vm1768, %v1765, %v1780
    %v1784 = vsel %vm1769, %v1766, %v1781
    %v1785 = vpack.c.bf16 %v1783, %v1782
    %v1786 = vpack.c.bf16 %v1784, %v1784
    %v1787 = vld [vmem:[%s99] sm:$0xf]
    %v1789 = vsel %vm1680, %v1785, 0
    %v1792 = vsel %vm1680, %v1786, 0
    %v1795 = vsel %vm1190, %v1787, 0
    %1797 = vmatprep.subr.bf16.mxu0 0
    %1798 = vmatpush1.bf16.msra.mxu0 0
    %1799 = vmatprep.subr.bf16.mxu0 0
    %1800 = vmatpush1.bf16.msra.mxu0 0
    %1801 = vmatprep.subr.bf16.mxu0 0
    %1802 = vmatpush1.bf16.msra.mxu0 0
    %1803 = vmatprep.subr.bf16.mxu0 0
    %1804 = vmatpush1.bf16.msra.mxu0 0
    %1805 = vmatprep.subr.bf16.mxu0 0
    %1806 = vmatpush1.bf16.msra.mxu0 0
    %1807 = vmatprep.subr.bf16.mxu0 0
    %1808 = vmatpush1.bf16.msra.mxu0 0
    %1809 = vmatprep.subr.bf16.mxu0 0
    %1810 = vmatpush1.bf16.msra.mxu0 0
    %1811 = vmatprep.subr.bf16.mxu0 0
    %1812 = vmatpush1.bf16.msra.mxu0 %v1795
    %1813 = vmatprep.subr.bf16.mxu0 0
    %1814 = vmatpush2.bf16.msra.mxu0 0
    %1815 = vmatprep.subr.bf16.mxu0 0
    %1816 = vmatpush2.bf16.msra.mxu0 0
    %1817 = vmatprep.subr.bf16.mxu0 0
    %1818 = vmatpush2.bf16.msra.mxu0 0
    %1819 = vmatprep.subr.bf16.mxu0 0
    %1820 = vmatpush2.bf16.msra.mxu0 0
    %1821 = vmatprep.subr.bf16.mxu0 0
    %1822 = vmatpush2.bf16.msra.mxu0 0
    %1823 = vmatprep.subr.bf16.mxu0 0
    %1824 = vmatpush2.bf16.msra.mxu0 0
    %1825 = vmatprep.subr.bf16.mxu0 0
    %1826 = vmatpush2.bf16.msra.mxu0 0
    %1827 = vmatprep.subr.bf16.mxu0 0
    %1828 = vmatpush2.bf16.msra.mxu0 0
    %1829 = vmatprep.mubr.bf16.mxu0 0
    %1830 = vmatmul.mubr.bf16.gmra.mxu0 %v1789
    %v1831 = vpop.f32.mrf.mxu0
    %v1832 = vadd.f32 0.0, %v1831
    %v1833 = vpop.f32.mrf.mxu0
    %v1834 = vpop.f32.mrf.mxu0
    %v1835 = vadd.f32 0.0, %v1834
    %v1836 = vpop.f32.mrf.mxu0
    %1837 = vmatprep.mubr.bf16.mxu0 0
    %1838 = vmatmul.mubr.bf16.gmra.mxu0 %v1792
    %v1839 = vpop.f32.mrf.mxu0
    %v1840 = vadd.f32 0.0, %v1839
    %v1841 = vpop.f32.mrf.mxu0
    %v1842 = vpop.f32.mrf.mxu0
    %v1843 = vpop.f32.mrf.mxu0
    %1844 = vdwg.mxu0
    %v1845 = vadd.f32 %v1744, %v1832
    %v1846 = vadd.f32 %v1745, %v1835
    %v1847 = vadd.f32 %v1746, %v1840
    %v1848 = vld [vmem:[#allocation13] sm:$0x1]
    %v1850 = vlaneseq
    %v1851 = vshrl.u32 %v1850, 7
    %v1852 = vsub.s32 0, %v1851
    %v1853 = vrot.slane %v1848, %v1852
    %v1855 = vmul.f32 %v1295, %v1853
    %v1856 = vmul.f32 %v1298, %v1853
    %v1857 = vmul.f32 %v1303, %v1853
    %v1858 = vld [vmem:[#allocation25] sm:$0x1]
    %v1860 = vlaneseq
    %v1861 = vshrl.u32 %v1860, 7
    %v1862 = vsub.s32 0, %v1861
    %v1863 = vrot.slane %v1858, %v1862
    %v1865 = vadd.f32 %v1855, %v1863
    %v1866 = vadd.f32 %v1856, %v1863
    %v1867 = vadd.f32 %v1857, %v1863
    %vm1868 = vcmp.gt.f32.partialorder %v1865, 0.0
    %vm1869 = vcmp.gt.f32.partialorder %v1866, 0.0
    %vm1870 = vcmp.gt.f32.partialorder %v1867, 0.0
    %v1871 = vmin.f32 %v1865, 0.0
    %v1872 = vmin.f32 %v1866, 0.0
    %v1873 = vmin.f32 %v1867, 0.0
    %v1874 = vmul.f32 %v1871, 1.442695
    %v1875 = vpow.pop %v1874
    %v1876 = vmul.f32 %v1872, 1.442695
    %v1877 = vpow.pop %v1876
    %v1878 = vmul.f32 %v1873, 1.442695
    %v1879 = vpow.pop %v1878
    %v1880 = vsub.f32 %v1875, 1.0
    %v1881 = vsub.f32 %v1877, 1.0
    %v1882 = vsub.f32 %v1879, 1.0
    %v1883 = vsel %vm1868, %v1865, %v1880
    %v1884 = vsel %vm1869, %v1866, %v1881
    %v1885 = vsel %vm1870, %v1867, %v1882
    %v1886 = vpack.c.bf16 %v1884, %v1883
    %v1887 = vpack.c.bf16 %v1885, %v1885
    %v1888 = vld [vmem:[%s101] sm:$0xf]
    %v1890 = vsel %vm1680, %v1886, 0
    %v1893 = vsel %vm1680, %v1887, 0
    %v1896 = vsel %vm1190, %v1888, 0
    %1898 = vmatprep.subr.bf16.mxu0 0
    %1899 = vmatpush1.bf16.msra.mxu0 0
    %1900 = vmatprep.subr.bf16.mxu0 0
    %1901 = vmatpush1.bf16.msra.mxu0 0
    %1902 = vmatprep.subr.bf16.mxu0 0
    %1903 = vmatpush1.bf16.msra.mxu0 0
    %1904 = vmatprep.subr.bf16.mxu0 0
    %1905 = vmatpush1.bf16.msra.mxu0 0
    %1906 = vmatprep.subr.bf16.mxu0 0
    %1907 = vmatpush1.bf16.msra.mxu0 0
    %1908 = vmatprep.subr.bf16.mxu0 0
    %1909 = vmatpush1.bf16.msra.mxu0 0
    %1910 = vmatprep.subr.bf16.mxu0 0
    %1911 = vmatpush1.bf16.msra.mxu0 0
    %1912 = vmatprep.subr.bf16.mxu0 0
    %1913 = vmatpush1.bf16.msra.mxu0 %v1896
    %1914 = vmatprep.subr.bf16.mxu0 0
    %1915 = vmatpush2.bf16.msra.mxu0 0
    %1916 = vmatprep.subr.bf16.mxu0 0
    %1917 = vmatpush2.bf16.msra.mxu0 0
    %1918 = vmatprep.subr.bf16.mxu0 0
    %1919 = vmatpush2.bf16.msra.mxu0 0
    %1920 = vmatprep.subr.bf16.mxu0 0
    %1921 = vmatpush2.bf16.msra.mxu0 0
    %1922 = vmatprep.subr.bf16.mxu0 0
    %1923 = vmatpush2.bf16.msra.mxu0 0
    %1924 = vmatprep.subr.bf16.mxu0 0
    %1925 = vmatpush2.bf16.msra.mxu0 0
    %1926 = vmatprep.subr.bf16.mxu0 0
    %1927 = vmatpush2.bf16.msra.mxu0 0
    %1928 = vmatprep.subr.bf16.mxu0 0
    %1929 = vmatpush2.bf16.msra.mxu0 0
    %1930 = vmatprep.mubr.bf16.mxu0 0
    %1931 = vmatmul.mubr.bf16.gmra.mxu0 %v1890
    %v1932 = vpop.f32.mrf.mxu0
    %v1933 = vadd.f32 0.0, %v1932
    %v1934 = vpop.f32.mrf.mxu0
    %v1935 = vpop.f32.mrf.mxu0
    %v1936 = vadd.f32 0.0, %v1935
    %v1937 = vpop.f32.mrf.mxu0
    %1938 = vmatprep.mubr.bf16.mxu0 0
    %1939 = vmatmul.mubr.bf16.gmra.mxu0 %v1893
    %v1940 = vpop.f32.mrf.mxu0
    %v1941 = vadd.f32 0.0, %v1940
    %v1942 = vpop.f32.mrf.mxu0
    %v1943 = vpop.f32.mrf.mxu0
    %v1944 = vpop.f32.mrf.mxu0
    %1945 = vdwg.mxu0
    %v1946 = vadd.f32 %v1845, %v1933
    %v1947 = vadd.f32 %v1846, %v1936
    %v1948 = vadd.f32 %v1847, %v1941
    %v1949 = vld [vmem:[#allocation14] sm:$0x1]
    %v1951 = vlaneseq
    %v1952 = vshrl.u32 %v1951, 7
    %v1953 = vsub.s32 0, %v1952
    %v1954 = vrot.slane %v1949, %v1953
    %v1956 = vmul.f32 %v1361, %v1954
    %v1957 = vmul.f32 %v1364, %v1954
    %v1958 = vmul.f32 %v1369, %v1954
    %v1959 = vld [vmem:[#allocation26] sm:$0x1]
    %v1961 = vlaneseq
    %v1962 = vshrl.u32 %v1961, 7
    %v1963 = vsub.s32 0, %v1962
    %v1964 = vrot.slane %v1959, %v1963
    %v1966 = vadd.f32 %v1956, %v1964
    %v1967 = vadd.f32 %v1957, %v1964
    %v1968 = vadd.f32 %v1958, %v1964
    %vm1969 = vcmp.gt.f32.partialorder %v1966, 0.0
    %vm1970 = vcmp.gt.f32.partialorder %v1967, 0.0
    %vm1971 = vcmp.gt.f32.partialorder %v1968, 0.0
    %v1972 = vmin.f32 %v1966, 0.0
    %v1973 = vmin.f32 %v1967, 0.0
    %v1974 = vmin.f32 %v1968, 0.0
    %v1975 = vmul.f32 %v1972, 1.442695
    %v1976 = vpow.pop %v1975
    %v1977 = vmul.f32 %v1973, 1.442695
    %v1978 = vpow.pop %v1977
    %v1979 = vmul.f32 %v1974, 1.442695
    %v1980 = vpow.pop %v1979
    %v1981 = vsub.f32 %v1976, 1.0
    %v1982 = vsub.f32 %v1978, 1.0
    %v1983 = vsub.f32 %v1980, 1.0
    %v1984 = vsel %vm1969, %v1966, %v1981
    %v1985 = vsel %vm1970, %v1967, %v1982
    %v1986 = vsel %vm1971, %v1968, %v1983
    %v1987 = vpack.c.bf16 %v1985, %v1984
    %v1988 = vpack.c.bf16 %v1986, %v1986
    %v1989 = vld [vmem:[%s103] sm:$0xf]
    %v1991 = vsel %vm1680, %v1987, 0
    %v1994 = vsel %vm1680, %v1988, 0
    %v1997 = vsel %vm1190, %v1989, 0
    %1999 = vmatprep.subr.bf16.mxu0 0
    %2000 = vmatpush1.bf16.msra.mxu0 0
    %2001 = vmatprep.subr.bf16.mxu0 0
    %2002 = vmatpush1.bf16.msra.mxu0 0
    %2003 = vmatprep.subr.bf16.mxu0 0
    %2004 = vmatpush1.bf16.msra.mxu0 0
    %2005 = vmatprep.subr.bf16.mxu0 0
    %2006 = vmatpush1.bf16.msra.mxu0 0
    %2007 = vmatprep.subr.bf16.mxu0 0
    %2008 = vmatpush1.bf16.msra.mxu0 0
    %2009 = vmatprep.subr.bf16.mxu0 0
    %2010 = vmatpush1.bf16.msra.mxu0 0
    %2011 = vmatprep.subr.bf16.mxu0 0
    %2012 = vmatpush1.bf16.msra.mxu0 0
    %2013 = vmatprep.subr.bf16.mxu0 0
    %2014 = vmatpush1.bf16.msra.mxu0 %v1997
    %2015 = vmatprep.subr.bf16.mxu0 0
    %2016 = vmatpush2.bf16.msra.mxu0 0
    %2017 = vmatprep.subr.bf16.mxu0 0
    %2018 = vmatpush2.bf16.msra.mxu0 0
    %2019 = vmatprep.subr.bf16.mxu0 0
    %2020 = vmatpush2.bf16.msra.mxu0 0
    %2021 = vmatprep.subr.bf16.mxu0 0
    %2022 = vmatpush2.bf16.msra.mxu0 0
    %2023 = vmatprep.subr.bf16.mxu0 0
    %2024 = vmatpush2.bf16.msra.mxu0 0
    %2025 = vmatprep.subr.bf16.mxu0 0
    %2026 = vmatpush2.bf16.msra.mxu0 0
    %2027 = vmatprep.subr.bf16.mxu0 0
    %2028 = vmatpush2.bf16.msra.mxu0 0
    %2029 = vmatprep.subr.bf16.mxu0 0
    %2030 = vmatpush2.bf16.msra.mxu0 0
    %2031 = vmatprep.mubr.bf16.mxu0 0
    %2032 = vmatmul.mubr.bf16.gmra.mxu0 %v1991
    %v2033 = vpop.f32.mrf.mxu0
    %v2034 = vadd.f32 0.0, %v2033
    %v2035 = vpop.f32.mrf.mxu0
    %v2036 = vpop.f32.mrf.mxu0
    %v2037 = vadd.f32 0.0, %v2036
    %v2038 = vpop.f32.mrf.mxu0
    %2039 = vmatprep.mubr.bf16.mxu0 0
    %2040 = vmatmul.mubr.bf16.gmra.mxu0 %v1994
    %v2041 = vpop.f32.mrf.mxu0
    %v2042 = vadd.f32 0.0, %v2041
    %v2043 = vpop.f32.mrf.mxu0
    %v2044 = vpop.f32.mrf.mxu0
    %v2045 = vpop.f32.mrf.mxu0
    %2046 = vdwg.mxu0
    %v2047 = vadd.f32 %v1946, %v2034
    %v2048 = vadd.f32 %v1947, %v2037
    %v2049 = vadd.f32 %v1948, %v2042
    %v2050 = vld [vmem:[#allocation16] sm:$0x1]
    %v2052 = vlaneseq
    %v2053 = vshrl.u32 %v2052, 7
    %v2054 = vsub.s32 0, %v2053
    %v2055 = vrot.slane %v2050, %v2054
    %v2057 = vmul.f32 %v1427, %v2055
    %v2058 = vmul.f32 %v1430, %v2055
    %v2059 = vmul.f32 %v1435, %v2055
    %v2060 = vld [vmem:[#allocation28] sm:$0x1]
    %v2062 = vlaneseq
    %v2063 = vshrl.u32 %v2062, 7
    %v2064 = vsub.s32 0, %v2063
    %v2065 = vrot.slane %v2060, %v2064
    %v2067 = vadd.f32 %v2057, %v2065
    %v2068 = vadd.f32 %v2058, %v2065
    %v2069 = vadd.f32 %v2059, %v2065
    %vm2070 = vcmp.gt.f32.partialorder %v2067, 0.0
    %vm2071 = vcmp.gt.f32.partialorder %v2068, 0.0
    %vm2072 = vcmp.gt.f32.partialorder %v2069, 0.0
    %v2073 = vmin.f32 %v2067, 0.0
    %v2074 = vmin.f32 %v2068, 0.0
    %v2075 = vmin.f32 %v2069, 0.0
    %v2076 = vmul.f32 %v2073, 1.442695
    %v2077 = vpow.pop %v2076
    %v2078 = vmul.f32 %v2074, 1.442695
    %v2079 = vpow.pop %v2078
    %v2080 = vmul.f32 %v2075, 1.442695
    %v2081 = vpow.pop %v2080
    %v2082 = vsub.f32 %v2077, 1.0
    %v2083 = vsub.f32 %v2079, 1.0
    %v2084 = vsub.f32 %v2081, 1.0
    %v2085 = vsel %vm2070, %v2067, %v2082
    %v2086 = vsel %vm2071, %v2068, %v2083
    %v2087 = vsel %vm2072, %v2069, %v2084
    %v2088 = vpack.c.bf16 %v2086, %v2085
    %v2089 = vpack.c.bf16 %v2087, %v2087
    %v2090 = vld [vmem:[%s105] sm:$0xf]
    %v2092 = vsel %vm1680, %v2088, 0
    %v2095 = vsel %vm1680, %v2089, 0
    %v2098 = vsel %vm1190, %v2090, 0
    %2100 = vmatprep.subr.bf16.mxu0 0
    %2101 = vmatpush1.bf16.msra.mxu0 0
    %2102 = vmatprep.subr.bf16.mxu0 0
    %2103 = vmatpush1.bf16.msra.mxu0 0
    %2104 = vmatprep.subr.bf16.mxu0 0
    %2105 = vmatpush1.bf16.msra.mxu0 0
    %2106 = vmatprep.subr.bf16.mxu0 0
    %2107 = vmatpush1.bf16.msra.mxu0 0
    %2108 = vmatprep.subr.bf16.mxu0 0
    %2109 = vmatpush1.bf16.msra.mxu0 0
    %2110 = vmatprep.subr.bf16.mxu0 0
    %2111 = vmatpush1.bf16.msra.mxu0 0
    %2112 = vmatprep.subr.bf16.mxu0 0
    %2113 = vmatpush1.bf16.msra.mxu0 0
    %2114 = vmatprep.subr.bf16.mxu0 0
    %2115 = vmatpush1.bf16.msra.mxu0 %v2098
    %2116 = vmatprep.subr.bf16.mxu0 0
    %2117 = vmatpush2.bf16.msra.mxu0 0
    %2118 = vmatprep.subr.bf16.mxu0 0
    %2119 = vmatpush2.bf16.msra.mxu0 0
    %2120 = vmatprep.subr.bf16.mxu0 0
    %2121 = vmatpush2.bf16.msra.mxu0 0
    %2122 = vmatprep.subr.bf16.mxu0 0
    %2123 = vmatpush2.bf16.msra.mxu0 0
    %2124 = vmatprep.subr.bf16.mxu0 0
    %2125 = vmatpush2.bf16.msra.mxu0 0
    %2126 = vmatprep.subr.bf16.mxu0 0
    %2127 = vmatpush2.bf16.msra.mxu0 0
    %2128 = vmatprep.subr.bf16.mxu0 0
    %2129 = vmatpush2.bf16.msra.mxu0 0
    %2130 = vmatprep.subr.bf16.mxu0 0
    %2131 = vmatpush2.bf16.msra.mxu0 0
    %2132 = vmatprep.mubr.bf16.mxu0 0
    %2133 = vmatmul.mubr.bf16.gmra.mxu0 %v2092
    %v2134 = vpop.f32.mrf.mxu0
    %v2135 = vadd.f32 0.0, %v2134
    %v2136 = vpop.f32.mrf.mxu0
    %v2137 = vpop.f32.mrf.mxu0
    %v2138 = vadd.f32 0.0, %v2137
    %v2139 = vpop.f32.mrf.mxu0
    %2140 = vmatprep.mubr.bf16.mxu0 0
    %2141 = vmatmul.mubr.bf16.gmra.mxu0 %v2095
    %v2142 = vpop.f32.mrf.mxu0
    %v2143 = vadd.f32 0.0, %v2142
    %v2144 = vpop.f32.mrf.mxu0
    %v2145 = vpop.f32.mrf.mxu0
    %v2146 = vpop.f32.mrf.mxu0
    %2147 = vdwg.mxu0
    %v2148 = vadd.f32 %v2047, %v2135
    %v2149 = vadd.f32 %v2048, %v2138
    %v2150 = vadd.f32 %v2049, %v2143
    %v2151 = vld [vmem:[#allocation17] sm:$0x1]
    %v2153 = vlaneseq
    %v2154 = vshrl.u32 %v2153, 7
    %v2155 = vsub.s32 0, %v2154
    %v2156 = vrot.slane %v2151, %v2155
    %v2158 = vmul.f32 %v1493, %v2156
    %v2159 = vmul.f32 %v1496, %v2156
    %v2160 = vmul.f32 %v1501, %v2156
    %v2161 = vld [vmem:[#allocation29] sm:$0x1]
    %v2163 = vlaneseq
    %v2164 = vshrl.u32 %v2163, 7
    %v2165 = vsub.s32 0, %v2164
    %v2166 = vrot.slane %v2161, %v2165
    %v2168 = vadd.f32 %v2158, %v2166
    %v2169 = vadd.f32 %v2159, %v2166
    %v2170 = vadd.f32 %v2160, %v2166
    %vm2171 = vcmp.gt.f32.partialorder %v2168, 0.0
    %vm2172 = vcmp.gt.f32.partialorder %v2169, 0.0
    %vm2173 = vcmp.gt.f32.partialorder %v2170, 0.0
    %v2174 = vmin.f32 %v2168, 0.0
    %v2175 = vmin.f32 %v2169, 0.0
    %v2176 = vmin.f32 %v2170, 0.0
    %v2177 = vmul.f32 %v2174, 1.442695
    %v2178 = vpow.pop %v2177
    %v2179 = vmul.f32 %v2175, 1.442695
    %v2180 = vpow.pop %v2179
    %v2181 = vmul.f32 %v2176, 1.442695
    %v2182 = vpow.pop %v2181
    %v2183 = vsub.f32 %v2178, 1.0
    %v2184 = vsub.f32 %v2180, 1.0
    %v2185 = vsub.f32 %v2182, 1.0
    %v2186 = vsel %vm2171, %v2168, %v2183
    %v2187 = vsel %vm2172, %v2169, %v2184
    %v2188 = vsel %vm2173, %v2170, %v2185
    %v2189 = vpack.c.bf16 %v2187, %v2186
    %v2190 = vpack.c.bf16 %v2188, %v2188
    %v2191 = vld [vmem:[%s107] sm:$0xf]
    %v2193 = vsel %vm1680, %v2189, 0
    %v2196 = vsel %vm1680, %v2190, 0
    %v2199 = vsel %vm1190, %v2191, 0
    %2201 = vmatprep.subr.bf16.mxu0 0
    %2202 = vmatpush1.bf16.msra.mxu0 0
    %2203 = vmatprep.subr.bf16.mxu0 0
    %2204 = vmatpush1.bf16.msra.mxu0 0
    %2205 = vmatprep.subr.bf16.mxu0 0
    %2206 = vmatpush1.bf16.msra.mxu0 0
    %2207 = vmatprep.subr.bf16.mxu0 0
    %2208 = vmatpush1.bf16.msra.mxu0 0
    %2209 = vmatprep.subr.bf16.mxu0 0
    %2210 = vmatpush1.bf16.msra.mxu0 0
    %2211 = vmatprep.subr.bf16.mxu0 0
    %2212 = vmatpush1.bf16.msra.mxu0 0
    %2213 = vmatprep.subr.bf16.mxu0 0
    %2214 = vmatpush1.bf16.msra.mxu0 0
    %2215 = vmatprep.subr.bf16.mxu0 0
    %2216 = vmatpush1.bf16.msra.mxu0 %v2199
    %2217 = vmatprep.subr.bf16.mxu0 0
    %2218 = vmatpush2.bf16.msra.mxu0 0
    %2219 = vmatprep.subr.bf16.mxu0 0
    %2220 = vmatpush2.bf16.msra.mxu0 0
    %2221 = vmatprep.subr.bf16.mxu0 0
    %2222 = vmatpush2.bf16.msra.mxu0 0
    %2223 = vmatprep.subr.bf16.mxu0 0
    %2224 = vmatpush2.bf16.msra.mxu0 0
    %2225 = vmatprep.subr.bf16.mxu0 0
    %2226 = vmatpush2.bf16.msra.mxu0 0
    %2227 = vmatprep.subr.bf16.mxu0 0
    %2228 = vmatpush2.bf16.msra.mxu0 0
    %2229 = vmatprep.subr.bf16.mxu0 0
    %2230 = vmatpush2.bf16.msra.mxu0 0
    %2231 = vmatprep.subr.bf16.mxu0 0
    %2232 = vmatpush2.bf16.msra.mxu0 0
    %2233 = vmatprep.mubr.bf16.mxu0 0
    %2234 = vmatmul.mubr.bf16.gmra.mxu0 %v2193
    %v2235 = vpop.f32.mrf.mxu0
    %v2236 = vadd.f32 0.0, %v2235
    %v2237 = vpop.f32.mrf.mxu0
    %v2238 = vpop.f32.mrf.mxu0
    %v2239 = vadd.f32 0.0, %v2238
    %v2240 = vpop.f32.mrf.mxu0
    %2241 = vmatprep.mubr.bf16.mxu0 0
    %2242 = vmatmul.mubr.bf16.gmra.mxu0 %v2196
    %v2243 = vpop.f32.mrf.mxu0
    %v2244 = vadd.f32 0.0, %v2243
    %v2245 = vpop.f32.mrf.mxu0
    %v2246 = vpop.f32.mrf.mxu0
    %v2247 = vpop.f32.mrf.mxu0
    %2248 = vdwg.mxu0
    %v2249 = vadd.f32 %v2148, %v2236
    %v2250 = vadd.f32 %v2149, %v2239
    %v2251 = vadd.f32 %v2150, %v2244
    %v2252 = vld [vmem:[#allocation19] sm:$0x1]
    %v2254 = vlaneseq
    %v2255 = vshrl.u32 %v2254, 7
    %v2256 = vsub.s32 0, %v2255
    %v2257 = vrot.slane %v2252, %v2256
    %v2259 = vmul.f32 %v1559, %v2257
    %v2260 = vmul.f32 %v1562, %v2257
    %v2261 = vmul.f32 %v1567, %v2257
    %v2262 = vld [vmem:[#allocation31] sm:$0x1]
    %v2264 = vlaneseq
    %v2265 = vshrl.u32 %v2264, 7
    %v2266 = vsub.s32 0, %v2265
    %v2267 = vrot.slane %v2262, %v2266
    %v2269 = vadd.f32 %v2259, %v2267
    %v2270 = vadd.f32 %v2260, %v2267
    %v2271 = vadd.f32 %v2261, %v2267
    %vm2272 = vcmp.gt.f32.partialorder %v2269, 0.0
    %vm2273 = vcmp.gt.f32.partialorder %v2270, 0.0
    %vm2274 = vcmp.gt.f32.partialorder %v2271, 0.0
    %v2275 = vmin.f32 %v2269, 0.0
    %v2276 = vmin.f32 %v2270, 0.0
    %v2277 = vmin.f32 %v2271, 0.0
    %v2278 = vmul.f32 %v2275, 1.442695
    %v2279 = vpow.pop %v2278
    %v2280 = vmul.f32 %v2276, 1.442695
    %v2281 = vpow.pop %v2280
    %v2282 = vmul.f32 %v2277, 1.442695
    %v2283 = vpow.pop %v2282
    %v2284 = vsub.f32 %v2279, 1.0
    %v2285 = vsub.f32 %v2281, 1.0
    %v2286 = vsub.f32 %v2283, 1.0
    %v2287 = vsel %vm2272, %v2269, %v2284
    %v2288 = vsel %vm2273, %v2270, %v2285
    %v2289 = vsel %vm2274, %v2271, %v2286
    %v2290 = vpack.c.bf16 %v2288, %v2287
    %v2291 = vpack.c.bf16 %v2289, %v2289
    %v2292 = vld [vmem:[%s109] sm:$0xf]
    %v2294 = vsel %vm1680, %v2290, 0
    %v2297 = vsel %vm1680, %v2291, 0
    %v2300 = vsel %vm1190, %v2292, 0
    %2302 = vmatprep.subr.bf16.mxu0 0
    %2303 = vmatpush1.bf16.msra.mxu0 0
    %2304 = vmatprep.subr.bf16.mxu0 0
    %2305 = vmatpush1.bf16.msra.mxu0 0
    %2306 = vmatprep.subr.bf16.mxu0 0
    %2307 = vmatpush1.bf16.msra.mxu0 0
    %2308 = vmatprep.subr.bf16.mxu0 0
    %2309 = vmatpush1.bf16.msra.mxu0 0
    %2310 = vmatprep.subr.bf16.mxu0 0
    %2311 = vmatpush1.bf16.msra.mxu0 0
    %2312 = vmatprep.subr.bf16.mxu0 0
    %2313 = vmatpush1.bf16.msra.mxu0 0
    %2314 = vmatprep.subr.bf16.mxu0 0
    %2315 = vmatpush1.bf16.msra.mxu0 0
    %2316 = vmatprep.subr.bf16.mxu0 0
    %2317 = vmatpush1.bf16.msra.mxu0 %v2300
    %2318 = vmatprep.subr.bf16.mxu0 0
    %2319 = vmatpush2.bf16.msra.mxu0 0
    %2320 = vmatprep.subr.bf16.mxu0 0
    %2321 = vmatpush2.bf16.msra.mxu0 0
    %2322 = vmatprep.subr.bf16.mxu0 0
    %2323 = vmatpush2.bf16.msra.mxu0 0
    %2324 = vmatprep.subr.bf16.mxu0 0
    %2325 = vmatpush2.bf16.msra.mxu0 0
    %2326 = vmatprep.subr.bf16.mxu0 0
    %2327 = vmatpush2.bf16.msra.mxu0 0
    %2328 = vmatprep.subr.bf16.mxu0 0
    %2329 = vmatpush2.bf16.msra.mxu0 0
    %2330 = vmatprep.subr.bf16.mxu0 0
    %2331 = vmatpush2.bf16.msra.mxu0 0
    %2332 = vmatprep.subr.bf16.mxu0 0
    %2333 = vmatpush2.bf16.msra.mxu0 0
    %2334 = vmatprep.mubr.bf16.mxu0 0
    %2335 = vmatmul.mubr.bf16.gmra.mxu0 %v2294
    %v2336 = vpop.f32.mrf.mxu0
    %v2337 = vadd.f32 0.0, %v2336
    %v2338 = vpop.f32.mrf.mxu0
    %v2339 = vpop.f32.mrf.mxu0
    %v2340 = vadd.f32 0.0, %v2339
    %v2341 = vpop.f32.mrf.mxu0
    %2342 = vmatprep.mubr.bf16.mxu0 0
    %2343 = vmatmul.mubr.bf16.gmra.mxu0 %v2297
    %v2344 = vpop.f32.mrf.mxu0
    %v2345 = vadd.f32 0.0, %v2344
    %v2346 = vpop.f32.mrf.mxu0
    %v2347 = vpop.f32.mrf.mxu0
    %v2348 = vpop.f32.mrf.mxu0
    %2349 = vdwg.mxu0
    %v2350 = vadd.f32 %v2249, %v2337
    %v2351 = vadd.f32 %v2250, %v2340
    %v2352 = vadd.f32 %v2251, %v2345
    %v2353 = vld [vmem:[#allocation20] sm:$0x1]
    %v2355 = vlaneseq
    %v2356 = vshrl.u32 %v2355, 7
    %v2357 = vsub.s32 0, %v2356
    %v2358 = vrot.slane %v2353, %v2357
    %v2360 = vmul.f32 %v1625, %v2358
    %v2361 = vmul.f32 %v1628, %v2358
    %v2362 = vmul.f32 %v1633, %v2358
    %v2363 = vld [vmem:[#allocation32] sm:$0x1]
    %v2365 = vlaneseq
    %v2366 = vshrl.u32 %v2365, 7
    %v2367 = vsub.s32 0, %v2366
    %v2368 = vrot.slane %v2363, %v2367
    %v2370 = vadd.f32 %v2360, %v2368
    %v2371 = vadd.f32 %v2361, %v2368
    %v2372 = vadd.f32 %v2362, %v2368
    %vm2373 = vcmp.gt.f32.partialorder %v2370, 0.0
    %vm2374 = vcmp.gt.f32.partialorder %v2371, 0.0
    %vm2375 = vcmp.gt.f32.partialorder %v2372, 0.0
    %v2376 = vmin.f32 %v2370, 0.0
    %v2377 = vmin.f32 %v2371, 0.0
    %v2378 = vmin.f32 %v2372, 0.0
    %v2379 = vmul.f32 %v2376, 1.442695
    %v2380 = vpow.pop %v2379
    %v2381 = vmul.f32 %v2377, 1.442695
    %v2382 = vpow.pop %v2381
    %v2383 = vmul.f32 %v2378, 1.442695
    %v2384 = vpow.pop %v2383
    %v2385 = vsub.f32 %v2380, 1.0
    %v2386 = vsub.f32 %v2382, 1.0
    %v2387 = vsub.f32 %v2384, 1.0
    %v2388 = vsel %vm2373, %v2370, %v2385
    %v2389 = vsel %vm2374, %v2371, %v2386
    %v2390 = vsel %vm2375, %v2372, %v2387
    %v2391 = vpack.c.bf16 %v2389, %v2388
    %v2392 = vpack.c.bf16 %v2390, %v2390
    %v2393 = vld [vmem:[%s111] sm:$0xf]
    %v2395 = vsel %vm1680, %v2391, 0
    %v2398 = vsel %vm1680, %v2392, 0
    %v2401 = vsel %vm1190, %v2393, 0
    %2403 = vmatprep.subr.bf16.mxu0 0
    %2404 = vmatpush1.bf16.msra.mxu0 0
    %2405 = vmatprep.subr.bf16.mxu0 0
    %2406 = vmatpush1.bf16.msra.mxu0 0
    %2407 = vmatprep.subr.bf16.mxu0 0
    %2408 = vmatpush1.bf16.msra.mxu0 0
    %2409 = vmatprep.subr.bf16.mxu0 0
    %2410 = vmatpush1.bf16.msra.mxu0 0
    %2411 = vmatprep.subr.bf16.mxu0 0
    %2412 = vmatpush1.bf16.msra.mxu0 0
    %2413 = vmatprep.subr.bf16.mxu0 0
    %2414 = vmatpush1.bf16.msra.mxu0 0
    %2415 = vmatprep.subr.bf16.mxu0 0
    %2416 = vmatpush1.bf16.msra.mxu0 0
    %2417 = vmatprep.subr.bf16.mxu0 0
    %2418 = vmatpush1.bf16.msra.mxu0 %v2401
    %2419 = vmatprep.subr.bf16.mxu0 0
    %2420 = vmatpush2.bf16.msra.mxu0 0
    %2421 = vmatprep.subr.bf16.mxu0 0
    %2422 = vmatpush2.bf16.msra.mxu0 0
    %2423 = vmatprep.subr.bf16.mxu0 0
    %2424 = vmatpush2.bf16.msra.mxu0 0
    %2425 = vmatprep.subr.bf16.mxu0 0
    %2426 = vmatpush2.bf16.msra.mxu0 0
    %2427 = vmatprep.subr.bf16.mxu0 0
    %2428 = vmatpush2.bf16.msra.mxu0 0
    %2429 = vmatprep.subr.bf16.mxu0 0
    %2430 = vmatpush2.bf16.msra.mxu0 0
    %2431 = vmatprep.subr.bf16.mxu0 0
    %2432 = vmatpush2.bf16.msra.mxu0 0
    %2433 = vmatprep.subr.bf16.mxu0 0
    %2434 = vmatpush2.bf16.msra.mxu0 0
    %2435 = vmatprep.mubr.bf16.mxu0 0
    %2436 = vmatmul.mubr.bf16.gmra.mxu0 %v2395
    %v2437 = vpop.f32.mrf.mxu0
    %v2438 = vadd.f32 0.0, %v2437
    %v2439 = vpop.f32.mrf.mxu0
    %v2440 = vpop.f32.mrf.mxu0
    %v2441 = vadd.f32 0.0, %v2440
    %v2442 = vpop.f32.mrf.mxu0
    %2443 = vmatprep.mubr.bf16.mxu0 0
    %2444 = vmatmul.mubr.bf16.gmra.mxu0 %v2398
    %v2445 = vpop.f32.mrf.mxu0
    %v2446 = vadd.f32 0.0, %v2445
    %v2447 = vpop.f32.mrf.mxu0
    %v2448 = vpop.f32.mrf.mxu0
    %v2449 = vpop.f32.mrf.mxu0
    %2450 = vdwg.mxu0
    %v2451 = vadd.f32 %v2350, %v2438
    %v2452 = vadd.f32 %v2351, %v2441
    %v2453 = vadd.f32 %v2352, %v2446
    %v2454 = vld [vmem:[#allocation34] sm:$0x1]
    %v2455 = vld [vmem:[#allocation35] sm:$0x1]
    %v2457 = vlaneseq
    %v2458 = vshrl.u32 %v2457, 7
    %v2459 = vsub.s32 0, %v2458
    %v2460 = vrot.slane %v2455, %v2459
    %v2462 = vmul.f32 %v2451, %v2460
    %v2463 = vmul.f32 %v2452, %v2460
    %v2464 = vmul.f32 %v2453, %v2460
    %v2465 = vld [vmem:[#allocation37] sm:$0x1]
    %v2467 = vlaneseq
    %v2468 = vshrl.u32 %v2467, 7
    %v2469 = vsub.s32 0, %v2468
    %v2470 = vrot.slane %v2465, %v2469
    %v2472 = vadd.f32 %v2462, %v2470
    %v2473 = vadd.f32 %v2463, %v2470
    %v2474 = vadd.f32 %v2464, %v2470
    %vm2475 = vcmp.gt.f32.partialorder %v2472, 0.0
    %vm2476 = vcmp.gt.f32.partialorder %v2473, 0.0
    %vm2477 = vcmp.gt.f32.partialorder %v2474, 0.0
    %v2478 = vmin.f32 %v2472, 0.0
    %v2479 = vmin.f32 %v2473, 0.0
    %v2480 = vmin.f32 %v2474, 0.0
    %v2481 = vmul.f32 %v2478, 1.442695
    %v2482 = vpow.pop %v2481
    %v2483 = vmul.f32 %v2479, 1.442695
    %v2484 = vpow.pop %v2483
    %v2485 = vmul.f32 %v2480, 1.442695
    %v2486 = vpow.pop %v2485
    %v2487 = vsub.f32 %v2482, 1.0
    %v2488 = vsub.f32 %v2484, 1.0
    %v2489 = vsub.f32 %v2486, 1.0
    %v2490 = vsel %vm2475, %v2472, %v2487
    %v2491 = vsel %vm2476, %v2473, %v2488
    %v2492 = vsel %vm2477, %v2474, %v2489
    %v2493 = vpack.c.bf16 %v2491, %v2490
    %v2494 = vpack.c.bf16 %v2492, %v2492
    %v2495 = vld [vmem:[%s119] sm:$0xf]
    %v2496 = vld [vmem:[%s119 + $0x4] sm:$0xf]
    %v2499 = vunpack.c.l.b16 %v2495
    %v2500 = vunpack.c.l.b16 %v2496
    %v2501 = vpack.c.b16 %v2500, %v2499
    %v2504 = vsel %vm1106, %v2493, 0
    %v2507 = vsel %vm1106, %v2494, 0
    %2509 = vmatprep.subr.bf16.mxu0 0
    %2510 = vmatpush1.bf16.msra.mxu0 0
    %2511 = vmatprep.subr.bf16.mxu0 0
    %2512 = vmatpush1.bf16.msra.mxu0 0
    %2513 = vmatprep.subr.bf16.mxu0 0
    %2514 = vmatpush1.bf16.msra.mxu0 0
    %2515 = vmatprep.subr.bf16.mxu0 0
    %2516 = vmatpush1.bf16.msra.mxu0 0
    %2517 = vmatprep.subr.bf16.mxu0 0
    %2518 = vmatpush1.bf16.msra.mxu0 0
    %2519 = vmatprep.subr.bf16.mxu0 0
    %2520 = vmatpush1.bf16.msra.mxu0 0
    %2521 = vmatprep.subr.bf16.mxu0 0
    %2522 = vmatpush1.bf16.msra.mxu0 0
    %2523 = vmatprep.subr.bf16.mxu0 0
    %2524 = vmatpush1.bf16.msra.mxu0 %v2501
    %2525 = vmatprep.subr.bf16.mxu0 0
    %2526 = vmatpush2.bf16.msra.mxu0 0
    %2527 = vmatprep.subr.bf16.mxu0 0
    %2528 = vmatpush2.bf16.msra.mxu0 0
    %2529 = vmatprep.subr.bf16.mxu0 0
    %2530 = vmatpush2.bf16.msra.mxu0 0
    %2531 = vmatprep.subr.bf16.mxu0 0
    %2532 = vmatpush2.bf16.msra.mxu0 0
    %2533 = vmatprep.subr.bf16.mxu0 0
    %2534 = vmatpush2.bf16.msra.mxu0 0
    %2535 = vmatprep.subr.bf16.mxu0 0
    %2536 = vmatpush2.bf16.msra.mxu0 0
    %2537 = vmatprep.subr.bf16.mxu0 0
    %2538 = vmatpush2.bf16.msra.mxu0 0
    %2539 = vmatprep.subr.bf16.mxu0 0
    %2540 = vmatpush2.bf16.msra.mxu0 0
    %2541 = vmatprep.mubr.bf16.mxu0 0
    %2542 = vmatmul.mubr.bf16.gmra.mxu0 %v2504
    %v2543 = vpop.f32.mrf.mxu0
    %v2544 = vadd.f32 0.0, %v2543
    %v2545 = vpop.f32.mrf.mxu0
    %v2546 = vpop.f32.mrf.mxu0
    %v2547 = vadd.f32 0.0, %v2546
    %v2548 = vpop.f32.mrf.mxu0
    %2549 = vmatprep.mubr.bf16.mxu0 0
    %2550 = vmatmul.mubr.bf16.gmra.mxu0 %v2507
    %v2551 = vpop.f32.mrf.mxu0
    %v2552 = vadd.f32 0.0, %v2551
    %v2553 = vpop.f32.mrf.mxu0
    %v2554 = vpop.f32.mrf.mxu0
    %v2555 = vpop.f32.mrf.mxu0
    %2556 = vdwg.mxu0
    %v2558 = vlaneseq
    %v2559 = vshrl.u32 %v2558, 7
    %v2560 = vsub.s32 0, %v2559
    %v2561 = vrot.slane %v2454, %v2560
    %v2563 = vadd.f32 %v2561, %v2544
    %v2564 = vadd.f32 %v2561, %v2547
    %v2565 = vadd.f32 %v2561, %v2552
    %v2566 = vld [vmem:[#allocation38] sm:$0x1]
    %v2567 = vld [vmem:[#allocation40] sm:$0x1]
    %v2569 = vlaneseq
    %v2570 = vshrl.u32 %v2569, 7
    %v2571 = vsub.s32 0, %v2570
    %v2572 = vrot.slane %v2567, %v2571
    %v2574 = vmul.f32 %v2563, %v2572
    %v2575 = vmul.f32 %v2564, %v2572
    %v2576 = vmul.f32 %v2565, %v2572
    %v2577 = vld [vmem:[#allocation41] sm:$0x1]
    %v2579 = vlaneseq
    %v2580 = vshrl.u32 %v2579, 7
    %v2581 = vsub.s32 0, %v2580
    %v2582 = vrot.slane %v2577, %v2581
    %v2584 = vadd.f32 %v2574, %v2582
    %v2585 = vadd.f32 %v2575, %v2582
    %v2586 = vadd.f32 %v2576, %v2582
    %vm2587 = vcmp.gt.f32.partialorder %v2584, 0.0
    %vm2588 = vcmp.gt.f32.partialorder %v2585, 0.0
    %vm2589 = vcmp.gt.f32.partialorder %v2586, 0.0
    %v2590 = vmin.f32 %v2584, 0.0
    %v2591 = vmin.f32 %v2585, 0.0
    %v2592 = vmin.f32 %v2586, 0.0
    %v2593 = vmul.f32 %v2590, 1.442695
    %v2594 = vpow.pop %v2593
    %v2595 = vmul.f32 %v2591, 1.442695
    %v2596 = vpow.pop %v2595
    %v2597 = vmul.f32 %v2592, 1.442695
    %v2598 = vpow.pop %v2597
    %v2599 = vsub.f32 %v2594, 1.0
    %v2600 = vsub.f32 %v2596, 1.0
    %v2601 = vsub.f32 %v2598, 1.0
    %v2602 = vsel %vm2587, %v2584, %v2599
    %v2603 = vsel %vm2588, %v2585, %v2600
    %v2604 = vsel %vm2589, %v2586, %v2601
    %v2605 = vpack.c.bf16 %v2603, %v2602
    %v2606 = vpack.c.bf16 %v2604, %v2604
    %v2607 = vld [vmem:[%s127] sm:$0xf]
    %v2608 = vld [vmem:[%s127 + $0x4] sm:$0xf]
    %v2611 = vunpack.c.l.b16 %v2607
    %v2612 = vunpack.c.l.b16 %v2608
    %v2613 = vpack.c.b16 %v2612, %v2611
    %v2616 = vsel %vm1106, %v2605, 0
    %v2619 = vsel %vm1106, %v2606, 0
    %2621 = vmatprep.subr.bf16.mxu0 0
    %2622 = vmatpush1.bf16.msra.mxu0 0
    %2623 = vmatprep.subr.bf16.mxu0 0
    %2624 = vmatpush1.bf16.msra.mxu0 0
    %2625 = vmatprep.subr.bf16.mxu0 0
    %2626 = vmatpush1.bf16.msra.mxu0 0
    %2627 = vmatprep.subr.bf16.mxu0 0
    %2628 = vmatpush1.bf16.msra.mxu0 0
    %2629 = vmatprep.subr.bf16.mxu0 0
    %2630 = vmatpush1.bf16.msra.mxu0 0
    %2631 = vmatprep.subr.bf16.mxu0 0
    %2632 = vmatpush1.bf16.msra.mxu0 0
    %2633 = vmatprep.subr.bf16.mxu0 0
    %2634 = vmatpush1.bf16.msra.mxu0 0
    %2635 = vmatprep.subr.bf16.mxu0 0
    %2636 = vmatpush1.bf16.msra.mxu0 %v2613
    %2637 = vmatprep.subr.bf16.mxu0 0
    %2638 = vmatpush2.bf16.msra.mxu0 0
    %2639 = vmatprep.subr.bf16.mxu0 0
    %2640 = vmatpush2.bf16.msra.mxu0 0
    %2641 = vmatprep.subr.bf16.mxu0 0
    %2642 = vmatpush2.bf16.msra.mxu0 0
    %2643 = vmatprep.subr.bf16.mxu0 0
    %2644 = vmatpush2.bf16.msra.mxu0 0
    %2645 = vmatprep.subr.bf16.mxu0 0
    %2646 = vmatpush2.bf16.msra.mxu0 0
    %2647 = vmatprep.subr.bf16.mxu0 0
    %2648 = vmatpush2.bf16.msra.mxu0 0
    %2649 = vmatprep.subr.bf16.mxu0 0
    %2650 = vmatpush2.bf16.msra.mxu0 0
    %2651 = vmatprep.subr.bf16.mxu0 0
    %2652 = vmatpush2.bf16.msra.mxu0 0
    %2653 = vmatprep.mubr.bf16.mxu0 0
    %2654 = vmatmul.mubr.bf16.gmra.mxu0 %v2616
    %v2655 = vpop.f32.mrf.mxu0
    %v2656 = vadd.f32 0.0, %v2655
    %v2657 = vpop.f32.mrf.mxu0
    %v2658 = vpop.f32.mrf.mxu0
    %v2659 = vadd.f32 0.0, %v2658
    %v2660 = vpop.f32.mrf.mxu0
    %2661 = vmatprep.mubr.bf16.mxu0 0
    %2662 = vmatmul.mubr.bf16.gmra.mxu0 %v2619
    %v2663 = vpop.f32.mrf.mxu0
    %v2664 = vadd.f32 0.0, %v2663
    %v2665 = vpop.f32.mrf.mxu0
    %v2666 = vpop.f32.mrf.mxu0
    %v2667 = vpop.f32.mrf.mxu0
    %2668 = vdwg.mxu0
    %v2670 = vlaneseq
    %v2671 = vshrl.u32 %v2670, 7
    %v2672 = vsub.s32 0, %v2671
    %v2673 = vrot.slane %v2566, %v2672
    %v2675 = vadd.f32 %v2673, %v2656
    %v2676 = vadd.f32 %v2673, %v2659
    %v2677 = vadd.f32 %v2673, %v2664
    %v2678 = vld [vmem:[#allocation43] sm:$0x1]
    %v2679 = vld [vmem:[#allocation44] sm:$0x1]
    %v2681 = vlaneseq
    %v2682 = vshrl.u32 %v2681, 7
    %v2683 = vsub.s32 0, %v2682
    %v2684 = vrot.slane %v2679, %v2683
    %v2686 = vmul.f32 %v1054, %v2684
    %v2687 = vmul.f32 %v1055, %v2684
    %v2688 = vmul.f32 %v1056, %v2684
    %v2689 = vld [vmem:[#allocation47] sm:$0x1]
    %v2691 = vlaneseq
    %v2692 = vshrl.u32 %v2691, 7
    %v2693 = vsub.s32 0, %v2692
    %v2694 = vrot.slane %v2689, %v2693
    %v2696 = vadd.f32 %v2686, %v2694
    %v2697 = vadd.f32 %v2687, %v2694
    %v2698 = vadd.f32 %v2688, %v2694
    %vm2699 = vcmp.gt.f32.partialorder %v2696, 0.0
    %vm2700 = vcmp.gt.f32.partialorder %v2697, 0.0
    %vm2701 = vcmp.gt.f32.partialorder %v2698, 0.0
    %v2702 = vmin.f32 %v2696, 0.0
    %v2703 = vmin.f32 %v2697, 0.0
    %v2704 = vmin.f32 %v2698, 0.0
    %v2705 = vmul.f32 %v2702, 1.442695
    %v2706 = vpow.pop %v2705
    %v2707 = vmul.f32 %v2703, 1.442695
    %v2708 = vpow.pop %v2707
    %v2709 = vmul.f32 %v2704, 1.442695
    %v2710 = vpow.pop %v2709
    %v2711 = vsub.f32 %v2706, 1.0
    %v2712 = vsub.f32 %v2708, 1.0
    %v2713 = vsub.f32 %v2710, 1.0
    %v2714 = vsel %vm2699, %v2696, %v2711
    %v2715 = vsel %vm2700, %v2697, %v2712
    %v2716 = vsel %vm2701, %v2698, %v2713
    %v2717 = vpack.c.bf16 %v2715, %v2714
    %v2718 = vpack.c.bf16 %v2716, %v2716
    %v2719 = vld [vmem:[%s139] sm:$0xf]
    %v2720 = vld [vmem:[%s139 + $0x4] sm:$0xf]
    %v2723 = vunpack.c.l.b16 %v2719
    %v2724 = vunpack.c.l.b16 %v2720
    %v2725 = vpack.c.b16 %v2724, %v2723
    %v2728 = vsel %vm1106, %v2717, 0
    %v2731 = vsel %vm1106, %v2718, 0
    %2733 = vmatprep.subr.bf16.mxu0 0
    %2734 = vmatpush1.bf16.msra.mxu0 0
    %2735 = vmatprep.subr.bf16.mxu0 0
    %2736 = vmatpush1.bf16.msra.mxu0 0
    %2737 = vmatprep.subr.bf16.mxu0 0
    %2738 = vmatpush1.bf16.msra.mxu0 0
    %2739 = vmatprep.subr.bf16.mxu0 0
    %2740 = vmatpush1.bf16.msra.mxu0 0
    %2741 = vmatprep.subr.bf16.mxu0 0
    %2742 = vmatpush1.bf16.msra.mxu0 0
    %2743 = vmatprep.subr.bf16.mxu0 0
    %2744 = vmatpush1.bf16.msra.mxu0 0
    %2745 = vmatprep.subr.bf16.mxu0 0
    %2746 = vmatpush1.bf16.msra.mxu0 0
    %2747 = vmatprep.subr.bf16.mxu0 0
    %2748 = vmatpush1.bf16.msra.mxu0 %v2725
    %2749 = vmatprep.subr.bf16.mxu0 0
    %2750 = vmatpush2.bf16.msra.mxu0 0
    %2751 = vmatprep.subr.bf16.mxu0 0
    %2752 = vmatpush2.bf16.msra.mxu0 0
    %2753 = vmatprep.subr.bf16.mxu0 0
    %2754 = vmatpush2.bf16.msra.mxu0 0
    %2755 = vmatprep.subr.bf16.mxu0 0
    %2756 = vmatpush2.bf16.msra.mxu0 0
    %2757 = vmatprep.subr.bf16.mxu0 0
    %2758 = vmatpush2.bf16.msra.mxu0 0
    %2759 = vmatprep.subr.bf16.mxu0 0
    %2760 = vmatpush2.bf16.msra.mxu0 0
    %2761 = vmatprep.subr.bf16.mxu0 0
    %2762 = vmatpush2.bf16.msra.mxu0 0
    %2763 = vmatprep.subr.bf16.mxu0 0
    %2764 = vmatpush2.bf16.msra.mxu0 0
    %2765 = vmatprep.mubr.bf16.mxu0 0
    %2766 = vmatmul.mubr.bf16.gmra.mxu0 %v2728
    %v2767 = vpop.f32.mrf.mxu0
    %v2768 = vadd.f32 0.0, %v2767
    %v2769 = vpop.f32.mrf.mxu0
    %v2770 = vpop.f32.mrf.mxu0
    %v2771 = vadd.f32 0.0, %v2770
    %v2772 = vpop.f32.mrf.mxu0
    %2773 = vmatprep.mubr.bf16.mxu0 0
    %2774 = vmatmul.mubr.bf16.gmra.mxu0 %v2731
    %v2775 = vpop.f32.mrf.mxu0
    %v2776 = vadd.f32 0.0, %v2775
    %v2777 = vpop.f32.mrf.mxu0
    %v2778 = vpop.f32.mrf.mxu0
    %v2779 = vpop.f32.mrf.mxu0
    %2780 = vdwg.mxu0
    %v2782 = vlaneseq
    %v2783 = vshrl.u32 %v2782, 7
    %v2784 = vsub.s32 0, %v2783
    %v2785 = vrot.slane %v2678, %v2784
    %v2787 = vadd.f32 %v2785, %v2768
    %v2788 = vadd.f32 %v2785, %v2771
    %v2789 = vadd.f32 %v2785, %v2776
    %v2790 = vld [vmem:[#allocation46] sm:$0x1]
    %v2792 = vlaneseq
    %v2793 = vshrl.u32 %v2792, 7
    %v2794 = vsub.s32 0, %v2793
    %v2795 = vrot.slane %v2790, %v2794
    %v2797 = vmul.f32 %v2675, %v2795
    %v2798 = vmul.f32 %v2676, %v2795
    %v2799 = vmul.f32 %v2677, %v2795
    %v2800 = vld [vmem:[#allocation49] sm:$0x1]
    %v2802 = vlaneseq
    %v2803 = vshrl.u32 %v2802, 7
    %v2804 = vsub.s32 0, %v2803
    %v2805 = vrot.slane %v2800, %v2804
    %v2807 = vadd.f32 %v2797, %v2805
    %v2808 = vadd.f32 %v2798, %v2805
    %v2809 = vadd.f32 %v2799, %v2805
    %vm2810 = vcmp.gt.f32.partialorder %v2807, 0.0
    %vm2811 = vcmp.gt.f32.partialorder %v2808, 0.0
    %vm2812 = vcmp.gt.f32.partialorder %v2809, 0.0
    %v2813 = vmin.f32 %v2807, 0.0
    %v2814 = vmin.f32 %v2808, 0.0
    %v2815 = vmin.f32 %v2809, 0.0
    %v2816 = vmul.f32 %v2813, 1.442695
    %v2817 = vpow.pop %v2816
    %v2818 = vmul.f32 %v2814, 1.442695
    %v2819 = vpow.pop %v2818
    %v2820 = vmul.f32 %v2815, 1.442695
    %v2821 = vpow.pop %v2820
    %v2822 = vsub.f32 %v2817, 1.0
    %v2823 = vsub.f32 %v2819, 1.0
    %v2824 = vsub.f32 %v2821, 1.0
    %v2825 = vsel %vm2810, %v2807, %v2822
    %v2826 = vsel %vm2811, %v2808, %v2823
    %v2827 = vsel %vm2812, %v2809, %v2824
    %v2828 = vpack.c.bf16 %v2826, %v2825
    %v2829 = vpack.c.bf16 %v2827, %v2827
    %v2830 = vld [vmem:[%s141] sm:$0xf]
    %v2832 = vsel %vm1680, %v2828, 0
    %v2835 = vsel %vm1680, %v2829, 0
    %v2838 = vsel %vm1190, %v2830, 0
    %2840 = vmatprep.subr.bf16.mxu0 0
    %2841 = vmatpush1.bf16.msra.mxu0 0
    %2842 = vmatprep.subr.bf16.mxu0 0
    %2843 = vmatpush1.bf16.msra.mxu0 0
    %2844 = vmatprep.subr.bf16.mxu0 0
    %2845 = vmatpush1.bf16.msra.mxu0 0
    %2846 = vmatprep.subr.bf16.mxu0 0
    %2847 = vmatpush1.bf16.msra.mxu0 0
    %2848 = vmatprep.subr.bf16.mxu0 0
    %2849 = vmatpush1.bf16.msra.mxu0 0
    %2850 = vmatprep.subr.bf16.mxu0 0
    %2851 = vmatpush1.bf16.msra.mxu0 0
    %2852 = vmatprep.subr.bf16.mxu0 0
    %2853 = vmatpush1.bf16.msra.mxu0 0
    %2854 = vmatprep.subr.bf16.mxu0 0
    %2855 = vmatpush1.bf16.msra.mxu0 %v2838
    %2856 = vmatprep.subr.bf16.mxu0 0
    %2857 = vmatpush2.bf16.msra.mxu0 0
    %2858 = vmatprep.subr.bf16.mxu0 0
    %2859 = vmatpush2.bf16.msra.mxu0 0
    %2860 = vmatprep.subr.bf16.mxu0 0
    %2861 = vmatpush2.bf16.msra.mxu0 0
    %2862 = vmatprep.subr.bf16.mxu0 0
    %2863 = vmatpush2.bf16.msra.mxu0 0
    %2864 = vmatprep.subr.bf16.mxu0 0
    %2865 = vmatpush2.bf16.msra.mxu0 0
    %2866 = vmatprep.subr.bf16.mxu0 0
    %2867 = vmatpush2.bf16.msra.mxu0 0
    %2868 = vmatprep.subr.bf16.mxu0 0
    %2869 = vmatpush2.bf16.msra.mxu0 0
    %2870 = vmatprep.subr.bf16.mxu0 0
    %2871 = vmatpush2.bf16.msra.mxu0 0
    %2872 = vmatprep.mubr.bf16.mxu0 0
    %2873 = vmatmul.mubr.bf16.gmra.mxu0 %v2832
    %v2874 = vpop.f32.mrf.mxu0
    %v2875 = vadd.f32 0.0, %v2874
    %v2876 = vpop.f32.mrf.mxu0
    %v2877 = vpop.f32.mrf.mxu0
    %v2878 = vadd.f32 0.0, %v2877
    %v2879 = vpop.f32.mrf.mxu0
    %2880 = vmatprep.mubr.bf16.mxu0 0
    %2881 = vmatmul.mubr.bf16.gmra.mxu0 %v2835
    %v2882 = vpop.f32.mrf.mxu0
    %v2883 = vadd.f32 0.0, %v2882
    %v2884 = vpop.f32.mrf.mxu0
    %v2885 = vpop.f32.mrf.mxu0
    %v2886 = vpop.f32.mrf.mxu0
    %2887 = vdwg.mxu0
    %v2888 = vadd.f32 %v2787, %v2875
    %v2889 = vadd.f32 %v2788, %v2878
    %v2890 = vadd.f32 %v2789, %v2883
    %v2891 = vpack.c.bf16 %v2889, %v2888
    %v2892 = vpack.c.bf16 %v2890, %v2890
    %v2894 = vsel %vm1190, %v2892, 0
    %2896 = vmatprep.subr.bf16.mxu0 0
    %2897 = vmatpush1.bf16.msra.mxu0 0
    %2898 = vmatprep.subr.bf16.mxu0 0
    %2899 = vmatpush1.bf16.msra.mxu0 0
    %2900 = vmatprep.subr.bf16.mxu0 0
    %2901 = vmatpush1.bf16.msra.mxu0 0
    %2902 = vmatprep.subr.bf16.mxu0 0
    %2903 = vmatpush1.bf16.msra.mxu0 0
    %2904 = vmatprep.subr.bf16.mxu0 0
    %2905 = vmatpush1.bf16.msra.mxu0 0
    %2906 = vmatprep.subr.bf16.mxu0 0
    %2907 = vmatpush1.bf16.msra.mxu0 0
    %2908 = vmatprep.subr.bf16.mxu0 0
    %2909 = vmatpush1.bf16.msra.mxu0 %v2894
    %2910 = vmatprep.subr.bf16.mxu0 0
    %2911 = vmatpush1.bf16.msra.mxu0 %v2891
    %2912 = vmatprep.subr.bf16.mxu0 0
    %2913 = vmatpush2.bf16.msra.mxu0 0
    %2914 = vmatprep.subr.bf16.mxu0 0
    %2915 = vmatpush2.bf16.msra.mxu0 0
    %2916 = vmatprep.subr.bf16.mxu0 0
    %2917 = vmatpush2.bf16.msra.mxu0 0
    %2918 = vmatprep.subr.bf16.mxu0 0
    %2919 = vmatpush2.bf16.msra.mxu0 0
    %2920 = vmatprep.subr.bf16.mxu0 0
    %2921 = vmatpush2.bf16.msra.mxu0 0
    %2922 = vmatprep.subr.bf16.mxu0 0
    %2923 = vmatpush2.bf16.msra.mxu0 0
    %2924 = vmatprep.subr.bf16.mxu0 0
    %2925 = vmatpush2.bf16.msra.mxu0 0
    %2926 = vmatprep.subr.bf16.mxu0 0
    %2927 = vmatpush2.bf16.msra.mxu0 0
    %2928 = vmatprep.mubr.bf16.mxu0 0
    %2929 = vmatmul.mubr.bf16.gmra.mxu0 %v1185
    %v2930 = vpop.f32.mrf.mxu0
    %v2931 = vadd.f32 0.0, %v2930
    %v2932 = vpop.f32.mrf.mxu0
    %v2933 = vpop.f32.mrf.mxu0
    %v2934 = vadd.f32 0.0, %v2933
    %v2935 = vpop.f32.mrf.mxu0
    %2936 = vmatprep.mubr.bf16.mxu0 0
    %2937 = vmatmul.mubr.bf16.gmra.mxu0 %v1188
    %v2938 = vpop.f32.mrf.mxu0
    %v2939 = vadd.f32 0.0, %v2938
    %v2940 = vpop.f32.mrf.mxu0
    %v2941 = vpop.f32.mrf.mxu0
    %v2942 = vpop.f32.mrf.mxu0
    %2943 = vdwg.mxu0
    %2944 = vmatprep.subr.bf16.mxu0 0
    %2945 = vmatpush1.bf16.msra.mxu0 0
    %2946 = vmatprep.subr.bf16.mxu0 0
    %2947 = vmatpush1.bf16.msra.mxu0 0
    %2948 = vmatprep.subr.bf16.mxu0 0
    %2949 = vmatpush1.bf16.msra.mxu0 0
    %2950 = vmatprep.subr.bf16.mxu0 0
    %2951 = vmatpush1.bf16.msra.mxu0 0
    %2952 = vmatprep.subr.bf16.mxu0 0
    %2953 = vmatpush1.bf16.msra.mxu0 0
    %2954 = vmatprep.subr.bf16.mxu0 0
    %2955 = vmatpush1.bf16.msra.mxu0 0
    %2956 = vmatprep.subr.bf16.mxu0 0
    %2957 = vmatpush1.bf16.msra.mxu0 %v2894
    %2958 = vmatprep.subr.bf16.mxu0 0
    %2959 = vmatpush1.bf16.msra.mxu0 %v2891
    %2960 = vmatprep.subr.bf16.mxu0 0
    %2961 = vmatpush2.bf16.msra.mxu0 0
    %2962 = vmatprep.subr.bf16.mxu0 0
    %2963 = vmatpush2.bf16.msra.mxu0 0
    %2964 = vmatprep.subr.bf16.mxu0 0
    %2965 = vmatpush2.bf16.msra.mxu0 0
    %2966 = vmatprep.subr.bf16.mxu0 0
    %2967 = vmatpush2.bf16.msra.mxu0 0
    %2968 = vmatprep.subr.bf16.mxu0 0
    %2969 = vmatpush2.bf16.msra.mxu0 0
    %2970 = vmatprep.subr.bf16.mxu0 0
    %2971 = vmatpush2.bf16.msra.mxu0 0
    %2972 = vmatprep.subr.bf16.mxu0 0
    %2973 = vmatpush2.bf16.msra.mxu0 0
    %2974 = vmatprep.subr.bf16.mxu0 0
    %2975 = vmatpush2.bf16.msra.mxu0 0
    %2976 = vmatprep.mubr.bf16.mxu0 0
    %2977 = vmatmul.mubr.bf16.gmra.mxu0 %v1255
    %v2978 = vpop.f32.mrf.mxu0
    %v2979 = vadd.f32 0.0, %v2978
    %v2980 = vpop.f32.mrf.mxu0
    %v2981 = vpop.f32.mrf.mxu0
    %v2982 = vadd.f32 0.0, %v2981
    %v2983 = vpop.f32.mrf.mxu0
    %2984 = vmatprep.mubr.bf16.mxu0 0
    %2985 = vmatmul.mubr.bf16.gmra.mxu0 %v1258
    %v2986 = vpop.f32.mrf.mxu0
    %v2987 = vadd.f32 0.0, %v2986
    %v2988 = vpop.f32.mrf.mxu0
    %v2989 = vpop.f32.mrf.mxu0
    %v2990 = vpop.f32.mrf.mxu0
    %2991 = vdwg.mxu0
    %2992 = vmatprep.subr.bf16.mxu0 0
    %2993 = vmatpush1.bf16.msra.mxu0 0
    %2994 = vmatprep.subr.bf16.mxu0 0
    %2995 = vmatpush1.bf16.msra.mxu0 0
    %2996 = vmatprep.subr.bf16.mxu0 0
    %2997 = vmatpush1.bf16.msra.mxu0 0
    %2998 = vmatprep.subr.bf16.mxu0 0
    %2999 = vmatpush1.bf16.msra.mxu0 0
    %3000 = vmatprep.subr.bf16.mxu0 0
    %3001 = vmatpush1.bf16.msra.mxu0 0
    %3002 = vmatprep.subr.bf16.mxu0 0
    %3003 = vmatpush1.bf16.msra.mxu0 0
    %3004 = vmatprep.subr.bf16.mxu0 0
    %3005 = vmatpush1.bf16.msra.mxu0 %v2894
    %3006 = vmatprep.subr.bf16.mxu0 0
    %3007 = vmatpush1.bf16.msra.mxu0 %v2891
    %3008 = vmatprep.subr.bf16.mxu0 0
    %3009 = vmatpush2.bf16.msra.mxu0 0
    %3010 = vmatprep.subr.bf16.mxu0 0
    %3011 = vmatpush2.bf16.msra.mxu0 0
    %3012 = vmatprep.subr.bf16.mxu0 0
    %3013 = vmatpush2.bf16.msra.mxu0 0
    %3014 = vmatprep.subr.bf16.mxu0 0
    %3015 = vmatpush2.bf16.msra.mxu0 0
    %3016 = vmatprep.subr.bf16.mxu0 0
    %3017 = vmatpush2.bf16.msra.mxu0 0
    %3018 = vmatprep.subr.bf16.mxu0 0
    %3019 = vmatpush2.bf16.msra.mxu0 0
    %3020 = vmatprep.subr.bf16.mxu0 0
    %3021 = vmatpush2.bf16.msra.mxu0 0
    %3022 = vmatprep.subr.bf16.mxu0 0
    %3023 = vmatpush2.bf16.msra.mxu0 0
    %3024 = vmatprep.mubr.bf16.mxu0 0
    %3025 = vmatmul.mubr.bf16.gmra.mxu0 %v1321
    %v3026 = vpop.f32.mrf.mxu0
    %v3027 = vadd.f32 0.0, %v3026
    %v3028 = vpop.f32.mrf.mxu0
    %v3029 = vpop.f32.mrf.mxu0
    %v3030 = vadd.f32 0.0, %v3029
    %v3031 = vpop.f32.mrf.mxu0
    %3032 = vmatprep.mubr.bf16.mxu0 0
    %3033 = vmatmul.mubr.bf16.gmra.mxu0 %v1324
    %v3034 = vpop.f32.mrf.mxu0
    %v3035 = vadd.f32 0.0, %v3034
    %v3036 = vpop.f32.mrf.mxu0
    %v3037 = vpop.f32.mrf.mxu0
    %v3038 = vpop.f32.mrf.mxu0
    %3039 = vdwg.mxu0
    %3040 = vmatprep.subr.bf16.mxu0 0
    %3041 = vmatpush1.bf16.msra.mxu0 0
    %3042 = vmatprep.subr.bf16.mxu0 0
    %3043 = vmatpush1.bf16.msra.mxu0 0
    %3044 = vmatprep.subr.bf16.mxu0 0
    %3045 = vmatpush1.bf16.msra.mxu0 0
    %3046 = vmatprep.subr.bf16.mxu0 0
    %3047 = vmatpush1.bf16.msra.mxu0 0
    %3048 = vmatprep.subr.bf16.mxu0 0
    %3049 = vmatpush1.bf16.msra.mxu0 0
    %3050 = vmatprep.subr.bf16.mxu0 0
    %3051 = vmatpush1.bf16.msra.mxu0 0
    %3052 = vmatprep.subr.bf16.mxu0 0
    %3053 = vmatpush1.bf16.msra.mxu0 %v2894
    %3054 = vmatprep.subr.bf16.mxu0 0
    %3055 = vmatpush1.bf16.msra.mxu0 %v2891
    %3056 = vmatprep.subr.bf16.mxu0 0
    %3057 = vmatpush2.bf16.msra.mxu0 0
    %3058 = vmatprep.subr.bf16.mxu0 0
    %3059 = vmatpush2.bf16.msra.mxu0 0
    %3060 = vmatprep.subr.bf16.mxu0 0
    %3061 = vmatpush2.bf16.msra.mxu0 0
    %3062 = vmatprep.subr.bf16.mxu0 0
    %3063 = vmatpush2.bf16.msra.mxu0 0
    %3064 = vmatprep.subr.bf16.mxu0 0
    %3065 = vmatpush2.bf16.msra.mxu0 0
    %3066 = vmatprep.subr.bf16.mxu0 0
    %3067 = vmatpush2.bf16.msra.mxu0 0
    %3068 = vmatprep.subr.bf16.mxu0 0
    %3069 = vmatpush2.bf16.msra.mxu0 0
    %3070 = vmatprep.subr.bf16.mxu0 0
    %3071 = vmatpush2.bf16.msra.mxu0 0
    %3072 = vmatprep.mubr.bf16.mxu0 0
    %3073 = vmatmul.mubr.bf16.gmra.mxu0 %v1387
    %v3074 = vpop.f32.mrf.mxu0
    %v3075 = vadd.f32 0.0, %v3074
    %v3076 = vpop.f32.mrf.mxu0
    %v3077 = vpop.f32.mrf.mxu0
    %v3078 = vadd.f32 0.0, %v3077
    %v3079 = vpop.f32.mrf.mxu0
    %3080 = vmatprep.mubr.bf16.mxu0 0
    %3081 = vmatmul.mubr.bf16.gmra.mxu0 %v1390
    %v3082 = vpop.f32.mrf.mxu0
    %v3083 = vadd.f32 0.0, %v3082
    %v3084 = vpop.f32.mrf.mxu0
    %v3085 = vpop.f32.mrf.mxu0
    %v3086 = vpop.f32.mrf.mxu0
    %3087 = vdwg.mxu0
    %3088 = vmatprep.subr.bf16.mxu0 0
    %3089 = vmatpush1.bf16.msra.mxu0 0
    %3090 = vmatprep.subr.bf16.mxu0 0
    %3091 = vmatpush1.bf16.msra.mxu0 0
    %3092 = vmatprep.subr.bf16.mxu0 0
    %3093 = vmatpush1.bf16.msra.mxu0 0
    %3094 = vmatprep.subr.bf16.mxu0 0
    %3095 = vmatpush1.bf16.msra.mxu0 0
    %3096 = vmatprep.subr.bf16.mxu0 0
    %3097 = vmatpush1.bf16.msra.mxu0 0
    %3098 = vmatprep.subr.bf16.mxu0 0
    %3099 = vmatpush1.bf16.msra.mxu0 0
    %3100 = vmatprep.subr.bf16.mxu0 0
    %3101 = vmatpush1.bf16.msra.mxu0 %v2894
    %3102 = vmatprep.subr.bf16.mxu0 0
    %3103 = vmatpush1.bf16.msra.mxu0 %v2891
    %3104 = vmatprep.subr.bf16.mxu0 0
    %3105 = vmatpush2.bf16.msra.mxu0 0
    %3106 = vmatprep.subr.bf16.mxu0 0
    %3107 = vmatpush2.bf16.msra.mxu0 0
    %3108 = vmatprep.subr.bf16.mxu0 0
    %3109 = vmatpush2.bf16.msra.mxu0 0
    %3110 = vmatprep.subr.bf16.mxu0 0
    %3111 = vmatpush2.bf16.msra.mxu0 0
    %3112 = vmatprep.subr.bf16.mxu0 0
    %3113 = vmatpush2.bf16.msra.mxu0 0
    %3114 = vmatprep.subr.bf16.mxu0 0
    %3115 = vmatpush2.bf16.msra.mxu0 0
    %3116 = vmatprep.subr.bf16.mxu0 0
    %3117 = vmatpush2.bf16.msra.mxu0 0
    %3118 = vmatprep.subr.bf16.mxu0 0
    %3119 = vmatpush2.bf16.msra.mxu0 0
    %3120 = vmatprep.mubr.bf16.mxu0 0
    %3121 = vmatmul.mubr.bf16.gmra.mxu0 %v1453
    %v3122 = vpop.f32.mrf.mxu0
    %v3123 = vadd.f32 0.0, %v3122
    %v3124 = vpop.f32.mrf.mxu0
    %v3125 = vpop.f32.mrf.mxu0
    %v3126 = vadd.f32 0.0, %v3125
    %v3127 = vpop.f32.mrf.mxu0
    %3128 = vmatprep.mubr.bf16.mxu0 0
    %3129 = vmatmul.mubr.bf16.gmra.mxu0 %v1456
    %v3130 = vpop.f32.mrf.mxu0
    %v3131 = vadd.f32 0.0, %v3130
    %v3132 = vpop.f32.mrf.mxu0
    %v3133 = vpop.f32.mrf.mxu0
    %v3134 = vpop.f32.mrf.mxu0
    %3135 = vdwg.mxu0
    %3136 = vmatprep.subr.bf16.mxu0 0
    %3137 = vmatpush1.bf16.msra.mxu0 0
    %3138 = vmatprep.subr.bf16.mxu0 0
    %3139 = vmatpush1.bf16.msra.mxu0 0
    %3140 = vmatprep.subr.bf16.mxu0 0
    %3141 = vmatpush1.bf16.msra.mxu0 0
    %3142 = vmatprep.subr.bf16.mxu0 0
    %3143 = vmatpush1.bf16.msra.mxu0 0
    %3144 = vmatprep.subr.bf16.mxu0 0
    %3145 = vmatpush1.bf16.msra.mxu0 0
    %3146 = vmatprep.subr.bf16.mxu0 0
    %3147 = vmatpush1.bf16.msra.mxu0 0
    %3148 = vmatprep.subr.bf16.mxu0 0
    %3149 = vmatpush1.bf16.msra.mxu0 %v2894
    %3150 = vmatprep.subr.bf16.mxu0 0
    %3151 = vmatpush1.bf16.msra.mxu0 %v2891
    %3152 = vmatprep.subr.bf16.mxu0 0
    %3153 = vmatpush2.bf16.msra.mxu0 0
    %3154 = vmatprep.subr.bf16.mxu0 0
    %3155 = vmatpush2.bf16.msra.mxu0 0
    %3156 = vmatprep.subr.bf16.mxu0 0
    %3157 = vmatpush2.bf16.msra.mxu0 0
    %3158 = vmatprep.subr.bf16.mxu0 0
    %3159 = vmatpush2.bf16.msra.mxu0 0
    %3160 = vmatprep.subr.bf16.mxu0 0
    %3161 = vmatpush2.bf16.msra.mxu0 0
    %3162 = vmatprep.subr.bf16.mxu0 0
    %3163 = vmatpush2.bf16.msra.mxu0 0
    %3164 = vmatprep.subr.bf16.mxu0 0
    %3165 = vmatpush2.bf16.msra.mxu0 0
    %3166 = vmatprep.subr.bf16.mxu0 0
    %3167 = vmatpush2.bf16.msra.mxu0 0
    %3168 = vmatprep.mubr.bf16.mxu0 0
    %3169 = vmatmul.mubr.bf16.gmra.mxu0 %v1519
    %v3170 = vpop.f32.mrf.mxu0
    %v3171 = vadd.f32 0.0, %v3170
    %v3172 = vpop.f32.mrf.mxu0
    %v3173 = vpop.f32.mrf.mxu0
    %v3174 = vadd.f32 0.0, %v3173
    %v3175 = vpop.f32.mrf.mxu0
    %3176 = vmatprep.mubr.bf16.mxu0 0
    %3177 = vmatmul.mubr.bf16.gmra.mxu0 %v1522
    %v3178 = vpop.f32.mrf.mxu0
    %v3179 = vadd.f32 0.0, %v3178
    %v3180 = vpop.f32.mrf.mxu0
    %v3181 = vpop.f32.mrf.mxu0
    %v3182 = vpop.f32.mrf.mxu0
    %3183 = vdwg.mxu0
    %3184 = vmatprep.subr.bf16.mxu0 0
    %3185 = vmatpush1.bf16.msra.mxu0 0
    %3186 = vmatprep.subr.bf16.mxu0 0
    %3187 = vmatpush1.bf16.msra.mxu0 0
    %3188 = vmatprep.subr.bf16.mxu0 0
    %3189 = vmatpush1.bf16.msra.mxu0 0
    %3190 = vmatprep.subr.bf16.mxu0 0
    %3191 = vmatpush1.bf16.msra.mxu0 0
    %3192 = vmatprep.subr.bf16.mxu0 0
    %3193 = vmatpush1.bf16.msra.mxu0 0
    %3194 = vmatprep.subr.bf16.mxu0 0
    %3195 = vmatpush1.bf16.msra.mxu0 0
    %3196 = vmatprep.subr.bf16.mxu0 0
    %3197 = vmatpush1.bf16.msra.mxu0 %v2894
    %3198 = vmatprep.subr.bf16.mxu0 0
    %3199 = vmatpush1.bf16.msra.mxu0 %v2891
    %3200 = vmatprep.subr.bf16.mxu0 0
    %3201 = vmatpush2.bf16.msra.mxu0 0
    %3202 = vmatprep.subr.bf16.mxu0 0
    %3203 = vmatpush2.bf16.msra.mxu0 0
    %3204 = vmatprep.subr.bf16.mxu0 0
    %3205 = vmatpush2.bf16.msra.mxu0 0
    %3206 = vmatprep.subr.bf16.mxu0 0
    %3207 = vmatpush2.bf16.msra.mxu0 0
    %3208 = vmatprep.subr.bf16.mxu0 0
    %3209 = vmatpush2.bf16.msra.mxu0 0
    %3210 = vmatprep.subr.bf16.mxu0 0
    %3211 = vmatpush2.bf16.msra.mxu0 0
    %3212 = vmatprep.subr.bf16.mxu0 0
    %3213 = vmatpush2.bf16.msra.mxu0 0
    %3214 = vmatprep.subr.bf16.mxu0 0
    %3215 = vmatpush2.bf16.msra.mxu0 0
    %3216 = vmatprep.mubr.bf16.mxu0 0
    %3217 = vmatmul.mubr.bf16.gmra.mxu0 %v1585
    %v3218 = vpop.f32.mrf.mxu0
    %v3219 = vadd.f32 0.0, %v3218
    %v3220 = vpop.f32.mrf.mxu0
    %v3221 = vpop.f32.mrf.mxu0
    %v3222 = vadd.f32 0.0, %v3221
    %v3223 = vpop.f32.mrf.mxu0
    %3224 = vmatprep.mubr.bf16.mxu0 0
    %3225 = vmatmul.mubr.bf16.gmra.mxu0 %v1588
    %v3226 = vpop.f32.mrf.mxu0
    %v3227 = vadd.f32 0.0, %v3226
    %v3228 = vpop.f32.mrf.mxu0
    %v3229 = vpop.f32.mrf.mxu0
    %v3230 = vpop.f32.mrf.mxu0
    %3231 = vdwg.mxu0
    %v3232 = vld [vmem:[#allocation50] sm:$0x1]
    %v3233 = vld [vmem:[#allocation52] sm:$0x1]
    %v3235 = vlaneseq
    %v3236 = vshrl.u32 %v3235, 7
    %v3237 = vsub.s32 0, %v3236
    %v3238 = vrot.slane %v3233, %v3237
    %v3240 = vmul.f32 %v2888, %v3238
    %v3241 = vmul.f32 %v2889, %v3238
    %v3242 = vmul.f32 %v2890, %v3238
    %v3243 = vld [vmem:[#allocation64] sm:$0x1]
    %v3245 = vlaneseq
    %v3246 = vshrl.u32 %v3245, 7
    %v3247 = vsub.s32 0, %v3246
    %v3248 = vrot.slane %v3243, %v3247
    %v3250 = vadd.f32 %v3240, %v3248
    %v3251 = vadd.f32 %v3241, %v3248
    %v3252 = vadd.f32 %v3242, %v3248
    %vm3253 = vcmp.gt.f32.partialorder %v3250, 0.0
    %vm3254 = vcmp.gt.f32.partialorder %v3251, 0.0
    %vm3255 = vcmp.gt.f32.partialorder %v3252, 0.0
    %v3256 = vmin.f32 %v3250, 0.0
    %v3257 = vmin.f32 %v3251, 0.0
    %v3258 = vmin.f32 %v3252, 0.0
    %v3259 = vmul.f32 %v3256, 1.442695
    %v3260 = vpow.pop %v3259
    %v3261 = vmul.f32 %v3257, 1.442695
    %v3262 = vpow.pop %v3261
    %v3263 = vmul.f32 %v3258, 1.442695
    %v3264 = vpow.pop %v3263
    %v3265 = vsub.f32 %v3260, 1.0
    %v3266 = vsub.f32 %v3262, 1.0
    %v3267 = vsub.f32 %v3264, 1.0
    %v3268 = vsel %vm3253, %v3250, %v3265
    %v3269 = vsel %vm3254, %v3251, %v3266
    %v3270 = vsel %vm3255, %v3252, %v3267
    %v3271 = vpack.c.bf16 %v3269, %v3268
    %v3272 = vpack.c.bf16 %v3270, %v3270
    %v3273 = vld [vmem:[%s177] sm:$0xf]
    %v3275 = vsel %vm1680, %v3271, 0
    %v3278 = vsel %vm1680, %v3272, 0
    %v3281 = vsel %vm1190, %v3273, 0
    %3283 = vmatprep.subr.bf16.mxu0 0
    %3284 = vmatpush1.bf16.msra.mxu0 0
    %3285 = vmatprep.subr.bf16.mxu0 0
    %3286 = vmatpush1.bf16.msra.mxu0 0
    %3287 = vmatprep.subr.bf16.mxu0 0
    %3288 = vmatpush1.bf16.msra.mxu0 0
    %3289 = vmatprep.subr.bf16.mxu0 0
    %3290 = vmatpush1.bf16.msra.mxu0 0
    %3291 = vmatprep.subr.bf16.mxu0 0
    %3292 = vmatpush1.bf16.msra.mxu0 0
    %3293 = vmatprep.subr.bf16.mxu0 0
    %3294 = vmatpush1.bf16.msra.mxu0 0
    %3295 = vmatprep.subr.bf16.mxu0 0
    %3296 = vmatpush1.bf16.msra.mxu0 0
    %3297 = vmatprep.subr.bf16.mxu0 0
    %3298 = vmatpush1.bf16.msra.mxu0 %v3281
    %3299 = vmatprep.subr.bf16.mxu0 0
    %3300 = vmatpush2.bf16.msra.mxu0 0
    %3301 = vmatprep.subr.bf16.mxu0 0
    %3302 = vmatpush2.bf16.msra.mxu0 0
    %3303 = vmatprep.subr.bf16.mxu0 0
    %3304 = vmatpush2.bf16.msra.mxu0 0
    %3305 = vmatprep.subr.bf16.mxu0 0
    %3306 = vmatpush2.bf16.msra.mxu0 0
    %3307 = vmatprep.subr.bf16.mxu0 0
    %3308 = vmatpush2.bf16.msra.mxu0 0
    %3309 = vmatprep.subr.bf16.mxu0 0
    %3310 = vmatpush2.bf16.msra.mxu0 0
    %3311 = vmatprep.subr.bf16.mxu0 0
    %3312 = vmatpush2.bf16.msra.mxu0 0
    %3313 = vmatprep.subr.bf16.mxu0 0
    %3314 = vmatpush2.bf16.msra.mxu0 0
    %3315 = vmatprep.mubr.bf16.mxu0 0
    %3316 = vmatmul.mubr.bf16.gmra.mxu0 %v3275
    %v3317 = vpop.f32.mrf.mxu0
    %v3318 = vadd.f32 0.0, %v3317
    %v3319 = vpop.f32.mrf.mxu0
    %v3320 = vpop.f32.mrf.mxu0
    %v3321 = vadd.f32 0.0, %v3320
    %v3322 = vpop.f32.mrf.mxu0
    %3323 = vmatprep.mubr.bf16.mxu0 0
    %3324 = vmatmul.mubr.bf16.gmra.mxu0 %v3278
    %v3325 = vpop.f32.mrf.mxu0
    %v3326 = vadd.f32 0.0, %v3325
    %v3327 = vpop.f32.mrf.mxu0
    %v3328 = vpop.f32.mrf.mxu0
    %v3329 = vpop.f32.mrf.mxu0
    %3330 = vdwg.mxu0
    %v3332 = vlaneseq
    %v3333 = vshrl.u32 %v3332, 7
    %v3334 = vsub.s32 0, %v3333
    %v3335 = vrot.slane %v3232, %v3334
    %v3337 = vadd.f32 %v3335, %v3318
    %v3338 = vadd.f32 %v3335, %v3321
    %v3339 = vadd.f32 %v3335, %v3326
    %v3340 = vld [vmem:[#allocation53] sm:$0x1]
    %v3342 = vlaneseq
    %v3343 = vshrl.u32 %v3342, 7
    %v3344 = vsub.s32 0, %v3343
    %v3345 = vrot.slane %v3340, %v3344
    %v3347 = vmul.f32 %v2931, %v3345
    %v3348 = vmul.f32 %v2934, %v3345
    %v3349 = vmul.f32 %v2939, %v3345
    %v3350 = vld [vmem:[#allocation65] sm:$0x1]
    %v3352 = vlaneseq
    %v3353 = vshrl.u32 %v3352, 7
    %v3354 = vsub.s32 0, %v3353
    %v3355 = vrot.slane %v3350, %v3354
    %v3357 = vadd.f32 %v3347, %v3355
    %v3358 = vadd.f32 %v3348, %v3355
    %v3359 = vadd.f32 %v3349, %v3355
    %vm3360 = vcmp.gt.f32.partialorder %v3357, 0.0
    %vm3361 = vcmp.gt.f32.partialorder %v3358, 0.0
    %vm3362 = vcmp.gt.f32.partialorder %v3359, 0.0
    %v3363 = vmin.f32 %v3357, 0.0
    %v3364 = vmin.f32 %v3358, 0.0
    %v3365 = vmin.f32 %v3359, 0.0
    %v3366 = vmul.f32 %v3363, 1.442695
    %v3367 = vpow.pop %v3366
    %v3368 = vmul.f32 %v3364, 1.442695
    %v3369 = vpow.pop %v3368
    %v3370 = vmul.f32 %v3365, 1.442695
    %v3371 = vpow.pop %v3370
    %v3372 = vsub.f32 %v3367, 1.0
    %v3373 = vsub.f32 %v3369, 1.0
    %v3374 = vsub.f32 %v3371, 1.0
    %v3375 = vsel %vm3360, %v3357, %v3372
    %v3376 = vsel %vm3361, %v3358, %v3373
    %v3377 = vsel %vm3362, %v3359, %v3374
    %v3378 = vpack.c.bf16 %v3376, %v3375
    %v3379 = vpack.c.bf16 %v3377, %v3377
    %v3380 = vld [vmem:[%s179] sm:$0xf]
    %v3382 = vsel %vm1680, %v3378, 0
    %v3385 = vsel %vm1680, %v3379, 0
    %v3388 = vsel %vm1190, %v3380, 0
    %3390 = vmatprep.subr.bf16.mxu0 0
    %3391 = vmatpush1.bf16.msra.mxu0 0
    %3392 = vmatprep.subr.bf16.mxu0 0
    %3393 = vmatpush1.bf16.msra.mxu0 0
    %3394 = vmatprep.subr.bf16.mxu0 0
    %3395 = vmatpush1.bf16.msra.mxu0 0
    %3396 = vmatprep.subr.bf16.mxu0 0
    %3397 = vmatpush1.bf16.msra.mxu0 0
    %3398 = vmatprep.subr.bf16.mxu0 0
    %3399 = vmatpush1.bf16.msra.mxu0 0
    %3400 = vmatprep.subr.bf16.mxu0 0
    %3401 = vmatpush1.bf16.msra.mxu0 0
    %3402 = vmatprep.subr.bf16.mxu0 0
    %3403 = vmatpush1.bf16.msra.mxu0 0
    %3404 = vmatprep.subr.bf16.mxu0 0
    %3405 = vmatpush1.bf16.msra.mxu0 %v3388
    %3406 = vmatprep.subr.bf16.mxu0 0
    %3407 = vmatpush2.bf16.msra.mxu0 0
    %3408 = vmatprep.subr.bf16.mxu0 0
    %3409 = vmatpush2.bf16.msra.mxu0 0
    %3410 = vmatprep.subr.bf16.mxu0 0
    %3411 = vmatpush2.bf16.msra.mxu0 0
    %3412 = vmatprep.subr.bf16.mxu0 0
    %3413 = vmatpush2.bf16.msra.mxu0 0
    %3414 = vmatprep.subr.bf16.mxu0 0
    %3415 = vmatpush2.bf16.msra.mxu0 0
    %3416 = vmatprep.subr.bf16.mxu0 0
    %3417 = vmatpush2.bf16.msra.mxu0 0
    %3418 = vmatprep.subr.bf16.mxu0 0
    %3419 = vmatpush2.bf16.msra.mxu0 0
    %3420 = vmatprep.subr.bf16.mxu0 0
    %3421 = vmatpush2.bf16.msra.mxu0 0
    %3422 = vmatprep.mubr.bf16.mxu0 0
    %3423 = vmatmul.mubr.bf16.gmra.mxu0 %v3382
    %v3424 = vpop.f32.mrf.mxu0
    %v3425 = vadd.f32 0.0, %v3424
    %v3426 = vpop.f32.mrf.mxu0
    %v3427 = vpop.f32.mrf.mxu0
    %v3428 = vadd.f32 0.0, %v3427
    %v3429 = vpop.f32.mrf.mxu0
    %3430 = vmatprep.mubr.bf16.mxu0 0
    %3431 = vmatmul.mubr.bf16.gmra.mxu0 %v3385
    %v3432 = vpop.f32.mrf.mxu0
    %v3433 = vadd.f32 0.0, %v3432
    %v3434 = vpop.f32.mrf.mxu0
    %v3435 = vpop.f32.mrf.mxu0
    %v3436 = vpop.f32.mrf.mxu0
    %3437 = vdwg.mxu0
    %v3438 = vadd.f32 %v3337, %v3425
    %v3439 = vadd.f32 %v3338, %v3428
    %v3440 = vadd.f32 %v3339, %v3433
    %v3441 = vld [vmem:[#allocation55] sm:$0x1]
    %v3443 = vlaneseq
    %v3444 = vshrl.u32 %v3443, 7
    %v3445 = vsub.s32 0, %v3444
    %v3446 = vrot.slane %v3441, %v3445
    %v3448 = vmul.f32 %v2979, %v3446
    %v3449 = vmul.f32 %v2982, %v3446
    %v3450 = vmul.f32 %v2987, %v3446
    %v3451 = vld [vmem:[#allocation67] sm:$0x1]
    %v3453 = vlaneseq
    %v3454 = vshrl.u32 %v3453, 7
    %v3455 = vsub.s32 0, %v3454
    %v3456 = vrot.slane %v3451, %v3455
    %v3458 = vadd.f32 %v3448, %v3456
    %v3459 = vadd.f32 %v3449, %v3456
    %v3460 = vadd.f32 %v3450, %v3456
    %vm3461 = vcmp.gt.f32.partialorder %v3458, 0.0
    %vm3462 = vcmp.gt.f32.partialorder %v3459, 0.0
    %vm3463 = vcmp.gt.f32.partialorder %v3460, 0.0
    %v3464 = vmin.f32 %v3458, 0.0
    %v3465 = vmin.f32 %v3459, 0.0
    %v3466 = vmin.f32 %v3460, 0.0
    %v3467 = vmul.f32 %v3464, 1.442695
    %v3468 = vpow.pop %v3467
    %v3469 = vmul.f32 %v3465, 1.442695
    %v3470 = vpow.pop %v3469
    %v3471 = vmul.f32 %v3466, 1.442695
    %v3472 = vpow.pop %v3471
    %v3473 = vsub.f32 %v3468, 1.0
    %v3474 = vsub.f32 %v3470, 1.0
    %v3475 = vsub.f32 %v3472, 1.0
    %v3476 = vsel %vm3461, %v3458, %v3473
    %v3477 = vsel %vm3462, %v3459, %v3474
    %v3478 = vsel %vm3463, %v3460, %v3475
    %v3479 = vpack.c.bf16 %v3477, %v3476
    %v3480 = vpack.c.bf16 %v3478, %v3478
    %v3481 = vld [vmem:[%s181] sm:$0xf]
    %v3483 = vsel %vm1680, %v3479, 0
    %v3486 = vsel %vm1680, %v3480, 0
    %v3489 = vsel %vm1190, %v3481, 0
    %3491 = vmatprep.subr.bf16.mxu0 0
    %3492 = vmatpush1.bf16.msra.mxu0 0
    %3493 = vmatprep.subr.bf16.mxu0 0
    %3494 = vmatpush1.bf16.msra.mxu0 0
    %3495 = vmatprep.subr.bf16.mxu0 0
    %3496 = vmatpush1.bf16.msra.mxu0 0
    %3497 = vmatprep.subr.bf16.mxu0 0
    %3498 = vmatpush1.bf16.msra.mxu0 0
    %3499 = vmatprep.subr.bf16.mxu0 0
    %3500 = vmatpush1.bf16.msra.mxu0 0
    %3501 = vmatprep.subr.bf16.mxu0 0
    %3502 = vmatpush1.bf16.msra.mxu0 0
    %3503 = vmatprep.subr.bf16.mxu0 0
    %3504 = vmatpush1.bf16.msra.mxu0 0
    %3505 = vmatprep.subr.bf16.mxu0 0
    %3506 = vmatpush1.bf16.msra.mxu0 %v3489
    %3507 = vmatprep.subr.bf16.mxu0 0
    %3508 = vmatpush2.bf16.msra.mxu0 0
    %3509 = vmatprep.subr.bf16.mxu0 0
    %3510 = vmatpush2.bf16.msra.mxu0 0
    %3511 = vmatprep.subr.bf16.mxu0 0
    %3512 = vmatpush2.bf16.msra.mxu0 0
    %3513 = vmatprep.subr.bf16.mxu0 0
    %3514 = vmatpush2.bf16.msra.mxu0 0
    %3515 = vmatprep.subr.bf16.mxu0 0
    %3516 = vmatpush2.bf16.msra.mxu0 0
    %3517 = vmatprep.subr.bf16.mxu0 0
    %3518 = vmatpush2.bf16.msra.mxu0 0
    %3519 = vmatprep.subr.bf16.mxu0 0
    %3520 = vmatpush2.bf16.msra.mxu0 0
    %3521 = vmatprep.subr.bf16.mxu0 0
    %3522 = vmatpush2.bf16.msra.mxu0 0
    %3523 = vmatprep.mubr.bf16.mxu0 0
    %3524 = vmatmul.mubr.bf16.gmra.mxu0 %v3483
    %v3525 = vpop.f32.mrf.mxu0
    %v3526 = vadd.f32 0.0, %v3525
    %v3527 = vpop.f32.mrf.mxu0
    %v3528 = vpop.f32.mrf.mxu0
    %v3529 = vadd.f32 0.0, %v3528
    %v3530 = vpop.f32.mrf.mxu0
    %3531 = vmatprep.mubr.bf16.mxu0 0
    %3532 = vmatmul.mubr.bf16.gmra.mxu0 %v3486
    %v3533 = vpop.f32.mrf.mxu0
    %v3534 = vadd.f32 0.0, %v3533
    %v3535 = vpop.f32.mrf.mxu0
    %v3536 = vpop.f32.mrf.mxu0
    %v3537 = vpop.f32.mrf.mxu0
    %3538 = vdwg.mxu0
    %v3539 = vadd.f32 %v3438, %v3526
    %v3540 = vadd.f32 %v3439, %v3529
    %v3541 = vadd.f32 %v3440, %v3534
    %v3542 = vld [vmem:[#allocation56] sm:$0x1]
    %v3544 = vlaneseq
    %v3545 = vshrl.u32 %v3544, 7
    %v3546 = vsub.s32 0, %v3545
    %v3547 = vrot.slane %v3542, %v3546
    %v3549 = vmul.f32 %v3027, %v3547
    %v3550 = vmul.f32 %v3030, %v3547
    %v3551 = vmul.f32 %v3035, %v3547
    %v3552 = vld [vmem:[#allocation68] sm:$0x1]
    %v3554 = vlaneseq
    %v3555 = vshrl.u32 %v3554, 7
    %v3556 = vsub.s32 0, %v3555
    %v3557 = vrot.slane %v3552, %v3556
    %v3559 = vadd.f32 %v3549, %v3557
    %v3560 = vadd.f32 %v3550, %v3557
    %v3561 = vadd.f32 %v3551, %v3557
    %vm3562 = vcmp.gt.f32.partialorder %v3559, 0.0
    %vm3563 = vcmp.gt.f32.partialorder %v3560, 0.0
    %vm3564 = vcmp.gt.f32.partialorder %v3561, 0.0
    %v3565 = vmin.f32 %v3559, 0.0
    %v3566 = vmin.f32 %v3560, 0.0
    %v3567 = vmin.f32 %v3561, 0.0
    %v3568 = vmul.f32 %v3565, 1.442695
    %v3569 = vpow.pop %v3568
    %v3570 = vmul.f32 %v3566, 1.442695
    %v3571 = vpow.pop %v3570
    %v3572 = vmul.f32 %v3567, 1.442695
    %v3573 = vpow.pop %v3572
    %v3574 = vsub.f32 %v3569, 1.0
    %v3575 = vsub.f32 %v3571, 1.0
    %v3576 = vsub.f32 %v3573, 1.0
    %v3577 = vsel %vm3562, %v3559, %v3574
    %v3578 = vsel %vm3563, %v3560, %v3575
    %v3579 = vsel %vm3564, %v3561, %v3576
    %v3580 = vpack.c.bf16 %v3578, %v3577
    %v3581 = vpack.c.bf16 %v3579, %v3579
    %v3582 = vld [vmem:[%s183] sm:$0xf]
    %v3584 = vsel %vm1680, %v3580, 0
    %v3587 = vsel %vm1680, %v3581, 0
    %v3590 = vsel %vm1190, %v3582, 0
    %3592 = vmatprep.subr.bf16.mxu0 0
    %3593 = vmatpush1.bf16.msra.mxu0 0
    %3594 = vmatprep.subr.bf16.mxu0 0
    %3595 = vmatpush1.bf16.msra.mxu0 0
    %3596 = vmatprep.subr.bf16.mxu0 0
    %3597 = vmatpush1.bf16.msra.mxu0 0
    %3598 = vmatprep.subr.bf16.mxu0 0
    %3599 = vmatpush1.bf16.msra.mxu0 0
    %3600 = vmatprep.subr.bf16.mxu0 0
    %3601 = vmatpush1.bf16.msra.mxu0 0
    %3602 = vmatprep.subr.bf16.mxu0 0
    %3603 = vmatpush1.bf16.msra.mxu0 0
    %3604 = vmatprep.subr.bf16.mxu0 0
    %3605 = vmatpush1.bf16.msra.mxu0 0
    %3606 = vmatprep.subr.bf16.mxu0 0
    %3607 = vmatpush1.bf16.msra.mxu0 %v3590
    %3608 = vmatprep.subr.bf16.mxu0 0
    %3609 = vmatpush2.bf16.msra.mxu0 0
    %3610 = vmatprep.subr.bf16.mxu0 0
    %3611 = vmatpush2.bf16.msra.mxu0 0
    %3612 = vmatprep.subr.bf16.mxu0 0
    %3613 = vmatpush2.bf16.msra.mxu0 0
    %3614 = vmatprep.subr.bf16.mxu0 0
    %3615 = vmatpush2.bf16.msra.mxu0 0
    %3616 = vmatprep.subr.bf16.mxu0 0
    %3617 = vmatpush2.bf16.msra.mxu0 0
    %3618 = vmatprep.subr.bf16.mxu0 0
    %3619 = vmatpush2.bf16.msra.mxu0 0
    %3620 = vmatprep.subr.bf16.mxu0 0
    %3621 = vmatpush2.bf16.msra.mxu0 0
    %3622 = vmatprep.subr.bf16.mxu0 0
    %3623 = vmatpush2.bf16.msra.mxu0 0
    %3624 = vmatprep.mubr.bf16.mxu0 0
    %3625 = vmatmul.mubr.bf16.gmra.mxu0 %v3584
    %v3626 = vpop.f32.mrf.mxu0
    %v3627 = vadd.f32 0.0, %v3626
    %v3628 = vpop.f32.mrf.mxu0
    %v3629 = vpop.f32.mrf.mxu0
    %v3630 = vadd.f32 0.0, %v3629
    %v3631 = vpop.f32.mrf.mxu0
    %3632 = vmatprep.mubr.bf16.mxu0 0
    %3633 = vmatmul.mubr.bf16.gmra.mxu0 %v3587
    %v3634 = vpop.f32.mrf.mxu0
    %v3635 = vadd.f32 0.0, %v3634
    %v3636 = vpop.f32.mrf.mxu0
    %v3637 = vpop.f32.mrf.mxu0
    %v3638 = vpop.f32.mrf.mxu0
    %3639 = vdwg.mxu0
    %v3640 = vadd.f32 %v3539, %v3627
    %v3641 = vadd.f32 %v3540, %v3630
    %v3642 = vadd.f32 %v3541, %v3635
    %v3643 = vld [vmem:[#allocation58] sm:$0x1]
    %v3645 = vlaneseq
    %v3646 = vshrl.u32 %v3645, 7
    %v3647 = vsub.s32 0, %v3646
    %v3648 = vrot.slane %v3643, %v3647
    %v3650 = vmul.f32 %v3075, %v3648
    %v3651 = vmul.f32 %v3078, %v3648
    %v3652 = vmul.f32 %v3083, %v3648
    %v3653 = vld [vmem:[#allocation70] sm:$0x1]
    %v3655 = vlaneseq
    %v3656 = vshrl.u32 %v3655, 7
    %v3657 = vsub.s32 0, %v3656
    %v3658 = vrot.slane %v3653, %v3657
    %v3660 = vadd.f32 %v3650, %v3658
    %v3661 = vadd.f32 %v3651, %v3658
    %v3662 = vadd.f32 %v3652, %v3658
    %vm3663 = vcmp.gt.f32.partialorder %v3660, 0.0
    %vm3664 = vcmp.gt.f32.partialorder %v3661, 0.0
    %vm3665 = vcmp.gt.f32.partialorder %v3662, 0.0
    %v3666 = vmin.f32 %v3660, 0.0
    %v3667 = vmin.f32 %v3661, 0.0
    %v3668 = vmin.f32 %v3662, 0.0
    %v3669 = vmul.f32 %v3666, 1.442695
    %v3670 = vpow.pop %v3669
    %v3671 = vmul.f32 %v3667, 1.442695
    %v3672 = vpow.pop %v3671
    %v3673 = vmul.f32 %v3668, 1.442695
    %v3674 = vpow.pop %v3673
    %v3675 = vsub.f32 %v3670, 1.0
    %v3676 = vsub.f32 %v3672, 1.0
    %v3677 = vsub.f32 %v3674, 1.0
    %v3678 = vsel %vm3663, %v3660, %v3675
    %v3679 = vsel %vm3664, %v3661, %v3676
    %v3680 = vsel %vm3665, %v3662, %v3677
    %v3681 = vpack.c.bf16 %v3679, %v3678
    %v3682 = vpack.c.bf16 %v3680, %v3680
    %v3683 = vld [vmem:[%s185] sm:$0xf]
    %v3685 = vsel %vm1680, %v3681, 0
    %v3688 = vsel %vm1680, %v3682, 0
    %v3691 = vsel %vm1190, %v3683, 0
    %3693 = vmatprep.subr.bf16.mxu0 0
    %3694 = vmatpush1.bf16.msra.mxu0 0
    %3695 = vmatprep.subr.bf16.mxu0 0
    %3696 = vmatpush1.bf16.msra.mxu0 0
    %3697 = vmatprep.subr.bf16.mxu0 0
    %3698 = vmatpush1.bf16.msra.mxu0 0
    %3699 = vmatprep.subr.bf16.mxu0 0
    %3700 = vmatpush1.bf16.msra.mxu0 0
    %3701 = vmatprep.subr.bf16.mxu0 0
    %3702 = vmatpush1.bf16.msra.mxu0 0
    %3703 = vmatprep.subr.bf16.mxu0 0
    %3704 = vmatpush1.bf16.msra.mxu0 0
    %3705 = vmatprep.subr.bf16.mxu0 0
    %3706 = vmatpush1.bf16.msra.mxu0 0
    %3707 = vmatprep.subr.bf16.mxu0 0
    %3708 = vmatpush1.bf16.msra.mxu0 %v3691
    %3709 = vmatprep.subr.bf16.mxu0 0
    %3710 = vmatpush2.bf16.msra.mxu0 0
    %3711 = vmatprep.subr.bf16.mxu0 0
    %3712 = vmatpush2.bf16.msra.mxu0 0
    %3713 = vmatprep.subr.bf16.mxu0 0
    %3714 = vmatpush2.bf16.msra.mxu0 0
    %3715 = vmatprep.subr.bf16.mxu0 0
    %3716 = vmatpush2.bf16.msra.mxu0 0
    %3717 = vmatprep.subr.bf16.mxu0 0
    %3718 = vmatpush2.bf16.msra.mxu0 0
    %3719 = vmatprep.subr.bf16.mxu0 0
    %3720 = vmatpush2.bf16.msra.mxu0 0
    %3721 = vmatprep.subr.bf16.mxu0 0
    %3722 = vmatpush2.bf16.msra.mxu0 0
    %3723 = vmatprep.subr.bf16.mxu0 0
    %3724 = vmatpush2.bf16.msra.mxu0 0
    %3725 = vmatprep.mubr.bf16.mxu0 0
    %3726 = vmatmul.mubr.bf16.gmra.mxu0 %v3685
    %v3727 = vpop.f32.mrf.mxu0
    %v3728 = vadd.f32 0.0, %v3727
    %v3729 = vpop.f32.mrf.mxu0
    %v3730 = vpop.f32.mrf.mxu0
    %v3731 = vadd.f32 0.0, %v3730
    %v3732 = vpop.f32.mrf.mxu0
    %3733 = vmatprep.mubr.bf16.mxu0 0
    %3734 = vmatmul.mubr.bf16.gmra.mxu0 %v3688
    %v3735 = vpop.f32.mrf.mxu0
    %v3736 = vadd.f32 0.0, %v3735
    %v3737 = vpop.f32.mrf.mxu0
    %v3738 = vpop.f32.mrf.mxu0
    %v3739 = vpop.f32.mrf.mxu0
    %3740 = vdwg.mxu0
    %v3741 = vadd.f32 %v3640, %v3728
    %v3742 = vadd.f32 %v3641, %v3731
    %v3743 = vadd.f32 %v3642, %v3736
    %v3744 = vld [vmem:[#allocation59] sm:$0x1]
    %v3746 = vlaneseq
    %v3747 = vshrl.u32 %v3746, 7
    %v3748 = vsub.s32 0, %v3747
    %v3749 = vrot.slane %v3744, %v3748
    %v3751 = vmul.f32 %v3123, %v3749
    %v3752 = vmul.f32 %v3126, %v3749
    %v3753 = vmul.f32 %v3131, %v3749
    %v3754 = vld [vmem:[#allocation71] sm:$0x1]
    %v3756 = vlaneseq
    %v3757 = vshrl.u32 %v3756, 7
    %v3758 = vsub.s32 0, %v3757
    %v3759 = vrot.slane %v3754, %v3758
    %v3761 = vadd.f32 %v3751, %v3759
    %v3762 = vadd.f32 %v3752, %v3759
    %v3763 = vadd.f32 %v3753, %v3759
    %vm3764 = vcmp.gt.f32.partialorder %v3761, 0.0
    %vm3765 = vcmp.gt.f32.partialorder %v3762, 0.0
    %vm3766 = vcmp.gt.f32.partialorder %v3763, 0.0
    %v3767 = vmin.f32 %v3761, 0.0
    %v3768 = vmin.f32 %v3762, 0.0
    %v3769 = vmin.f32 %v3763, 0.0
    %v3770 = vmul.f32 %v3767, 1.442695
    %v3771 = vpow.pop %v3770
    %v3772 = vmul.f32 %v3768, 1.442695
    %v3773 = vpow.pop %v3772
    %v3774 = vmul.f32 %v3769, 1.442695
    %v3775 = vpow.pop %v3774
    %v3776 = vsub.f32 %v3771, 1.0
    %v3777 = vsub.f32 %v3773, 1.0
    %v3778 = vsub.f32 %v3775, 1.0
    %v3779 = vsel %vm3764, %v3761, %v3776
    %v3780 = vsel %vm3765, %v3762, %v3777
    %v3781 = vsel %vm3766, %v3763, %v3778
    %v3782 = vpack.c.bf16 %v3780, %v3779
    %v3783 = vpack.c.bf16 %v3781, %v3781
    %v3784 = vld [vmem:[%s187] sm:$0xf]
    %v3786 = vsel %vm1680, %v3782, 0
    %v3789 = vsel %vm1680, %v3783, 0
    %v3792 = vsel %vm1190, %v3784, 0
    %3794 = vmatprep.subr.bf16.mxu0 0
    %3795 = vmatpush1.bf16.msra.mxu0 0
    %3796 = vmatprep.subr.bf16.mxu0 0
    %3797 = vmatpush1.bf16.msra.mxu0 0
    %3798 = vmatprep.subr.bf16.mxu0 0
    %3799 = vmatpush1.bf16.msra.mxu0 0
    %3800 = vmatprep.subr.bf16.mxu0 0
    %3801 = vmatpush1.bf16.msra.mxu0 0
    %3802 = vmatprep.subr.bf16.mxu0 0
    %3803 = vmatpush1.bf16.msra.mxu0 0
    %3804 = vmatprep.subr.bf16.mxu0 0
    %3805 = vmatpush1.bf16.msra.mxu0 0
    %3806 = vmatprep.subr.bf16.mxu0 0
    %3807 = vmatpush1.bf16.msra.mxu0 0
    %3808 = vmatprep.subr.bf16.mxu0 0
    %3809 = vmatpush1.bf16.msra.mxu0 %v3792
    %3810 = vmatprep.subr.bf16.mxu0 0
    %3811 = vmatpush2.bf16.msra.mxu0 0
    %3812 = vmatprep.subr.bf16.mxu0 0
    %3813 = vmatpush2.bf16.msra.mxu0 0
    %3814 = vmatprep.subr.bf16.mxu0 0
    %3815 = vmatpush2.bf16.msra.mxu0 0
    %3816 = vmatprep.subr.bf16.mxu0 0
    %3817 = vmatpush2.bf16.msra.mxu0 0
    %3818 = vmatprep.subr.bf16.mxu0 0
    %3819 = vmatpush2.bf16.msra.mxu0 0
    %3820 = vmatprep.subr.bf16.mxu0 0
    %3821 = vmatpush2.bf16.msra.mxu0 0
    %3822 = vmatprep.subr.bf16.mxu0 0
    %3823 = vmatpush2.bf16.msra.mxu0 0
    %3824 = vmatprep.subr.bf16.mxu0 0
    %3825 = vmatpush2.bf16.msra.mxu0 0
    %3826 = vmatprep.mubr.bf16.mxu0 0
    %3827 = vmatmul.mubr.bf16.gmra.mxu0 %v3786
    %v3828 = vpop.f32.mrf.mxu0
    %v3829 = vadd.f32 0.0, %v3828
    %v3830 = vpop.f32.mrf.mxu0
    %v3831 = vpop.f32.mrf.mxu0
    %v3832 = vadd.f32 0.0, %v3831
    %v3833 = vpop.f32.mrf.mxu0
    %3834 = vmatprep.mubr.bf16.mxu0 0
    %3835 = vmatmul.mubr.bf16.gmra.mxu0 %v3789
    %v3836 = vpop.f32.mrf.mxu0
    %v3837 = vadd.f32 0.0, %v3836
    %v3838 = vpop.f32.mrf.mxu0
    %v3839 = vpop.f32.mrf.mxu0
    %v3840 = vpop.f32.mrf.mxu0
    %3841 = vdwg.mxu0
    %v3842 = vadd.f32 %v3741, %v3829
    %v3843 = vadd.f32 %v3742, %v3832
    %v3844 = vadd.f32 %v3743, %v3837
    %v3845 = vld [vmem:[#allocation61] sm:$0x1]
    %v3847 = vlaneseq
    %v3848 = vshrl.u32 %v3847, 7
    %v3849 = vsub.s32 0, %v3848
    %v3850 = vrot.slane %v3845, %v3849
    %v3852 = vmul.f32 %v3171, %v3850
    %v3853 = vmul.f32 %v3174, %v3850
    %v3854 = vmul.f32 %v3179, %v3850
    %v3855 = vld [vmem:[#allocation73] sm:$0x1]
    %v3857 = vlaneseq
    %v3858 = vshrl.u32 %v3857, 7
    %v3859 = vsub.s32 0, %v3858
    %v3860 = vrot.slane %v3855, %v3859
    %v3862 = vadd.f32 %v3852, %v3860
    %v3863 = vadd.f32 %v3853, %v3860
    %v3864 = vadd.f32 %v3854, %v3860
    %vm3865 = vcmp.gt.f32.partialorder %v3862, 0.0
    %vm3866 = vcmp.gt.f32.partialorder %v3863, 0.0
    %vm3867 = vcmp.gt.f32.partialorder %v3864, 0.0
    %v3868 = vmin.f32 %v3862, 0.0
    %v3869 = vmin.f32 %v3863, 0.0
    %v3870 = vmin.f32 %v3864, 0.0
    %v3871 = vmul.f32 %v3868, 1.442695
    %v3872 = vpow.pop %v3871
    %v3873 = vmul.f32 %v3869, 1.442695
    %v3874 = vpow.pop %v3873
    %v3875 = vmul.f32 %v3870, 1.442695
    %v3876 = vpow.pop %v3875
    %v3877 = vsub.f32 %v3872, 1.0
    %v3878 = vsub.f32 %v3874, 1.0
    %v3879 = vsub.f32 %v3876, 1.0
    %v3880 = vsel %vm3865, %v3862, %v3877
    %v3881 = vsel %vm3866, %v3863, %v3878
    %v3882 = vsel %vm3867, %v3864, %v3879
    %v3883 = vpack.c.bf16 %v3881, %v3880
    %v3884 = vpack.c.bf16 %v3882, %v3882
    %v3885 = vld [vmem:[%s189] sm:$0xf]
    %v3887 = vsel %vm1680, %v3883, 0
    %v3890 = vsel %vm1680, %v3884, 0
    %v3893 = vsel %vm1190, %v3885, 0
    %3895 = vmatprep.subr.bf16.mxu0 0
    %3896 = vmatpush1.bf16.msra.mxu0 0
    %3897 = vmatprep.subr.bf16.mxu0 0
    %3898 = vmatpush1.bf16.msra.mxu0 0
    %3899 = vmatprep.subr.bf16.mxu0 0
    %3900 = vmatpush1.bf16.msra.mxu0 0
    %3901 = vmatprep.subr.bf16.mxu0 0
    %3902 = vmatpush1.bf16.msra.mxu0 0
    %3903 = vmatprep.subr.bf16.mxu0 0
    %3904 = vmatpush1.bf16.msra.mxu0 0
    %3905 = vmatprep.subr.bf16.mxu0 0
    %3906 = vmatpush1.bf16.msra.mxu0 0
    %3907 = vmatprep.subr.bf16.mxu0 0
    %3908 = vmatpush1.bf16.msra.mxu0 0
    %3909 = vmatprep.subr.bf16.mxu0 0
    %3910 = vmatpush1.bf16.msra.mxu0 %v3893
    %3911 = vmatprep.subr.bf16.mxu0 0
    %3912 = vmatpush2.bf16.msra.mxu0 0
    %3913 = vmatprep.subr.bf16.mxu0 0
    %3914 = vmatpush2.bf16.msra.mxu0 0
    %3915 = vmatprep.subr.bf16.mxu0 0
    %3916 = vmatpush2.bf16.msra.mxu0 0
    %3917 = vmatprep.subr.bf16.mxu0 0
    %3918 = vmatpush2.bf16.msra.mxu0 0
    %3919 = vmatprep.subr.bf16.mxu0 0
    %3920 = vmatpush2.bf16.msra.mxu0 0
    %3921 = vmatprep.subr.bf16.mxu0 0
    %3922 = vmatpush2.bf16.msra.mxu0 0
    %3923 = vmatprep.subr.bf16.mxu0 0
    %3924 = vmatpush2.bf16.msra.mxu0 0
    %3925 = vmatprep.subr.bf16.mxu0 0
    %3926 = vmatpush2.bf16.msra.mxu0 0
    %3927 = vmatprep.mubr.bf16.mxu0 0
    %3928 = vmatmul.mubr.bf16.gmra.mxu0 %v3887
    %v3929 = vpop.f32.mrf.mxu0
    %v3930 = vadd.f32 0.0, %v3929
    %v3931 = vpop.f32.mrf.mxu0
    %v3932 = vpop.f32.mrf.mxu0
    %v3933 = vadd.f32 0.0, %v3932
    %v3934 = vpop.f32.mrf.mxu0
    %3935 = vmatprep.mubr.bf16.mxu0 0
    %3936 = vmatmul.mubr.bf16.gmra.mxu0 %v3890
    %v3937 = vpop.f32.mrf.mxu0
    %v3938 = vadd.f32 0.0, %v3937
    %v3939 = vpop.f32.mrf.mxu0
    %v3940 = vpop.f32.mrf.mxu0
    %v3941 = vpop.f32.mrf.mxu0
    %3942 = vdwg.mxu0
    %v3943 = vadd.f32 %v3842, %v3930
    %v3944 = vadd.f32 %v3843, %v3933
    %v3945 = vadd.f32 %v3844, %v3938
    %v3946 = vld [vmem:[#allocation62] sm:$0x1]
    %v3948 = vlaneseq
    %v3949 = vshrl.u32 %v3948, 7
    %v3950 = vsub.s32 0, %v3949
    %v3951 = vrot.slane %v3946, %v3950
    %v3953 = vmul.f32 %v3219, %v3951
    %v3954 = vmul.f32 %v3222, %v3951
    %v3955 = vmul.f32 %v3227, %v3951
    %v3956 = vld [vmem:[#allocation74] sm:$0x1]
    %v3958 = vlaneseq
    %v3959 = vshrl.u32 %v3958, 7
    %v3960 = vsub.s32 0, %v3959
    %v3961 = vrot.slane %v3956, %v3960
    %v3963 = vadd.f32 %v3953, %v3961
    %v3964 = vadd.f32 %v3954, %v3961
    %v3965 = vadd.f32 %v3955, %v3961
    %vm3966 = vcmp.gt.f32.partialorder %v3963, 0.0
    %vm3967 = vcmp.gt.f32.partialorder %v3964, 0.0
    %vm3968 = vcmp.gt.f32.partialorder %v3965, 0.0
    %v3969 = vmin.f32 %v3963, 0.0
    %v3970 = vmin.f32 %v3964, 0.0
    %v3971 = vmin.f32 %v3965, 0.0
    %v3972 = vmul.f32 %v3969, 1.442695
    %v3973 = vpow.pop %v3972
    %v3974 = vmul.f32 %v3970, 1.442695
    %v3975 = vpow.pop %v3974
    %v3976 = vmul.f32 %v3971, 1.442695
    %v3977 = vpow.pop %v3976
    %v3978 = vsub.f32 %v3973, 1.0
    %v3979 = vsub.f32 %v3975, 1.0
    %v3980 = vsub.f32 %v3977, 1.0
    %v3981 = vsel %vm3966, %v3963, %v3978
    %v3982 = vsel %vm3967, %v3964, %v3979
    %v3983 = vsel %vm3968, %v3965, %v3980
    %v3984 = vpack.c.bf16 %v3982, %v3981
    %v3985 = vpack.c.bf16 %v3983, %v3983
    %v3986 = vld [vmem:[%s191] sm:$0xf]
    %v3988 = vsel %vm1680, %v3984, 0
    %v3991 = vsel %vm1680, %v3985, 0
    %v3994 = vsel %vm1190, %v3986, 0
    %3996 = vmatprep.subr.bf16.mxu0 0
    %3997 = vmatpush1.bf16.msra.mxu0 0
    %3998 = vmatprep.subr.bf16.mxu0 0
    %3999 = vmatpush1.bf16.msra.mxu0 0
    %4000 = vmatprep.subr.bf16.mxu0 0
    %4001 = vmatpush1.bf16.msra.mxu0 0
    %4002 = vmatprep.subr.bf16.mxu0 0
    %4003 = vmatpush1.bf16.msra.mxu0 0
    %4004 = vmatprep.subr.bf16.mxu0 0
    %4005 = vmatpush1.bf16.msra.mxu0 0
    %4006 = vmatprep.subr.bf16.mxu0 0
    %4007 = vmatpush1.bf16.msra.mxu0 0
    %4008 = vmatprep.subr.bf16.mxu0 0
    %4009 = vmatpush1.bf16.msra.mxu0 0
    %4010 = vmatprep.subr.bf16.mxu0 0
    %4011 = vmatpush1.bf16.msra.mxu0 %v3994
    %4012 = vmatprep.subr.bf16.mxu0 0
    %4013 = vmatpush2.bf16.msra.mxu0 0
    %4014 = vmatprep.subr.bf16.mxu0 0
    %4015 = vmatpush2.bf16.msra.mxu0 0
    %4016 = vmatprep.subr.bf16.mxu0 0
    %4017 = vmatpush2.bf16.msra.mxu0 0
    %4018 = vmatprep.subr.bf16.mxu0 0
    %4019 = vmatpush2.bf16.msra.mxu0 0
    %4020 = vmatprep.subr.bf16.mxu0 0
    %4021 = vmatpush2.bf16.msra.mxu0 0
    %4022 = vmatprep.subr.bf16.mxu0 0
    %4023 = vmatpush2.bf16.msra.mxu0 0
    %4024 = vmatprep.subr.bf16.mxu0 0
    %4025 = vmatpush2.bf16.msra.mxu0 0
    %4026 = vmatprep.subr.bf16.mxu0 0
    %4027 = vmatpush2.bf16.msra.mxu0 0
    %4028 = vmatprep.mubr.bf16.mxu0 0
    %4029 = vmatmul.mubr.bf16.gmra.mxu0 %v3988
    %v4030 = vpop.f32.mrf.mxu0
    %v4031 = vadd.f32 0.0, %v4030
    %v4032 = vpop.f32.mrf.mxu0
    %v4033 = vpop.f32.mrf.mxu0
    %v4034 = vadd.f32 0.0, %v4033
    %v4035 = vpop.f32.mrf.mxu0
    %4036 = vmatprep.mubr.bf16.mxu0 0
    %4037 = vmatmul.mubr.bf16.gmra.mxu0 %v3991
    %v4038 = vpop.f32.mrf.mxu0
    %v4039 = vadd.f32 0.0, %v4038
    %v4040 = vpop.f32.mrf.mxu0
    %v4041 = vpop.f32.mrf.mxu0
    %v4042 = vpop.f32.mrf.mxu0
    %4043 = vdwg.mxu0
    %v4044 = vadd.f32 %v3943, %v4031
    %v4045 = vadd.f32 %v3944, %v4034
    %v4046 = vadd.f32 %v3945, %v4039
    %v4047 = vld [vmem:[#allocation76] sm:$0x1]
    %v4048 = vld [vmem:[#allocation77] sm:$0x1]
    %v4050 = vlaneseq
    %v4051 = vshrl.u32 %v4050, 7
    %v4052 = vsub.s32 0, %v4051
    %v4053 = vrot.slane %v4048, %v4052
    %v4055 = vmul.f32 %v4044, %v4053
    %v4056 = vmul.f32 %v4045, %v4053
    %v4057 = vmul.f32 %v4046, %v4053
    %v4058 = vld [vmem:[#allocation79] sm:$0x1]
    %v4060 = vlaneseq
    %v4061 = vshrl.u32 %v4060, 7
    %v4062 = vsub.s32 0, %v4061
    %v4063 = vrot.slane %v4058, %v4062
    %v4065 = vadd.f32 %v4055, %v4063
    %v4066 = vadd.f32 %v4056, %v4063
    %v4067 = vadd.f32 %v4057, %v4063
    %vm4068 = vcmp.gt.f32.partialorder %v4065, 0.0
    %vm4069 = vcmp.gt.f32.partialorder %v4066, 0.0
    %vm4070 = vcmp.gt.f32.partialorder %v4067, 0.0
    %v4071 = vmin.f32 %v4065, 0.0
    %v4072 = vmin.f32 %v4066, 0.0
    %v4073 = vmin.f32 %v4067, 0.0
    %v4074 = vmul.f32 %v4071, 1.442695
    %v4075 = vpow.pop %v4074
    %v4076 = vmul.f32 %v4072, 1.442695
    %v4077 = vpow.pop %v4076
    %v4078 = vmul.f32 %v4073, 1.442695
    %v4079 = vpow.pop %v4078
    %v4080 = vsub.f32 %v4075, 1.0
    %v4081 = vsub.f32 %v4077, 1.0
    %v4082 = vsub.f32 %v4079, 1.0
    %v4083 = vsel %vm4068, %v4065, %v4080
    %v4084 = vsel %vm4069, %v4066, %v4081
    %v4085 = vsel %vm4070, %v4067, %v4082
    %v4086 = vpack.c.bf16 %v4084, %v4083
    %v4087 = vpack.c.bf16 %v4085, %v4085
    %v4088 = vld [vmem:[%s199] sm:$0xf]
    %v4089 = vld [vmem:[%s199 + $0x4] sm:$0xf]
    %v4092 = vunpack.c.l.b16 %v4088
    %v4093 = vunpack.c.l.b16 %v4089
    %v4094 = vpack.c.b16 %v4093, %v4092
    %v4097 = vsel %vm1106, %v4086, 0
    %v4100 = vsel %vm1106, %v4087, 0
    %4102 = vmatprep.subr.bf16.mxu0 0
    %4103 = vmatpush1.bf16.msra.mxu0 0
    %4104 = vmatprep.subr.bf16.mxu0 0
    %4105 = vmatpush1.bf16.msra.mxu0 0
    %4106 = vmatprep.subr.bf16.mxu0 0
    %4107 = vmatpush1.bf16.msra.mxu0 0
    %4108 = vmatprep.subr.bf16.mxu0 0
    %4109 = vmatpush1.bf16.msra.mxu0 0
    %4110 = vmatprep.subr.bf16.mxu0 0
    %4111 = vmatpush1.bf16.msra.mxu0 0
    %4112 = vmatprep.subr.bf16.mxu0 0
    %4113 = vmatpush1.bf16.msra.mxu0 0
    %4114 = vmatprep.subr.bf16.mxu0 0
    %4115 = vmatpush1.bf16.msra.mxu0 0
    %4116 = vmatprep.subr.bf16.mxu0 0
    %4117 = vmatpush1.bf16.msra.mxu0 %v4094
    %4118 = vmatprep.subr.bf16.mxu0 0
    %4119 = vmatpush2.bf16.msra.mxu0 0
    %4120 = vmatprep.subr.bf16.mxu0 0
    %4121 = vmatpush2.bf16.msra.mxu0 0
    %4122 = vmatprep.subr.bf16.mxu0 0
    %4123 = vmatpush2.bf16.msra.mxu0 0
    %4124 = vmatprep.subr.bf16.mxu0 0
    %4125 = vmatpush2.bf16.msra.mxu0 0
    %4126 = vmatprep.subr.bf16.mxu0 0
    %4127 = vmatpush2.bf16.msra.mxu0 0
    %4128 = vmatprep.subr.bf16.mxu0 0
    %4129 = vmatpush2.bf16.msra.mxu0 0
    %4130 = vmatprep.subr.bf16.mxu0 0
    %4131 = vmatpush2.bf16.msra.mxu0 0
    %4132 = vmatprep.subr.bf16.mxu0 0
    %4133 = vmatpush2.bf16.msra.mxu0 0
    %4134 = vmatprep.mubr.bf16.mxu0 0
    %4135 = vmatmul.mubr.bf16.gmra.mxu0 %v4097
    %v4136 = vpop.f32.mrf.mxu0
    %v4137 = vadd.f32 0.0, %v4136
    %v4138 = vpop.f32.mrf.mxu0
    %v4139 = vpop.f32.mrf.mxu0
    %v4140 = vadd.f32 0.0, %v4139
    %v4141 = vpop.f32.mrf.mxu0
    %4142 = vmatprep.mubr.bf16.mxu0 0
    %4143 = vmatmul.mubr.bf16.gmra.mxu0 %v4100
    %v4144 = vpop.f32.mrf.mxu0
    %v4145 = vadd.f32 0.0, %v4144
    %v4146 = vpop.f32.mrf.mxu0
    %v4147 = vpop.f32.mrf.mxu0
    %v4148 = vpop.f32.mrf.mxu0
    %4149 = vdwg.mxu0
    %v4151 = vlaneseq
    %v4152 = vshrl.u32 %v4151, 7
    %v4153 = vsub.s32 0, %v4152
    %v4154 = vrot.slane %v4047, %v4153
    %v4156 = vadd.f32 %v4154, %v4137
    %v4157 = vadd.f32 %v4154, %v4140
    %v4158 = vadd.f32 %v4154, %v4145
    %v4159 = vld [vmem:[#allocation80] sm:$0x1]
    %v4160 = vld [vmem:[#allocation82] sm:$0x1]
    %v4162 = vlaneseq
    %v4163 = vshrl.u32 %v4162, 7
    %v4164 = vsub.s32 0, %v4163
    %v4165 = vrot.slane %v4160, %v4164
    %v4167 = vmul.f32 %v4156, %v4165
    %v4168 = vmul.f32 %v4157, %v4165
    %v4169 = vmul.f32 %v4158, %v4165
    %v4170 = vld [vmem:[#allocation83] sm:$0x1]
    %v4172 = vlaneseq
    %v4173 = vshrl.u32 %v4172, 7
    %v4174 = vsub.s32 0, %v4173
    %v4175 = vrot.slane %v4170, %v4174
    %v4177 = vadd.f32 %v4167, %v4175
    %v4178 = vadd.f32 %v4168, %v4175
    %v4179 = vadd.f32 %v4169, %v4175
    %vm4180 = vcmp.gt.f32.partialorder %v4177, 0.0
    %vm4181 = vcmp.gt.f32.partialorder %v4178, 0.0
    %vm4182 = vcmp.gt.f32.partialorder %v4179, 0.0
    %v4183 = vmin.f32 %v4177, 0.0
    %v4184 = vmin.f32 %v4178, 0.0
    %v4185 = vmin.f32 %v4179, 0.0
    %v4186 = vmul.f32 %v4183, 1.442695
    %v4187 = vpow.pop %v4186
    %v4188 = vmul.f32 %v4184, 1.442695
    %v4189 = vpow.pop %v4188
    %v4190 = vmul.f32 %v4185, 1.442695
    %v4191 = vpow.pop %v4190
    %v4192 = vsub.f32 %v4187, 1.0
    %v4193 = vsub.f32 %v4189, 1.0
    %v4194 = vsub.f32 %v4191, 1.0
    %v4195 = vsel %vm4180, %v4177, %v4192
    %v4196 = vsel %vm4181, %v4178, %v4193
    %v4197 = vsel %vm4182, %v4179, %v4194
    %v4198 = vpack.c.bf16 %v4196, %v4195
    %v4199 = vpack.c.bf16 %v4197, %v4197
    %v4200 = vld [vmem:[%s207] sm:$0xf]
    %v4201 = vld [vmem:[%s207 + $0x4] sm:$0xf]
    %v4204 = vunpack.c.l.b16 %v4200
    %v4205 = vunpack.c.l.b16 %v4201
    %v4206 = vpack.c.b16 %v4205, %v4204
    %v4209 = vsel %vm1106, %v4198, 0
    %v4212 = vsel %vm1106, %v4199, 0
    %4214 = vmatprep.subr.bf16.mxu0 0
    %4215 = vmatpush1.bf16.msra.mxu0 0
    %4216 = vmatprep.subr.bf16.mxu0 0
    %4217 = vmatpush1.bf16.msra.mxu0 0
    %4218 = vmatprep.subr.bf16.mxu0 0
    %4219 = vmatpush1.bf16.msra.mxu0 0
    %4220 = vmatprep.subr.bf16.mxu0 0
    %4221 = vmatpush1.bf16.msra.mxu0 0
    %4222 = vmatprep.subr.bf16.mxu0 0
    %4223 = vmatpush1.bf16.msra.mxu0 0
    %4224 = vmatprep.subr.bf16.mxu0 0
    %4225 = vmatpush1.bf16.msra.mxu0 0
    %4226 = vmatprep.subr.bf16.mxu0 0
    %4227 = vmatpush1.bf16.msra.mxu0 0
    %4228 = vmatprep.subr.bf16.mxu0 0
    %4229 = vmatpush1.bf16.msra.mxu0 %v4206
    %4230 = vmatprep.subr.bf16.mxu0 0
    %4231 = vmatpush2.bf16.msra.mxu0 0
    %4232 = vmatprep.subr.bf16.mxu0 0
    %4233 = vmatpush2.bf16.msra.mxu0 0
    %4234 = vmatprep.subr.bf16.mxu0 0
    %4235 = vmatpush2.bf16.msra.mxu0 0
    %4236 = vmatprep.subr.bf16.mxu0 0
    %4237 = vmatpush2.bf16.msra.mxu0 0
    %4238 = vmatprep.subr.bf16.mxu0 0
    %4239 = vmatpush2.bf16.msra.mxu0 0
    %4240 = vmatprep.subr.bf16.mxu0 0
    %4241 = vmatpush2.bf16.msra.mxu0 0
    %4242 = vmatprep.subr.bf16.mxu0 0
    %4243 = vmatpush2.bf16.msra.mxu0 0
    %4244 = vmatprep.subr.bf16.mxu0 0
    %4245 = vmatpush2.bf16.msra.mxu0 0
    %4246 = vmatprep.mubr.bf16.mxu0 0
    %4247 = vmatmul.mubr.bf16.gmra.mxu0 %v4209
    %v4248 = vpop.f32.mrf.mxu0
    %v4249 = vadd.f32 0.0, %v4248
    %v4250 = vpop.f32.mrf.mxu0
    %v4251 = vpop.f32.mrf.mxu0
    %v4252 = vadd.f32 0.0, %v4251
    %v4253 = vpop.f32.mrf.mxu0
    %4254 = vmatprep.mubr.bf16.mxu0 0
    %4255 = vmatmul.mubr.bf16.gmra.mxu0 %v4212
    %v4256 = vpop.f32.mrf.mxu0
    %v4257 = vadd.f32 0.0, %v4256
    %v4258 = vpop.f32.mrf.mxu0
    %v4259 = vpop.f32.mrf.mxu0
    %v4260 = vpop.f32.mrf.mxu0
    %4261 = vdwg.mxu0
    %v4263 = vlaneseq
    %v4264 = vshrl.u32 %v4263, 7
    %v4265 = vsub.s32 0, %v4264
    %v4266 = vrot.slane %v4159, %v4265
    %v4268 = vadd.f32 %v4266, %v4249
    %v4269 = vadd.f32 %v4266, %v4252
    %v4270 = vadd.f32 %v4266, %v4257
    %v4271 = vld [vmem:[%s35] sm:$0x1]
    %v4272 = vld [vmem:[%s37] sm:$0x1]
    %v4274 = vlaneseq
    %v4275 = vshrl.u32 %v4274, 7
    %v4276 = vsub.s32 0, %v4275
    %v4277 = vrot.slane %v4272, %v4276
    %v4279 = vmul.f32 %v1054, %v4277
    %v4280 = vmul.f32 %v1055, %v4277
    %v4281 = vmul.f32 %v1056, %v4277
    %v4282 = vld [vmem:[%s43] sm:$0x1]
    %v4284 = vlaneseq
    %v4285 = vshrl.u32 %v4284, 7
    %v4286 = vsub.s32 0, %v4285
    %v4287 = vrot.slane %v4282, %v4286
    %v4289 = vadd.f32 %v4279, %v4287
    %v4290 = vadd.f32 %v4280, %v4287
    %v4291 = vadd.f32 %v4281, %v4287
    %vm4292 = vcmp.gt.f32.partialorder %v4289, 0.0
    %vm4293 = vcmp.gt.f32.partialorder %v4290, 0.0
    %vm4294 = vcmp.gt.f32.partialorder %v4291, 0.0
    %v4295 = vmin.f32 %v4289, 0.0
    %v4296 = vmin.f32 %v4290, 0.0
    %v4297 = vmin.f32 %v4291, 0.0
    %v4298 = vmul.f32 %v4295, 1.442695
    %v4299 = vpow.pop %v4298
    %v4300 = vmul.f32 %v4296, 1.442695
    %v4301 = vpow.pop %v4300
    %v4302 = vmul.f32 %v4297, 1.442695
    %v4303 = vpow.pop %v4302
    %v4304 = vsub.f32 %v4299, 1.0
    %v4305 = vsub.f32 %v4301, 1.0
    %v4306 = vsub.f32 %v4303, 1.0
    %v4307 = vsel %vm4292, %v4289, %v4304
    %v4308 = vsel %vm4293, %v4290, %v4305
    %v4309 = vsel %vm4294, %v4291, %v4306
    %v4310 = vpack.c.bf16 %v4308, %v4307
    %v4311 = vpack.c.bf16 %v4309, %v4309
    %v4312 = vld [vmem:[%s49] sm:$0xf]
    %v4313 = vld [vmem:[%s49 + $0x4] sm:$0xf]
    %v4316 = vunpack.c.l.b16 %v4312
    %v4317 = vunpack.c.l.b16 %v4313
    %v4318 = vpack.c.b16 %v4317, %v4316
    %v4321 = vsel %vm1106, %v4310, 0
    %v4324 = vsel %vm1106, %v4311, 0
    %4326 = vmatprep.subr.bf16.mxu0 0
    %4327 = vmatpush1.bf16.msra.mxu0 0
    %4328 = vmatprep.subr.bf16.mxu0 0
    %4329 = vmatpush1.bf16.msra.mxu0 0
    %4330 = vmatprep.subr.bf16.mxu0 0
    %4331 = vmatpush1.bf16.msra.mxu0 0
    %4332 = vmatprep.subr.bf16.mxu0 0
    %4333 = vmatpush1.bf16.msra.mxu0 0
    %4334 = vmatprep.subr.bf16.mxu0 0
    %4335 = vmatpush1.bf16.msra.mxu0 0
    %4336 = vmatprep.subr.bf16.mxu0 0
    %4337 = vmatpush1.bf16.msra.mxu0 0
    %4338 = vmatprep.subr.bf16.mxu0 0
    %4339 = vmatpush1.bf16.msra.mxu0 0
    %4340 = vmatprep.subr.bf16.mxu0 0
    %4341 = vmatpush1.bf16.msra.mxu0 %v4318
    %4342 = vmatprep.subr.bf16.mxu0 0
    %4343 = vmatpush2.bf16.msra.mxu0 0
    %4344 = vmatprep.subr.bf16.mxu0 0
    %4345 = vmatpush2.bf16.msra.mxu0 0
    %4346 = vmatprep.subr.bf16.mxu0 0
    %4347 = vmatpush2.bf16.msra.mxu0 0
    %4348 = vmatprep.subr.bf16.mxu0 0
    %4349 = vmatpush2.bf16.msra.mxu0 0
    %4350 = vmatprep.subr.bf16.mxu0 0
    %4351 = vmatpush2.bf16.msra.mxu0 0
    %4352 = vmatprep.subr.bf16.mxu0 0
    %4353 = vmatpush2.bf16.msra.mxu0 0
    %4354 = vmatprep.subr.bf16.mxu0 0
    %4355 = vmatpush2.bf16.msra.mxu0 0
    %4356 = vmatprep.subr.bf16.mxu0 0
    %4357 = vmatpush2.bf16.msra.mxu0 0
    %4358 = vmatprep.mubr.bf16.mxu0 0
    %4359 = vmatmul.mubr.bf16.gmra.mxu0 %v4321
    %v4360 = vpop.f32.mrf.mxu0
    %v4361 = vadd.f32 0.0, %v4360
    %v4362 = vpop.f32.mrf.mxu0
    %v4363 = vpop.f32.mrf.mxu0
    %v4364 = vadd.f32 0.0, %v4363
    %v4365 = vpop.f32.mrf.mxu0
    %4366 = vmatprep.mubr.bf16.mxu0 0
    %4367 = vmatmul.mubr.bf16.gmra.mxu0 %v4324
    %v4368 = vpop.f32.mrf.mxu0
    %v4369 = vadd.f32 0.0, %v4368
    %v4370 = vpop.f32.mrf.mxu0
    %v4371 = vpop.f32.mrf.mxu0
    %v4372 = vpop.f32.mrf.mxu0
    %4373 = vdwg.mxu0
    %v4375 = vlaneseq
    %v4376 = vshrl.u32 %v4375, 7
    %v4377 = vsub.s32 0, %v4376
    %v4378 = vrot.slane %v4271, %v4377
    %v4380 = vadd.f32 %v4378, %v4361
    %v4381 = vadd.f32 %v4378, %v4364
    %v4382 = vadd.f32 %v4378, %v4369
    %v4383 = vld [vmem:[%s39] sm:$0x1]
    %v4385 = vlaneseq
    %v4386 = vshrl.u32 %v4385, 7
    %v4387 = vsub.s32 0, %v4386
    %v4388 = vrot.slane %v4383, %v4387
    %v4390 = vmul.f32 %v2675, %v4388
    %v4391 = vmul.f32 %v2676, %v4388
    %v4392 = vmul.f32 %v2677, %v4388
    %v4393 = vld [vmem:[%s45] sm:$0x1]
    %v4395 = vlaneseq
    %v4396 = vshrl.u32 %v4395, 7
    %v4397 = vsub.s32 0, %v4396
    %v4398 = vrot.slane %v4393, %v4397
    %v4400 = vadd.f32 %v4390, %v4398
    %v4401 = vadd.f32 %v4391, %v4398
    %v4402 = vadd.f32 %v4392, %v4398
    %vm4403 = vcmp.gt.f32.partialorder %v4400, 0.0
    %vm4404 = vcmp.gt.f32.partialorder %v4401, 0.0
    %vm4405 = vcmp.gt.f32.partialorder %v4402, 0.0
    %v4406 = vmin.f32 %v4400, 0.0
    %v4407 = vmin.f32 %v4401, 0.0
    %v4408 = vmin.f32 %v4402, 0.0
    %v4409 = vmul.f32 %v4406, 1.442695
    %v4410 = vpow.pop %v4409
    %v4411 = vmul.f32 %v4407, 1.442695
    %v4412 = vpow.pop %v4411
    %v4413 = vmul.f32 %v4408, 1.442695
    %v4414 = vpow.pop %v4413
    %v4415 = vsub.f32 %v4410, 1.0
    %v4416 = vsub.f32 %v4412, 1.0
    %v4417 = vsub.f32 %v4414, 1.0
    %v4418 = vsel %vm4403, %v4400, %v4415
    %v4419 = vsel %vm4404, %v4401, %v4416
    %v4420 = vsel %vm4405, %v4402, %v4417
    %v4421 = vpack.c.bf16 %v4419, %v4418
    %v4422 = vpack.c.bf16 %v4420, %v4420
    %v4423 = vld [vmem:[%s51] sm:$0xf]
    %v4425 = vsel %vm1680, %v4421, 0
    %v4428 = vsel %vm1680, %v4422, 0
    %v4431 = vsel %vm1190, %v4423, 0
    %4433 = vmatprep.subr.bf16.mxu0 0
    %4434 = vmatpush1.bf16.msra.mxu0 0
    %4435 = vmatprep.subr.bf16.mxu0 0
    %4436 = vmatpush1.bf16.msra.mxu0 0
    %4437 = vmatprep.subr.bf16.mxu0 0
    %4438 = vmatpush1.bf16.msra.mxu0 0
    %4439 = vmatprep.subr.bf16.mxu0 0
    %4440 = vmatpush1.bf16.msra.mxu0 0
    %4441 = vmatprep.subr.bf16.mxu0 0
    %4442 = vmatpush1.bf16.msra.mxu0 0
    %4443 = vmatprep.subr.bf16.mxu0 0
    %4444 = vmatpush1.bf16.msra.mxu0 0
    %4445 = vmatprep.subr.bf16.mxu0 0
    %4446 = vmatpush1.bf16.msra.mxu0 0
    %4447 = vmatprep.subr.bf16.mxu0 0
    %4448 = vmatpush1.bf16.msra.mxu0 %v4431
    %4449 = vmatprep.subr.bf16.mxu0 0
    %4450 = vmatpush2.bf16.msra.mxu0 0
    %4451 = vmatprep.subr.bf16.mxu0 0
    %4452 = vmatpush2.bf16.msra.mxu0 0
    %4453 = vmatprep.subr.bf16.mxu0 0
    %4454 = vmatpush2.bf16.msra.mxu0 0
    %4455 = vmatprep.subr.bf16.mxu0 0
    %4456 = vmatpush2.bf16.msra.mxu0 0
    %4457 = vmatprep.subr.bf16.mxu0 0
    %4458 = vmatpush2.bf16.msra.mxu0 0
    %4459 = vmatprep.subr.bf16.mxu0 0
    %4460 = vmatpush2.bf16.msra.mxu0 0
    %4461 = vmatprep.subr.bf16.mxu0 0
    %4462 = vmatpush2.bf16.msra.mxu0 0
    %4463 = vmatprep.subr.bf16.mxu0 0
    %4464 = vmatpush2.bf16.msra.mxu0 0
    %4465 = vmatprep.mubr.bf16.mxu0 0
    %4466 = vmatmul.mubr.bf16.gmra.mxu0 %v4425
    %v4467 = vpop.f32.mrf.mxu0
    %v4468 = vadd.f32 0.0, %v4467
    %v4469 = vpop.f32.mrf.mxu0
    %v4470 = vpop.f32.mrf.mxu0
    %v4471 = vadd.f32 0.0, %v4470
    %v4472 = vpop.f32.mrf.mxu0
    %4473 = vmatprep.mubr.bf16.mxu0 0
    %4474 = vmatmul.mubr.bf16.gmra.mxu0 %v4428
    %v4475 = vpop.f32.mrf.mxu0
    %v4476 = vadd.f32 0.0, %v4475
    %v4477 = vpop.f32.mrf.mxu0
    %v4478 = vpop.f32.mrf.mxu0
    %v4479 = vpop.f32.mrf.mxu0
    %4480 = vdwg.mxu0
    %v4481 = vadd.f32 %v4380, %v4468
    %v4482 = vadd.f32 %v4381, %v4471
    %v4483 = vadd.f32 %v4382, %v4476
    %v4484 = vld [vmem:[%s41] sm:$0x1]
    %v4486 = vlaneseq
    %v4487 = vshrl.u32 %v4486, 7
    %v4488 = vsub.s32 0, %v4487
    %v4489 = vrot.slane %v4484, %v4488
    %v4491 = vmul.f32 %v4268, %v4489
    %v4492 = vmul.f32 %v4269, %v4489
    %v4493 = vmul.f32 %v4270, %v4489
    %v4494 = vld [vmem:[%s47] sm:$0x1]
    %v4496 = vlaneseq
    %v4497 = vshrl.u32 %v4496, 7
    %v4498 = vsub.s32 0, %v4497
    %v4499 = vrot.slane %v4494, %v4498
    %v4501 = vadd.f32 %v4491, %v4499
    %v4502 = vadd.f32 %v4492, %v4499
    %v4503 = vadd.f32 %v4493, %v4499
    %vm4504 = vcmp.gt.f32.partialorder %v4501, 0.0
    %vm4505 = vcmp.gt.f32.partialorder %v4502, 0.0
    %vm4506 = vcmp.gt.f32.partialorder %v4503, 0.0
    %v4507 = vmin.f32 %v4501, 0.0
    %v4508 = vmin.f32 %v4502, 0.0
    %v4509 = vmin.f32 %v4503, 0.0
    %v4510 = vmul.f32 %v4507, 1.442695
    %v4511 = vpow.pop %v4510
    %v4512 = vmul.f32 %v4508, 1.442695
    %v4513 = vpow.pop %v4512
    %v4514 = vmul.f32 %v4509, 1.442695
    %v4515 = vpow.pop %v4514
    %v4516 = vsub.f32 %v4511, 1.0
    %v4517 = vsub.f32 %v4513, 1.0
    %v4518 = vsub.f32 %v4515, 1.0
    %v4519 = vsel %vm4504, %v4501, %v4516
    %v4520 = vsel %vm4505, %v4502, %v4517
    %v4521 = vsel %vm4506, %v4503, %v4518
    %v4522 = vpack.c.bf16 %v4520, %v4519
    %v4523 = vpack.c.bf16 %v4521, %v4521
    %v4524 = vld [vmem:[%s53] sm:$0xf]
    %v4526 = vsel %vm1680, %v4522, 0
    %v4529 = vsel %vm1680, %v4523, 0
    %v4532 = vsel %vm1190, %v4524, 0
    %4534 = vmatprep.subr.bf16.mxu0 0
    %4535 = vmatpush1.bf16.msra.mxu0 0
    %4536 = vmatprep.subr.bf16.mxu0 0
    %4537 = vmatpush1.bf16.msra.mxu0 0
    %4538 = vmatprep.subr.bf16.mxu0 0
    %4539 = vmatpush1.bf16.msra.mxu0 0
    %4540 = vmatprep.subr.bf16.mxu0 0
    %4541 = vmatpush1.bf16.msra.mxu0 0
    %4542 = vmatprep.subr.bf16.mxu0 0
    %4543 = vmatpush1.bf16.msra.mxu0 0
    %4544 = vmatprep.subr.bf16.mxu0 0
    %4545 = vmatpush1.bf16.msra.mxu0 0
    %4546 = vmatprep.subr.bf16.mxu0 0
    %4547 = vmatpush1.bf16.msra.mxu0 0
    %4548 = vmatprep.subr.bf16.mxu0 0
    %4549 = vmatpush1.bf16.msra.mxu0 %v4532
    %4550 = vmatprep.subr.bf16.mxu0 0
    %4551 = vmatpush2.bf16.msra.mxu0 0
    %4552 = vmatprep.subr.bf16.mxu0 0
    %4553 = vmatpush2.bf16.msra.mxu0 0
    %4554 = vmatprep.subr.bf16.mxu0 0
    %4555 = vmatpush2.bf16.msra.mxu0 0
    %4556 = vmatprep.subr.bf16.mxu0 0
    %4557 = vmatpush2.bf16.msra.mxu0 0
    %4558 = vmatprep.subr.bf16.mxu0 0
    %4559 = vmatpush2.bf16.msra.mxu0 0
    %4560 = vmatprep.subr.bf16.mxu0 0
    %4561 = vmatpush2.bf16.msra.mxu0 0
    %4562 = vmatprep.subr.bf16.mxu0 0
    %4563 = vmatpush2.bf16.msra.mxu0 0
    %4564 = vmatprep.subr.bf16.mxu0 0
    %4565 = vmatpush2.bf16.msra.mxu0 0
    %4566 = vmatprep.mubr.bf16.mxu0 0
    %4567 = vmatmul.mubr.bf16.gmra.mxu0 %v4526
    %v4568 = vpop.f32.mrf.mxu0
    %v4569 = vadd.f32 0.0, %v4568
    %v4570 = vpop.f32.mrf.mxu0
    %v4571 = vpop.f32.mrf.mxu0
    %v4572 = vadd.f32 0.0, %v4571
    %v4573 = vpop.f32.mrf.mxu0
    %4574 = vmatprep.mubr.bf16.mxu0 0
    %4575 = vmatmul.mubr.bf16.gmra.mxu0 %v4529
    %v4576 = vpop.f32.mrf.mxu0
    %v4577 = vadd.f32 0.0, %v4576
    %v4578 = vpop.f32.mrf.mxu0
    %v4579 = vpop.f32.mrf.mxu0
    %v4580 = vpop.f32.mrf.mxu0
    %4581 = vdwg.mxu0
    %v4582 = vadd.f32 %v4481, %v4569
    %v4583 = vadd.f32 %v4482, %v4572
    %v4584 = vadd.f32 %v4483, %v4577
    %v4585 = vld [vmem:[%s23] sm:$0x1]
    %v4587 = vlaneseq
    %v4588 = vshrl.u32 %v4587, 7
    %v4589 = vsub.s32 0, %v4588
    %v4590 = vrot.slane %v4585, %v4589
    %v4592 = vmul.f32 %v4582, %v4590
    %v4593 = vmul.f32 %v4583, %v4590
    %v4594 = vmul.f32 %v4584, %v4590
    %v4595 = vld [vmem:[%s25] sm:$0x1]
    %v4597 = vlaneseq
    %v4598 = vshrl.u32 %v4597, 7
    %v4599 = vsub.s32 0, %v4598
    %v4600 = vrot.slane %v4595, %v4599
    %v4602 = vadd.f32 %v4592, %v4600
    %v4603 = vadd.f32 %v4593, %v4600
    %v4604 = vadd.f32 %v4594, %v4600
    %vm4605 = vcmp.gt.f32.partialorder %v4602, 0.0
    %vm4606 = vcmp.gt.f32.partialorder %v4603, 0.0
    %vm4607 = vcmp.gt.f32.partialorder %v4604, 0.0
    %v4608 = vmin.f32 %v4602, 0.0
    %v4609 = vmin.f32 %v4603, 0.0
    %v4610 = vmin.f32 %v4604, 0.0
    %v4611 = vmul.f32 %v4608, 1.442695
    %v4612 = vpow.pop %v4611
    %v4613 = vmul.f32 %v4609, 1.442695
    %v4614 = vpow.pop %v4613
    %v4615 = vmul.f32 %v4610, 1.442695
    %v4616 = vpow.pop %v4615
    %v4617 = vsub.f32 %v4612, 1.0
    %v4618 = vsub.f32 %v4614, 1.0
    %v4619 = vsub.f32 %v4616, 1.0
    %v4620 = vsel %vm4605, %v4602, %v4617
    %v4621 = vsel %vm4606, %v4603, %v4618
    %v4622 = vsel %vm4607, %v4604, %v4619
    %vm4623 = vcmask 191488
    %v4624 = vsel %vm4623, %v1050, 0.0
    %4625 = vadd.xlane.f32.xlu0 %v4624
    %v4626 = vpop.xlane.xlu0 %4625
    %v4627 = vmax.f32 %v4626, 1.0
    %v4629 = vsel %vm1183, %v1050, 0
    %4631 = vmatprep.subr.mxu0 0.0
    %4632 = vmatpush1.msra.mxu0 0.0
    %4633 = vmatprep.subr.mxu0 0.0
    %4634 = vmatpush1.msra.mxu0 0.0
    %4635 = vmatprep.subr.mxu0 0.0
    %4636 = vmatpush1.msra.mxu0 0.0
    %4637 = vmatprep.subr.mxu0 0.0
    %4638 = vmatpush1.msra.mxu0 0.0
    %4639 = vmatprep.subr.mxu0 0.0
    %4640 = vmatpush1.msra.mxu0 0.0
    %4641 = vmatprep.subr.mxu0 0.0
    %4642 = vmatpush1.msra.mxu0 0.0
    %4643 = vmatprep.subr.mxu0 0.0
    %4644 = vmatpush1.msra.mxu0 0.0
    %4645 = vmatprep.subr.mxu0 0.0
    %4646 = vmatpush1.msra.mxu0 0.0
    %4647 = vmatprep.subr.mxu0 0.0
    %4648 = vmatpush1.msra.mxu0 0.0
    %4649 = vmatprep.subr.mxu0 0.0
    %4650 = vmatpush1.msra.mxu0 0.0
    %4651 = vmatprep.subr.mxu0 0.0
    %4652 = vmatpush1.msra.mxu0 0.0
    %4653 = vmatprep.subr.mxu0 0.0
    %4654 = vmatpush1.msra.mxu0 0.0
    %4655 = vmatprep.subr.mxu0 0.0
    %4656 = vmatpush1.msra.mxu0 0.0
    %4657 = vmatprep.subr.mxu0 0.0
    %4658 = vmatpush1.msra.mxu0 %v4622
    %4659 = vmatprep.subr.mxu0 0.0
    %4660 = vmatpush1.msra.mxu0 %v4621
    %4661 = vmatprep.subr.mxu0 0.0
    %4662 = vmatpush1.msra.mxu0 %v4620
    %4663 = vmatprep.subr.mxu0 0.0
    %4664 = vmatpush2.msra.mxu0 0.0
    %4665 = vmatprep.subr.mxu0 0.0
    %4666 = vmatpush2.msra.mxu0 0.0
    %4667 = vmatprep.subr.mxu0 0.0
    %4668 = vmatpush2.msra.mxu0 0.0
    %4669 = vmatprep.subr.mxu0 0.0
    %4670 = vmatpush2.msra.mxu0 0.0
    %4671 = vmatprep.subr.mxu0 0.0
    %4672 = vmatpush2.msra.mxu0 0.0
    %4673 = vmatprep.subr.mxu0 0.0
    %4674 = vmatpush2.msra.mxu0 0.0
    %4675 = vmatprep.subr.mxu0 0.0
    %4676 = vmatpush2.msra.mxu0 0.0
    %4677 = vmatprep.subr.mxu0 0.0
    %4678 = vmatpush2.msra.mxu0 0.0
    %4679 = vmatprep.subr.mxu0 0.0
    %4680 = vmatpush2.msra.mxu0 0.0
    %4681 = vmatprep.subr.mxu0 0.0
    %4682 = vmatpush2.msra.mxu0 0.0
    %4683 = vmatprep.subr.mxu0 0.0
    %4684 = vmatpush2.msra.mxu0 0.0
    %4685 = vmatprep.subr.mxu0 0.0
    %4686 = vmatpush2.msra.mxu0 0.0
    %4687 = vmatprep.subr.mxu0 0.0
    %4688 = vmatpush2.msra.mxu0 0.0
    %4689 = vmatprep.subr.mxu0 0.0
    %4690 = vmatpush2.msra.mxu0 0.0
    %4691 = vmatprep.subr.mxu0 0.0
    %4692 = vmatpush2.msra.mxu0 0.0
    %4693 = vmatprep.subr.mxu0 0.0
    %4694 = vmatpush2.msra.mxu0 0.0
    %4695 = vmatprep.mubr.f32.mxu0 0.0
    %4696 = vmatmul.mubr.f32.gmra.mxu0 %v4629
    %v4697 = vpop.f32.mrf.mxu0
    %v4698 = vadd.f32 0.0, %v4697
    %v4699 = vpop.f32.mrf.mxu0
    %4700 = vdwg.mxu0
    %v4701 = vrcp.pop %v4627
    %v4702 = vmul.f32 %v4698, %v4701
    %vm4703 = vcmask 31744
    %v4705 = vsel %vm4703, %v1051, 0
    %v4708 = vsel %vm4703, %v1052, 0
    %v4711 = vsel %vm4703, %v1053, 0
    %v4714 = vsel %vm1190, %v4702, 0
    %4716 = vmatprep.subr.mxu0 0.0
    %4717 = vmatpush1.msra.mxu0 0.0
    %4718 = vmatprep.subr.mxu0 0.0
    %4719 = vmatpush1.msra.mxu0 0.0
    %4720 = vmatprep.subr.mxu0 0.0
    %4721 = vmatpush1.msra.mxu0 0.0
    %4722 = vmatprep.subr.mxu0 0.0
    %4723 = vmatpush1.msra.mxu0 0.0
    %4724 = vmatprep.subr.mxu0 0.0
    %4725 = vmatpush1.msra.mxu0 0.0
    %4726 = vmatprep.subr.mxu0 0.0
    %4727 = vmatpush1.msra.mxu0 0.0
    %4728 = vmatprep.subr.mxu0 0.0
    %4729 = vmatpush1.msra.mxu0 0.0
    %4730 = vmatprep.subr.mxu0 0.0
    %4731 = vmatpush1.msra.mxu0 0.0
    %4732 = vmatprep.subr.mxu0 0.0
    %4733 = vmatpush1.msra.mxu0 0.0
    %4734 = vmatprep.subr.mxu0 0.0
    %4735 = vmatpush1.msra.mxu0 0.0
    %4736 = vmatprep.subr.mxu0 0.0
    %4737 = vmatpush1.msra.mxu0 0.0
    %4738 = vmatprep.subr.mxu0 0.0
    %4739 = vmatpush1.msra.mxu0 0.0
    %4740 = vmatprep.subr.mxu0 0.0
    %4741 = vmatpush1.msra.mxu0 0.0
    %4742 = vmatprep.subr.mxu0 0.0
    %4743 = vmatpush1.msra.mxu0 0.0
    %4744 = vmatprep.subr.mxu0 0.0
    %4745 = vmatpush1.msra.mxu0 0.0
    %4746 = vmatprep.subr.mxu0 0.0
    %4747 = vmatpush1.msra.mxu0 %v4714
    %4748 = vmatprep.subr.mxu0 0.0
    %4749 = vmatpush2.msra.mxu0 0.0
    %4750 = vmatprep.subr.mxu0 0.0
    %4751 = vmatpush2.msra.mxu0 0.0
    %4752 = vmatprep.subr.mxu0 0.0
    %4753 = vmatpush2.msra.mxu0 0.0
    %4754 = vmatprep.subr.mxu0 0.0
    %4755 = vmatpush2.msra.mxu0 0.0
    %4756 = vmatprep.subr.mxu0 0.0
    %4757 = vmatpush2.msra.mxu0 0.0
    %4758 = vmatprep.subr.mxu0 0.0
    %4759 = vmatpush2.msra.mxu0 0.0
    %4760 = vmatprep.subr.mxu0 0.0
    %4761 = vmatpush2.msra.mxu0 0.0
    %4762 = vmatprep.subr.mxu0 0.0
    %4763 = vmatpush2.msra.mxu0 0.0
    %4764 = vmatprep.subr.mxu0 0.0
    %4765 = vmatpush2.msra.mxu0 0.0
    %4766 = vmatprep.subr.mxu0 0.0
    %4767 = vmatpush2.msra.mxu0 0.0
    %4768 = vmatprep.subr.mxu0 0.0
    %4769 = vmatpush2.msra.mxu0 0.0
    %4770 = vmatprep.subr.mxu0 0.0
    %4771 = vmatpush2.msra.mxu0 0.0
    %4772 = vmatprep.subr.mxu0 0.0
    %4773 = vmatpush2.msra.mxu0 0.0
    %4774 = vmatprep.subr.mxu0 0.0
    %4775 = vmatpush2.msra.mxu0 0.0
    %4776 = vmatprep.subr.mxu0 0.0
    %4777 = vmatpush2.msra.mxu0 0.0
    %4778 = vmatprep.subr.mxu0 0.0
    %4779 = vmatpush2.msra.mxu0 0.0
    %4780 = vmatprep.mubr.f32.mxu0 0.0
    %4781 = vmatmul.mubr.f32.gmra.mxu0 %v4705
    %v4782 = vpop.f32.mrf.mxu0
    %v4783 = vadd.f32 0.0, %v4782
    %v4784 = vpop.f32.mrf.mxu0
    %4785 = vmatprep.mubr.f32.mxu0 0.0
    %4786 = vmatmul.mubr.f32.gmra.mxu0 %v4708
    %v4787 = vpop.f32.mrf.mxu0
    %v4788 = vadd.f32 0.0, %v4787
    %v4789 = vpop.f32.mrf.mxu0
    %4790 = vmatprep.mubr.f32.mxu0 0.0
    %4791 = vmatmul.mubr.f32.gmra.mxu0 %v4711
    %v4792 = vpop.f32.mrf.mxu0
    %v4793 = vadd.f32 0.0, %v4792
    %v4794 = vpop.f32.mrf.mxu0
    %4795 = vdwg.mxu0
    %v4796 = vld [vmem:[%s9] sm:$0x1]
    %v4797 = vld [vmem:[%s11] sm:$0x1]
    %v4799 = vlaneseq
    %v4800 = vshrl.u32 %v4799, 7
    %v4801 = vsub.s32 0, %v4800
    %v4802 = vrot.slane %v4797, %v4801
    %v4804 = vmul.f32 %v4582, %v4802
    %v4805 = vmul.f32 %v4583, %v4802
    %v4806 = vmul.f32 %v4584, %v4802
    %v4807 = vld [vmem:[%s15] sm:$0x1]
    %v4809 = vlaneseq
    %v4810 = vshrl.u32 %v4809, 7
    %v4811 = vsub.s32 0, %v4810
    %v4812 = vrot.slane %v4807, %v4811
    %v4814 = vadd.f32 %v4804, %v4812
    %v4815 = vadd.f32 %v4805, %v4812
    %v4816 = vadd.f32 %v4806, %v4812
    %vm4817 = vcmp.gt.f32.partialorder %v4814, 0.0
    %vm4818 = vcmp.gt.f32.partialorder %v4815, 0.0
    %vm4819 = vcmp.gt.f32.partialorder %v4816, 0.0
    %v4820 = vmin.f32 %v4814, 0.0
    %v4821 = vmin.f32 %v4815, 0.0
    %v4822 = vmin.f32 %v4816, 0.0
    %v4823 = vmul.f32 %v4820, 1.442695
    %v4824 = vpow.pop %v4823
    %v4825 = vmul.f32 %v4821, 1.442695
    %v4826 = vpow.pop %v4825
    %v4827 = vmul.f32 %v4822, 1.442695
    %v4828 = vpow.pop %v4827
    %v4829 = vsub.f32 %v4824, 1.0
    %v4830 = vsub.f32 %v4826, 1.0
    %v4831 = vsub.f32 %v4828, 1.0
    %v4832 = vsel %vm4817, %v4814, %v4829
    %v4833 = vsel %vm4818, %v4815, %v4830
    %v4834 = vsel %vm4819, %v4816, %v4831
    %v4835 = vpack.c.bf16 %v4833, %v4832
    %v4836 = vpack.c.bf16 %v4834, %v4834
    %v4837 = vld [vmem:[%s19] sm:$0xf]
    %v4838 = vld [vmem:[%s19 + $0x4] sm:$0xf]
    %v4839 = vld [vmem:[%s19 + $0x8] sm:$0xf]
    %v4840 = vld [vmem:[%s19 + $0xc] sm:$0xf]
    %v4845 = vunpack.c.l.b16 %v4837
    %v4846 = vunpack.c.l.b16 %v4838
    %v4847 = vunpack.c.l.b16 %v4839
    %v4848 = vunpack.c.l.b16 %v4840
    %v4849 = vpack.c.b16 %v4846, %v4845
    %v4850 = vpack.c.b16 %v4848, %v4847
    %vm4853 = vcmask 261120
    %v4855 = vsel %vm4853, %v4835, 0
    %v4858 = vsel %vm4853, %v4836, 0
    %4860 = vmatprep.subr.bf16.mxu0 0
    %4861 = vmatpush1.bf16.msra.mxu0 0
    %4862 = vmatprep.subr.bf16.mxu0 0
    %4863 = vmatpush1.bf16.msra.mxu0 0
    %4864 = vmatprep.subr.bf16.mxu0 0
    %4865 = vmatpush1.bf16.msra.mxu0 0
    %4866 = vmatprep.subr.bf16.mxu0 0
    %4867 = vmatpush1.bf16.msra.mxu0 0
    %4868 = vmatprep.subr.bf16.mxu0 0
    %4869 = vmatpush1.bf16.msra.mxu0 0
    %4870 = vmatprep.subr.bf16.mxu0 0
    %4871 = vmatpush1.bf16.msra.mxu0 0
    %4872 = vmatprep.subr.bf16.mxu0 0
    %4873 = vmatpush1.bf16.msra.mxu0 %v4850
    %4874 = vmatprep.subr.bf16.mxu0 0
    %4875 = vmatpush1.bf16.msra.mxu0 %v4849
    %4876 = vmatprep.subr.bf16.mxu0 0
    %4877 = vmatpush2.bf16.msra.mxu0 0
    %4878 = vmatprep.subr.bf16.mxu0 0
    %4879 = vmatpush2.bf16.msra.mxu0 0
    %4880 = vmatprep.subr.bf16.mxu0 0
    %4881 = vmatpush2.bf16.msra.mxu0 0
    %4882 = vmatprep.subr.bf16.mxu0 0
    %4883 = vmatpush2.bf16.msra.mxu0 0
    %4884 = vmatprep.subr.bf16.mxu0 0
    %4885 = vmatpush2.bf16.msra.mxu0 0
    %4886 = vmatprep.subr.bf16.mxu0 0
    %4887 = vmatpush2.bf16.msra.mxu0 0
    %4888 = vmatprep.subr.bf16.mxu0 0
    %4889 = vmatpush2.bf16.msra.mxu0 0
    %4890 = vmatprep.subr.bf16.mxu0 0
    %4891 = vmatpush2.bf16.msra.mxu0 0
    %4892 = vmatprep.mubr.bf16.mxu0 0
    %4893 = vmatmul.mubr.bf16.gmra.mxu0 %v4855
    %v4894 = vpop.f32.mrf.mxu0
    %v4895 = vadd.f32 0.0, %v4894
    %v4896 = vpop.f32.mrf.mxu0
    %v4897 = vpop.f32.mrf.mxu0
    %v4898 = vadd.f32 0.0, %v4897
    %v4899 = vpop.f32.mrf.mxu0
    %4900 = vmatprep.mubr.bf16.mxu0 0
    %4901 = vmatmul.mubr.bf16.gmra.mxu0 %v4858
    %v4902 = vpop.f32.mrf.mxu0
    %v4903 = vadd.f32 0.0, %v4902
    %v4904 = vpop.f32.mrf.mxu0
    %v4905 = vpop.f32.mrf.mxu0
    %v4906 = vpop.f32.mrf.mxu0
    %4907 = vdwg.mxu0
    %v4909 = vlaneseq
    %v4910 = vshrl.u32 %v4909, 7
    %v4911 = vsub.s32 0, %v4910
    %v4912 = vrot.slane %v4796, %v4911
    %v4914 = vadd.f32 %v4912, %v4895
    %v4915 = vadd.f32 %v4912, %v4898
    %v4916 = vadd.f32 %v4912, %v4903
    %v4917 = vld [vmem:[%s13] sm:$0x1]
    %v4919 = vlaneseq
    %v4920 = vshrl.u32 %v4919, 7
    %v4921 = vsub.s32 0, %v4920
    %v4922 = vrot.slane %v4917, %v4921
    %v4924 = vmul.f32 %v4783, %v4922
    %v4925 = vmul.f32 %v4788, %v4922
    %v4926 = vmul.f32 %v4793, %v4922
    %v4927 = vld [vmem:[%s17] sm:$0x1]
    %v4929 = vlaneseq
    %v4930 = vshrl.u32 %v4929, 7
    %v4931 = vsub.s32 0, %v4930
    %v4932 = vrot.slane %v4927, %v4931
    %v4934 = vadd.f32 %v4924, %v4932
    %v4935 = vadd.f32 %v4925, %v4932
    %v4936 = vadd.f32 %v4926, %v4932
    %vm4937 = vcmp.gt.f32.partialorder %v4934, 0.0
    %vm4938 = vcmp.gt.f32.partialorder %v4935, 0.0
    %vm4939 = vcmp.gt.f32.partialorder %v4936, 0.0
    %v4940 = vmin.f32 %v4934, 0.0
    %v4941 = vmin.f32 %v4935, 0.0
    %v4942 = vmin.f32 %v4936, 0.0
    %v4943 = vmul.f32 %v4940, 1.442695
    %v4944 = vpow.pop %v4943
    %v4945 = vmul.f32 %v4941, 1.442695
    %v4946 = vpow.pop %v4945
    %v4947 = vmul.f32 %v4942, 1.442695
    %v4948 = vpow.pop %v4947
    %v4949 = vsub.f32 %v4944, 1.0
    %v4950 = vsub.f32 %v4946, 1.0
    %v4951 = vsub.f32 %v4948, 1.0
    %v4952 = vsel %vm4937, %v4934, %v4949
    %v4953 = vsel %vm4938, %v4935, %v4950
    %v4954 = vsel %vm4939, %v4936, %v4951
    %v4955 = vpack.c.bf16 %v4953, %v4952
    %v4956 = vpack.c.bf16 %v4954, %v4954
    %v4957 = vld [vmem:[%s21] sm:$0xf]
    %v4958 = vld [vmem:[%s21 + $0x4] sm:$0xf]
    %v4959 = vld [vmem:[%s21 + $0x8] sm:$0xf]
    %v4960 = vld [vmem:[%s21 + $0xc] sm:$0xf]
    %v4965 = vunpack.c.l.b16 %v4957
    %v4966 = vunpack.c.l.b16 %v4958
    %v4967 = vunpack.c.l.b16 %v4959
    %v4968 = vunpack.c.l.b16 %v4960
    %v4969 = vpack.c.b16 %v4966, %v4965
    %v4970 = vpack.c.b16 %v4968, %v4967
    %v4974 = vsel %vm4853, %v4955, 0
    %v4977 = vsel %vm4853, %v4956, 0
    %4979 = vmatprep.subr.bf16.mxu0 0
    %4980 = vmatpush1.bf16.msra.mxu0 0
    %4981 = vmatprep.subr.bf16.mxu0 0
    %4982 = vmatpush1.bf16.msra.mxu0 0
    %4983 = vmatprep.subr.bf16.mxu0 0
    %4984 = vmatpush1.bf16.msra.mxu0 0
    %4985 = vmatprep.subr.bf16.mxu0 0
    %4986 = vmatpush1.bf16.msra.mxu0 0
    %4987 = vmatprep.subr.bf16.mxu0 0
    %4988 = vmatpush1.bf16.msra.mxu0 0
    %4989 = vmatprep.subr.bf16.mxu0 0
    %4990 = vmatpush1.bf16.msra.mxu0 0
    %4991 = vmatprep.subr.bf16.mxu0 0
    %4992 = vmatpush1.bf16.msra.mxu0 %v4970
    %4993 = vmatprep.subr.bf16.mxu0 0
    %4994 = vmatpush1.bf16.msra.mxu0 %v4969
    %4995 = vmatprep.subr.bf16.mxu0 0
    %4996 = vmatpush2.bf16.msra.mxu0 0
    %4997 = vmatprep.subr.bf16.mxu0 0
    %4998 = vmatpush2.bf16.msra.mxu0 0
    %4999 = vmatprep.subr.bf16.mxu0 0
    %5000 = vmatpush2.bf16.msra.mxu0 0
    %5001 = vmatprep.subr.bf16.mxu0 0
    %5002 = vmatpush2.bf16.msra.mxu0 0
    %5003 = vmatprep.subr.bf16.mxu0 0
    %5004 = vmatpush2.bf16.msra.mxu0 0
    %5005 = vmatprep.subr.bf16.mxu0 0
    %5006 = vmatpush2.bf16.msra.mxu0 0
    %5007 = vmatprep.subr.bf16.mxu0 0
    %5008 = vmatpush2.bf16.msra.mxu0 0
    %5009 = vmatprep.subr.bf16.mxu0 0
    %5010 = vmatpush2.bf16.msra.mxu0 0
    %5011 = vmatprep.mubr.bf16.mxu0 0
    %5012 = vmatmul.mubr.bf16.gmra.mxu0 %v4974
    %v5013 = vpop.f32.mrf.mxu0
    %v5014 = vadd.f32 0.0, %v5013
    %v5015 = vpop.f32.mrf.mxu0
    %v5016 = vpop.f32.mrf.mxu0
    %v5017 = vadd.f32 0.0, %v5016
    %v5018 = vpop.f32.mrf.mxu0
    %5019 = vmatprep.mubr.bf16.mxu0 0
    %5020 = vmatmul.mubr.bf16.gmra.mxu0 %v4977
    %v5021 = vpop.f32.mrf.mxu0
    %v5022 = vadd.f32 0.0, %v5021
    %v5023 = vpop.f32.mrf.mxu0
    %v5024 = vpop.f32.mrf.mxu0
    %v5025 = vpop.f32.mrf.mxu0
    %5026 = vdwg.mxu0
    %v5027 = vadd.f32 %v4914, %v5014
    %v5028 = vadd.f32 %v4915, %v5017
    %v5029 = vadd.f32 %v4916, %v5022
    %v5030 = vld [vmem:[#allocation2] sm:$0x1]
    %v5031 = vld [vmem:[%s29] sm:$0x1]
    %v5033 = vlaneseq
    %v5034 = vshrl.u32 %v5033, 7
    %v5035 = vsub.s32 0, %v5034
    %v5036 = vrot.slane %v5031, %v5035
    %v5038 = vmul.f32 %v4702, %v5036
    %v5039 = vld [vmem:[%s31] sm:$0x1]
    %v5041 = vlaneseq
    %v5042 = vshrl.u32 %v5041, 7
    %v5043 = vsub.s32 0, %v5042
    %v5044 = vrot.slane %v5039, %v5043
    %v5046 = vadd.f32 %v5038, %v5044
    %vm5047 = vcmp.gt.f32.partialorder %v5046, 0.0
    %v5048 = vmin.f32 %v5046, 0.0
    %v5049 = vmul.f32 %v5048, 1.442695
    %v5050 = vpow.pop %v5049
    %v5051 = vsub.f32 %v5050, 1.0
    %v5052 = vsel %vm5047, %v5046, %v5051
    %v5053 = vpack.c.bf16 %v5052, %v5052
    %v5054 = vld [vmem:[%s33] sm:$0xf]
    %v5055 = vld [vmem:[%s33 + $0x4] sm:$0xf]
    %v5056 = vld [vmem:[%s33 + $0x8] sm:$0xf]
    %v5057 = vld [vmem:[%s33 + $0xc] sm:$0xf]
    %v5062 = vunpack.c.l.b16 %v5054
    %v5063 = vunpack.c.l.b16 %v5055
    %v5064 = vunpack.c.l.b16 %v5056
    %v5065 = vunpack.c.l.b16 %v5057
    %v5066 = vpack.c.b16 %v5063, %v5062
    %v5067 = vpack.c.b16 %v5065, %v5064
    %v5071 = vsel %vm4853, %v5053, 0
    %5073 = vmatprep.subr.bf16.mxu0 0
    %5074 = vmatpush1.bf16.msra.mxu0 0
    %5075 = vmatprep.subr.bf16.mxu0 0
    %5076 = vmatpush1.bf16.msra.mxu0 0
    %5077 = vmatprep.subr.bf16.mxu0 0
    %5078 = vmatpush1.bf16.msra.mxu0 0
    %5079 = vmatprep.subr.bf16.mxu0 0
    %5080 = vmatpush1.bf16.msra.mxu0 0
    %5081 = vmatprep.subr.bf16.mxu0 0
    %5082 = vmatpush1.bf16.msra.mxu0 0
    %5083 = vmatprep.subr.bf16.mxu0 0
    %5084 = vmatpush1.bf16.msra.mxu0 0
    %5085 = vmatprep.subr.bf16.mxu0 0
    %5086 = vmatpush1.bf16.msra.mxu0 %v5067
    %5087 = vmatprep.subr.bf16.mxu0 0
    %5088 = vmatpush1.bf16.msra.mxu0 %v5066
    %5089 = vmatprep.subr.bf16.mxu0 0
    %5090 = vmatpush2.bf16.msra.mxu0 0
    %5091 = vmatprep.subr.bf16.mxu0 0
    %5092 = vmatpush2.bf16.msra.mxu0 0
    %5093 = vmatprep.subr.bf16.mxu0 0
    %5094 = vmatpush2.bf16.msra.mxu0 0
    %5095 = vmatprep.subr.bf16.mxu0 0
    %5096 = vmatpush2.bf16.msra.mxu0 0
    %5097 = vmatprep.subr.bf16.mxu0 0
    %5098 = vmatpush2.bf16.msra.mxu0 0
    %5099 = vmatprep.subr.bf16.mxu0 0
    %5100 = vmatpush2.bf16.msra.mxu0 0
    %5101 = vmatprep.subr.bf16.mxu0 0
    %5102 = vmatpush2.bf16.msra.mxu0 0
    %5103 = vmatprep.subr.bf16.mxu0 0
    %5104 = vmatpush2.bf16.msra.mxu0 0
    %5105 = vmatprep.mubr.bf16.mxu0 0
    %5106 = vmatmul.mubr.bf16.gmra.mxu0 %v5071
    %v5107 = vpop.f32.mrf.mxu0
    %v5108 = vadd.f32 0.0, %v5107
    %v5109 = vpop.f32.mrf.mxu0
    %v5110 = vpop.f32.mrf.mxu0
    %v5111 = vpop.f32.mrf.mxu0
    %5112 = vdwg.mxu0
    %v5114 = vlaneseq
    %v5115 = vshrl.u32 %v5114, 7
    %v5116 = vsub.s32 0, %v5115
    %v5117 = vrot.slane %v5030, %v5116
    %v5119 = vadd.f32 %v5117, %v5108
    %5120 = vmax.xlane.f32.xlu0 %v5027
    %v5121 = vpop.xlane.xlu0 %5120
    %5122 = vmax.xlane.f32.xlu0 %v5028
    %v5123 = vpop.xlane.xlu0 %5122
    %5124 = vmax.xlane.f32.xlu0 %v5029
    %v5125 = vpop.xlane.xlu0 %5124
    %v5127 = vsel %vm1190, %v5119, 0
    %5129 = vmatprep.subr.mxu0 0.0
    %5130 = vmatpush1.msra.mxu0 0.0
    %5131 = vmatprep.subr.mxu0 0.0
    %5132 = vmatpush1.msra.mxu0 0.0
    %5133 = vmatprep.subr.mxu0 0.0
    %5134 = vmatpush1.msra.mxu0 0.0
    %5135 = vmatprep.subr.mxu0 0.0
    %5136 = vmatpush1.msra.mxu0 0.0
    %5137 = vmatprep.subr.mxu0 0.0
    %5138 = vmatpush1.msra.mxu0 0.0
    %5139 = vmatprep.subr.mxu0 0.0
    %5140 = vmatpush1.msra.mxu0 0.0
    %5141 = vmatprep.subr.mxu0 0.0
    %5142 = vmatpush1.msra.mxu0 0.0
    %5143 = vmatprep.subr.mxu0 0.0
    %5144 = vmatpush1.msra.mxu0 0.0
    %5145 = vmatprep.subr.mxu0 0.0
    %5146 = vmatpush1.msra.mxu0 0.0
    %5147 = vmatprep.subr.mxu0 0.0
    %5148 = vmatpush1.msra.mxu0 0.0
    %5149 = vmatprep.subr.mxu0 0.0
    %5150 = vmatpush1.msra.mxu0 0.0
    %5151 = vmatprep.subr.mxu0 0.0
    %5152 = vmatpush1.msra.mxu0 0.0
    %5153 = vmatprep.subr.mxu0 0.0
    %5154 = vmatpush1.msra.mxu0 0.0
    %5155 = vmatprep.subr.mxu0 0.0
    %5156 = vmatpush1.msra.mxu0 0.0
    %5157 = vmatprep.subr.mxu0 0.0
    %5158 = vmatpush1.msra.mxu0 0.0
    %5159 = vmatprep.subr.mxu0 0.0
    %5160 = vmatpush1.msra.mxu0 %v5127
    %5161 = vmatprep.subr.mxu0 0.0
    %5162 = vmatpush2.msra.mxu0 0.0
    %5163 = vmatprep.subr.mxu0 0.0
    %5164 = vmatpush2.msra.mxu0 0.0
    %5165 = vmatprep.subr.mxu0 0.0
    %5166 = vmatpush2.msra.mxu0 0.0
    %5167 = vmatprep.subr.mxu0 0.0
    %5168 = vmatpush2.msra.mxu0 0.0
    %5169 = vmatprep.subr.mxu0 0.0
    %5170 = vmatpush2.msra.mxu0 0.0
    %5171 = vmatprep.subr.mxu0 0.0
    %5172 = vmatpush2.msra.mxu0 0.0
    %5173 = vmatprep.subr.mxu0 0.0
    %5174 = vmatpush2.msra.mxu0 0.0
    %5175 = vmatprep.subr.mxu0 0.0
    %5176 = vmatpush2.msra.mxu0 0.0
    %5177 = vmatprep.subr.mxu0 0.0
    %5178 = vmatpush2.msra.mxu0 0.0
    %5179 = vmatprep.subr.mxu0 0.0
    %5180 = vmatpush2.msra.mxu0 0.0
    %5181 = vmatprep.subr.mxu0 0.0
    %5182 = vmatpush2.msra.mxu0 0.0
    %5183 = vmatprep.subr.mxu0 0.0
    %5184 = vmatpush2.msra.mxu0 0.0
    %5185 = vmatprep.subr.mxu0 0.0
    %5186 = vmatpush2.msra.mxu0 0.0
    %5187 = vmatprep.subr.mxu0 0.0
    %5188 = vmatpush2.msra.mxu0 0.0
    %5189 = vmatprep.subr.mxu0 0.0
    %5190 = vmatpush2.msra.mxu0 0.0
    %5191 = vmatprep.subr.mxu0 0.0
    %5192 = vmatpush2.msra.mxu0 0.0
    %5193 = vmatprep.mubr.f32.mxu0 0.0
    %5194 = vmatmul.mubr.f32.gmra.mxu0 %v4705
    %v5195 = vpop.f32.mrf.mxu0
    %v5196 = vadd.f32 0.0, %v5195
    %v5197 = vpop.f32.mrf.mxu0
    %5198 = vmatprep.mubr.f32.mxu0 0.0
    %5199 = vmatmul.mubr.f32.gmra.mxu0 %v4708
    %v5200 = vpop.f32.mrf.mxu0
    %v5201 = vadd.f32 0.0, %v5200
    %v5202 = vpop.f32.mrf.mxu0
    %5203 = vmatprep.mubr.f32.mxu0 0.0
    %5204 = vmatmul.mubr.f32.gmra.mxu0 %v4711
    %v5205 = vpop.f32.mrf.mxu0
    %v5206 = vadd.f32 0.0, %v5205
    %v5207 = vpop.f32.mrf.mxu0
    %5208 = vdwg.mxu0
    %v5209 = vmax.f32 %v5121, %v5196
    %v5210 = vmax.f32 %v5123, %v5201
    %v5211 = vmax.f32 %v5125, %v5206
    %vm5212 = vcmp.gt.f32.partialorder %v1051, 0.0
    %vm5213 = vcmp.gt.f32.partialorder %v1052, 0.0
    %vm5214 = vcmp.gt.f32.partialorder %v1053, 0.0
    %5216 = vset.pattern.permute.xlu0 0
    %5217 = vperm.xlu0 %5216, %v5209
    %v5218 = vpop.permute.xlu0 %5217
    %5221 = vset.pattern.permute.xlu0 0
    %5222 = vperm.xlu0 %5221, %v5210
    %v5223 = vpop.permute.xlu0 %5222
    %5226 = vset.pattern.permute.xlu0 0
    %5227 = vperm.xlu0 %5226, %v5211
    %v5228 = vpop.permute.xlu0 %5227
    %v5230 = vsel %vm5212, %v5218, -1e+30
    %v5231 = vsel %vm5213, %v5223, -1e+30
    %v5232 = vsel %vm5214, %v5228, -1e+30
    %v5233 = vsel %vm4703, %v5230, -inf
    %v5234 = vsel %vm4703, %v5231, -inf
    %v5235 = vsel %vm4703, %v5232, -inf
    %v5236 = vmax.f32 %v5233, %v5234
    %v5237 = vmax.f32 %v5236, %v5235
    %v5238 = vrot.slane %v5237, 4
    %v5239 = vmax.f32 %v5237, %v5238
    %v5240 = vrot.slane %v5239, 2
    %v5241 = vmax.f32 %v5239, %v5240
    %v5242 = vrot.slane %v5241, 1
    %v5243 = vmax.f32 %v5241, %v5242
    %v5244 = vmul.f32 %v1051, %v5243
    %v5245 = vmul.f32 %v1052, %v5243
    %v5246 = vmul.f32 %v1053, %v5243
    %v5247 = vsel %vm4703, %v5244, 0.0
    %5248 = vadd.xlane.f32.xlu0 %v5247
    %v5249 = vpop.xlane.xlu0 %5248
    %v5250 = vsel %vm4703, %v5245, 0.0
    %5251 = vadd.xlane.f32.xlu0 %v5250
    %v5252 = vpop.xlane.xlu0 %5251
    %v5253 = vsel %vm4703, %v5246, 0.0
    %5254 = vadd.xlane.f32.xlu0 %v5253
    %v5255 = vpop.xlane.xlu0 %5254
    %5256 = vmatprep.subr.mxu0 0.0
    %5257 = vmatpush1.msra.mxu0 0.0
    %5258 = vmatprep.subr.mxu0 0.0
    %5259 = vmatpush1.msra.mxu0 0.0
    %5260 = vmatprep.subr.mxu0 0.0
    %5261 = vmatpush1.msra.mxu0 0.0
    %5262 = vmatprep.subr.mxu0 0.0
    %5263 = vmatpush1.msra.mxu0 0.0
    %5264 = vmatprep.subr.mxu0 0.0
    %5265 = vmatpush1.msra.mxu0 0.0
    %5266 = vmatprep.subr.mxu0 0.0
    %5267 = vmatpush1.msra.mxu0 0.0
    %5268 = vmatprep.subr.mxu0 0.0
    %5269 = vmatpush1.msra.mxu0 0.0
    %5270 = vmatprep.subr.mxu0 0.0
    %5271 = vmatpush1.msra.mxu0 0.0
    %5272 = vmatprep.subr.mxu0 0.0
    %5273 = vmatpush1.msra.mxu0 0.0
    %5274 = vmatprep.subr.mxu0 0.0
    %5275 = vmatpush1.msra.mxu0 0.0
    %5276 = vmatprep.subr.mxu0 0.0
    %5277 = vmatpush1.msra.mxu0 0.0
    %5278 = vmatprep.subr.mxu0 0.0
    %5279 = vmatpush1.msra.mxu0 0.0
    %5280 = vmatprep.subr.mxu0 0.0
    %5281 = vmatpush1.msra.mxu0 0.0
    %5282 = vmatprep.subr.mxu0 0.0
    %5283 = vmatpush1.msra.mxu0 %v5255
    %5284 = vmatprep.subr.mxu0 0.0
    %5285 = vmatpush1.msra.mxu0 %v5252
    %5286 = vmatprep.subr.mxu0 0.0
    %5287 = vmatpush1.msra.mxu0 %v5249
    %5288 = vmatprep.subr.mxu0 0.0
    %5289 = vmatpush2.msra.mxu0 0.0
    %5290 = vmatprep.subr.mxu0 0.0
    %5291 = vmatpush2.msra.mxu0 0.0
    %5292 = vmatprep.subr.mxu0 0.0
    %5293 = vmatpush2.msra.mxu0 0.0
    %5294 = vmatprep.subr.mxu0 0.0
    %5295 = vmatpush2.msra.mxu0 0.0
    %5296 = vmatprep.subr.mxu0 0.0
    %5297 = vmatpush2.msra.mxu0 0.0
    %5298 = vmatprep.subr.mxu0 0.0
    %5299 = vmatpush2.msra.mxu0 0.0
    %5300 = vmatprep.subr.mxu0 0.0
    %5301 = vmatpush2.msra.mxu0 0.0
    %5302 = vmatprep.subr.mxu0 0.0
    %5303 = vmatpush2.msra.mxu0 0.0
    %5304 = vmatprep.subr.mxu0 0.0
    %5305 = vmatpush2.msra.mxu0 0.0
    %5306 = vmatprep.subr.mxu0 0.0
    %5307 = vmatpush2.msra.mxu0 0.0
    %5308 = vmatprep.subr.mxu0 0.0
    %5309 = vmatpush2.msra.mxu0 0.0
    %5310 = vmatprep.subr.mxu0 0.0
    %5311 = vmatpush2.msra.mxu0 0.0
    %5312 = vmatprep.subr.mxu0 0.0
    %5313 = vmatpush2.msra.mxu0 0.0
    %5314 = vmatprep.subr.mxu0 0.0
    %5315 = vmatpush2.msra.mxu0 0.0
    %5316 = vmatprep.subr.mxu0 0.0
    %5317 = vmatpush2.msra.mxu0 0.0
    %5318 = vmatprep.subr.mxu0 0.0
    %5319 = vmatpush2.msra.mxu0 0.0
    %5320 = vmatprep.mubr.f32.mxu0 0.0
    %5321 = vmatmul.mubr.f32.gmra.mxu0 %v4629
    %v5322 = vpop.f32.mrf.mxu0
    %v5323 = vadd.f32 0.0, %v5322
    %v5324 = vpop.f32.mrf.mxu0
    %5325 = vdwg.mxu0
    %v5326 = vmul.f32 %v5323, %v4701
    %v5327 = vsub.f32 %v5027, %v5249
    %v5328 = vsub.f32 %v5028, %v5252
    %v5329 = vsub.f32 %v5029, %v5255
    %v5330 = vmul.f32 %v5327, 1.442695
    %v5331 = vpow.pop %v5330
    %v5332 = vmul.f32 %v5328, 1.442695
    %v5333 = vpow.pop %v5332
    %v5334 = vmul.f32 %v5329, 1.442695
    %v5335 = vpow.pop %v5334
    %5336 = vadd.xlane.f32.xlu0 %v5331
    %v5337 = vpop.xlane.xlu0 %5336
    %5338 = vadd.xlane.f32.xlu0 %v5333
    %v5339 = vpop.xlane.xlu0 %5338
    %5340 = vadd.xlane.f32.xlu0 %v5335
    %v5341 = vpop.xlane.xlu0 %5340
    %v5342 = vsub.f32 %v5119, %v5326
    %v5343 = vmul.f32 %v5342, 1.442695
    %v5344 = vpow.pop %v5343
    %5345 = vmatprep.subr.mxu0 0.0
    %5346 = vmatpush1.msra.mxu0 0.0
    %5347 = vmatprep.subr.mxu0 0.0
    %5348 = vmatpush1.msra.mxu0 0.0
    %5349 = vmatprep.subr.mxu0 0.0
    %5350 = vmatpush1.msra.mxu0 0.0
    %5351 = vmatprep.subr.mxu0 0.0
    %5352 = vmatpush1.msra.mxu0 0.0
    %5353 = vmatprep.subr.mxu0 0.0
    %5354 = vmatpush1.msra.mxu0 0.0
    %5355 = vmatprep.subr.mxu0 0.0
    %5356 = vmatpush1.msra.mxu0 0.0
    %5357 = vmatprep.subr.mxu0 0.0
    %5358 = vmatpush1.msra.mxu0 0.0
    %5359 = vmatprep.subr.mxu0 0.0
    %5360 = vmatpush1.msra.mxu0 0.0
    %5361 = vmatprep.subr.mxu0 0.0
    %5362 = vmatpush1.msra.mxu0 0.0
    %5363 = vmatprep.subr.mxu0 0.0
    %5364 = vmatpush1.msra.mxu0 0.0
    %5365 = vmatprep.subr.mxu0 0.0
    %5366 = vmatpush1.msra.mxu0 0.0
    %5367 = vmatprep.subr.mxu0 0.0
    %5368 = vmatpush1.msra.mxu0 0.0
    %5369 = vmatprep.subr.mxu0 0.0
    %5370 = vmatpush1.msra.mxu0 0.0
    %5371 = vmatprep.subr.mxu0 0.0
    %5372 = vmatpush1.msra.mxu0 %v5341
    %5373 = vmatprep.subr.mxu0 0.0
    %5374 = vmatpush1.msra.mxu0 %v5339
    %5375 = vmatprep.subr.mxu0 0.0
    %5376 = vmatpush1.msra.mxu0 %v5337
    %5377 = vmatprep.subr.mxu0 0.0
    %5378 = vmatpush2.msra.mxu0 0.0
    %5379 = vmatprep.subr.mxu0 0.0
    %5380 = vmatpush2.msra.mxu0 0.0
    %5381 = vmatprep.subr.mxu0 0.0
    %5382 = vmatpush2.msra.mxu0 0.0
    %5383 = vmatprep.subr.mxu0 0.0
    %5384 = vmatpush2.msra.mxu0 0.0
    %5385 = vmatprep.subr.mxu0 0.0
    %5386 = vmatpush2.msra.mxu0 0.0
    %5387 = vmatprep.subr.mxu0 0.0
    %5388 = vmatpush2.msra.mxu0 0.0
    %5389 = vmatprep.subr.mxu0 0.0
    %5390 = vmatpush2.msra.mxu0 0.0
    %5391 = vmatprep.subr.mxu0 0.0
    %5392 = vmatpush2.msra.mxu0 0.0
    %5393 = vmatprep.subr.mxu0 0.0
    %5394 = vmatpush2.msra.mxu0 0.0
    %5395 = vmatprep.subr.mxu0 0.0
    %5396 = vmatpush2.msra.mxu0 0.0
    %5397 = vmatprep.subr.mxu0 0.0
    %5398 = vmatpush2.msra.mxu0 0.0
    %5399 = vmatprep.subr.mxu0 0.0
    %5400 = vmatpush2.msra.mxu0 0.0
    %5401 = vmatprep.subr.mxu0 0.0
    %5402 = vmatpush2.msra.mxu0 0.0
    %5403 = vmatprep.subr.mxu0 0.0
    %5404 = vmatpush2.msra.mxu0 0.0
    %5405 = vmatprep.subr.mxu0 0.0
    %5406 = vmatpush2.msra.mxu0 0.0
    %5407 = vmatprep.subr.mxu0 0.0
    %5408 = vmatpush2.msra.mxu0 0.0
    %5409 = vmatprep.mubr.f32.mxu0 0.0
    %5410 = vmatmul.mubr.f32.gmra.mxu0 %v4629
    %v5411 = vpop.f32.mrf.mxu0
    %v5412 = vadd.f32 %v5344, %v5411
    %v5413 = vpop.f32.mrf.mxu0
    %5414 = vdwg.mxu0
    %v5416 = vsel %vm1190, %v5412, 0
    %5418 = vmatprep.subr.mxu0 0.0
    %5419 = vmatpush1.msra.mxu0 0.0
    %5420 = vmatprep.subr.mxu0 0.0
    %5421 = vmatpush1.msra.mxu0 0.0
    %5422 = vmatprep.subr.mxu0 0.0
    %5423 = vmatpush1.msra.mxu0 0.0
    %5424 = vmatprep.subr.mxu0 0.0
    %5425 = vmatpush1.msra.mxu0 0.0
    %5426 = vmatprep.subr.mxu0 0.0
    %5427 = vmatpush1.msra.mxu0 0.0
    %5428 = vmatprep.subr.mxu0 0.0
    %5429 = vmatpush1.msra.mxu0 0.0
    %5430 = vmatprep.subr.mxu0 0.0
    %5431 = vmatpush1.msra.mxu0 0.0
    %5432 = vmatprep.subr.mxu0 0.0
    %5433 = vmatpush1.msra.mxu0 0.0
    %5434 = vmatprep.subr.mxu0 0.0
    %5435 = vmatpush1.msra.mxu0 0.0
    %5436 = vmatprep.subr.mxu0 0.0
    %5437 = vmatpush1.msra.mxu0 0.0
    %5438 = vmatprep.subr.mxu0 0.0
    %5439 = vmatpush1.msra.mxu0 0.0
    %5440 = vmatprep.subr.mxu0 0.0
    %5441 = vmatpush1.msra.mxu0 0.0
    %5442 = vmatprep.subr.mxu0 0.0
    %5443 = vmatpush1.msra.mxu0 0.0
    %5444 = vmatprep.subr.mxu0 0.0
    %5445 = vmatpush1.msra.mxu0 0.0
    %5446 = vmatprep.subr.mxu0 0.0
    %5447 = vmatpush1.msra.mxu0 0.0
    %5448 = vmatprep.subr.mxu0 0.0
    %5449 = vmatpush1.msra.mxu0 %v5416
    %5450 = vmatprep.subr.mxu0 0.0
    %5451 = vmatpush2.msra.mxu0 0.0
    %5452 = vmatprep.subr.mxu0 0.0
    %5453 = vmatpush2.msra.mxu0 0.0
    %5454 = vmatprep.subr.mxu0 0.0
    %5455 = vmatpush2.msra.mxu0 0.0
    %5456 = vmatprep.subr.mxu0 0.0
    %5457 = vmatpush2.msra.mxu0 0.0
    %5458 = vmatprep.subr.mxu0 0.0
    %5459 = vmatpush2.msra.mxu0 0.0
    %5460 = vmatprep.subr.mxu0 0.0
    %5461 = vmatpush2.msra.mxu0 0.0
    %5462 = vmatprep.subr.mxu0 0.0
    %5463 = vmatpush2.msra.mxu0 0.0
    %5464 = vmatprep.subr.mxu0 0.0
    %5465 = vmatpush2.msra.mxu0 0.0
    %5466 = vmatprep.subr.mxu0 0.0
    %5467 = vmatpush2.msra.mxu0 0.0
    %5468 = vmatprep.subr.mxu0 0.0
    %5469 = vmatpush2.msra.mxu0 0.0
    %5470 = vmatprep.subr.mxu0 0.0
    %5471 = vmatpush2.msra.mxu0 0.0
    %5472 = vmatprep.subr.mxu0 0.0
    %5473 = vmatpush2.msra.mxu0 0.0
    %5474 = vmatprep.subr.mxu0 0.0
    %5475 = vmatpush2.msra.mxu0 0.0
    %5476 = vmatprep.subr.mxu0 0.0
    %5477 = vmatpush2.msra.mxu0 0.0
    %5478 = vmatprep.subr.mxu0 0.0
    %5479 = vmatpush2.msra.mxu0 0.0
    %5480 = vmatprep.subr.mxu0 0.0
    %5481 = vmatpush2.msra.mxu0 0.0
    %5482 = vmatprep.mubr.f32.mxu0 0.0
    %5483 = vmatmul.mubr.f32.gmra.mxu0 %v4705
    %v5484 = vpop.f32.mrf.mxu0
    %v5485 = vadd.f32 0.0, %v5484
    %v5486 = vpop.f32.mrf.mxu0
    %5487 = vmatprep.mubr.f32.mxu0 0.0
    %5488 = vmatmul.mubr.f32.gmra.mxu0 %v4708
    %v5489 = vpop.f32.mrf.mxu0
    %v5490 = vadd.f32 0.0, %v5489
    %v5491 = vpop.f32.mrf.mxu0
    %5492 = vmatprep.mubr.f32.mxu0 0.0
    %5493 = vmatmul.mubr.f32.gmra.mxu0 %v4711
    %v5494 = vpop.f32.mrf.mxu0
    %v5495 = vadd.f32 0.0, %v5494
    %v5496 = vpop.f32.mrf.mxu0
    %5497 = vdwg.mxu0
    %v5498 = vmax.f32 %v5485, 1e-30
    %v5499 = vmax.f32 %v5490, 1e-30
    %v5500 = vmax.f32 %v5495, 1e-30
    %5502 = vset.pattern.permute.xlu0 0
    %5503 = vperm.xlu0 %5502, %v5498
    %v5504 = vpop.permute.xlu0 %5503
    %5507 = vset.pattern.permute.xlu0 0
    %5508 = vperm.xlu0 %5507, %v5499
    %v5509 = vpop.permute.xlu0 %5508
    %5512 = vset.pattern.permute.xlu0 0
    %5513 = vperm.xlu0 %5512, %v5500
    %v5514 = vpop.permute.xlu0 %5513
    %v5516 = vrcp.pop %v5504
    %v5517 = vmul.f32 %v5331, %v5516
    %v5518 = vrcp.pop %v5509
    %v5519 = vmul.f32 %v5333, %v5518
    %v5520 = vrcp.pop %v5514
    %v5521 = vmul.f32 %v5335, %v5520
    %5522 = vst [vmem:[%s209] sm:$0xff] %v5517
    %5523 = vst [vmem:[%s209 + $0x8] sm:$0xff] %v5519
    %5524 = vst [vmem:[%s209 + $0x10] sm:$0xff] %v5521
    %v5525 = vrcp.pop %v5412
    %v5526 = vmul.f32 %v5344, %v5525
    %5528 = vset.pattern.permute.xlu0 0
    %5529 = vperm.xlu0 %5528, %v5526
    %v5530 = vpop.permute.xlu0 %5529
    %5532 = vst [vmem:[%s211] sm:$0xf] %v5530
    // Predicated region
    $region634: #{deep_scaffold_likelihood.1} parent=1 // pred_check
      _
    $region635: #{deep_scaffold_likelihood.1} parent=1 // pred_check_branch
      %5534 = sbr.rel (0) target = $region637
    $region636: #{deep_scaffold_likelihood.1} parent=1 // pred_region
      _
    $region637: #{deep_scaffold_likelihood.1} parent=1 // pred_fallthru
      _
    // Predicated region
    $region638: #{deep_scaffold_likelihood.1} parent=1 // pred_check
      _
    $region639: #{deep_scaffold_likelihood.1} parent=1 // pred_check_branch
      %5536 = sbr.rel (0) target = $region641
    $region640: #{deep_scaffold_likelihood.1} parent=1 // pred_region
      _
    $region641: #{deep_scaffold_likelihood.1} parent=1 // pred_fallthru
      _
    // Predicated region
    $region642: #{deep_scaffold_likelihood.1} parent=1 // pred_check
      _
    $region643: #{deep_scaffold_likelihood.1} parent=1 // pred_check_branch
      %5538 = sbr.rel (0) target = $region645
    $region644: #{deep_scaffold_likelihood.1} parent=1 // pred_region
      _
    $region645: #{deep_scaffold_likelihood.1} parent=1 // pred_fallthru
      _
    // Predicated region
    $region646: #{deep_scaffold_likelihood.1} parent=1 // pred_check
      _
    $region647: #{deep_scaffold_likelihood.1} parent=1 // pred_check_branch
      %5540 = sbr.rel (0) target = $region649
    $region648: #{deep_scaffold_likelihood.1} parent=1 // pred_region
      _
    $region649: #{deep_scaffold_likelihood.1} parent=1 // pred_fallthru
      _
    %5541 = vsyncpa [#allocation4], 1
    %5542 = vsyncpa [#allocation6], 1
    %5543 = vsyncpa [#allocation9], 1
    %5544 = vsyncpa [#allocation12], 1
    %5545 = vsyncpa [#allocation15], 1
    %5546 = vsyncpa [#allocation18], 1
    %5547 = vsyncpa [#allocation21], 1
    %5548 = vsyncpa [#allocation24], 1
    %5549 = vsyncpa [#allocation27], 1
    %5550 = vsyncpa [#allocation30], 1
    %5551 = vsyncpa [#allocation33], 1
    %5552 = vsyncpa [#allocation36], 1
    %5553 = vsyncpa [#allocation39], 1
    %5554 = vsyncpa [#allocation42], 1
    %5555 = vsyncpa [#allocation45], 1
    %5556 = vsyncpa [#allocation48], 1
    %5557 = vsyncpa [#allocation51], 1
    %5558 = vsyncpa [#allocation54], 1
    %5559 = vsyncpa [#allocation57], 1
    %5560 = vsyncpa [#allocation60], 1
    %5561 = vsyncpa [#allocation63], 1
    %5562 = vsyncpa [#allocation66], 1
    %5563 = vsyncpa [#allocation69], 1
    %5564 = vsyncpa [#allocation72], 1
    %5565 = vsyncpa [#allocation75], 1
    %5566 = vsyncpa [#allocation78], 1
    %5567 = vsyncpa [#allocation81], 1
    %5568 = vsyncpa [#allocation84], 1

</llo_original>
